<compile_context>
chip_gen: v7x
topology: tpu7x:2x2x1
jax: 0.10.0
libtpu: 0.0.40
codegen_flags: <defaults>
</compile_context>

<pallas_src>
import jax
import jax.numpy as jnp
import numpy as np
from jax.experimental import pallas as pl
from jax.experimental.pallas import tpu as pltpu

KSIZE = 5           # kernel_size = -2*res + 11 with res=3
NK = KSIZE * KSIZE  # 25 offsets
PAD = 2             # padding = 5 - res with res=3
MID = 64            # planes[1..3] in SCR
BN_EPS = 1e-5
NORM_EPS = 1e-12


def _scr_kernel(corr_ref, org_ref, w1_ref, b1_ref, wc_ref, b3_ref,
                wout_ref, b2_ref, out_ref):
    """Fused SCR conv stack + residual for one batch block.

    corr_ref : (25, rows, C)  self-correlation slab, rows = bb * H * W
    org_ref  : (rows, C)      original input (residual branch)
    w1_ref   : (C, 64)        conv1x1_in weight, BN1 scale folded in
    wc_ref   : (25, 64, 64)   Conv3d(1,5,5) weight, BN3 scale folded in
    wout_ref : (64, C)        conv1x1_out weight, BN2 scale folded in
    b*_ref   : (1, n)         folded BN biases
    out_ref  : (rows, C)
    """
    nk, rows, cin = corr_ref.shape
    mid = w1_ref.shape[1]

    # conv1x1_in + BN1 + ReLU: all 25 offsets and all rows in one MXU matmul.
    corr = corr_ref[...].reshape(nk * rows, cin)              # leading-dim merge
    z1 = jnp.dot(corr, w1_ref[...], preferred_element_type=jnp.float32)
    z1 = jnp.maximum(z1 + b1_ref[...], 0.0)                   # (25*rows, 64)

    # Conv3d(1,5,5): contraction over the 25 offsets, f32 accumulation.
    acc = jnp.zeros((rows, mid), dtype=jnp.float32)
    for j in range(nk):                                       # static, contiguous slices
        acc = acc + jnp.dot(z1[j * rows:(j + 1) * rows, :], wc_ref[j],
                            preferred_element_type=jnp.float32)

    z2 = jnp.maximum(acc + b3_ref[...], 0.0)                  # BN3 bias + ReLU
    z3 = jnp.dot(z2, wout_ref[...],
                 preferred_element_type=jnp.float32) + b2_ref[...]  # conv1x1_out + BN2
    out_ref[...] = jnp.maximum(z3 + org_ref[...], 0.0)        # residual + ReLU


def _pick_batch_block(b, max_bb=8):
    for bb in range(min(b, max_bb), 0, -1):
        if b % bb == 0:
            return bb
    return 1


def renet_pallas(x_nchw, params, *, batch_block=None):
    b, c, h, w = x_nchw.shape
    hw = h * w
    win_t, s1, b1, wc_r, s3, b3, wout_t, s2, b2 = params

    # Fold eval-mode BN scales into the adjacent weights (biases stay separate).
    w1f = (win_t * s1).astype(jnp.float32)        # (C, 64)
    wcf = (wc_r * s3).astype(jnp.float32)         # (25, 64, 64), scaled along k_out
    woutf = (wout_t * s2).astype(jnp.float32)     # (64, C)

    # Preprocessing: ReLU -> p=3 normalize -> zero-pad -> 5x5 unfold -> * center.
    x_nhwc = jnp.transpose(x_nchw, (0, 2, 3, 1)).astype(jnp.float32)   # (B,H,W,C)
    xr = jnp.maximum(x_nhwc, 0.0)
    norm = jnp.sum(xr ** 3, axis=-1, keepdims=True) ** (1.0 / 3.0)
    xn = xr / jnp.maximum(norm, NORM_EPS)
    padded = jnp.pad(xn, ((0, 0), (PAD, PAD), (PAD, PAD), (0, 0)))
    shifts = jnp.stack([padded[:, u:u + h, v:v + w, :]
                        for u in range(KSIZE) for v in range(KSIZE)], axis=0)
    corr = (shifts * xn[None]).reshape(NK, b * hw, c)          # (25, B*HW, C)
    org = x_nhwc.reshape(b * hw, c)                            # residual branch

    bb = batch_block if batch_block is not None else _pick_batch_block(b)
    assert b % bb == 0, "batch_block must divide the batch size"
    rows = bb * hw

    def full_spec(shape):
        return pl.BlockSpec(shape, lambda i: (0,) * len(shape))

    out = pl.pallas_call(
        _scr_kernel,
        out_shape=jax.ShapeDtypeStruct((b * hw, c), jnp.float32),
        grid=(b // bb,),
        in_specs=[
            pl.BlockSpec((NK, rows, c), lambda i: (0, i, 0)),   # corr slab
            pl.BlockSpec((rows, c), lambda i: (i, 0)),          # residual
            full_spec(w1f.shape), full_spec(b1.shape),
            full_spec(wcf.shape), full_spec(b3.shape),
            full_spec(woutf.shape), full_spec(b2.shape),
        ],
        out_specs=pl.BlockSpec((rows, c), lambda i: (i, 0)),
        compiler_params=pltpu.CompilerParams(
            dimension_semantics=("parallel",)),                 # v7x megacore sharding
    )(corr, org, w1f, b1, wcf, b3, woutf, b2)

    return jnp.transpose(out.reshape(b, h, w, c), (0, 3, 1, 2))


def renet_reference(x, params):
    """Pure-JAX reference following the PyTorch forward semantics (NCHW)."""
    win_t, s1, b1, wc_r, s3, b3, wout_t, s2, b2 = params
    bsz, c, h, w = x.shape
    xr = jnp.maximum(x, 0.0)
    norm = jnp.sum(jnp.abs(xr) ** 3, axis=1, keepdims=True) ** (1.0 / 3.0)
    xn = xr / jnp.maximum(norm, NORM_EPS)
    padded = jnp.pad(xn, ((0, 0), (0, 0), (PAD, PAD), (PAD, PAD)))
    patches = jnp.stack(
        [padded[:, :, u:u + h, v:v + w] for u in range(KSIZE) for v in range(KSIZE)],
        axis=2)                                             # (b, c, 25, h, w)
    corr = patches * xn[:, :, None, :, :]
    corr = jnp.transpose(corr, (0, 3, 4, 2, 1)).reshape(bsz, h * w, KSIZE * KSIZE, c)
    z1 = jnp.einsum('bsjc,ck->bsjk', corr, win_t)
    z1 = jnp.maximum(z1 * s1[0] + b1[0], 0.0)               # BN1 + ReLU
    z2 = jnp.einsum('bsjk,jkm->bsm', z1, wc_r)              # Conv3d (1,5,5)
    z2 = jnp.maximum(z2 * s3[0] + b3[0], 0.0)               # BN3d + ReLU
    z3 = jnp.einsum('bsm,mc->bsc', z2, wout_t)
    z3 = z3 * s2[0] + b2[0]                                 # BN2
    org = jnp.transpose(x, (0, 2, 3, 1)).reshape(bsz, h * w, c)
    out = jnp.maximum(z3 + org, 0.0)
    return jnp.transpose(out.reshape(bsz, h, w, c), (0, 3, 1, 2))


def make_params(key, channel):
    """Deterministic synthetic parameters (eval-mode BatchNorm folded to scale/bias)."""
    ks = jax.random.split(key, 16)

    def bn_fold(kg, kb, km, kv, n):
        gamma = jax.random.uniform(kg, (n,), minval=0.5, maxval=1.5)
        beta = jax.random.normal(kb, (n,)) * 0.1
        mean = jax.random.normal(km, (n,)) * 0.1
        var = jax.random.uniform(kv, (n,), minval=0.5, maxval=1.5)
        scale = gamma / jnp.sqrt(var + BN_EPS)
        bias = beta - mean * scale
        return scale.reshape(1, n).astype(jnp.float32), bias.reshape(1, n).astype(jnp.float32)

    w_in = jax.random.normal(ks[0], (MID, channel)) * 0.1           # Conv2d(ch->64, 1x1)
    s1, b1 = bn_fold(ks[1], ks[2], ks[3], ks[4], MID)               # BatchNorm2d(64)
    w_c = jax.random.normal(ks[5], (MID, MID, 1, KSIZE, KSIZE)) * 0.05  # Conv3d(64->64,(1,5,5))
    s3, b3 = bn_fold(ks[6], ks[7], ks[8], ks[9], MID)               # BatchNorm3d(64)
    w_out = jax.random.normal(ks[10], (channel, MID)) * 0.1         # Conv2d(64->ch, 1x1)
    s2, b2 = bn_fold(ks[11], ks[12], ks[13], ks[14], channel)       # BatchNorm2d(ch)

    win_t = w_in.T.astype(jnp.float32)                              # (c, 64)
    # wc_r[u*5+v, k_in, k_out] = w_c[k_out, k_in, 0, u, v]
    wc_r = jnp.transpose(w_c[:, :, 0, :, :], (2, 3, 1, 0)).reshape(
        KSIZE * KSIZE, MID, MID).astype(jnp.float32)
    wout_t = w_out.T.astype(jnp.float32)                            # (64, c)
    return (win_t, s1, b1, wc_r, s3, b3, wout_t, s2, b2)


if __name__ == "__main__":
    key = jax.random.PRNGKey(0)
    k_x, k_p = jax.random.split(key)

    B, C, H, W = 2, 32, 8, 8
    x = jax.random.normal(k_x, (B, C, H, W), dtype=jnp.float32)
    params = make_params(k_p, C)

    out = jax.block_until_ready(jax.jit(renet_pallas)(x, params))
    ref = jax.block_until_ready(renet_reference(x, params))

    np.testing.assert_allclose(np.asarray(out), np.asarray(ref), rtol=1e-4, atol=1e-4)
    print("KERNEL_OK")
</pallas_src>

<mosaic_0001>
module attributes {stable_mosaic.version = 11 : i64} {
  func.func @_scr_kernel(%arg0: i32, %arg1: memref<25x128x32xf32, #tpu.memory_space<vmem>>, %arg2: memref<128x32xf32, #tpu.memory_space<vmem>>, %arg3: memref<32x64xf32, #tpu.memory_space<vmem>>, %arg4: memref<1x64xf32, #tpu.memory_space<vmem>>, %arg5: memref<25x64x64xf32, #tpu.memory_space<vmem>>, %arg6: memref<1x64xf32, #tpu.memory_space<vmem>>, %arg7: memref<64x32xf32, #tpu.memory_space<vmem>>, %arg8: memref<1x32xf32, #tpu.memory_space<vmem>>, %arg9: memref<128x32xf32, #tpu.memory_space<vmem>>) attributes {dimension_semantics = [#tpu.dimension_semantics<parallel>], iteration_bounds = array<i64: 1>, scalar_prefetch = 0 : i64, scratch_operands = 0 : i64, tpu.core_type = #tpu.core_type<tc>, window_params = [{transform_indices = @transform_0, window_bounds = array<i64: 25, 128, 32>}, {transform_indices = @transform_1, window_bounds = array<i64: 128, 32>}, {pipeline_mode = #tpu.pipeline_mode<synchronous>, transform_indices = @transform_2, window_bounds = array<i64: 32, 64>}, {pipeline_mode = #tpu.pipeline_mode<synchronous>, transform_indices = @transform_3, window_bounds = array<i64: 1, 64>}, {pipeline_mode = #tpu.pipeline_mode<synchronous>, transform_indices = @transform_4, window_bounds = array<i64: 25, 64, 64>}, {pipeline_mode = #tpu.pipeline_mode<synchronous>, transform_indices = @transform_5, window_bounds = array<i64: 1, 64>}, {pipeline_mode = #tpu.pipeline_mode<synchronous>, transform_indices = @transform_6, window_bounds = array<i64: 64, 32>}, {pipeline_mode = #tpu.pipeline_mode<synchronous>, transform_indices = @transform_7, window_bounds = array<i64: 1, 32>}, {transform_indices = @transform_8, window_bounds = array<i64: 128, 32>}]} {
    %c0 = arith.constant 0 : index
    %c0_0 = arith.constant 0 : index
    %c0_1 = arith.constant 0 : index
    %0 = vector.load %arg1[%c0, %c0_0, %c0_1] : memref<25x128x32xf32, #tpu.memory_space<vmem>>, vector<25x128x32xf32>
    %1 = vector.shape_cast %0 : vector<25x128x32xf32> to vector<3200x32xf32>
    %c0_2 = arith.constant 0 : index
    %c0_3 = arith.constant 0 : index
    %2 = vector.load %arg3[%c0_2, %c0_3] : memref<32x64xf32, #tpu.memory_space<vmem>>, vector<32x64xf32>
    %cst = arith.constant dense<0.000000e+00> : vector<3200x64xf32>
    %3 = tpu.matmul %1, %2, %cst {dimension_numbers = #tpu.dot_dimension_numbers<[1], [0], [0], [1], [0, 0, 1, 1], [], []>} : vector<3200x32xf32>, vector<32x64xf32>, vector<3200x64xf32> -> vector<3200x64xf32>
    %c0_4 = arith.constant 0 : index
    %c0_5 = arith.constant 0 : index
    %4 = vector.load %arg4[%c0_4, %c0_5] : memref<1x64xf32, #tpu.memory_space<vmem>>, vector<1x64xf32>
    %5 = vector.broadcast %4 : vector<1x64xf32> to vector<3200x64xf32>
    %6 = arith.addf %3, %5 : vector<3200x64xf32>
    %cst_6 = arith.constant 0.000000e+00 : f32
    %7 = vector.broadcast %cst_6 : f32 to vector<3200x64xf32>
    %8 = arith.maximumf %6, %7 : vector<3200x64xf32>
    %cst_7 = arith.constant 0.000000e+00 : f32
    %9 = vector.broadcast %cst_7 : f32 to vector<128x64xf32>
    %10 = vector.extract_strided_slice %8 {offsets = [0, 0], sizes = [128, 64], strides = [1, 1]} : vector<3200x64xf32> to vector<128x64xf32>
    %c0_8 = arith.constant 0 : index
    %c0_9 = arith.constant 0 : index
    %c0_10 = arith.constant 0 : index
    %11 = vector.load %arg5[%c0_8, %c0_9, %c0_10] : memref<25x64x64xf32, #tpu.memory_space<vmem>>, vector<1x64x64xf32>
    %12 = vector.shape_cast %11 : vector<1x64x64xf32> to vector<64x64xf32>
    %cst_11 = arith.constant dense<0.000000e+00> : vector<128x64xf32>
    %13 = tpu.matmul %10, %12, %cst_11 {dimension_numbers = #tpu.dot_dimension_numbers<[1], [0], [0], [1], [0, 0, 1, 1], [], []>} : vector<128x64xf32>, vector<64x64xf32>, vector<128x64xf32> -> vector<128x64xf32>
    %14 = arith.addf %9, %13 : vector<128x64xf32>
    %15 = vector.extract_strided_slice %8 {offsets = [128, 0], sizes = [128, 64], strides = [1, 1]} : vector<3200x64xf32> to vector<128x64xf32>
    %c1 = arith.constant 1 : index
    %c0_12 = arith.constant 0 : index
    %c0_13 = arith.constant 0 : index
    %16 = vector.load %arg5[%c1, %c0_12, %c0_13] : memref<25x64x64xf32, #tpu.memory_space<vmem>>, vector<1x64x64xf32>
    %17 = vector.shape_cast %16 : vector<1x64x64xf32> to vector<64x64xf32>
    %cst_14 = arith.constant dense<0.000000e+00> : vector<128x64xf32>
    %18 = tpu.matmul %15, %17, %cst_14 {dimension_numbers = #tpu.dot_dimension_numbers<[1], [0], [0], [1], [0, 0, 1, 1], [], []>} : vector<128x64xf32>, vector<64x64xf32>, vector<128x64xf32> -> vector<128x64xf32>
    %19 = arith.addf %14, %18 : vector<128x64xf32>
    %20 = vector.extract_strided_slice %8 {offsets = [256, 0], sizes = [128, 64], strides = [1, 1]} : vector<3200x64xf32> to vector<128x64xf32>
    %c2 = arith.constant 2 : index
    %c0_15 = arith.constant 0 : index
    %c0_16 = arith.constant 0 : index
    %21 = vector.load %arg5[%c2, %c0_15, %c0_16] : memref<25x64x64xf32, #tpu.memory_space<vmem>>, vector<1x64x64xf32>
    %22 = vector.shape_cast %21 : vector<1x64x64xf32> to vector<64x64xf32>
    %cst_17 = arith.constant dense<0.000000e+00> : vector<128x64xf32>
    %23 = tpu.matmul %20, %22, %cst_17 {dimension_numbers = #tpu.dot_dimension_numbers<[1], [0], [0], [1], [0, 0, 1, 1], [], []>} : vector<128x64xf32>, vector<64x64xf32>, vector<128x64xf32> -> vector<128x64xf32>
    %24 = arith.addf %19, %23 : vector<128x64xf32>
    %25 = vector.extract_strided_slice %8 {offsets = [384, 0], sizes = [128, 64], strides = [1, 1]} : vector<3200x64xf32> to vector<128x64xf32>
    %c3 = arith.constant 3 : index
    %c0_18 = arith.constant 0 : index
    %c0_19 = arith.constant 0 : index
    %26 = vector.load %arg5[%c3, %c0_18, %c0_19] : memref<25x64x64xf32, #tpu.memory_space<vmem>>, vector<1x64x64xf32>
    %27 = vector.shape_cast %26 : vector<1x64x64xf32> to vector<64x64xf32>
    %cst_20 = arith.constant dense<0.000000e+00> : vector<128x64xf32>
    %28 = tpu.matmul %25, %27, %cst_20 {dimension_numbers = #tpu.dot_dimension_numbers<[1], [0], [0], [1], [0, 0, 1, 1], [], []>} : vector<128x64xf32>, vector<64x64xf32>, vector<128x64xf32> -> vector<128x64xf32>
    %29 = arith.addf %24, %28 : vector<128x64xf32>
    %30 = vector.extract_strided_slice %8 {offsets = [512, 0], sizes = [128, 64], strides = [1, 1]} : vector<3200x64xf32> to vector<128x64xf32>
    %c4 = arith.constant 4 : index
    %c0_21 = arith.constant 0 : index
    %c0_22 = arith.constant 0 : index
    %31 = vector.load %arg5[%c4, %c0_21, %c0_22] : memref<25x64x64xf32, #tpu.memory_space<vmem>>, vector<1x64x64xf32>
    %32 = vector.shape_cast %31 : vector<1x64x64xf32> to vector<64x64xf32>
    %cst_23 = arith.constant dense<0.000000e+00> : vector<128x64xf32>
    %33 = tpu.matmul %30, %32, %cst_23 {dimension_numbers = #tpu.dot_dimension_numbers<[1], [0], [0], [1], [0, 0, 1, 1], [], []>} : vector<128x64xf32>, vector<64x64xf32>, vector<128x64xf32> -> vector<128x64xf32>
    %34 = arith.addf %29, %33 : vector<128x64xf32>
    %35 = vector.extract_strided_slice %8 {offsets = [640, 0], sizes = [128, 64], strides = [1, 1]} : vector<3200x64xf32> to vector<128x64xf32>
    %c5 = arith.constant 5 : index
    %c0_24 = arith.constant 0 : index
    %c0_25 = arith.constant 0 : index
    %36 = vector.load %arg5[%c5, %c0_24, %c0_25] : memref<25x64x64xf32, #tpu.memory_space<vmem>>, vector<1x64x64xf32>
    %37 = vector.shape_cast %36 : vector<1x64x64xf32> to vector<64x64xf32>
    %cst_26 = arith.constant dense<0.000000e+00> : vector<128x64xf32>
    %38 = tpu.matmul %35, %37, %cst_26 {dimension_numbers = #tpu.dot_dimension_numbers<[1], [0], [0], [1], [0, 0, 1, 1], [], []>} : vector<128x64xf32>, vector<64x64xf32>, vector<128x64xf32> -> vector<128x64xf32>
    %39 = arith.addf %34, %38 : vector<128x64xf32>
    %40 = vector.extract_strided_slice %8 {offsets = [768, 0], sizes = [128, 64], strides = [1, 1]} : vector<3200x64xf32> to vector<128x64xf32>
    %c6 = arith.constant 6 : index
    %c0_27 = arith.constant 0 : index
    %c0_28 = arith.constant 0 : index
    %41 = vector.load %arg5[%c6, %c0_27, %c0_28] : memref<25x64x64xf32, #tpu.memory_space<vmem>>, vector<1x64x64xf32>
    %42 = vector.shape_cast %41 : vector<1x64x64xf32> to vector<64x64xf32>
    %cst_29 = arith.constant dense<0.000000e+00> : vector<128x64xf32>
    %43 = tpu.matmul %40, %42, %cst_29 {dimension_numbers = #tpu.dot_dimension_numbers<[1], [0], [0], [1], [0, 0, 1, 1], [], []>} : vector<128x64xf32>, vector<64x64xf32>, vector<128x64xf32> -> vector<128x64xf32>
    %44 = arith.addf %39, %43 : vector<128x64xf32>
    %45 = vector.extract_strided_slice %8 {offsets = [896, 0], sizes = [128, 64], strides = [1, 1]} : vector<3200x64xf32> to vector<128x64xf32>
    %c7 = arith.constant 7 : index
    %c0_30 = arith.constant 0 : index
    %c0_31 = arith.constant 0 : index
    %46 = vector.load %arg5[%c7, %c0_30, %c0_31] : memref<25x64x64xf32, #tpu.memory_space<vmem>>, vector<1x64x64xf32>
    %47 = vector.shape_cast %46 : vector<1x64x64xf32> to vector<64x64xf32>
    %cst_32 = arith.constant dense<0.000000e+00> : vector<128x64xf32>
    %48 = tpu.matmul %45, %47, %cst_32 {dimension_numbers = #tpu.dot_dimension_numbers<[1], [0], [0], [1], [0, 0, 1, 1], [], []>} : vector<128x64xf32>, vector<64x64xf32>, vector<128x64xf32> -> vector<128x64xf32>
    %49 = arith.addf %44, %48 : vector<128x64xf32>
    %50 = vector.extract_strided_slice %8 {offsets = [1024, 0], sizes = [128, 64], strides = [1, 1]} : vector<3200x64xf32> to vector<128x64xf32>
    %c8 = arith.constant 8 : index
    %c0_33 = arith.constant 0 : index
    %c0_34 = arith.constant 0 : index
    %51 = vector.load %arg5[%c8, %c0_33, %c0_34] : memref<25x64x64xf32, #tpu.memory_space<vmem>>, vector<1x64x64xf32>
    %52 = vector.shape_cast %51 : vector<1x64x64xf32> to vector<64x64xf32>
    %cst_35 = arith.constant dense<0.000000e+00> : vector<128x64xf32>
    %53 = tpu.matmul %50, %52, %cst_35 {dimension_numbers = #tpu.dot_dimension_numbers<[1], [0], [0], [1], [0, 0, 1, 1], [], []>} : vector<128x64xf32>, vector<64x64xf32>, vector<128x64xf32> -> vector<128x64xf32>
    %54 = arith.addf %49, %53 : vector<128x64xf32>
    %55 = vector.extract_strided_slice %8 {offsets = [1152, 0], sizes = [128, 64], strides = [1, 1]} : vector<3200x64xf32> to vector<128x64xf32>
    %c9 = arith.constant 9 : index
    %c0_36 = arith.constant 0 : index
    %c0_37 = arith.constant 0 : index
    %56 = vector.load %arg5[%c9, %c0_36, %c0_37] : memref<25x64x64xf32, #tpu.memory_space<vmem>>, vector<1x64x64xf32>
    %57 = vector.shape_cast %56 : vector<1x64x64xf32> to vector<64x64xf32>
    %cst_38 = arith.constant dense<0.000000e+00> : vector<128x64xf32>
    %58 = tpu.matmul %55, %57, %cst_38 {dimension_numbers = #tpu.dot_dimension_numbers<[1], [0], [0], [1], [0, 0, 1, 1], [], []>} : vector<128x64xf32>, vector<64x64xf32>, vector<128x64xf32> -> vector<128x64xf32>
    %59 = arith.addf %54, %58 : vector<128x64xf32>
    %60 = vector.extract_strided_slice %8 {offsets = [1280, 0], sizes = [128, 64], strides = [1, 1]} : vector<3200x64xf32> to vector<128x64xf32>
    %c10 = arith.constant 10 : index
    %c0_39 = arith.constant 0 : index
    %c0_40 = arith.constant 0 : index
    %61 = vector.load %arg5[%c10, %c0_39, %c0_40] : memref<25x64x64xf32, #tpu.memory_space<vmem>>, vector<1x64x64xf32>
    %62 = vector.shape_cast %61 : vector<1x64x64xf32> to vector<64x64xf32>
    %cst_41 = arith.constant dense<0.000000e+00> : vector<128x64xf32>
    %63 = tpu.matmul %60, %62, %cst_41 {dimension_numbers = #tpu.dot_dimension_numbers<[1], [0], [0], [1], [0, 0, 1, 1], [], []>} : vector<128x64xf32>, vector<64x64xf32>, vector<128x64xf32> -> vector<128x64xf32>
    %64 = arith.addf %59, %63 : vector<128x64xf32>
    %65 = vector.extract_strided_slice %8 {offsets = [1408, 0], sizes = [128, 64], strides = [1, 1]} : vector<3200x64xf32> to vector<128x64xf32>
    %c11 = arith.constant 11 : index
    %c0_42 = arith.constant 0 : index
    %c0_43 = arith.constant 0 : index
    %66 = vector.load %arg5[%c11, %c0_42, %c0_43] : memref<25x64x64xf32, #tpu.memory_space<vmem>>, vector<1x64x64xf32>
    %67 = vector.shape_cast %66 : vector<1x64x64xf32> to vector<64x64xf32>
    %cst_44 = arith.constant dense<0.000000e+00> : vector<128x64xf32>
    %68 = tpu.matmul %65, %67, %cst_44 {dimension_numbers = #tpu.dot_dimension_numbers<[1], [0], [0], [1], [0, 0, 1, 1], [], []>} : vector<128x64xf32>, vector<64x64xf32>, vector<128x64xf32> -> vector<128x64xf32>
    %69 = arith.addf %64, %68 : vector<128x64xf32>
    %70 = vector.extract_strided_slice %8 {offsets = [1536, 0], sizes = [128, 64], strides = [1, 1]} : vector<3200x64xf32> to vector<128x64xf32>
    %c12 = arith.constant 12 : index
    %c0_45 = arith.constant 0 : index
    %c0_46 = arith.constant 0 : index
    %71 = vector.load %arg5[%c12, %c0_45, %c0_46] : memref<25x64x64xf32, #tpu.memory_space<vmem>>, vector<1x64x64xf32>
    %72 = vector.shape_cast %71 : vector<1x64x64xf32> to vector<64x64xf32>
    %cst_47 = arith.constant dense<0.000000e+00> : vector<128x64xf32>
    %73 = tpu.matmul %70, %72, %cst_47 {dimension_numbers = #tpu.dot_dimension_numbers<[1], [0], [0], [1], [0, 0, 1, 1], [], []>} : vector<128x64xf32>, vector<64x64xf32>, vector<128x64xf32> -> vector<128x64xf32>
    %74 = arith.addf %69, %73 : vector<128x64xf32>
    %75 = vector.extract_strided_slice %8 {offsets = [1664, 0], sizes = [128, 64], strides = [1, 1]} : vector<3200x64xf32> to vector<128x64xf32>
    %c13 = arith.constant 13 : index
    %c0_48 = arith.constant 0 : index
    %c0_49 = arith.constant 0 : index
    %76 = vector.load %arg5[%c13, %c0_48, %c0_49] : memref<25x64x64xf32, #tpu.memory_space<vmem>>, vector<1x64x64xf32>
    %77 = vector.shape_cast %76 : vector<1x64x64xf32> to vector<64x64xf32>
    %cst_50 = arith.constant dense<0.000000e+00> : vector<128x64xf32>
    %78 = tpu.matmul %75, %77, %cst_50 {dimension_numbers = #tpu.dot_dimension_numbers<[1], [0], [0], [1], [0, 0, 1, 1], [], []>} : vector<128x64xf32>, vector<64x64xf32>, vector<128x64xf32> -> vector<128x64xf32>
    %79 = arith.addf %74, %78 : vector<128x64xf32>
    %80 = vector.extract_strided_slice %8 {offsets = [1792, 0], sizes = [128, 64], strides = [1, 1]} : vector<3200x64xf32> to vector<128x64xf32>
    %c14 = arith.constant 14 : index
    %c0_51 = arith.constant 0 : index
    %c0_52 = arith.constant 0 : index
    %81 = vector.load %arg5[%c14, %c0_51, %c0_52] : memref<25x64x64xf32, #tpu.memory_space<vmem>>, vector<1x64x64xf32>
    %82 = vector.shape_cast %81 : vector<1x64x64xf32> to vector<64x64xf32>
    %cst_53 = arith.constant dense<0.000000e+00> : vector<128x64xf32>
    %83 = tpu.matmul %80, %82, %cst_53 {dimension_numbers = #tpu.dot_dimension_numbers<[1], [0], [0], [1], [0, 0, 1, 1], [], []>} : vector<128x64xf32>, vector<64x64xf32>, vector<128x64xf32> -> vector<128x64xf32>
    %84 = arith.addf %79, %83 : vector<128x64xf32>
    %85 = vector.extract_strided_slice %8 {offsets = [1920, 0], sizes = [128, 64], strides = [1, 1]} : vector<3200x64xf32> to vector<128x64xf32>
    %c15 = arith.constant 15 : index
    %c0_54 = arith.constant 0 : index
    %c0_55 = arith.constant 0 : index
    %86 = vector.load %arg5[%c15, %c0_54, %c0_55] : memref<25x64x64xf32, #tpu.memory_space<vmem>>, vector<1x64x64xf32>
    %87 = vector.shape_cast %86 : vector<1x64x64xf32> to vector<64x64xf32>
    %cst_56 = arith.constant dense<0.000000e+00> : vector<128x64xf32>
    %88 = tpu.matmul %85, %87, %cst_56 {dimension_numbers = #tpu.dot_dimension_numbers<[1], [0], [0], [1], [0, 0, 1, 1], [], []>} : vector<128x64xf32>, vector<64x64xf32>, vector<128x64xf32> -> vector<128x64xf32>
    %89 = arith.addf %84, %88 : vector<128x64xf32>
    %90 = vector.extract_strided_slice %8 {offsets = [2048, 0], sizes = [128, 64], strides = [1, 1]} : vector<3200x64xf32> to vector<128x64xf32>
    %c16 = arith.constant 16 : index
    %c0_57 = arith.constant 0 : index
    %c0_58 = arith.constant 0 : index
    %91 = vector.load %arg5[%c16, %c0_57, %c0_58] : memref<25x64x64xf32, #tpu.memory_space<vmem>>, vector<1x64x64xf32>
    %92 = vector.shape_cast %91 : vector<1x64x64xf32> to vector<64x64xf32>
    %cst_59 = arith.constant dense<0.000000e+00> : vector<128x64xf32>
    %93 = tpu.matmul %90, %92, %cst_59 {dimension_numbers = #tpu.dot_dimension_numbers<[1], [0], [0], [1], [0, 0, 1, 1], [], []>} : vector<128x64xf32>, vector<64x64xf32>, vector<128x64xf32> -> vector<128x64xf32>
    %94 = arith.addf %89, %93 : vector<128x64xf32>
    %95 = vector.extract_strided_slice %8 {offsets = [2176, 0], sizes = [128, 64], strides = [1, 1]} : vector<3200x64xf32> to vector<128x64xf32>
    %c17 = arith.constant 17 : index
    %c0_60 = arith.constant 0 : index
    %c0_61 = arith.constant 0 : index
    %96 = vector.load %arg5[%c17, %c0_60, %c0_61] : memref<25x64x64xf32, #tpu.memory_space<vmem>>, vector<1x64x64xf32>
    %97 = vector.shape_cast %96 : vector<1x64x64xf32> to vector<64x64xf32>
    %cst_62 = arith.constant dense<0.000000e+00> : vector<128x64xf32>
    %98 = tpu.matmul %95, %97, %cst_62 {dimension_numbers = #tpu.dot_dimension_numbers<[1], [0], [0], [1], [0, 0, 1, 1], [], []>} : vector<128x64xf32>, vector<64x64xf32>, vector<128x64xf32> -> vector<128x64xf32>
    %99 = arith.addf %94, %98 : vector<128x64xf32>
    %100 = vector.extract_strided_slice %8 {offsets = [2304, 0], sizes = [128, 64], strides = [1, 1]} : vector<3200x64xf32> to vector<128x64xf32>
    %c18 = arith.constant 18 : index
    %c0_63 = arith.constant 0 : index
    %c0_64 = arith.constant 0 : index
    %101 = vector.load %arg5[%c18, %c0_63, %c0_64] : memref<25x64x64xf32, #tpu.memory_space<vmem>>, vector<1x64x64xf32>
    %102 = vector.shape_cast %101 : vector<1x64x64xf32> to vector<64x64xf32>
    %cst_65 = arith.constant dense<0.000000e+00> : vector<128x64xf32>
    %103 = tpu.matmul %100, %102, %cst_65 {dimension_numbers = #tpu.dot_dimension_numbers<[1], [0], [0], [1], [0, 0, 1, 1], [], []>} : vector<128x64xf32>, vector<64x64xf32>, vector<128x64xf32> -> vector<128x64xf32>
    %104 = arith.addf %99, %103 : vector<128x64xf32>
    %105 = vector.extract_strided_slice %8 {offsets = [2432, 0], sizes = [128, 64], strides = [1, 1]} : vector<3200x64xf32> to vector<128x64xf32>
    %c19 = arith.constant 19 : index
    %c0_66 = arith.constant 0 : index
    %c0_67 = arith.constant 0 : index
    %106 = vector.load %arg5[%c19, %c0_66, %c0_67] : memref<25x64x64xf32, #tpu.memory_space<vmem>>, vector<1x64x64xf32>
    %107 = vector.shape_cast %106 : vector<1x64x64xf32> to vector<64x64xf32>
    %cst_68 = arith.constant dense<0.000000e+00> : vector<128x64xf32>
    %108 = tpu.matmul %105, %107, %cst_68 {dimension_numbers = #tpu.dot_dimension_numbers<[1], [0], [0], [1], [0, 0, 1, 1], [], []>} : vector<128x64xf32>, vector<64x64xf32>, vector<128x64xf32> -> vector<128x64xf32>
    %109 = arith.addf %104, %108 : vector<128x64xf32>
    %110 = vector.extract_strided_slice %8 {offsets = [2560, 0], sizes = [128, 64], strides = [1, 1]} : vector<3200x64xf32> to vector<128x64xf32>
    %c20 = arith.constant 20 : index
    %c0_69 = arith.constant 0 : index
    %c0_70 = arith.constant 0 : index
    %111 = vector.load %arg5[%c20, %c0_69, %c0_70] : memref<25x64x64xf32, #tpu.memory_space<vmem>>, vector<1x64x64xf32>
    %112 = vector.shape_cast %111 : vector<1x64x64xf32> to vector<64x64xf32>
    %cst_71 = arith.constant dense<0.000000e+00> : vector<128x64xf32>
    %113 = tpu.matmul %110, %112, %cst_71 {dimension_numbers = #tpu.dot_dimension_numbers<[1], [0], [0], [1], [0, 0, 1, 1], [], []>} : vector<128x64xf32>, vector<64x64xf32>, vector<128x64xf32> -> vector<128x64xf32>
    %114 = arith.addf %109, %113 : vector<128x64xf32>
    %115 = vector.extract_strided_slice %8 {offsets = [2688, 0], sizes = [128, 64], strides = [1, 1]} : vector<3200x64xf32> to vector<128x64xf32>
    %c21 = arith.constant 21 : index
    %c0_72 = arith.constant 0 : index
    %c0_73 = arith.constant 0 : index
    %116 = vector.load %arg5[%c21, %c0_72, %c0_73] : memref<25x64x64xf32, #tpu.memory_space<vmem>>, vector<1x64x64xf32>
    %117 = vector.shape_cast %116 : vector<1x64x64xf32> to vector<64x64xf32>
    %cst_74 = arith.constant dense<0.000000e+00> : vector<128x64xf32>
    %118 = tpu.matmul %115, %117, %cst_74 {dimension_numbers = #tpu.dot_dimension_numbers<[1], [0], [0], [1], [0, 0, 1, 1], [], []>} : vector<128x64xf32>, vector<64x64xf32>, vector<128x64xf32> -> vector<128x64xf32>
    %119 = arith.addf %114, %118 : vector<128x64xf32>
    %120 = vector.extract_strided_slice %8 {offsets = [2816, 0], sizes = [128, 64], strides = [1, 1]} : vector<3200x64xf32> to vector<128x64xf32>
    %c22 = arith.constant 22 : index
    %c0_75 = arith.constant 0 : index
    %c0_76 = arith.constant 0 : index
    %121 = vector.load %arg5[%c22, %c0_75, %c0_76] : memref<25x64x64xf32, #tpu.memory_space<vmem>>, vector<1x64x64xf32>
    %122 = vector.shape_cast %121 : vector<1x64x64xf32> to vector<64x64xf32>
    %cst_77 = arith.constant dense<0.000000e+00> : vector<128x64xf32>
    %123 = tpu.matmul %120, %122, %cst_77 {dimension_numbers = #tpu.dot_dimension_numbers<[1], [0], [0], [1], [0, 0, 1, 1], [], []>} : vector<128x64xf32>, vector<64x64xf32>, vector<128x64xf32> -> vector<128x64xf32>
    %124 = arith.addf %119, %123 : vector<128x64xf32>
    %125 = vector.extract_strided_slice %8 {offsets = [2944, 0], sizes = [128, 64], strides = [1, 1]} : vector<3200x64xf32> to vector<128x64xf32>
    %c23 = arith.constant 23 : index
    %c0_78 = arith.constant 0 : index
    %c0_79 = arith.constant 0 : index
    %126 = vector.load %arg5[%c23, %c0_78, %c0_79] : memref<25x64x64xf32, #tpu.memory_space<vmem>>, vector<1x64x64xf32>
    %127 = vector.shape_cast %126 : vector<1x64x64xf32> to vector<64x64xf32>
    %cst_80 = arith.constant dense<0.000000e+00> : vector<128x64xf32>
    %128 = tpu.matmul %125, %127, %cst_80 {dimension_numbers = #tpu.dot_dimension_numbers<[1], [0], [0], [1], [0, 0, 1, 1], [], []>} : vector<128x64xf32>, vector<64x64xf32>, vector<128x64xf32> -> vector<128x64xf32>
    %129 = arith.addf %124, %128 : vector<128x64xf32>
    %130 = vector.extract_strided_slice %8 {offsets = [3072, 0], sizes = [128, 64], strides = [1, 1]} : vector<3200x64xf32> to vector<128x64xf32>
    %c24 = arith.constant 24 : index
    %c0_81 = arith.constant 0 : index
    %c0_82 = arith.constant 0 : index
    %131 = vector.load %arg5[%c24, %c0_81, %c0_82] : memref<25x64x64xf32, #tpu.memory_space<vmem>>, vector<1x64x64xf32>
    %132 = vector.shape_cast %131 : vector<1x64x64xf32> to vector<64x64xf32>
    %cst_83 = arith.constant dense<0.000000e+00> : vector<128x64xf32>
    %133 = tpu.matmul %130, %132, %cst_83 {dimension_numbers = #tpu.dot_dimension_numbers<[1], [0], [0], [1], [0, 0, 1, 1], [], []>} : vector<128x64xf32>, vector<64x64xf32>, vector<128x64xf32> -> vector<128x64xf32>
    %134 = arith.addf %129, %133 : vector<128x64xf32>
    %c0_84 = arith.constant 0 : index
    %c0_85 = arith.constant 0 : index
    %135 = vector.load %arg6[%c0_84, %c0_85] : memref<1x64xf32, #tpu.memory_space<vmem>>, vector<1x64xf32>
    %136 = vector.broadcast %135 : vector<1x64xf32> to vector<128x64xf32>
    %137 = arith.addf %134, %136 : vector<128x64xf32>
    %cst_86 = arith.constant 0.000000e+00 : f32
    %138 = vector.broadcast %cst_86 : f32 to vector<128x64xf32>
    %139 = arith.maximumf %137, %138 : vector<128x64xf32>
    %c0_87 = arith.constant 0 : index
    %c0_88 = arith.constant 0 : index
    %140 = vector.load %arg7[%c0_87, %c0_88] : memref<64x32xf32, #tpu.memory_space<vmem>>, vector<64x32xf32>
    %cst_89 = arith.constant dense<0.000000e+00> : vector<128x32xf32>
    %141 = tpu.matmul %139, %140, %cst_89 {dimension_numbers = #tpu.dot_dimension_numbers<[1], [0], [0], [1], [0, 0, 1, 1], [], []>} : vector<128x64xf32>, vector<64x32xf32>, vector<128x32xf32> -> vector<128x32xf32>
    %c0_90 = arith.constant 0 : index
    %c0_91 = arith.constant 0 : index
    %142 = vector.load %arg8[%c0_90, %c0_91] : memref<1x32xf32, #tpu.memory_space<vmem>>, vector<1x32xf32>
    %143 = vector.broadcast %142 : vector<1x32xf32> to vector<128x32xf32>
    %144 = arith.addf %141, %143 : vector<128x32xf32>
    %c0_92 = arith.constant 0 : index
    %c0_93 = arith.constant 0 : index
    %145 = vector.load %arg2[%c0_92, %c0_93] : memref<128x32xf32, #tpu.memory_space<vmem>>, vector<128x32xf32>
    %146 = arith.addf %144, %145 : vector<128x32xf32>
    %cst_94 = arith.constant 0.000000e+00 : f32
    %147 = vector.broadcast %cst_94 : f32 to vector<128x32xf32>
    %148 = arith.maximumf %146, %147 : vector<128x32xf32>
    %c0_95 = arith.constant 0 : index
    %c0_96 = arith.constant 0 : index
    %149 = vector.load %arg9[%c0_95, %c0_96] : memref<128x32xf32, #tpu.memory_space<vmem>>, vector<128x32xf32>
    tpu.vector_store %arg9[%c0_95, %c0_96], %148 {strides = array<i32>} : memref<128x32xf32, #tpu.memory_space<vmem>>, vector<128x32xf32>,
    return
  }
  func.func @transform_0(%arg0: i32) -> (i32, i32, i32) {
    %c0_i32 = arith.constant 0 : i32
    %c0_i32_0 = arith.constant 0 : i32
    %c0_i32_1 = arith.constant 0 : i32
    return %c0_i32, %arg0, %c0_i32_0 : i32, i32, i32
  }
  func.func @transform_1(%arg0: i32) -> (i32, i32) {
    %c0_i32 = arith.constant 0 : i32
    %c0_i32_0 = arith.constant 0 : i32
    return %arg0, %c0_i32 : i32, i32
  }
  func.func @transform_2(%arg0: i32) -> (i32, i32) {
    %c0_i32 = arith.constant 0 : i32
    %c0_i32_0 = arith.constant 0 : i32
    %c0_i32_1 = arith.constant 0 : i32
    return %c0_i32, %c0_i32_0 : i32, i32
  }
  func.func @transform_3(%arg0: i32) -> (i32, i32) {
    %c0_i32 = arith.constant 0 : i32
    %c0_i32_0 = arith.constant 0 : i32
    %c0_i32_1 = arith.constant 0 : i32
    return %c0_i32, %c0_i32_0 : i32, i32
  }
  func.func @transform_4(%arg0: i32) -> (i32, i32, i32) {
    %c0_i32 = arith.constant 0 : i32
    %c0_i32_0 = arith.constant 0 : i32
    %c0_i32_1 = arith.constant 0 : i32
    %c0_i32_2 = arith.constant 0 : i32
    return %c0_i32, %c0_i32_0, %c0_i32_1 : i32, i32, i32
  }
  func.func @transform_5(%arg0: i32) -> (i32, i32) {
    %c0_i32 = arith.constant 0 : i32
    %c0_i32_0 = arith.constant 0 : i32
    %c0_i32_1 = arith.constant 0 : i32
    return %c0_i32, %c0_i32_0 : i32, i32
  }
  func.func @transform_6(%arg0: i32) -> (i32, i32) {
    %c0_i32 = arith.constant 0 : i32
    %c0_i32_0 = arith.constant 0 : i32
    %c0_i32_1 = arith.constant 0 : i32
    return %c0_i32, %c0_i32_0 : i32, i32
  }
  func.func @transform_7(%arg0: i32) -> (i32, i32) {
    %c0_i32 = arith.constant 0 : i32
    %c0_i32_0 = arith.constant 0 : i32
    %c0_i32_1 = arith.constant 0 : i32
    return %c0_i32, %c0_i32_0 : i32, i32
  }
  func.func @transform_8(%arg0: i32) -> (i32, i32) {
    %c0_i32 = arith.constant 0 : i32
    %c0_i32_0 = arith.constant 0 : i32
    return %arg0, %c0_i32 : i32, i32
  }
}

</mosaic_0001>

<llo_original>
// kernel: renet_pallas.1
$region0: #{renet_pallas.1}
  #allocation0 [shape = 'u32[]', space=smem, size = 0x4, offset = 0x4, fixed_abs, tag = 'smem constant byte address 0x4 - core index']
  #allocation1 [shape = 'u32[144,128]{1,0:T(1,128)}', space=vmem, size = 0x12000, scoped, tag = 'internal scratch']
  %s0 = inlined_call_operand.vmem [shape: f32[25,128,32], index: 0, kind: input, shape index: {}]
  %s1 = inlined_call_operand.vmem [shape: f32[128,32], index: 1, kind: input, shape index: {}]
  %s2 = inlined_call_operand.vmem [shape: f32[32,64], index: 2, kind: input, shape index: {}]
  %s3 = inlined_call_operand.vmem [shape: f32[1,64], index: 3, kind: input, shape index: {}]
  %s4 = inlined_call_operand.vmem [shape: f32[25,64,64], index: 4, kind: input, shape index: {}]
  %s5 = inlined_call_operand.vmem [shape: f32[1,64], index: 5, kind: input, shape index: {}]
  %s6 = inlined_call_operand.vmem [shape: f32[64,32], index: 6, kind: input, shape index: {}]
  %s7 = inlined_call_operand.vmem [shape: f32[1,32], index: 7, kind: input, shape index: {}]
  %s8 = inlined_call_operand.hbm [shape: f32[128,32], index: 8, kind: output, shape index: {}]
  %s9 = sld [smem:[#allocation0]]
  $region42: #{renet_pallas.1} parent=0
    _
  %s11 = ssub.s32 1, %s9
  %s12 = scalar_select 0, %s11, %s9
  $region1: #{renet_pallas.1} parent=0
    #allocation2 [shape = 'u8[65536]{0}', space=vmem, size = 0x10000, scoped, tag = 'output window, operand 0, single buffered']
    #allocation3 [shape = 's32[1]{0}', space=sflag, size = 0x4, scoped, tag = 'scoped memory for renet_pallas.1']
    %13 = vsyncpa [#allocation3], 0
    // Predicated region
    $region2: #{renet_pallas.1} parent=1 // pred_check
      _
    $region3: #{renet_pallas.1} parent=1 // pred_check_branch
      %15 = sbr.rel (0) target = $region5
    $region4: #{renet_pallas.1} parent=1 // pred_region
      _
    $region5: #{renet_pallas.1} parent=1 // pred_fallthru
      _
    // Predicated region
    $region6: #{renet_pallas.1} parent=1 // pred_check
      _
    $region7: #{renet_pallas.1} parent=1 // pred_check_branch
      %17 = sbr.rel (0) target = $region9
    $region8: #{renet_pallas.1} parent=1 // pred_region
      _
    $region9: #{renet_pallas.1} parent=1 // pred_fallthru
      _
    // Predicated region
    $region10: #{renet_pallas.1} parent=1 // pred_check
      _
    $region11: #{renet_pallas.1} parent=1 // pred_check_branch
      %19 = sbr.rel (0) target = $region13
    $region12: #{renet_pallas.1} parent=1 // pred_region
      _
    $region13: #{renet_pallas.1} parent=1 // pred_fallthru
      _
    // Predicated region
    $region14: #{renet_pallas.1} parent=1 // pred_check
      _
    $region15: #{renet_pallas.1} parent=1 // pred_check_branch
      %21 = sbr.rel (0) target = $region17
    $region16: #{renet_pallas.1} parent=1 // pred_region
      _
    $region17: #{renet_pallas.1} parent=1 // pred_fallthru
      _
    // Predicated region
    $region18: #{renet_pallas.1} parent=1 // pred_check
      _
    $region19: #{renet_pallas.1} parent=1 // pred_check_branch
      %23 = sbr.rel (0) target = $region21
    $region20: #{renet_pallas.1} parent=1 // pred_region
      _
    $region21: #{renet_pallas.1} parent=1 // pred_fallthru
      _
    // Predicated region
    $region22: #{renet_pallas.1} parent=1 // pred_check
      _
    $region23: #{renet_pallas.1} parent=1 // pred_check_branch
      %25 = sbr.rel (0) target = $region25
    $region24: #{renet_pallas.1} parent=1 // pred_region
      _
    $region25: #{renet_pallas.1} parent=1 // pred_fallthru
      _
    // Predicated region
    $region26: #{renet_pallas.1} parent=1 // pred_check
      _
    $region27: #{renet_pallas.1} parent=1 // pred_check_branch
      %27 = sbr.rel (0) target = $region29
    $region28: #{renet_pallas.1} parent=1 // pred_region
      _
    $region29: #{renet_pallas.1} parent=1 // pred_fallthru
      _
    // Predicated region
    $region30: #{renet_pallas.1} parent=1 // pred_check
      _
    $region31: #{renet_pallas.1} parent=1 // pred_check_branch
      %29 = sbr.rel (0) target = $region33
    $region32: #{renet_pallas.1} parent=1 // pred_region
      _
    $region33: #{renet_pallas.1} parent=1 // pred_fallthru
      _
    %v30 = vld [vmem:[%s0] sm:$0xff]
    %v31 = vld [vmem:[%s0 + $0x8] sm:$0xff]
    %v32 = vld [vmem:[%s0 + $0x10] sm:$0xff]
    %v33 = vld [vmem:[%s0 + $0x18] sm:$0xff]
    %v34 = vld [vmem:[%s0 + $0x20] sm:$0xff]
    %v35 = vld [vmem:[%s0 + $0x28] sm:$0xff]
    %v36 = vld [vmem:[%s0 + $0x30] sm:$0xff]
    %v37 = vld [vmem:[%s0 + $0x38] sm:$0xff]
    %v38 = vld [vmem:[%s0 + $0x40] sm:$0xff]
    %v39 = vld [vmem:[%s0 + $0x48] sm:$0xff]
    %v40 = vld [vmem:[%s0 + $0x50] sm:$0xff]
    %v41 = vld [vmem:[%s0 + $0x58] sm:$0xff]
    %v42 = vld [vmem:[%s0 + $0x60] sm:$0xff]
    %v43 = vld [vmem:[%s0 + $0x68] sm:$0xff]
    %v44 = vld [vmem:[%s0 + $0x70] sm:$0xff]
    %v45 = vld [vmem:[%s0 + $0x78] sm:$0xff]
    %v46 = vld [vmem:[%s0 + $0x80] sm:$0xff]
    %v47 = vld [vmem:[%s0 + $0x88] sm:$0xff]
    %v48 = vld [vmem:[%s0 + $0x90] sm:$0xff]
    %v49 = vld [vmem:[%s0 + $0x98] sm:$0xff]
    %v50 = vld [vmem:[%s0 + $0xa0] sm:$0xff]
    %v51 = vld [vmem:[%s0 + $0xa8] sm:$0xff]
    %v52 = vld [vmem:[%s0 + $0xb0] sm:$0xff]
    %v53 = vld [vmem:[%s0 + $0xb8] sm:$0xff]
    %v54 = vld [vmem:[%s0 + $0xc0] sm:$0xff]
    %v55 = vld [vmem:[%s0 + $0xc8] sm:$0xff]
    %v56 = vld [vmem:[%s0 + $0xd0] sm:$0xff]
    %v57 = vld [vmem:[%s0 + $0xd8] sm:$0xff]
    %v58 = vld [vmem:[%s0 + $0xe0] sm:$0xff]
    %v59 = vld [vmem:[%s0 + $0xe8] sm:$0xff]
    %v60 = vld [vmem:[%s0 + $0xf0] sm:$0xff]
    %v61 = vld [vmem:[%s0 + $0xf8] sm:$0xff]
    %v62 = vld [vmem:[%s0 + $0x100] sm:$0xff]
    %v63 = vld [vmem:[%s0 + $0x108] sm:$0xff]
    %v64 = vld [vmem:[%s0 + $0x110] sm:$0xff]
    %v65 = vld [vmem:[%s0 + $0x118] sm:$0xff]
    %v66 = vld [vmem:[%s0 + $0x120] sm:$0xff]
    %v67 = vld [vmem:[%s0 + $0x128] sm:$0xff]
    %v68 = vld [vmem:[%s0 + $0x130] sm:$0xff]
    %v69 = vld [vmem:[%s0 + $0x138] sm:$0xff]
    %v70 = vld [vmem:[%s0 + $0x140] sm:$0xff]
    %v71 = vld [vmem:[%s0 + $0x148] sm:$0xff]
    %v72 = vld [vmem:[%s0 + $0x150] sm:$0xff]
    %v73 = vld [vmem:[%s0 + $0x158] sm:$0xff]
    %v74 = vld [vmem:[%s0 + $0x160] sm:$0xff]
    %v75 = vld [vmem:[%s0 + $0x168] sm:$0xff]
    %v76 = vld [vmem:[%s0 + $0x170] sm:$0xff]
    %v77 = vld [vmem:[%s0 + $0x178] sm:$0xff]
    %v78 = vld [vmem:[%s0 + $0x180] sm:$0xff]
    %v79 = vld [vmem:[%s0 + $0x188] sm:$0xff]
    %v80 = vld [vmem:[%s0 + $0x190] sm:$0xff]
    %v81 = vld [vmem:[%s0 + $0x198] sm:$0xff]
    %v82 = vld [vmem:[%s0 + $0x1a0] sm:$0xff]
    %v83 = vld [vmem:[%s0 + $0x1a8] sm:$0xff]
    %v84 = vld [vmem:[%s0 + $0x1b0] sm:$0xff]
    %v85 = vld [vmem:[%s0 + $0x1b8] sm:$0xff]
    %v86 = vld [vmem:[%s0 + $0x1c0] sm:$0xff]
    %v87 = vld [vmem:[%s0 + $0x1c8] sm:$0xff]
    %v88 = vld [vmem:[%s0 + $0x1d0] sm:$0xff]
    %v89 = vld [vmem:[%s0 + $0x1d8] sm:$0xff]
    %v90 = vld [vmem:[%s0 + $0x1e0] sm:$0xff]
    %v91 = vld [vmem:[%s0 + $0x1e8] sm:$0xff]
    %v92 = vld [vmem:[%s0 + $0x1f0] sm:$0xff]
    %v93 = vld [vmem:[%s0 + $0x1f8] sm:$0xff]
    %v94 = vld [vmem:[%s0 + $0x200] sm:$0xff]
    %v95 = vld [vmem:[%s0 + $0x208] sm:$0xff]
    %v96 = vld [vmem:[%s0 + $0x210] sm:$0xff]
    %v97 = vld [vmem:[%s0 + $0x218] sm:$0xff]
    %v98 = vld [vmem:[%s0 + $0x220] sm:$0xff]
    %v99 = vld [vmem:[%s0 + $0x228] sm:$0xff]
    %v100 = vld [vmem:[%s0 + $0x230] sm:$0xff]
    %v101 = vld [vmem:[%s0 + $0x238] sm:$0xff]
    %v102 = vld [vmem:[%s0 + $0x240] sm:$0xff]
    %v103 = vld [vmem:[%s0 + $0x248] sm:$0xff]
    %v104 = vld [vmem:[%s0 + $0x250] sm:$0xff]
    %v105 = vld [vmem:[%s0 + $0x258] sm:$0xff]
    %v106 = vld [vmem:[%s0 + $0x260] sm:$0xff]
    %v107 = vld [vmem:[%s0 + $0x268] sm:$0xff]
    %v108 = vld [vmem:[%s0 + $0x270] sm:$0xff]
    %v109 = vld [vmem:[%s0 + $0x278] sm:$0xff]
    %v110 = vld [vmem:[%s0 + $0x280] sm:$0xff]
    %v111 = vld [vmem:[%s0 + $0x288] sm:$0xff]
    %v112 = vld [vmem:[%s0 + $0x290] sm:$0xff]
    %v113 = vld [vmem:[%s0 + $0x298] sm:$0xff]
    %v114 = vld [vmem:[%s0 + $0x2a0] sm:$0xff]
    %v115 = vld [vmem:[%s0 + $0x2a8] sm:$0xff]
    %v116 = vld [vmem:[%s0 + $0x2b0] sm:$0xff]
    %v117 = vld [vmem:[%s0 + $0x2b8] sm:$0xff]
    %v118 = vld [vmem:[%s0 + $0x2c0] sm:$0xff]
    %v119 = vld [vmem:[%s0 + $0x2c8] sm:$0xff]
    %v120 = vld [vmem:[%s0 + $0x2d0] sm:$0xff]
    %v121 = vld [vmem:[%s0 + $0x2d8] sm:$0xff]
    %v122 = vld [vmem:[%s0 + $0x2e0] sm:$0xff]
    %v123 = vld [vmem:[%s0 + $0x2e8] sm:$0xff]
    %v124 = vld [vmem:[%s0 + $0x2f0] sm:$0xff]
    %v125 = vld [vmem:[%s0 + $0x2f8] sm:$0xff]
    %v126 = vld [vmem:[%s0 + $0x300] sm:$0xff]
    %v127 = vld [vmem:[%s0 + $0x308] sm:$0xff]
    %v128 = vld [vmem:[%s0 + $0x310] sm:$0xff]
    %v129 = vld [vmem:[%s0 + $0x318] sm:$0xff]
    %v130 = vld [vmem:[%s0 + $0x320] sm:$0xff]
    %v131 = vld [vmem:[%s0 + $0x328] sm:$0xff]
    %v132 = vld [vmem:[%s0 + $0x330] sm:$0xff]
    %v133 = vld [vmem:[%s0 + $0x338] sm:$0xff]
    %v134 = vld [vmem:[%s0 + $0x340] sm:$0xff]
    %v135 = vld [vmem:[%s0 + $0x348] sm:$0xff]
    %v136 = vld [vmem:[%s0 + $0x350] sm:$0xff]
    %v137 = vld [vmem:[%s0 + $0x358] sm:$0xff]
    %v138 = vld [vmem:[%s0 + $0x360] sm:$0xff]
    %v139 = vld [vmem:[%s0 + $0x368] sm:$0xff]
    %v140 = vld [vmem:[%s0 + $0x370] sm:$0xff]
    %v141 = vld [vmem:[%s0 + $0x378] sm:$0xff]
    %v142 = vld [vmem:[%s0 + $0x380] sm:$0xff]
    %v143 = vld [vmem:[%s0 + $0x388] sm:$0xff]
    %v144 = vld [vmem:[%s0 + $0x390] sm:$0xff]
    %v145 = vld [vmem:[%s0 + $0x398] sm:$0xff]
    %v146 = vld [vmem:[%s0 + $0x3a0] sm:$0xff]
    %v147 = vld [vmem:[%s0 + $0x3a8] sm:$0xff]
    %v148 = vld [vmem:[%s0 + $0x3b0] sm:$0xff]
    %v149 = vld [vmem:[%s0 + $0x3b8] sm:$0xff]
    %v150 = vld [vmem:[%s0 + $0x3c0] sm:$0xff]
    %v151 = vld [vmem:[%s0 + $0x3c8] sm:$0xff]
    %v152 = vld [vmem:[%s0 + $0x3d0] sm:$0xff]
    %v153 = vld [vmem:[%s0 + $0x3d8] sm:$0xff]
    %v154 = vld [vmem:[%s0 + $0x3e0] sm:$0xff]
    %v155 = vld [vmem:[%s0 + $0x3e8] sm:$0xff]
    %v156 = vld [vmem:[%s0 + $0x3f0] sm:$0xff]
    %v157 = vld [vmem:[%s0 + $0x3f8] sm:$0xff]
    %v158 = vld [vmem:[%s0 + $0x400] sm:$0xff]
    %v159 = vld [vmem:[%s0 + $0x408] sm:$0xff]
    %v160 = vld [vmem:[%s0 + $0x410] sm:$0xff]
    %v161 = vld [vmem:[%s0 + $0x418] sm:$0xff]
    %v162 = vld [vmem:[%s0 + $0x420] sm:$0xff]
    %v163 = vld [vmem:[%s0 + $0x428] sm:$0xff]
    %v164 = vld [vmem:[%s0 + $0x430] sm:$0xff]
    %v165 = vld [vmem:[%s0 + $0x438] sm:$0xff]
    %v166 = vld [vmem:[%s0 + $0x440] sm:$0xff]
    %v167 = vld [vmem:[%s0 + $0x448] sm:$0xff]
    %v168 = vld [vmem:[%s0 + $0x450] sm:$0xff]
    %v169 = vld [vmem:[%s0 + $0x458] sm:$0xff]
    %v170 = vld [vmem:[%s0 + $0x460] sm:$0xff]
    %v171 = vld [vmem:[%s0 + $0x468] sm:$0xff]
    %v172 = vld [vmem:[%s0 + $0x470] sm:$0xff]
    %v173 = vld [vmem:[%s0 + $0x478] sm:$0xff]
    %v174 = vld [vmem:[%s0 + $0x480] sm:$0xff]
    %v175 = vld [vmem:[%s0 + $0x488] sm:$0xff]
    %v176 = vld [vmem:[%s0 + $0x490] sm:$0xff]
    %v177 = vld [vmem:[%s0 + $0x498] sm:$0xff]
    %v178 = vld [vmem:[%s0 + $0x4a0] sm:$0xff]
    %v179 = vld [vmem:[%s0 + $0x4a8] sm:$0xff]
    %v180 = vld [vmem:[%s0 + $0x4b0] sm:$0xff]
    %v181 = vld [vmem:[%s0 + $0x4b8] sm:$0xff]
    %v182 = vld [vmem:[%s0 + $0x4c0] sm:$0xff]
    %v183 = vld [vmem:[%s0 + $0x4c8] sm:$0xff]
    %v184 = vld [vmem:[%s0 + $0x4d0] sm:$0xff]
    %v185 = vld [vmem:[%s0 + $0x4d8] sm:$0xff]
    %v186 = vld [vmem:[%s0 + $0x4e0] sm:$0xff]
    %v187 = vld [vmem:[%s0 + $0x4e8] sm:$0xff]
    %v188 = vld [vmem:[%s0 + $0x4f0] sm:$0xff]
    %v189 = vld [vmem:[%s0 + $0x4f8] sm:$0xff]
    %v190 = vld [vmem:[%s0 + $0x500] sm:$0xff]
    %v191 = vld [vmem:[%s0 + $0x508] sm:$0xff]
    %v192 = vld [vmem:[%s0 + $0x510] sm:$0xff]
    %v193 = vld [vmem:[%s0 + $0x518] sm:$0xff]
    %v194 = vld [vmem:[%s0 + $0x520] sm:$0xff]
    %v195 = vld [vmem:[%s0 + $0x528] sm:$0xff]
    %v196 = vld [vmem:[%s0 + $0x530] sm:$0xff]
    %v197 = vld [vmem:[%s0 + $0x538] sm:$0xff]
    %v198 = vld [vmem:[%s0 + $0x540] sm:$0xff]
    %v199 = vld [vmem:[%s0 + $0x548] sm:$0xff]
    %v200 = vld [vmem:[%s0 + $0x550] sm:$0xff]
    %v201 = vld [vmem:[%s0 + $0x558] sm:$0xff]
    %v202 = vld [vmem:[%s0 + $0x560] sm:$0xff]
    %v203 = vld [vmem:[%s0 + $0x568] sm:$0xff]
    %v204 = vld [vmem:[%s0 + $0x570] sm:$0xff]
    %v205 = vld [vmem:[%s0 + $0x578] sm:$0xff]
    %v206 = vld [vmem:[%s0 + $0x580] sm:$0xff]
    %v207 = vld [vmem:[%s0 + $0x588] sm:$0xff]
    %v208 = vld [vmem:[%s0 + $0x590] sm:$0xff]
    %v209 = vld [vmem:[%s0 + $0x598] sm:$0xff]
    %v210 = vld [vmem:[%s0 + $0x5a0] sm:$0xff]
    %v211 = vld [vmem:[%s0 + $0x5a8] sm:$0xff]
    %v212 = vld [vmem:[%s0 + $0x5b0] sm:$0xff]
    %v213 = vld [vmem:[%s0 + $0x5b8] sm:$0xff]
    %v214 = vld [vmem:[%s0 + $0x5c0] sm:$0xff]
    %v215 = vld [vmem:[%s0 + $0x5c8] sm:$0xff]
    %v216 = vld [vmem:[%s0 + $0x5d0] sm:$0xff]
    %v217 = vld [vmem:[%s0 + $0x5d8] sm:$0xff]
    %v218 = vld [vmem:[%s0 + $0x5e0] sm:$0xff]
    %v219 = vld [vmem:[%s0 + $0x5e8] sm:$0xff]
    %v220 = vld [vmem:[%s0 + $0x5f0] sm:$0xff]
    %v221 = vld [vmem:[%s0 + $0x5f8] sm:$0xff]
    %v222 = vld [vmem:[%s0 + $0x600] sm:$0xff]
    %v223 = vld [vmem:[%s0 + $0x608] sm:$0xff]
    %v224 = vld [vmem:[%s0 + $0x610] sm:$0xff]
    %v225 = vld [vmem:[%s0 + $0x618] sm:$0xff]
    %v226 = vld [vmem:[%s0 + $0x620] sm:$0xff]
    %v227 = vld [vmem:[%s0 + $0x628] sm:$0xff]
    %v228 = vld [vmem:[%s0 + $0x630] sm:$0xff]
    %v229 = vld [vmem:[%s0 + $0x638] sm:$0xff]
    %v230 = vld [vmem:[%s0 + $0x640] sm:$0xff]
    %v231 = vld [vmem:[%s0 + $0x648] sm:$0xff]
    %v232 = vld [vmem:[%s0 + $0x650] sm:$0xff]
    %v233 = vld [vmem:[%s0 + $0x658] sm:$0xff]
    %v234 = vld [vmem:[%s0 + $0x660] sm:$0xff]
    %v235 = vld [vmem:[%s0 + $0x668] sm:$0xff]
    %v236 = vld [vmem:[%s0 + $0x670] sm:$0xff]
    %v237 = vld [vmem:[%s0 + $0x678] sm:$0xff]
    %v238 = vld [vmem:[%s0 + $0x680] sm:$0xff]
    %v239 = vld [vmem:[%s0 + $0x688] sm:$0xff]
    %v240 = vld [vmem:[%s0 + $0x690] sm:$0xff]
    %v241 = vld [vmem:[%s0 + $0x698] sm:$0xff]
    %v242 = vld [vmem:[%s0 + $0x6a0] sm:$0xff]
    %v243 = vld [vmem:[%s0 + $0x6a8] sm:$0xff]
    %v244 = vld [vmem:[%s0 + $0x6b0] sm:$0xff]
    %v245 = vld [vmem:[%s0 + $0x6b8] sm:$0xff]
    %v246 = vld [vmem:[%s0 + $0x6c0] sm:$0xff]
    %v247 = vld [vmem:[%s0 + $0x6c8] sm:$0xff]
    %v248 = vld [vmem:[%s0 + $0x6d0] sm:$0xff]
    %v249 = vld [vmem:[%s0 + $0x6d8] sm:$0xff]
    %v250 = vld [vmem:[%s0 + $0x6e0] sm:$0xff]
    %v251 = vld [vmem:[%s0 + $0x6e8] sm:$0xff]
    %v252 = vld [vmem:[%s0 + $0x6f0] sm:$0xff]
    %v253 = vld [vmem:[%s0 + $0x6f8] sm:$0xff]
    %v254 = vld [vmem:[%s0 + $0x700] sm:$0xff]
    %v255 = vld [vmem:[%s0 + $0x708] sm:$0xff]
    %v256 = vld [vmem:[%s0 + $0x710] sm:$0xff]
    %v257 = vld [vmem:[%s0 + $0x718] sm:$0xff]
    %v258 = vld [vmem:[%s0 + $0x720] sm:$0xff]
    %v259 = vld [vmem:[%s0 + $0x728] sm:$0xff]
    %v260 = vld [vmem:[%s0 + $0x730] sm:$0xff]
    %v261 = vld [vmem:[%s0 + $0x738] sm:$0xff]
    %v262 = vld [vmem:[%s0 + $0x740] sm:$0xff]
    %v263 = vld [vmem:[%s0 + $0x748] sm:$0xff]
    %v264 = vld [vmem:[%s0 + $0x750] sm:$0xff]
    %v265 = vld [vmem:[%s0 + $0x758] sm:$0xff]
    %v266 = vld [vmem:[%s0 + $0x760] sm:$0xff]
    %v267 = vld [vmem:[%s0 + $0x768] sm:$0xff]
    %v268 = vld [vmem:[%s0 + $0x770] sm:$0xff]
    %v269 = vld [vmem:[%s0 + $0x778] sm:$0xff]
    %v270 = vld [vmem:[%s0 + $0x780] sm:$0xff]
    %v271 = vld [vmem:[%s0 + $0x788] sm:$0xff]
    %v272 = vld [vmem:[%s0 + $0x790] sm:$0xff]
    %v273 = vld [vmem:[%s0 + $0x798] sm:$0xff]
    %v274 = vld [vmem:[%s0 + $0x7a0] sm:$0xff]
    %v275 = vld [vmem:[%s0 + $0x7a8] sm:$0xff]
    %v276 = vld [vmem:[%s0 + $0x7b0] sm:$0xff]
    %v277 = vld [vmem:[%s0 + $0x7b8] sm:$0xff]
    %v278 = vld [vmem:[%s0 + $0x7c0] sm:$0xff]
    %v279 = vld [vmem:[%s0 + $0x7c8] sm:$0xff]
    %v280 = vld [vmem:[%s0 + $0x7d0] sm:$0xff]
    %v281 = vld [vmem:[%s0 + $0x7d8] sm:$0xff]
    %v282 = vld [vmem:[%s0 + $0x7e0] sm:$0xff]
    %v283 = vld [vmem:[%s0 + $0x7e8] sm:$0xff]
    %v284 = vld [vmem:[%s0 + $0x7f0] sm:$0xff]
    %v285 = vld [vmem:[%s0 + $0x7f8] sm:$0xff]
    %v286 = vld [vmem:[%s0 + $0x800] sm:$0xff]
    %v287 = vld [vmem:[%s0 + $0x808] sm:$0xff]
    %v288 = vld [vmem:[%s0 + $0x810] sm:$0xff]
    %v289 = vld [vmem:[%s0 + $0x818] sm:$0xff]
    %v290 = vld [vmem:[%s0 + $0x820] sm:$0xff]
    %v291 = vld [vmem:[%s0 + $0x828] sm:$0xff]
    %v292 = vld [vmem:[%s0 + $0x830] sm:$0xff]
    %v293 = vld [vmem:[%s0 + $0x838] sm:$0xff]
    %v294 = vld [vmem:[%s0 + $0x840] sm:$0xff]
    %v295 = vld [vmem:[%s0 + $0x848] sm:$0xff]
    %v296 = vld [vmem:[%s0 + $0x850] sm:$0xff]
    %v297 = vld [vmem:[%s0 + $0x858] sm:$0xff]
    %v298 = vld [vmem:[%s0 + $0x860] sm:$0xff]
    %v299 = vld [vmem:[%s0 + $0x868] sm:$0xff]
    %v300 = vld [vmem:[%s0 + $0x870] sm:$0xff]
    %v301 = vld [vmem:[%s0 + $0x878] sm:$0xff]
    %v302 = vld [vmem:[%s0 + $0x880] sm:$0xff]
    %v303 = vld [vmem:[%s0 + $0x888] sm:$0xff]
    %v304 = vld [vmem:[%s0 + $0x890] sm:$0xff]
    %v305 = vld [vmem:[%s0 + $0x898] sm:$0xff]
    %v306 = vld [vmem:[%s0 + $0x8a0] sm:$0xff]
    %v307 = vld [vmem:[%s0 + $0x8a8] sm:$0xff]
    %v308 = vld [vmem:[%s0 + $0x8b0] sm:$0xff]
    %v309 = vld [vmem:[%s0 + $0x8b8] sm:$0xff]
    %v310 = vld [vmem:[%s0 + $0x8c0] sm:$0xff]
    %v311 = vld [vmem:[%s0 + $0x8c8] sm:$0xff]
    %v312 = vld [vmem:[%s0 + $0x8d0] sm:$0xff]
    %v313 = vld [vmem:[%s0 + $0x8d8] sm:$0xff]
    %v314 = vld [vmem:[%s0 + $0x8e0] sm:$0xff]
    %v315 = vld [vmem:[%s0 + $0x8e8] sm:$0xff]
    %v316 = vld [vmem:[%s0 + $0x8f0] sm:$0xff]
    %v317 = vld [vmem:[%s0 + $0x8f8] sm:$0xff]
    %v318 = vld [vmem:[%s0 + $0x900] sm:$0xff]
    %v319 = vld [vmem:[%s0 + $0x908] sm:$0xff]
    %v320 = vld [vmem:[%s0 + $0x910] sm:$0xff]
    %v321 = vld [vmem:[%s0 + $0x918] sm:$0xff]
    %v322 = vld [vmem:[%s0 + $0x920] sm:$0xff]
    %v323 = vld [vmem:[%s0 + $0x928] sm:$0xff]
    %v324 = vld [vmem:[%s0 + $0x930] sm:$0xff]
    %v325 = vld [vmem:[%s0 + $0x938] sm:$0xff]
    %v326 = vld [vmem:[%s0 + $0x940] sm:$0xff]
    %v327 = vld [vmem:[%s0 + $0x948] sm:$0xff]
    %v328 = vld [vmem:[%s0 + $0x950] sm:$0xff]
    %v329 = vld [vmem:[%s0 + $0x958] sm:$0xff]
    %v330 = vld [vmem:[%s0 + $0x960] sm:$0xff]
    %v331 = vld [vmem:[%s0 + $0x968] sm:$0xff]
    %v332 = vld [vmem:[%s0 + $0x970] sm:$0xff]
    %v333 = vld [vmem:[%s0 + $0x978] sm:$0xff]
    %v334 = vld [vmem:[%s0 + $0x980] sm:$0xff]
    %v335 = vld [vmem:[%s0 + $0x988] sm:$0xff]
    %v336 = vld [vmem:[%s0 + $0x990] sm:$0xff]
    %v337 = vld [vmem:[%s0 + $0x998] sm:$0xff]
    %v338 = vld [vmem:[%s0 + $0x9a0] sm:$0xff]
    %v339 = vld [vmem:[%s0 + $0x9a8] sm:$0xff]
    %v340 = vld [vmem:[%s0 + $0x9b0] sm:$0xff]
    %v341 = vld [vmem:[%s0 + $0x9b8] sm:$0xff]
    %v342 = vld [vmem:[%s0 + $0x9c0] sm:$0xff]
    %v343 = vld [vmem:[%s0 + $0x9c8] sm:$0xff]
    %v344 = vld [vmem:[%s0 + $0x9d0] sm:$0xff]
    %v345 = vld [vmem:[%s0 + $0x9d8] sm:$0xff]
    %v346 = vld [vmem:[%s0 + $0x9e0] sm:$0xff]
    %v347 = vld [vmem:[%s0 + $0x9e8] sm:$0xff]
    %v348 = vld [vmem:[%s0 + $0x9f0] sm:$0xff]
    %v349 = vld [vmem:[%s0 + $0x9f8] sm:$0xff]
    %v350 = vld [vmem:[%s0 + $0xa00] sm:$0xff]
    %v351 = vld [vmem:[%s0 + $0xa08] sm:$0xff]
    %v352 = vld [vmem:[%s0 + $0xa10] sm:$0xff]
    %v353 = vld [vmem:[%s0 + $0xa18] sm:$0xff]
    %v354 = vld [vmem:[%s0 + $0xa20] sm:$0xff]
    %v355 = vld [vmem:[%s0 + $0xa28] sm:$0xff]
    %v356 = vld [vmem:[%s0 + $0xa30] sm:$0xff]
    %v357 = vld [vmem:[%s0 + $0xa38] sm:$0xff]
    %v358 = vld [vmem:[%s0 + $0xa40] sm:$0xff]
    %v359 = vld [vmem:[%s0 + $0xa48] sm:$0xff]
    %v360 = vld [vmem:[%s0 + $0xa50] sm:$0xff]
    %v361 = vld [vmem:[%s0 + $0xa58] sm:$0xff]
    %v362 = vld [vmem:[%s0 + $0xa60] sm:$0xff]
    %v363 = vld [vmem:[%s0 + $0xa68] sm:$0xff]
    %v364 = vld [vmem:[%s0 + $0xa70] sm:$0xff]
    %v365 = vld [vmem:[%s0 + $0xa78] sm:$0xff]
    %v366 = vld [vmem:[%s0 + $0xa80] sm:$0xff]
    %v367 = vld [vmem:[%s0 + $0xa88] sm:$0xff]
    %v368 = vld [vmem:[%s0 + $0xa90] sm:$0xff]
    %v369 = vld [vmem:[%s0 + $0xa98] sm:$0xff]
    %v370 = vld [vmem:[%s0 + $0xaa0] sm:$0xff]
    %v371 = vld [vmem:[%s0 + $0xaa8] sm:$0xff]
    %v372 = vld [vmem:[%s0 + $0xab0] sm:$0xff]
    %v373 = vld [vmem:[%s0 + $0xab8] sm:$0xff]
    %v374 = vld [vmem:[%s0 + $0xac0] sm:$0xff]
    %v375 = vld [vmem:[%s0 + $0xac8] sm:$0xff]
    %v376 = vld [vmem:[%s0 + $0xad0] sm:$0xff]
    %v377 = vld [vmem:[%s0 + $0xad8] sm:$0xff]
    %v378 = vld [vmem:[%s0 + $0xae0] sm:$0xff]
    %v379 = vld [vmem:[%s0 + $0xae8] sm:$0xff]
    %v380 = vld [vmem:[%s0 + $0xaf0] sm:$0xff]
    %v381 = vld [vmem:[%s0 + $0xaf8] sm:$0xff]
    %v382 = vld [vmem:[%s0 + $0xb00] sm:$0xff]
    %v383 = vld [vmem:[%s0 + $0xb08] sm:$0xff]
    %v384 = vld [vmem:[%s0 + $0xb10] sm:$0xff]
    %v385 = vld [vmem:[%s0 + $0xb18] sm:$0xff]
    %v386 = vld [vmem:[%s0 + $0xb20] sm:$0xff]
    %v387 = vld [vmem:[%s0 + $0xb28] sm:$0xff]
    %v388 = vld [vmem:[%s0 + $0xb30] sm:$0xff]
    %v389 = vld [vmem:[%s0 + $0xb38] sm:$0xff]
    %v390 = vld [vmem:[%s0 + $0xb40] sm:$0xff]
    %v391 = vld [vmem:[%s0 + $0xb48] sm:$0xff]
    %v392 = vld [vmem:[%s0 + $0xb50] sm:$0xff]
    %v393 = vld [vmem:[%s0 + $0xb58] sm:$0xff]
    %v394 = vld [vmem:[%s0 + $0xb60] sm:$0xff]
    %v395 = vld [vmem:[%s0 + $0xb68] sm:$0xff]
    %v396 = vld [vmem:[%s0 + $0xb70] sm:$0xff]
    %v397 = vld [vmem:[%s0 + $0xb78] sm:$0xff]
    %v398 = vld [vmem:[%s0 + $0xb80] sm:$0xff]
    %v399 = vld [vmem:[%s0 + $0xb88] sm:$0xff]
    %v400 = vld [vmem:[%s0 + $0xb90] sm:$0xff]
    %v401 = vld [vmem:[%s0 + $0xb98] sm:$0xff]
    %v402 = vld [vmem:[%s0 + $0xba0] sm:$0xff]
    %v403 = vld [vmem:[%s0 + $0xba8] sm:$0xff]
    %v404 = vld [vmem:[%s0 + $0xbb0] sm:$0xff]
    %v405 = vld [vmem:[%s0 + $0xbb8] sm:$0xff]
    %v406 = vld [vmem:[%s0 + $0xbc0] sm:$0xff]
    %v407 = vld [vmem:[%s0 + $0xbc8] sm:$0xff]
    %v408 = vld [vmem:[%s0 + $0xbd0] sm:$0xff]
    %v409 = vld [vmem:[%s0 + $0xbd8] sm:$0xff]
    %v410 = vld [vmem:[%s0 + $0xbe0] sm:$0xff]
    %v411 = vld [vmem:[%s0 + $0xbe8] sm:$0xff]
    %v412 = vld [vmem:[%s0 + $0xbf0] sm:$0xff]
    %v413 = vld [vmem:[%s0 + $0xbf8] sm:$0xff]
    %v414 = vld [vmem:[%s0 + $0xc00] sm:$0xff]
    %v415 = vld [vmem:[%s0 + $0xc08] sm:$0xff]
    %v416 = vld [vmem:[%s0 + $0xc10] sm:$0xff]
    %v417 = vld [vmem:[%s0 + $0xc18] sm:$0xff]
    %v418 = vld [vmem:[%s0 + $0xc20] sm:$0xff]
    %v419 = vld [vmem:[%s0 + $0xc28] sm:$0xff]
    %v420 = vld [vmem:[%s0 + $0xc30] sm:$0xff]
    %v421 = vld [vmem:[%s0 + $0xc38] sm:$0xff]
    %v422 = vld [vmem:[%s0 + $0xc40] sm:$0xff]
    %v423 = vld [vmem:[%s0 + $0xc48] sm:$0xff]
    %v424 = vld [vmem:[%s0 + $0xc50] sm:$0xff]
    %v425 = vld [vmem:[%s0 + $0xc58] sm:$0xff]
    %v426 = vld [vmem:[%s0 + $0xc60] sm:$0xff]
    %v427 = vld [vmem:[%s0 + $0xc68] sm:$0xff]
    %v428 = vld [vmem:[%s0 + $0xc70] sm:$0xff]
    %v429 = vld [vmem:[%s0 + $0xc78] sm:$0xff]
    %v430 = vld [vmem:[%s2] sm:$0xff]
    %v431 = vld [vmem:[%s2 + $0x8] sm:$0xff]
    %v432 = vld [vmem:[%s2 + $0x10] sm:$0xff]
    %v433 = vld [vmem:[%s2 + $0x18] sm:$0xff]
    %v434 = vld [vmem:[%s3] sm:$0x1]
    %v436 = vlaneseq
    %v437 = vshrl.u32 %v436, 7
    %v438 = vsub.s32 0, %v437
    %v439 = vrot.slane %v434, %v438
    %vm441 = vcmask 261120
    %v443 = vsel %vm441, %v30, 0
    %v446 = vsel %vm441, %v31, 0
    %v449 = vsel %vm441, %v32, 0
    %v452 = vsel %vm441, %v33, 0
    %v455 = vsel %vm441, %v34, 0
    %v458 = vsel %vm441, %v35, 0
    %v461 = vsel %vm441, %v36, 0
    %v464 = vsel %vm441, %v37, 0
    %v467 = vsel %vm441, %v38, 0
    %v470 = vsel %vm441, %v39, 0
    %v473 = vsel %vm441, %v40, 0
    %v476 = vsel %vm441, %v41, 0
    %v479 = vsel %vm441, %v42, 0
    %v482 = vsel %vm441, %v43, 0
    %v485 = vsel %vm441, %v44, 0
    %v488 = vsel %vm441, %v45, 0
    %v491 = vsel %vm441, %v46, 0
    %v494 = vsel %vm441, %v47, 0
    %v497 = vsel %vm441, %v48, 0
    %v500 = vsel %vm441, %v49, 0
    %v503 = vsel %vm441, %v50, 0
    %v506 = vsel %vm441, %v51, 0
    %v509 = vsel %vm441, %v52, 0
    %v512 = vsel %vm441, %v53, 0
    %v515 = vsel %vm441, %v54, 0
    %v518 = vsel %vm441, %v55, 0
    %v521 = vsel %vm441, %v56, 0
    %v524 = vsel %vm441, %v57, 0
    %v527 = vsel %vm441, %v58, 0
    %v530 = vsel %vm441, %v59, 0
    %v533 = vsel %vm441, %v60, 0
    %v536 = vsel %vm441, %v61, 0
    %v539 = vsel %vm441, %v62, 0
    %v542 = vsel %vm441, %v63, 0
    %v545 = vsel %vm441, %v64, 0
    %v548 = vsel %vm441, %v65, 0
    %v551 = vsel %vm441, %v66, 0
    %v554 = vsel %vm441, %v67, 0
    %v557 = vsel %vm441, %v68, 0
    %v560 = vsel %vm441, %v69, 0
    %v563 = vsel %vm441, %v70, 0
    %v566 = vsel %vm441, %v71, 0
    %v569 = vsel %vm441, %v72, 0
    %v572 = vsel %vm441, %v73, 0
    %v575 = vsel %vm441, %v74, 0
    %v578 = vsel %vm441, %v75, 0
    %v581 = vsel %vm441, %v76, 0
    %v584 = vsel %vm441, %v77, 0
    %v587 = vsel %vm441, %v78, 0
    %v590 = vsel %vm441, %v79, 0
    %v593 = vsel %vm441, %v80, 0
    %v596 = vsel %vm441, %v81, 0
    %v599 = vsel %vm441, %v82, 0
    %v602 = vsel %vm441, %v83, 0
    %v605 = vsel %vm441, %v84, 0
    %v608 = vsel %vm441, %v85, 0
    %v611 = vsel %vm441, %v86, 0
    %v614 = vsel %vm441, %v87, 0
    %v617 = vsel %vm441, %v88, 0
    %v620 = vsel %vm441, %v89, 0
    %v623 = vsel %vm441, %v90, 0
    %v626 = vsel %vm441, %v91, 0
    %v629 = vsel %vm441, %v92, 0
    %v632 = vsel %vm441, %v93, 0
    %v635 = vsel %vm441, %v94, 0
    %v638 = vsel %vm441, %v95, 0
    %v641 = vsel %vm441, %v96, 0
    %v644 = vsel %vm441, %v97, 0
    %v647 = vsel %vm441, %v98, 0
    %v650 = vsel %vm441, %v99, 0
    %v653 = vsel %vm441, %v100, 0
    %v656 = vsel %vm441, %v101, 0
    %v659 = vsel %vm441, %v102, 0
    %v662 = vsel %vm441, %v103, 0
    %v665 = vsel %vm441, %v104, 0
    %v668 = vsel %vm441, %v105, 0
    %v671 = vsel %vm441, %v106, 0
    %v674 = vsel %vm441, %v107, 0
    %v677 = vsel %vm441, %v108, 0
    %v680 = vsel %vm441, %v109, 0
    %v683 = vsel %vm441, %v110, 0
    %v686 = vsel %vm441, %v111, 0
    %v689 = vsel %vm441, %v112, 0
    %v692 = vsel %vm441, %v113, 0
    %v695 = vsel %vm441, %v114, 0
    %v698 = vsel %vm441, %v115, 0
    %v701 = vsel %vm441, %v116, 0
    %v704 = vsel %vm441, %v117, 0
    %v707 = vsel %vm441, %v118, 0
    %v710 = vsel %vm441, %v119, 0
    %v713 = vsel %vm441, %v120, 0
    %v716 = vsel %vm441, %v121, 0
    %v719 = vsel %vm441, %v122, 0
    %v722 = vsel %vm441, %v123, 0
    %v725 = vsel %vm441, %v124, 0
    %v728 = vsel %vm441, %v125, 0
    %v731 = vsel %vm441, %v126, 0
    %v734 = vsel %vm441, %v127, 0
    %v737 = vsel %vm441, %v128, 0
    %v740 = vsel %vm441, %v129, 0
    %v743 = vsel %vm441, %v130, 0
    %v746 = vsel %vm441, %v131, 0
    %v749 = vsel %vm441, %v132, 0
    %v752 = vsel %vm441, %v133, 0
    %v755 = vsel %vm441, %v134, 0
    %v758 = vsel %vm441, %v135, 0
    %v761 = vsel %vm441, %v136, 0
    %v764 = vsel %vm441, %v137, 0
    %v767 = vsel %vm441, %v138, 0
    %v770 = vsel %vm441, %v139, 0
    %v773 = vsel %vm441, %v140, 0
    %v776 = vsel %vm441, %v141, 0
    %v779 = vsel %vm441, %v142, 0
    %v782 = vsel %vm441, %v143, 0
    %v785 = vsel %vm441, %v144, 0
    %v788 = vsel %vm441, %v145, 0
    %v791 = vsel %vm441, %v146, 0
    %v794 = vsel %vm441, %v147, 0
    %v797 = vsel %vm441, %v148, 0
    %v800 = vsel %vm441, %v149, 0
    %v803 = vsel %vm441, %v150, 0
    %v806 = vsel %vm441, %v151, 0
    %v809 = vsel %vm441, %v152, 0
    %v812 = vsel %vm441, %v153, 0
    %v815 = vsel %vm441, %v154, 0
    %v818 = vsel %vm441, %v155, 0
    %v821 = vsel %vm441, %v156, 0
    %v824 = vsel %vm441, %v157, 0
    %v827 = vsel %vm441, %v158, 0
    %v830 = vsel %vm441, %v159, 0
    %v833 = vsel %vm441, %v160, 0
    %v836 = vsel %vm441, %v161, 0
    %v839 = vsel %vm441, %v162, 0
    %v842 = vsel %vm441, %v163, 0
    %v845 = vsel %vm441, %v164, 0
    %v848 = vsel %vm441, %v165, 0
    %v851 = vsel %vm441, %v166, 0
    %v854 = vsel %vm441, %v167, 0
    %v857 = vsel %vm441, %v168, 0
    %v860 = vsel %vm441, %v169, 0
    %v863 = vsel %vm441, %v170, 0
    %v866 = vsel %vm441, %v171, 0
    %v869 = vsel %vm441, %v172, 0
    %v872 = vsel %vm441, %v173, 0
    %v875 = vsel %vm441, %v174, 0
    %v878 = vsel %vm441, %v175, 0
    %v881 = vsel %vm441, %v176, 0
    %v884 = vsel %vm441, %v177, 0
    %v887 = vsel %vm441, %v178, 0
    %v890 = vsel %vm441, %v179, 0
    %v893 = vsel %vm441, %v180, 0
    %v896 = vsel %vm441, %v181, 0
    %v899 = vsel %vm441, %v182, 0
    %v902 = vsel %vm441, %v183, 0
    %v905 = vsel %vm441, %v184, 0
    %v908 = vsel %vm441, %v185, 0
    %v911 = vsel %vm441, %v186, 0
    %v914 = vsel %vm441, %v187, 0
    %v917 = vsel %vm441, %v188, 0
    %v920 = vsel %vm441, %v189, 0
    %v923 = vsel %vm441, %v190, 0
    %v926 = vsel %vm441, %v191, 0
    %v929 = vsel %vm441, %v192, 0
    %v932 = vsel %vm441, %v193, 0
    %v935 = vsel %vm441, %v194, 0
    %v938 = vsel %vm441, %v195, 0
    %v941 = vsel %vm441, %v196, 0
    %v944 = vsel %vm441, %v197, 0
    %v947 = vsel %vm441, %v198, 0
    %v950 = vsel %vm441, %v199, 0
    %v953 = vsel %vm441, %v200, 0
    %v956 = vsel %vm441, %v201, 0
    %v959 = vsel %vm441, %v202, 0
    %v962 = vsel %vm441, %v203, 0
    %v965 = vsel %vm441, %v204, 0
    %v968 = vsel %vm441, %v205, 0
    %v971 = vsel %vm441, %v206, 0
    %v974 = vsel %vm441, %v207, 0
    %v977 = vsel %vm441, %v208, 0
    %v980 = vsel %vm441, %v209, 0
    %v983 = vsel %vm441, %v210, 0
    %v986 = vsel %vm441, %v211, 0
    %v989 = vsel %vm441, %v212, 0
    %v992 = vsel %vm441, %v213, 0
    %v995 = vsel %vm441, %v214, 0
    %v998 = vsel %vm441, %v215, 0
    %v1001 = vsel %vm441, %v216, 0
    %v1004 = vsel %vm441, %v217, 0
    %v1007 = vsel %vm441, %v218, 0
    %v1010 = vsel %vm441, %v219, 0
    %v1013 = vsel %vm441, %v220, 0
    %v1016 = vsel %vm441, %v221, 0
    %v1019 = vsel %vm441, %v222, 0
    %v1022 = vsel %vm441, %v223, 0
    %v1025 = vsel %vm441, %v224, 0
    %v1028 = vsel %vm441, %v225, 0
    %v1031 = vsel %vm441, %v226, 0
    %v1034 = vsel %vm441, %v227, 0
    %v1037 = vsel %vm441, %v228, 0
    %v1040 = vsel %vm441, %v229, 0
    %v1043 = vsel %vm441, %v230, 0
    %v1046 = vsel %vm441, %v231, 0
    %v1049 = vsel %vm441, %v232, 0
    %v1052 = vsel %vm441, %v233, 0
    %v1055 = vsel %vm441, %v234, 0
    %v1058 = vsel %vm441, %v235, 0
    %v1061 = vsel %vm441, %v236, 0
    %v1064 = vsel %vm441, %v237, 0
    %v1067 = vsel %vm441, %v238, 0
    %v1070 = vsel %vm441, %v239, 0
    %v1073 = vsel %vm441, %v240, 0
    %v1076 = vsel %vm441, %v241, 0
    %v1079 = vsel %vm441, %v242, 0
    %v1082 = vsel %vm441, %v243, 0
    %v1085 = vsel %vm441, %v244, 0
    %v1088 = vsel %vm441, %v245, 0
    %v1091 = vsel %vm441, %v246, 0
    %v1094 = vsel %vm441, %v247, 0
    %v1097 = vsel %vm441, %v248, 0
    %v1100 = vsel %vm441, %v249, 0
    %v1103 = vsel %vm441, %v250, 0
    %v1106 = vsel %vm441, %v251, 0
    %v1109 = vsel %vm441, %v252, 0
    %v1112 = vsel %vm441, %v253, 0
    %v1115 = vsel %vm441, %v254, 0
    %v1118 = vsel %vm441, %v255, 0
    %v1121 = vsel %vm441, %v256, 0
    %v1124 = vsel %vm441, %v257, 0
    %v1127 = vsel %vm441, %v258, 0
    %v1130 = vsel %vm441, %v259, 0
    %v1133 = vsel %vm441, %v260, 0
    %v1136 = vsel %vm441, %v261, 0
    %v1139 = vsel %vm441, %v262, 0
    %v1142 = vsel %vm441, %v263, 0
    %v1145 = vsel %vm441, %v264, 0
    %v1148 = vsel %vm441, %v265, 0
    %v1151 = vsel %vm441, %v266, 0
    %v1154 = vsel %vm441, %v267, 0
    %v1157 = vsel %vm441, %v268, 0
    %v1160 = vsel %vm441, %v269, 0
    %v1163 = vsel %vm441, %v270, 0
    %v1166 = vsel %vm441, %v271, 0
    %v1169 = vsel %vm441, %v272, 0
    %v1172 = vsel %vm441, %v273, 0
    %v1175 = vsel %vm441, %v274, 0
    %v1178 = vsel %vm441, %v275, 0
    %v1181 = vsel %vm441, %v276, 0
    %v1184 = vsel %vm441, %v277, 0
    %v1187 = vsel %vm441, %v278, 0
    %v1190 = vsel %vm441, %v279, 0
    %v1193 = vsel %vm441, %v280, 0
    %v1196 = vsel %vm441, %v281, 0
    %v1199 = vsel %vm441, %v282, 0
    %v1202 = vsel %vm441, %v283, 0
    %v1205 = vsel %vm441, %v284, 0
    %v1208 = vsel %vm441, %v285, 0
    %v1211 = vsel %vm441, %v286, 0
    %v1214 = vsel %vm441, %v287, 0
    %v1217 = vsel %vm441, %v288, 0
    %v1220 = vsel %vm441, %v289, 0
    %v1223 = vsel %vm441, %v290, 0
    %v1226 = vsel %vm441, %v291, 0
    %v1229 = vsel %vm441, %v292, 0
    %v1232 = vsel %vm441, %v293, 0
    %v1235 = vsel %vm441, %v294, 0
    %v1238 = vsel %vm441, %v295, 0
    %v1241 = vsel %vm441, %v296, 0
    %v1244 = vsel %vm441, %v297, 0
    %v1247 = vsel %vm441, %v298, 0
    %v1250 = vsel %vm441, %v299, 0
    %v1253 = vsel %vm441, %v300, 0
    %v1256 = vsel %vm441, %v301, 0
    %v1259 = vsel %vm441, %v302, 0
    %v1262 = vsel %vm441, %v303, 0
    %v1265 = vsel %vm441, %v304, 0
    %v1268 = vsel %vm441, %v305, 0
    %v1271 = vsel %vm441, %v306, 0
    %v1274 = vsel %vm441, %v307, 0
    %v1277 = vsel %vm441, %v308, 0
    %v1280 = vsel %vm441, %v309, 0
    %v1283 = vsel %vm441, %v310, 0
    %v1286 = vsel %vm441, %v311, 0
    %v1289 = vsel %vm441, %v312, 0
    %v1292 = vsel %vm441, %v313, 0
    %v1295 = vsel %vm441, %v314, 0
    %v1298 = vsel %vm441, %v315, 0
    %v1301 = vsel %vm441, %v316, 0
    %v1304 = vsel %vm441, %v317, 0
    %v1307 = vsel %vm441, %v318, 0
    %v1310 = vsel %vm441, %v319, 0
    %v1313 = vsel %vm441, %v320, 0
    %v1316 = vsel %vm441, %v321, 0
    %v1319 = vsel %vm441, %v322, 0
    %v1322 = vsel %vm441, %v323, 0
    %v1325 = vsel %vm441, %v324, 0
    %v1328 = vsel %vm441, %v325, 0
    %v1331 = vsel %vm441, %v326, 0
    %v1334 = vsel %vm441, %v327, 0
    %v1337 = vsel %vm441, %v328, 0
    %v1340 = vsel %vm441, %v329, 0
    %v1343 = vsel %vm441, %v330, 0
    %v1346 = vsel %vm441, %v331, 0
    %v1349 = vsel %vm441, %v332, 0
    %v1352 = vsel %vm441, %v333, 0
    %v1355 = vsel %vm441, %v334, 0
    %v1358 = vsel %vm441, %v335, 0
    %v1361 = vsel %vm441, %v336, 0
    %v1364 = vsel %vm441, %v337, 0
    %v1367 = vsel %vm441, %v338, 0
    %v1370 = vsel %vm441, %v339, 0
    %v1373 = vsel %vm441, %v340, 0
    %v1376 = vsel %vm441, %v341, 0
    %v1379 = vsel %vm441, %v342, 0
    %v1382 = vsel %vm441, %v343, 0
    %v1385 = vsel %vm441, %v344, 0
    %v1388 = vsel %vm441, %v345, 0
    %v1391 = vsel %vm441, %v346, 0
    %v1394 = vsel %vm441, %v347, 0
    %v1397 = vsel %vm441, %v348, 0
    %v1400 = vsel %vm441, %v349, 0
    %v1403 = vsel %vm441, %v350, 0
    %v1406 = vsel %vm441, %v351, 0
    %v1409 = vsel %vm441, %v352, 0
    %v1412 = vsel %vm441, %v353, 0
    %v1415 = vsel %vm441, %v354, 0
    %v1418 = vsel %vm441, %v355, 0
    %v1421 = vsel %vm441, %v356, 0
    %v1424 = vsel %vm441, %v357, 0
    %v1427 = vsel %vm441, %v358, 0
    %v1430 = vsel %vm441, %v359, 0
    %v1433 = vsel %vm441, %v360, 0
    %v1436 = vsel %vm441, %v361, 0
    %v1439 = vsel %vm441, %v362, 0
    %v1442 = vsel %vm441, %v363, 0
    %v1445 = vsel %vm441, %v364, 0
    %v1448 = vsel %vm441, %v365, 0
    %v1451 = vsel %vm441, %v366, 0
    %v1454 = vsel %vm441, %v367, 0
    %v1457 = vsel %vm441, %v368, 0
    %v1460 = vsel %vm441, %v369, 0
    %v1463 = vsel %vm441, %v370, 0
    %v1466 = vsel %vm441, %v371, 0
    %v1469 = vsel %vm441, %v372, 0
    %v1472 = vsel %vm441, %v373, 0
    %v1475 = vsel %vm441, %v374, 0
    %v1478 = vsel %vm441, %v375, 0
    %v1481 = vsel %vm441, %v376, 0
    %v1484 = vsel %vm441, %v377, 0
    %v1487 = vsel %vm441, %v378, 0
    %v1490 = vsel %vm441, %v379, 0
    %v1493 = vsel %vm441, %v380, 0
    %v1496 = vsel %vm441, %v381, 0
    %v1499 = vsel %vm441, %v382, 0
    %v1502 = vsel %vm441, %v383, 0
    %v1505 = vsel %vm441, %v384, 0
    %v1508 = vsel %vm441, %v385, 0
    %v1511 = vsel %vm441, %v386, 0
    %v1514 = vsel %vm441, %v387, 0
    %v1517 = vsel %vm441, %v388, 0
    %v1520 = vsel %vm441, %v389, 0
    %v1523 = vsel %vm441, %v390, 0
    %v1526 = vsel %vm441, %v391, 0
    %v1529 = vsel %vm441, %v392, 0
    %v1532 = vsel %vm441, %v393, 0
    %v1535 = vsel %vm441, %v394, 0
    %v1538 = vsel %vm441, %v395, 0
    %v1541 = vsel %vm441, %v396, 0
    %v1544 = vsel %vm441, %v397, 0
    %v1547 = vsel %vm441, %v398, 0
    %v1550 = vsel %vm441, %v399, 0
    %v1553 = vsel %vm441, %v400, 0
    %v1556 = vsel %vm441, %v401, 0
    %v1559 = vsel %vm441, %v402, 0
    %v1562 = vsel %vm441, %v403, 0
    %v1565 = vsel %vm441, %v404, 0
    %v1568 = vsel %vm441, %v405, 0
    %v1571 = vsel %vm441, %v406, 0
    %v1574 = vsel %vm441, %v407, 0
    %v1577 = vsel %vm441, %v408, 0
    %v1580 = vsel %vm441, %v409, 0
    %v1583 = vsel %vm441, %v410, 0
    %v1586 = vsel %vm441, %v411, 0
    %v1589 = vsel %vm441, %v412, 0
    %v1592 = vsel %vm441, %v413, 0
    %v1595 = vsel %vm441, %v414, 0
    %v1598 = vsel %vm441, %v415, 0
    %v1601 = vsel %vm441, %v416, 0
    %v1604 = vsel %vm441, %v417, 0
    %v1607 = vsel %vm441, %v418, 0
    %v1610 = vsel %vm441, %v419, 0
    %v1613 = vsel %vm441, %v420, 0
    %v1616 = vsel %vm441, %v421, 0
    %v1619 = vsel %vm441, %v422, 0
    %v1622 = vsel %vm441, %v423, 0
    %v1625 = vsel %vm441, %v424, 0
    %v1628 = vsel %vm441, %v425, 0
    %v1631 = vsel %vm441, %v426, 0
    %v1634 = vsel %vm441, %v427, 0
    %v1637 = vsel %vm441, %v428, 0
    %v1640 = vsel %vm441, %v429, 0
    %1642 = vmatprep.subr.mxu0 0.0
    %1643 = vmatpush1.msra.mxu0 %v430
    %1644 = vmatprep.subr.mxu0 0.0
    %1645 = vmatpush1.msra.mxu0 %v431
    %1646 = vmatprep.subr.mxu0 0.0
    %1647 = vmatpush1.msra.mxu0 %v432
    %1648 = vmatprep.subr.mxu0 0.0
    %1649 = vmatpush1.msra.mxu0 %v433
    %1650 = vmatprep.subr.mxu0 0.0
    %1651 = vmatpush1.msra.mxu0 0.0
    %1652 = vmatprep.subr.mxu0 0.0
    %1653 = vmatpush1.msra.mxu0 0.0
    %1654 = vmatprep.subr.mxu0 0.0
    %1655 = vmatpush1.msra.mxu0 0.0
    %1656 = vmatprep.subr.mxu0 0.0
    %1657 = vmatpush1.msra.mxu0 0.0
    %1658 = vmatprep.subr.mxu0 0.0
    %1659 = vmatpush1.msra.mxu0 0.0
    %1660 = vmatprep.subr.mxu0 0.0
    %1661 = vmatpush1.msra.mxu0 0.0
    %1662 = vmatprep.subr.mxu0 0.0
    %1663 = vmatpush1.msra.mxu0 0.0
    %1664 = vmatprep.subr.mxu0 0.0
    %1665 = vmatpush1.msra.mxu0 0.0
    %1666 = vmatprep.subr.mxu0 0.0
    %1667 = vmatpush1.msra.mxu0 0.0
    %1668 = vmatprep.subr.mxu0 0.0
    %1669 = vmatpush1.msra.mxu0 0.0
    %1670 = vmatprep.subr.mxu0 0.0
    %1671 = vmatpush1.msra.mxu0 0.0
    %1672 = vmatprep.subr.mxu0 0.0
    %1673 = vmatpush1.msra.mxu0 0.0
    %1674 = vmatprep.subr.mxu0 0.0
    %1675 = vmatpush1.msra.mxu0 0.0
    %1676 = vmatprep.subr.mxu0 0.0
    %1677 = vmatpush1.msra.mxu0 0.0
    %1678 = vmatprep.subr.mxu0 0.0
    %1679 = vmatpush1.msra.mxu0 0.0
    %1680 = vmatprep.subr.mxu0 0.0
    %1681 = vmatpush1.msra.mxu0 0.0
    %1682 = vmatprep.subr.mxu0 0.0
    %1683 = vmatpush1.msra.mxu0 0.0
    %1684 = vmatprep.subr.mxu0 0.0
    %1685 = vmatpush1.msra.mxu0 0.0
    %1686 = vmatprep.subr.mxu0 0.0
    %1687 = vmatpush1.msra.mxu0 0.0
    %1688 = vmatprep.subr.mxu0 0.0
    %1689 = vmatpush1.msra.mxu0 0.0
    %1690 = vmatprep.subr.mxu0 0.0
    %1691 = vmatpush1.msra.mxu0 0.0
    %1692 = vmatprep.subr.mxu0 0.0
    %1693 = vmatpush1.msra.mxu0 0.0
    %1694 = vmatprep.subr.mxu0 0.0
    %1695 = vmatpush1.msra.mxu0 0.0
    %1696 = vmatprep.subr.mxu0 0.0
    %1697 = vmatpush1.msra.mxu0 0.0
    %1698 = vmatprep.subr.mxu0 0.0
    %1699 = vmatpush1.msra.mxu0 0.0
    %1700 = vmatprep.subr.mxu0 0.0
    %1701 = vmatpush1.msra.mxu0 0.0
    %1702 = vmatprep.subr.mxu0 0.0
    %1703 = vmatpush1.msra.mxu0 0.0
    %1704 = vmatprep.subr.mxu0 0.0
    %1705 = vmatpush1.msra.mxu0 0.0
    %1706 = vmatprep.mubr.f32.mxu0 0.0
    %1707 = vmatmul.mubr.f32.gmra.mrb[0].mxu0 %v443
    %v1708 = vpop.f32.mrb[0].mxu0
    %v1709 = vadd.f32 %v439, %v1708
    %v1710 = vpop.f32.mrb[0].mxu0
    %1711 = vmatprep.mubr.f32.mxu0 0.0
    %1712 = vmatmul.mubr.f32.gmra.mrb[0].mxu0 %v446
    %v1713 = vpop.f32.mrb[0].mxu0
    %v1714 = vadd.f32 %v439, %v1713
    %v1715 = vpop.f32.mrb[0].mxu0
    %1716 = vmatprep.mubr.f32.mxu0 0.0
    %1717 = vmatmul.mubr.f32.gmra.mrb[0].mxu0 %v449
    %v1718 = vpop.f32.mrb[0].mxu0
    %v1719 = vadd.f32 %v439, %v1718
    %v1720 = vpop.f32.mrb[0].mxu0
    %1721 = vmatprep.mubr.f32.mxu0 0.0
    %1722 = vmatmul.mubr.f32.gmra.mrb[0].mxu0 %v452
    %v1723 = vpop.f32.mrb[0].mxu0
    %v1724 = vadd.f32 %v439, %v1723
    %v1725 = vpop.f32.mrb[0].mxu0
    %1726 = vmatprep.mubr.f32.mxu0 0.0
    %1727 = vmatmul.mubr.f32.gmra.mrb[0].mxu0 %v455
    %v1728 = vpop.f32.mrb[0].mxu0
    %v1729 = vadd.f32 %v439, %v1728
    %v1730 = vpop.f32.mrb[0].mxu0
    %1731 = vmatprep.mubr.f32.mxu0 0.0
    %1732 = vmatmul.mubr.f32.gmra.mrb[0].mxu0 %v458
    %v1733 = vpop.f32.mrb[0].mxu0
    %v1734 = vadd.f32 %v439, %v1733
    %v1735 = vpop.f32.mrb[0].mxu0
    %1736 = vmatprep.mubr.f32.mxu0 0.0
    %1737 = vmatmul.mubr.f32.gmra.mrb[0].mxu0 %v461
    %v1738 = vpop.f32.mrb[0].mxu0
    %v1739 = vadd.f32 %v439, %v1738
    %v1740 = vpop.f32.mrb[0].mxu0
    %1741 = vmatprep.mubr.f32.mxu0 0.0
    %1742 = vmatmul.mubr.f32.gmra.mrb[0].mxu0 %v464
    %v1743 = vpop.f32.mrb[0].mxu0
    %v1744 = vadd.f32 %v439, %v1743
    %v1745 = vpop.f32.mrb[0].mxu0
    %1746 = vmatprep.mubr.f32.mxu0 0.0
    %1747 = vmatmul.mubr.f32.gmra.mrb[0].mxu0 %v467
    %v1748 = vpop.f32.mrb[0].mxu0
    %v1749 = vadd.f32 %v439, %v1748
    %v1750 = vpop.f32.mrb[0].mxu0
    %1751 = vmatprep.mubr.f32.mxu0 0.0
    %1752 = vmatmul.mubr.f32.gmra.mrb[0].mxu0 %v470
    %v1753 = vpop.f32.mrb[0].mxu0
    %v1754 = vadd.f32 %v439, %v1753
    %v1755 = vpop.f32.mrb[0].mxu0
    %1756 = vmatprep.mubr.f32.mxu0 0.0
    %1757 = vmatmul.mubr.f32.gmra.mrb[0].mxu0 %v473
    %v1758 = vpop.f32.mrb[0].mxu0
    %v1759 = vadd.f32 %v439, %v1758
    %v1760 = vpop.f32.mrb[0].mxu0
    %1761 = vmatprep.mubr.f32.mxu0 0.0
    %1762 = vmatmul.mubr.f32.gmra.mrb[0].mxu0 %v476
    %v1763 = vpop.f32.mrb[0].mxu0
    %v1764 = vadd.f32 %v439, %v1763
    %v1765 = vpop.f32.mrb[0].mxu0
    %1766 = vmatprep.mubr.f32.mxu0 0.0
    %1767 = vmatmul.mubr.f32.gmra.mrb[0].mxu0 %v479
    %v1768 = vpop.f32.mrb[0].mxu0
    %v1769 = vadd.f32 %v439, %v1768
    %v1770 = vpop.f32.mrb[0].mxu0
    %1771 = vmatprep.mubr.f32.mxu0 0.0
    %1772 = vmatmul.mubr.f32.gmra.mrb[0].mxu0 %v482
    %v1773 = vpop.f32.mrb[0].mxu0
    %v1774 = vadd.f32 %v439, %v1773
    %v1775 = vpop.f32.mrb[0].mxu0
    %1776 = vmatprep.mubr.f32.mxu0 0.0
    %1777 = vmatmul.mubr.f32.gmra.mrb[0].mxu0 %v485
    %v1778 = vpop.f32.mrb[0].mxu0
    %v1779 = vadd.f32 %v439, %v1778
    %v1780 = vpop.f32.mrb[0].mxu0
    %1781 = vmatprep.mubr.f32.mxu0 0.0
    %1782 = vmatmul.mubr.f32.gmra.mrb[0].mxu0 %v488
    %v1783 = vpop.f32.mrb[0].mxu0
    %v1784 = vadd.f32 %v439, %v1783
    %v1785 = vpop.f32.mrb[0].mxu0
    %1786 = vmatprep.mubr.f32.mxu0 0.0
    %1787 = vmatmul.mubr.f32.gmra.mrb[0].mxu0 %v491
    %v1788 = vpop.f32.mrb[0].mxu0
    %v1789 = vadd.f32 %v439, %v1788
    %v1790 = vpop.f32.mrb[0].mxu0
    %1791 = vmatprep.mubr.f32.mxu0 0.0
    %1792 = vmatmul.mubr.f32.gmra.mrb[0].mxu0 %v494
    %v1793 = vpop.f32.mrb[0].mxu0
    %v1794 = vadd.f32 %v439, %v1793
    %v1795 = vpop.f32.mrb[0].mxu0
    %1796 = vmatprep.mubr.f32.mxu0 0.0
    %1797 = vmatmul.mubr.f32.gmra.mrb[0].mxu0 %v497
    %v1798 = vpop.f32.mrb[0].mxu0
    %v1799 = vadd.f32 %v439, %v1798
    %v1800 = vpop.f32.mrb[0].mxu0
    %1801 = vmatprep.mubr.f32.mxu0 0.0
    %1802 = vmatmul.mubr.f32.gmra.mrb[0].mxu0 %v500
    %v1803 = vpop.f32.mrb[0].mxu0
    %v1804 = vadd.f32 %v439, %v1803
    %v1805 = vpop.f32.mrb[0].mxu0
    %1806 = vmatprep.mubr.f32.mxu0 0.0
    %1807 = vmatmul.mubr.f32.gmra.mrb[0].mxu0 %v503
    %v1808 = vpop.f32.mrb[0].mxu0
    %v1809 = vadd.f32 %v439, %v1808
    %v1810 = vpop.f32.mrb[0].mxu0
    %1811 = vmatprep.mubr.f32.mxu0 0.0
    %1812 = vmatmul.mubr.f32.gmra.mrb[0].mxu0 %v506
    %v1813 = vpop.f32.mrb[0].mxu0
    %v1814 = vadd.f32 %v439, %v1813
    %v1815 = vpop.f32.mrb[0].mxu0
    %1816 = vmatprep.mubr.f32.mxu0 0.0
    %1817 = vmatmul.mubr.f32.gmra.mrb[0].mxu0 %v509
    %v1818 = vpop.f32.mrb[0].mxu0
    %v1819 = vadd.f32 %v439, %v1818
    %v1820 = vpop.f32.mrb[0].mxu0
    %1821 = vmatprep.mubr.f32.mxu0 0.0
    %1822 = vmatmul.mubr.f32.gmra.mrb[0].mxu0 %v512
    %v1823 = vpop.f32.mrb[0].mxu0
    %v1824 = vadd.f32 %v439, %v1823
    %v1825 = vpop.f32.mrb[0].mxu0
    %1826 = vmatprep.mubr.f32.mxu0 0.0
    %1827 = vmatmul.mubr.f32.gmra.mrb[0].mxu0 %v515
    %v1828 = vpop.f32.mrb[0].mxu0
    %v1829 = vadd.f32 %v439, %v1828
    %v1830 = vpop.f32.mrb[0].mxu0
    %1831 = vmatprep.mubr.f32.mxu0 0.0
    %1832 = vmatmul.mubr.f32.gmra.mrb[0].mxu0 %v518
    %v1833 = vpop.f32.mrb[0].mxu0
    %v1834 = vadd.f32 %v439, %v1833
    %v1835 = vpop.f32.mrb[0].mxu0
    %1836 = vmatprep.mubr.f32.mxu0 0.0
    %1837 = vmatmul.mubr.f32.gmra.mrb[0].mxu0 %v521
    %v1838 = vpop.f32.mrb[0].mxu0
    %v1839 = vadd.f32 %v439, %v1838
    %v1840 = vpop.f32.mrb[0].mxu0
    %1841 = vmatprep.mubr.f32.mxu0 0.0
    %1842 = vmatmul.mubr.f32.gmra.mrb[0].mxu0 %v524
    %v1843 = vpop.f32.mrb[0].mxu0
    %v1844 = vadd.f32 %v439, %v1843
    %v1845 = vpop.f32.mrb[0].mxu0
    %1846 = vmatprep.mubr.f32.mxu0 0.0
    %1847 = vmatmul.mubr.f32.gmra.mrb[0].mxu0 %v527
    %v1848 = vpop.f32.mrb[0].mxu0
    %v1849 = vadd.f32 %v439, %v1848
    %v1850 = vpop.f32.mrb[0].mxu0
    %1851 = vmatprep.mubr.f32.mxu0 0.0
    %1852 = vmatmul.mubr.f32.gmra.mrb[0].mxu0 %v530
    %v1853 = vpop.f32.mrb[0].mxu0
    %v1854 = vadd.f32 %v439, %v1853
    %v1855 = vpop.f32.mrb[0].mxu0
    %1856 = vmatprep.mubr.f32.mxu0 0.0
    %1857 = vmatmul.mubr.f32.gmra.mrb[0].mxu0 %v533
    %v1858 = vpop.f32.mrb[0].mxu0
    %v1859 = vadd.f32 %v439, %v1858
    %v1860 = vpop.f32.mrb[0].mxu0
    %1861 = vmatprep.mubr.f32.mxu0 0.0
    %1862 = vmatmul.mubr.f32.gmra.mrb[0].mxu0 %v536
    %v1863 = vpop.f32.mrb[0].mxu0
    %v1864 = vadd.f32 %v439, %v1863
    %v1865 = vpop.f32.mrb[0].mxu0
    %1866 = vmatprep.mubr.f32.mxu0 0.0
    %1867 = vmatmul.mubr.f32.gmra.mrb[0].mxu0 %v539
    %v1868 = vpop.f32.mrb[0].mxu0
    %v1869 = vadd.f32 %v439, %v1868
    %v1870 = vpop.f32.mrb[0].mxu0
    %1871 = vmatprep.mubr.f32.mxu0 0.0
    %1872 = vmatmul.mubr.f32.gmra.mrb[0].mxu0 %v542
    %v1873 = vpop.f32.mrb[0].mxu0
    %v1874 = vadd.f32 %v439, %v1873
    %v1875 = vpop.f32.mrb[0].mxu0
    %1876 = vmatprep.mubr.f32.mxu0 0.0
    %1877 = vmatmul.mubr.f32.gmra.mrb[0].mxu0 %v545
    %v1878 = vpop.f32.mrb[0].mxu0
    %v1879 = vadd.f32 %v439, %v1878
    %v1880 = vpop.f32.mrb[0].mxu0
    %1881 = vmatprep.mubr.f32.mxu0 0.0
    %1882 = vmatmul.mubr.f32.gmra.mrb[0].mxu0 %v548
    %v1883 = vpop.f32.mrb[0].mxu0
    %v1884 = vadd.f32 %v439, %v1883
    %v1885 = vpop.f32.mrb[0].mxu0
    %1886 = vmatprep.mubr.f32.mxu0 0.0
    %1887 = vmatmul.mubr.f32.gmra.mrb[0].mxu0 %v551
    %v1888 = vpop.f32.mrb[0].mxu0
    %v1889 = vadd.f32 %v439, %v1888
    %v1890 = vpop.f32.mrb[0].mxu0
    %1891 = vmatprep.mubr.f32.mxu0 0.0
    %1892 = vmatmul.mubr.f32.gmra.mrb[0].mxu0 %v554
    %v1893 = vpop.f32.mrb[0].mxu0
    %v1894 = vadd.f32 %v439, %v1893
    %v1895 = vpop.f32.mrb[0].mxu0
    %1896 = vmatprep.mubr.f32.mxu0 0.0
    %1897 = vmatmul.mubr.f32.gmra.mrb[0].mxu0 %v557
    %v1898 = vpop.f32.mrb[0].mxu0
    %v1899 = vadd.f32 %v439, %v1898
    %v1900 = vpop.f32.mrb[0].mxu0
    %1901 = vmatprep.mubr.f32.mxu0 0.0
    %1902 = vmatmul.mubr.f32.gmra.mrb[0].mxu0 %v560
    %v1903 = vpop.f32.mrb[0].mxu0
    %v1904 = vadd.f32 %v439, %v1903
    %v1905 = vpop.f32.mrb[0].mxu0
    %1906 = vmatprep.mubr.f32.mxu0 0.0
    %1907 = vmatmul.mubr.f32.gmra.mrb[0].mxu0 %v563
    %v1908 = vpop.f32.mrb[0].mxu0
    %v1909 = vadd.f32 %v439, %v1908
    %v1910 = vpop.f32.mrb[0].mxu0
    %1911 = vmatprep.mubr.f32.mxu0 0.0
    %1912 = vmatmul.mubr.f32.gmra.mrb[0].mxu0 %v566
    %v1913 = vpop.f32.mrb[0].mxu0
    %v1914 = vadd.f32 %v439, %v1913
    %v1915 = vpop.f32.mrb[0].mxu0
    %1916 = vmatprep.mubr.f32.mxu0 0.0
    %1917 = vmatmul.mubr.f32.gmra.mrb[0].mxu0 %v569
    %v1918 = vpop.f32.mrb[0].mxu0
    %v1919 = vadd.f32 %v439, %v1918
    %v1920 = vpop.f32.mrb[0].mxu0
    %1921 = vmatprep.mubr.f32.mxu0 0.0
    %1922 = vmatmul.mubr.f32.gmra.mrb[0].mxu0 %v572
    %v1923 = vpop.f32.mrb[0].mxu0
    %v1924 = vadd.f32 %v439, %v1923
    %v1925 = vpop.f32.mrb[0].mxu0
    %1926 = vmatprep.mubr.f32.mxu0 0.0
    %1927 = vmatmul.mubr.f32.gmra.mrb[0].mxu0 %v575
    %v1928 = vpop.f32.mrb[0].mxu0
    %v1929 = vadd.f32 %v439, %v1928
    %v1930 = vpop.f32.mrb[0].mxu0
    %1931 = vmatprep.mubr.f32.mxu0 0.0
    %1932 = vmatmul.mubr.f32.gmra.mrb[0].mxu0 %v578
    %v1933 = vpop.f32.mrb[0].mxu0
    %v1934 = vadd.f32 %v439, %v1933
    %v1935 = vpop.f32.mrb[0].mxu0
    %1936 = vmatprep.mubr.f32.mxu0 0.0
    %1937 = vmatmul.mubr.f32.gmra.mrb[0].mxu0 %v581
    %v1938 = vpop.f32.mrb[0].mxu0
    %v1939 = vadd.f32 %v439, %v1938
    %v1940 = vpop.f32.mrb[0].mxu0
    %1941 = vmatprep.mubr.f32.mxu0 0.0
    %1942 = vmatmul.mubr.f32.gmra.mrb[0].mxu0 %v584
    %v1943 = vpop.f32.mrb[0].mxu0
    %v1944 = vadd.f32 %v439, %v1943
    %v1945 = vpop.f32.mrb[0].mxu0
    %1946 = vmatprep.mubr.f32.mxu0 0.0
    %1947 = vmatmul.mubr.f32.gmra.mrb[0].mxu0 %v587
    %v1948 = vpop.f32.mrb[0].mxu0
    %v1949 = vadd.f32 %v439, %v1948
    %v1950 = vpop.f32.mrb[0].mxu0
    %1951 = vmatprep.mubr.f32.mxu0 0.0
    %1952 = vmatmul.mubr.f32.gmra.mrb[0].mxu0 %v590
    %v1953 = vpop.f32.mrb[0].mxu0
    %v1954 = vadd.f32 %v439, %v1953
    %v1955 = vpop.f32.mrb[0].mxu0
    %1956 = vmatprep.mubr.f32.mxu0 0.0
    %1957 = vmatmul.mubr.f32.gmra.mrb[0].mxu0 %v593
    %v1958 = vpop.f32.mrb[0].mxu0
    %v1959 = vadd.f32 %v439, %v1958
    %v1960 = vpop.f32.mrb[0].mxu0
    %1961 = vmatprep.mubr.f32.mxu0 0.0
    %1962 = vmatmul.mubr.f32.gmra.mrb[0].mxu0 %v596
    %v1963 = vpop.f32.mrb[0].mxu0
    %v1964 = vadd.f32 %v439, %v1963
    %v1965 = vpop.f32.mrb[0].mxu0
    %1966 = vmatprep.mubr.f32.mxu0 0.0
    %1967 = vmatmul.mubr.f32.gmra.mrb[0].mxu0 %v599
    %v1968 = vpop.f32.mrb[0].mxu0
    %v1969 = vadd.f32 %v439, %v1968
    %v1970 = vpop.f32.mrb[0].mxu0
    %1971 = vmatprep.mubr.f32.mxu0 0.0
    %1972 = vmatmul.mubr.f32.gmra.mrb[0].mxu0 %v602
    %v1973 = vpop.f32.mrb[0].mxu0
    %v1974 = vadd.f32 %v439, %v1973
    %v1975 = vpop.f32.mrb[0].mxu0
    %1976 = vmatprep.mubr.f32.mxu0 0.0
    %1977 = vmatmul.mubr.f32.gmra.mrb[0].mxu0 %v605
    %v1978 = vpop.f32.mrb[0].mxu0
    %v1979 = vadd.f32 %v439, %v1978
    %v1980 = vpop.f32.mrb[0].mxu0
    %1981 = vmatprep.mubr.f32.mxu0 0.0
    %1982 = vmatmul.mubr.f32.gmra.mrb[0].mxu0 %v608
    %v1983 = vpop.f32.mrb[0].mxu0
    %v1984 = vadd.f32 %v439, %v1983
    %v1985 = vpop.f32.mrb[0].mxu0
    %1986 = vmatprep.mubr.f32.mxu0 0.0
    %1987 = vmatmul.mubr.f32.gmra.mrb[0].mxu0 %v611
    %v1988 = vpop.f32.mrb[0].mxu0
    %v1989 = vadd.f32 %v439, %v1988
    %v1990 = vpop.f32.mrb[0].mxu0
    %1991 = vmatprep.mubr.f32.mxu0 0.0
    %1992 = vmatmul.mubr.f32.gmra.mrb[0].mxu0 %v614
    %v1993 = vpop.f32.mrb[0].mxu0
    %v1994 = vadd.f32 %v439, %v1993
    %v1995 = vpop.f32.mrb[0].mxu0
    %1996 = vmatprep.mubr.f32.mxu0 0.0
    %1997 = vmatmul.mubr.f32.gmra.mrb[0].mxu0 %v617
    %v1998 = vpop.f32.mrb[0].mxu0
    %v1999 = vadd.f32 %v439, %v1998
    %v2000 = vpop.f32.mrb[0].mxu0
    %2001 = vmatprep.mubr.f32.mxu0 0.0
    %2002 = vmatmul.mubr.f32.gmra.mrb[0].mxu0 %v620
    %v2003 = vpop.f32.mrb[0].mxu0
    %v2004 = vadd.f32 %v439, %v2003
    %v2005 = vpop.f32.mrb[0].mxu0
    %2006 = vmatprep.mubr.f32.mxu0 0.0
    %2007 = vmatmul.mubr.f32.gmra.mrb[0].mxu0 %v623
    %v2008 = vpop.f32.mrb[0].mxu0
    %v2009 = vadd.f32 %v439, %v2008
    %v2010 = vpop.f32.mrb[0].mxu0
    %2011 = vmatprep.mubr.f32.mxu0 0.0
    %2012 = vmatmul.mubr.f32.gmra.mrb[0].mxu0 %v626
    %v2013 = vpop.f32.mrb[0].mxu0
    %v2014 = vadd.f32 %v439, %v2013
    %v2015 = vpop.f32.mrb[0].mxu0
    %2016 = vmatprep.mubr.f32.mxu0 0.0
    %2017 = vmatmul.mubr.f32.gmra.mrb[0].mxu0 %v629
    %v2018 = vpop.f32.mrb[0].mxu0
    %v2019 = vadd.f32 %v439, %v2018
    %v2020 = vpop.f32.mrb[0].mxu0
    %2021 = vmatprep.mubr.f32.mxu0 0.0
    %2022 = vmatmul.mubr.f32.gmra.mrb[0].mxu0 %v632
    %v2023 = vpop.f32.mrb[0].mxu0
    %v2024 = vadd.f32 %v439, %v2023
    %v2025 = vpop.f32.mrb[0].mxu0
    %2026 = vmatprep.mubr.f32.mxu0 0.0
    %2027 = vmatmul.mubr.f32.gmra.mrb[0].mxu0 %v635
    %v2028 = vpop.f32.mrb[0].mxu0
    %v2029 = vadd.f32 %v439, %v2028
    %v2030 = vpop.f32.mrb[0].mxu0
    %2031 = vmatprep.mubr.f32.mxu0 0.0
    %2032 = vmatmul.mubr.f32.gmra.mrb[0].mxu0 %v638
    %v2033 = vpop.f32.mrb[0].mxu0
    %v2034 = vadd.f32 %v439, %v2033
    %v2035 = vpop.f32.mrb[0].mxu0
    %2036 = vmatprep.mubr.f32.mxu0 0.0
    %2037 = vmatmul.mubr.f32.gmra.mrb[0].mxu0 %v641
    %v2038 = vpop.f32.mrb[0].mxu0
    %v2039 = vadd.f32 %v439, %v2038
    %v2040 = vpop.f32.mrb[0].mxu0
    %2041 = vmatprep.mubr.f32.mxu0 0.0
    %2042 = vmatmul.mubr.f32.gmra.mrb[0].mxu0 %v644
    %v2043 = vpop.f32.mrb[0].mxu0
    %v2044 = vadd.f32 %v439, %v2043
    %v2045 = vpop.f32.mrb[0].mxu0
    %2046 = vmatprep.mubr.f32.mxu0 0.0
    %2047 = vmatmul.mubr.f32.gmra.mrb[0].mxu0 %v647
    %v2048 = vpop.f32.mrb[0].mxu0
    %v2049 = vadd.f32 %v439, %v2048
    %v2050 = vpop.f32.mrb[0].mxu0
    %2051 = vmatprep.mubr.f32.mxu0 0.0
    %2052 = vmatmul.mubr.f32.gmra.mrb[0].mxu0 %v650
    %v2053 = vpop.f32.mrb[0].mxu0
    %v2054 = vadd.f32 %v439, %v2053
    %v2055 = vpop.f32.mrb[0].mxu0
    %2056 = vmatprep.mubr.f32.mxu0 0.0
    %2057 = vmatmul.mubr.f32.gmra.mrb[0].mxu0 %v653
    %v2058 = vpop.f32.mrb[0].mxu0
    %v2059 = vadd.f32 %v439, %v2058
    %v2060 = vpop.f32.mrb[0].mxu0
    %2061 = vmatprep.mubr.f32.mxu0 0.0
    %2062 = vmatmul.mubr.f32.gmra.mrb[0].mxu0 %v656
    %v2063 = vpop.f32.mrb[0].mxu0
    %v2064 = vadd.f32 %v439, %v2063
    %v2065 = vpop.f32.mrb[0].mxu0
    %2066 = vmatprep.mubr.f32.mxu0 0.0
    %2067 = vmatmul.mubr.f32.gmra.mrb[0].mxu0 %v659
    %v2068 = vpop.f32.mrb[0].mxu0
    %v2069 = vadd.f32 %v439, %v2068
    %v2070 = vpop.f32.mrb[0].mxu0
    %2071 = vmatprep.mubr.f32.mxu0 0.0
    %2072 = vmatmul.mubr.f32.gmra.mrb[0].mxu0 %v662
    %v2073 = vpop.f32.mrb[0].mxu0
    %v2074 = vadd.f32 %v439, %v2073
    %v2075 = vpop.f32.mrb[0].mxu0
    %2076 = vmatprep.mubr.f32.mxu0 0.0
    %2077 = vmatmul.mubr.f32.gmra.mrb[0].mxu0 %v665
    %v2078 = vpop.f32.mrb[0].mxu0
    %v2079 = vadd.f32 %v439, %v2078
    %v2080 = vpop.f32.mrb[0].mxu0
    %2081 = vmatprep.mubr.f32.mxu0 0.0
    %2082 = vmatmul.mubr.f32.gmra.mrb[0].mxu0 %v668
    %v2083 = vpop.f32.mrb[0].mxu0
    %v2084 = vadd.f32 %v439, %v2083
    %v2085 = vpop.f32.mrb[0].mxu0
    %2086 = vmatprep.mubr.f32.mxu0 0.0
    %2087 = vmatmul.mubr.f32.gmra.mrb[0].mxu0 %v671
    %v2088 = vpop.f32.mrb[0].mxu0
    %v2089 = vadd.f32 %v439, %v2088
    %v2090 = vpop.f32.mrb[0].mxu0
    %2091 = vmatprep.mubr.f32.mxu0 0.0
    %2092 = vmatmul.mubr.f32.gmra.mrb[0].mxu0 %v674
    %v2093 = vpop.f32.mrb[0].mxu0
    %v2094 = vadd.f32 %v439, %v2093
    %v2095 = vpop.f32.mrb[0].mxu0
    %2096 = vmatprep.mubr.f32.mxu0 0.0
    %2097 = vmatmul.mubr.f32.gmra.mrb[0].mxu0 %v677
    %v2098 = vpop.f32.mrb[0].mxu0
    %v2099 = vadd.f32 %v439, %v2098
    %v2100 = vpop.f32.mrb[0].mxu0
    %2101 = vmatprep.mubr.f32.mxu0 0.0
    %2102 = vmatmul.mubr.f32.gmra.mrb[0].mxu0 %v680
    %v2103 = vpop.f32.mrb[0].mxu0
    %v2104 = vadd.f32 %v439, %v2103
    %v2105 = vpop.f32.mrb[0].mxu0
    %2106 = vmatprep.mubr.f32.mxu0 0.0
    %2107 = vmatmul.mubr.f32.gmra.mrb[0].mxu0 %v683
    %v2108 = vpop.f32.mrb[0].mxu0
    %v2109 = vadd.f32 %v439, %v2108
    %v2110 = vpop.f32.mrb[0].mxu0
    %2111 = vmatprep.mubr.f32.mxu0 0.0
    %2112 = vmatmul.mubr.f32.gmra.mrb[0].mxu0 %v686
    %v2113 = vpop.f32.mrb[0].mxu0
    %v2114 = vadd.f32 %v439, %v2113
    %v2115 = vpop.f32.mrb[0].mxu0
    %2116 = vmatprep.mubr.f32.mxu0 0.0
    %2117 = vmatmul.mubr.f32.gmra.mrb[0].mxu0 %v689
    %v2118 = vpop.f32.mrb[0].mxu0
    %v2119 = vadd.f32 %v439, %v2118
    %v2120 = vpop.f32.mrb[0].mxu0
    %2121 = vmatprep.mubr.f32.mxu0 0.0
    %2122 = vmatmul.mubr.f32.gmra.mrb[0].mxu0 %v692
    %v2123 = vpop.f32.mrb[0].mxu0
    %v2124 = vadd.f32 %v439, %v2123
    %v2125 = vpop.f32.mrb[0].mxu0
    %2126 = vmatprep.mubr.f32.mxu0 0.0
    %2127 = vmatmul.mubr.f32.gmra.mrb[0].mxu0 %v695
    %v2128 = vpop.f32.mrb[0].mxu0
    %v2129 = vadd.f32 %v439, %v2128
    %v2130 = vpop.f32.mrb[0].mxu0
    %2131 = vmatprep.mubr.f32.mxu0 0.0
    %2132 = vmatmul.mubr.f32.gmra.mrb[0].mxu0 %v698
    %v2133 = vpop.f32.mrb[0].mxu0
    %v2134 = vadd.f32 %v439, %v2133
    %v2135 = vpop.f32.mrb[0].mxu0
    %2136 = vmatprep.mubr.f32.mxu0 0.0
    %2137 = vmatmul.mubr.f32.gmra.mrb[0].mxu0 %v701
    %v2138 = vpop.f32.mrb[0].mxu0
    %v2139 = vadd.f32 %v439, %v2138
    %v2140 = vpop.f32.mrb[0].mxu0
    %2141 = vmatprep.mubr.f32.mxu0 0.0
    %2142 = vmatmul.mubr.f32.gmra.mrb[0].mxu0 %v704
    %v2143 = vpop.f32.mrb[0].mxu0
    %v2144 = vadd.f32 %v439, %v2143
    %v2145 = vpop.f32.mrb[0].mxu0
    %2146 = vmatprep.mubr.f32.mxu0 0.0
    %2147 = vmatmul.mubr.f32.gmra.mrb[0].mxu0 %v707
    %v2148 = vpop.f32.mrb[0].mxu0
    %v2149 = vadd.f32 %v439, %v2148
    %v2150 = vpop.f32.mrb[0].mxu0
    %2151 = vmatprep.mubr.f32.mxu0 0.0
    %2152 = vmatmul.mubr.f32.gmra.mrb[0].mxu0 %v710
    %v2153 = vpop.f32.mrb[0].mxu0
    %v2154 = vadd.f32 %v439, %v2153
    %v2155 = vpop.f32.mrb[0].mxu0
    %2156 = vmatprep.mubr.f32.mxu0 0.0
    %2157 = vmatmul.mubr.f32.gmra.mrb[0].mxu0 %v713
    %v2158 = vpop.f32.mrb[0].mxu0
    %v2159 = vadd.f32 %v439, %v2158
    %v2160 = vpop.f32.mrb[0].mxu0
    %2161 = vmatprep.mubr.f32.mxu0 0.0
    %2162 = vmatmul.mubr.f32.gmra.mrb[0].mxu0 %v716
    %v2163 = vpop.f32.mrb[0].mxu0
    %v2164 = vadd.f32 %v439, %v2163
    %v2165 = vpop.f32.mrb[0].mxu0
    %2166 = vmatprep.mubr.f32.mxu0 0.0
    %2167 = vmatmul.mubr.f32.gmra.mrb[0].mxu0 %v719
    %v2168 = vpop.f32.mrb[0].mxu0
    %v2169 = vadd.f32 %v439, %v2168
    %v2170 = vpop.f32.mrb[0].mxu0
    %2171 = vmatprep.mubr.f32.mxu0 0.0
    %2172 = vmatmul.mubr.f32.gmra.mrb[0].mxu0 %v722
    %v2173 = vpop.f32.mrb[0].mxu0
    %v2174 = vadd.f32 %v439, %v2173
    %v2175 = vpop.f32.mrb[0].mxu0
    %2176 = vmatprep.mubr.f32.mxu0 0.0
    %2177 = vmatmul.mubr.f32.gmra.mrb[0].mxu0 %v725
    %v2178 = vpop.f32.mrb[0].mxu0
    %v2179 = vadd.f32 %v439, %v2178
    %v2180 = vpop.f32.mrb[0].mxu0
    %2181 = vmatprep.mubr.f32.mxu0 0.0
    %2182 = vmatmul.mubr.f32.gmra.mrb[0].mxu0 %v728
    %v2183 = vpop.f32.mrb[0].mxu0
    %v2184 = vadd.f32 %v439, %v2183
    %v2185 = vpop.f32.mrb[0].mxu0
    %2186 = vmatprep.mubr.f32.mxu0 0.0
    %2187 = vmatmul.mubr.f32.gmra.mrb[0].mxu0 %v731
    %v2188 = vpop.f32.mrb[0].mxu0
    %v2189 = vadd.f32 %v439, %v2188
    %v2190 = vpop.f32.mrb[0].mxu0
    %2191 = vmatprep.mubr.f32.mxu0 0.0
    %2192 = vmatmul.mubr.f32.gmra.mrb[0].mxu0 %v734
    %v2193 = vpop.f32.mrb[0].mxu0
    %v2194 = vadd.f32 %v439, %v2193
    %v2195 = vpop.f32.mrb[0].mxu0
    %2196 = vmatprep.mubr.f32.mxu0 0.0
    %2197 = vmatmul.mubr.f32.gmra.mrb[0].mxu0 %v737
    %v2198 = vpop.f32.mrb[0].mxu0
    %v2199 = vadd.f32 %v439, %v2198
    %v2200 = vpop.f32.mrb[0].mxu0
    %2201 = vmatprep.mubr.f32.mxu0 0.0
    %2202 = vmatmul.mubr.f32.gmra.mrb[0].mxu0 %v740
    %v2203 = vpop.f32.mrb[0].mxu0
    %v2204 = vadd.f32 %v439, %v2203
    %v2205 = vpop.f32.mrb[0].mxu0
    %2206 = vmatprep.mubr.f32.mxu0 0.0
    %2207 = vmatmul.mubr.f32.gmra.mrb[0].mxu0 %v743
    %v2208 = vpop.f32.mrb[0].mxu0
    %v2209 = vadd.f32 %v439, %v2208
    %v2210 = vpop.f32.mrb[0].mxu0
    %2211 = vmatprep.mubr.f32.mxu0 0.0
    %2212 = vmatmul.mubr.f32.gmra.mrb[0].mxu0 %v746
    %v2213 = vpop.f32.mrb[0].mxu0
    %v2214 = vadd.f32 %v439, %v2213
    %v2215 = vpop.f32.mrb[0].mxu0
    %2216 = vmatprep.mubr.f32.mxu0 0.0
    %2217 = vmatmul.mubr.f32.gmra.mrb[0].mxu0 %v749
    %v2218 = vpop.f32.mrb[0].mxu0
    %v2219 = vadd.f32 %v439, %v2218
    %v2220 = vpop.f32.mrb[0].mxu0
    %2221 = vmatprep.mubr.f32.mxu0 0.0
    %2222 = vmatmul.mubr.f32.gmra.mrb[0].mxu0 %v752
    %v2223 = vpop.f32.mrb[0].mxu0
    %v2224 = vadd.f32 %v439, %v2223
    %v2225 = vpop.f32.mrb[0].mxu0
    %2226 = vmatprep.mubr.f32.mxu0 0.0
    %2227 = vmatmul.mubr.f32.gmra.mrb[0].mxu0 %v755
    %v2228 = vpop.f32.mrb[0].mxu0
    %v2229 = vadd.f32 %v439, %v2228
    %v2230 = vpop.f32.mrb[0].mxu0
    %2231 = vmatprep.mubr.f32.mxu0 0.0
    %2232 = vmatmul.mubr.f32.gmra.mrb[0].mxu0 %v758
    %v2233 = vpop.f32.mrb[0].mxu0
    %v2234 = vadd.f32 %v439, %v2233
    %v2235 = vpop.f32.mrb[0].mxu0
    %2236 = vmatprep.mubr.f32.mxu0 0.0
    %2237 = vmatmul.mubr.f32.gmra.mrb[0].mxu0 %v761
    %v2238 = vpop.f32.mrb[0].mxu0
    %v2239 = vadd.f32 %v439, %v2238
    %v2240 = vpop.f32.mrb[0].mxu0
    %2241 = vmatprep.mubr.f32.mxu0 0.0
    %2242 = vmatmul.mubr.f32.gmra.mrb[0].mxu0 %v764
    %v2243 = vpop.f32.mrb[0].mxu0
    %v2244 = vadd.f32 %v439, %v2243
    %v2245 = vpop.f32.mrb[0].mxu0
    %2246 = vmatprep.mubr.f32.mxu0 0.0
    %2247 = vmatmul.mubr.f32.gmra.mrb[0].mxu0 %v767
    %v2248 = vpop.f32.mrb[0].mxu0
    %v2249 = vadd.f32 %v439, %v2248
    %v2250 = vpop.f32.mrb[0].mxu0
    %2251 = vmatprep.mubr.f32.mxu0 0.0
    %2252 = vmatmul.mubr.f32.gmra.mrb[0].mxu0 %v770
    %v2253 = vpop.f32.mrb[0].mxu0
    %v2254 = vadd.f32 %v439, %v2253
    %v2255 = vpop.f32.mrb[0].mxu0
    %2256 = vmatprep.mubr.f32.mxu0 0.0
    %2257 = vmatmul.mubr.f32.gmra.mrb[0].mxu0 %v773
    %v2258 = vpop.f32.mrb[0].mxu0
    %v2259 = vadd.f32 %v439, %v2258
    %v2260 = vpop.f32.mrb[0].mxu0
    %2261 = vmatprep.mubr.f32.mxu0 0.0
    %2262 = vmatmul.mubr.f32.gmra.mrb[0].mxu0 %v776
    %v2263 = vpop.f32.mrb[0].mxu0
    %v2264 = vadd.f32 %v439, %v2263
    %v2265 = vpop.f32.mrb[0].mxu0
    %2266 = vmatprep.mubr.f32.mxu0 0.0
    %2267 = vmatmul.mubr.f32.gmra.mrb[0].mxu0 %v779
    %v2268 = vpop.f32.mrb[0].mxu0
    %v2269 = vadd.f32 %v439, %v2268
    %v2270 = vpop.f32.mrb[0].mxu0
    %2271 = vmatprep.mubr.f32.mxu0 0.0
    %2272 = vmatmul.mubr.f32.gmra.mrb[0].mxu0 %v782
    %v2273 = vpop.f32.mrb[0].mxu0
    %v2274 = vadd.f32 %v439, %v2273
    %v2275 = vpop.f32.mrb[0].mxu0
    %2276 = vmatprep.mubr.f32.mxu0 0.0
    %2277 = vmatmul.mubr.f32.gmra.mrb[0].mxu0 %v785
    %v2278 = vpop.f32.mrb[0].mxu0
    %v2279 = vadd.f32 %v439, %v2278
    %v2280 = vpop.f32.mrb[0].mxu0
    %2281 = vmatprep.mubr.f32.mxu0 0.0
    %2282 = vmatmul.mubr.f32.gmra.mrb[0].mxu0 %v788
    %v2283 = vpop.f32.mrb[0].mxu0
    %v2284 = vadd.f32 %v439, %v2283
    %v2285 = vpop.f32.mrb[0].mxu0
    %2286 = vmatprep.mubr.f32.mxu0 0.0
    %2287 = vmatmul.mubr.f32.gmra.mrb[0].mxu0 %v791
    %v2288 = vpop.f32.mrb[0].mxu0
    %v2289 = vadd.f32 %v439, %v2288
    %v2290 = vpop.f32.mrb[0].mxu0
    %2291 = vmatprep.mubr.f32.mxu0 0.0
    %2292 = vmatmul.mubr.f32.gmra.mrb[0].mxu0 %v794
    %v2293 = vpop.f32.mrb[0].mxu0
    %v2294 = vadd.f32 %v439, %v2293
    %v2295 = vpop.f32.mrb[0].mxu0
    %2296 = vmatprep.mubr.f32.mxu0 0.0
    %2297 = vmatmul.mubr.f32.gmra.mrb[0].mxu0 %v797
    %v2298 = vpop.f32.mrb[0].mxu0
    %v2299 = vadd.f32 %v439, %v2298
    %v2300 = vpop.f32.mrb[0].mxu0
    %2301 = vmatprep.mubr.f32.mxu0 0.0
    %2302 = vmatmul.mubr.f32.gmra.mrb[0].mxu0 %v800
    %v2303 = vpop.f32.mrb[0].mxu0
    %v2304 = vadd.f32 %v439, %v2303
    %v2305 = vpop.f32.mrb[0].mxu0
    %2306 = vmatprep.mubr.f32.mxu0 0.0
    %2307 = vmatmul.mubr.f32.gmra.mrb[0].mxu0 %v803
    %v2308 = vpop.f32.mrb[0].mxu0
    %v2309 = vadd.f32 %v439, %v2308
    %v2310 = vpop.f32.mrb[0].mxu0
    %2311 = vmatprep.mubr.f32.mxu0 0.0
    %2312 = vmatmul.mubr.f32.gmra.mrb[0].mxu0 %v806
    %v2313 = vpop.f32.mrb[0].mxu0
    %v2314 = vadd.f32 %v439, %v2313
    %v2315 = vpop.f32.mrb[0].mxu0
    %2316 = vmatprep.mubr.f32.mxu0 0.0
    %2317 = vmatmul.mubr.f32.gmra.mrb[0].mxu0 %v809
    %v2318 = vpop.f32.mrb[0].mxu0
    %v2319 = vadd.f32 %v439, %v2318
    %v2320 = vpop.f32.mrb[0].mxu0
    %2321 = vmatprep.mubr.f32.mxu0 0.0
    %2322 = vmatmul.mubr.f32.gmra.mrb[0].mxu0 %v812
    %v2323 = vpop.f32.mrb[0].mxu0
    %v2324 = vadd.f32 %v439, %v2323
    %v2325 = vpop.f32.mrb[0].mxu0
    %2326 = vmatprep.mubr.f32.mxu0 0.0
    %2327 = vmatmul.mubr.f32.gmra.mrb[0].mxu0 %v815
    %v2328 = vpop.f32.mrb[0].mxu0
    %v2329 = vadd.f32 %v439, %v2328
    %v2330 = vpop.f32.mrb[0].mxu0
    %2331 = vmatprep.mubr.f32.mxu0 0.0
    %2332 = vmatmul.mubr.f32.gmra.mrb[0].mxu0 %v818
    %v2333 = vpop.f32.mrb[0].mxu0
    %v2334 = vadd.f32 %v439, %v2333
    %v2335 = vpop.f32.mrb[0].mxu0
    %2336 = vmatprep.mubr.f32.mxu0 0.0
    %2337 = vmatmul.mubr.f32.gmra.mrb[0].mxu0 %v821
    %v2338 = vpop.f32.mrb[0].mxu0
    %v2339 = vadd.f32 %v439, %v2338
    %v2340 = vpop.f32.mrb[0].mxu0
    %2341 = vmatprep.mubr.f32.mxu0 0.0
    %2342 = vmatmul.mubr.f32.gmra.mrb[0].mxu0 %v824
    %v2343 = vpop.f32.mrb[0].mxu0
    %v2344 = vadd.f32 %v439, %v2343
    %v2345 = vpop.f32.mrb[0].mxu0
    %2346 = vmatprep.mubr.f32.mxu0 0.0
    %2347 = vmatmul.mubr.f32.gmra.mrb[0].mxu0 %v827
    %v2348 = vpop.f32.mrb[0].mxu0
    %v2349 = vadd.f32 %v439, %v2348
    %v2350 = vpop.f32.mrb[0].mxu0
    %2351 = vmatprep.mubr.f32.mxu0 0.0
    %2352 = vmatmul.mubr.f32.gmra.mrb[0].mxu0 %v830
    %v2353 = vpop.f32.mrb[0].mxu0
    %v2354 = vadd.f32 %v439, %v2353
    %v2355 = vpop.f32.mrb[0].mxu0
    %2356 = vmatprep.mubr.f32.mxu0 0.0
    %2357 = vmatmul.mubr.f32.gmra.mrb[0].mxu0 %v833
    %v2358 = vpop.f32.mrb[0].mxu0
    %v2359 = vadd.f32 %v439, %v2358
    %v2360 = vpop.f32.mrb[0].mxu0
    %2361 = vmatprep.mubr.f32.mxu0 0.0
    %2362 = vmatmul.mubr.f32.gmra.mrb[0].mxu0 %v836
    %v2363 = vpop.f32.mrb[0].mxu0
    %v2364 = vadd.f32 %v439, %v2363
    %v2365 = vpop.f32.mrb[0].mxu0
    %2366 = vmatprep.mubr.f32.mxu0 0.0
    %2367 = vmatmul.mubr.f32.gmra.mrb[0].mxu0 %v839
    %v2368 = vpop.f32.mrb[0].mxu0
    %v2369 = vadd.f32 %v439, %v2368
    %v2370 = vpop.f32.mrb[0].mxu0
    %2371 = vmatprep.mubr.f32.mxu0 0.0
    %2372 = vmatmul.mubr.f32.gmra.mrb[0].mxu0 %v842
    %v2373 = vpop.f32.mrb[0].mxu0
    %v2374 = vadd.f32 %v439, %v2373
    %v2375 = vpop.f32.mrb[0].mxu0
    %2376 = vmatprep.mubr.f32.mxu0 0.0
    %2377 = vmatmul.mubr.f32.gmra.mrb[0].mxu0 %v845
    %v2378 = vpop.f32.mrb[0].mxu0
    %v2379 = vadd.f32 %v439, %v2378
    %v2380 = vpop.f32.mrb[0].mxu0
    %2381 = vmatprep.mubr.f32.mxu0 0.0
    %2382 = vmatmul.mubr.f32.gmra.mrb[0].mxu0 %v848
    %v2383 = vpop.f32.mrb[0].mxu0
    %v2384 = vadd.f32 %v439, %v2383
    %v2385 = vpop.f32.mrb[0].mxu0
    %2386 = vmatprep.mubr.f32.mxu0 0.0
    %2387 = vmatmul.mubr.f32.gmra.mrb[0].mxu0 %v851
    %v2388 = vpop.f32.mrb[0].mxu0
    %v2389 = vadd.f32 %v439, %v2388
    %v2390 = vpop.f32.mrb[0].mxu0
    %2391 = vmatprep.mubr.f32.mxu0 0.0
    %2392 = vmatmul.mubr.f32.gmra.mrb[0].mxu0 %v854
    %v2393 = vpop.f32.mrb[0].mxu0
    %v2394 = vadd.f32 %v439, %v2393
    %v2395 = vpop.f32.mrb[0].mxu0
    %2396 = vmatprep.mubr.f32.mxu0 0.0
    %2397 = vmatmul.mubr.f32.gmra.mrb[0].mxu0 %v857
    %v2398 = vpop.f32.mrb[0].mxu0
    %v2399 = vadd.f32 %v439, %v2398
    %v2400 = vpop.f32.mrb[0].mxu0
    %2401 = vmatprep.mubr.f32.mxu0 0.0
    %2402 = vmatmul.mubr.f32.gmra.mrb[0].mxu0 %v860
    %v2403 = vpop.f32.mrb[0].mxu0
    %v2404 = vadd.f32 %v439, %v2403
    %v2405 = vpop.f32.mrb[0].mxu0
    %2406 = vmatprep.mubr.f32.mxu0 0.0
    %2407 = vmatmul.mubr.f32.gmra.mrb[0].mxu0 %v863
    %v2408 = vpop.f32.mrb[0].mxu0
    %v2409 = vadd.f32 %v439, %v2408
    %v2410 = vpop.f32.mrb[0].mxu0
    %2411 = vmatprep.mubr.f32.mxu0 0.0
    %2412 = vmatmul.mubr.f32.gmra.mrb[0].mxu0 %v866
    %v2413 = vpop.f32.mrb[0].mxu0
    %v2414 = vadd.f32 %v439, %v2413
    %v2415 = vpop.f32.mrb[0].mxu0
    %2416 = vmatprep.mubr.f32.mxu0 0.0
    %2417 = vmatmul.mubr.f32.gmra.mrb[0].mxu0 %v869
    %v2418 = vpop.f32.mrb[0].mxu0
    %v2419 = vadd.f32 %v439, %v2418
    %v2420 = vpop.f32.mrb[0].mxu0
    %2421 = vmatprep.mubr.f32.mxu0 0.0
    %2422 = vmatmul.mubr.f32.gmra.mrb[0].mxu0 %v872
    %v2423 = vpop.f32.mrb[0].mxu0
    %v2424 = vadd.f32 %v439, %v2423
    %v2425 = vpop.f32.mrb[0].mxu0
    %2426 = vmatprep.mubr.f32.mxu0 0.0
    %2427 = vmatmul.mubr.f32.gmra.mrb[0].mxu0 %v875
    %v2428 = vpop.f32.mrb[0].mxu0
    %v2429 = vadd.f32 %v439, %v2428
    %v2430 = vpop.f32.mrb[0].mxu0
    %2431 = vmatprep.mubr.f32.mxu0 0.0
    %2432 = vmatmul.mubr.f32.gmra.mrb[0].mxu0 %v878
    %v2433 = vpop.f32.mrb[0].mxu0
    %v2434 = vadd.f32 %v439, %v2433
    %v2435 = vpop.f32.mrb[0].mxu0
    %2436 = vmatprep.mubr.f32.mxu0 0.0
    %2437 = vmatmul.mubr.f32.gmra.mrb[0].mxu0 %v881
    %v2438 = vpop.f32.mrb[0].mxu0
    %v2439 = vadd.f32 %v439, %v2438
    %v2440 = vpop.f32.mrb[0].mxu0
    %2441 = vmatprep.mubr.f32.mxu0 0.0
    %2442 = vmatmul.mubr.f32.gmra.mrb[0].mxu0 %v884
    %v2443 = vpop.f32.mrb[0].mxu0
    %v2444 = vadd.f32 %v439, %v2443
    %v2445 = vpop.f32.mrb[0].mxu0
    %2446 = vmatprep.mubr.f32.mxu0 0.0
    %2447 = vmatmul.mubr.f32.gmra.mrb[0].mxu0 %v887
    %v2448 = vpop.f32.mrb[0].mxu0
    %v2449 = vadd.f32 %v439, %v2448
    %v2450 = vpop.f32.mrb[0].mxu0
    %2451 = vmatprep.mubr.f32.mxu0 0.0
    %2452 = vmatmul.mubr.f32.gmra.mrb[0].mxu0 %v890
    %v2453 = vpop.f32.mrb[0].mxu0
    %v2454 = vadd.f32 %v439, %v2453
    %v2455 = vpop.f32.mrb[0].mxu0
    %2456 = vmatprep.mubr.f32.mxu0 0.0
    %2457 = vmatmul.mubr.f32.gmra.mrb[0].mxu0 %v893
    %v2458 = vpop.f32.mrb[0].mxu0
    %v2459 = vadd.f32 %v439, %v2458
    %v2460 = vpop.f32.mrb[0].mxu0
    %2461 = vmatprep.mubr.f32.mxu0 0.0
    %2462 = vmatmul.mubr.f32.gmra.mrb[0].mxu0 %v896
    %v2463 = vpop.f32.mrb[0].mxu0
    %v2464 = vadd.f32 %v439, %v2463
    %v2465 = vpop.f32.mrb[0].mxu0
    %2466 = vmatprep.mubr.f32.mxu0 0.0
    %2467 = vmatmul.mubr.f32.gmra.mrb[0].mxu0 %v899
    %v2468 = vpop.f32.mrb[0].mxu0
    %v2469 = vadd.f32 %v439, %v2468
    %v2470 = vpop.f32.mrb[0].mxu0
    %2471 = vmatprep.mubr.f32.mxu0 0.0
    %2472 = vmatmul.mubr.f32.gmra.mrb[0].mxu0 %v902
    %v2473 = vpop.f32.mrb[0].mxu0
    %v2474 = vadd.f32 %v439, %v2473
    %v2475 = vpop.f32.mrb[0].mxu0
    %2476 = vmatprep.mubr.f32.mxu0 0.0
    %2477 = vmatmul.mubr.f32.gmra.mrb[0].mxu0 %v905
    %v2478 = vpop.f32.mrb[0].mxu0
    %v2479 = vadd.f32 %v439, %v2478
    %v2480 = vpop.f32.mrb[0].mxu0
    %2481 = vmatprep.mubr.f32.mxu0 0.0
    %2482 = vmatmul.mubr.f32.gmra.mrb[0].mxu0 %v908
    %v2483 = vpop.f32.mrb[0].mxu0
    %v2484 = vadd.f32 %v439, %v2483
    %v2485 = vpop.f32.mrb[0].mxu0
    %2486 = vmatprep.mubr.f32.mxu0 0.0
    %2487 = vmatmul.mubr.f32.gmra.mrb[0].mxu0 %v911
    %v2488 = vpop.f32.mrb[0].mxu0
    %v2489 = vadd.f32 %v439, %v2488
    %v2490 = vpop.f32.mrb[0].mxu0
    %2491 = vmatprep.mubr.f32.mxu0 0.0
    %2492 = vmatmul.mubr.f32.gmra.mrb[0].mxu0 %v914
    %v2493 = vpop.f32.mrb[0].mxu0
    %v2494 = vadd.f32 %v439, %v2493
    %v2495 = vpop.f32.mrb[0].mxu0
    %2496 = vmatprep.mubr.f32.mxu0 0.0
    %2497 = vmatmul.mubr.f32.gmra.mrb[0].mxu0 %v917
    %v2498 = vpop.f32.mrb[0].mxu0
    %v2499 = vadd.f32 %v439, %v2498
    %v2500 = vpop.f32.mrb[0].mxu0
    %2501 = vmatprep.mubr.f32.mxu0 0.0
    %2502 = vmatmul.mubr.f32.gmra.mrb[0].mxu0 %v920
    %v2503 = vpop.f32.mrb[0].mxu0
    %v2504 = vadd.f32 %v439, %v2503
    %v2505 = vpop.f32.mrb[0].mxu0
    %2506 = vmatprep.mubr.f32.mxu0 0.0
    %2507 = vmatmul.mubr.f32.gmra.mrb[0].mxu0 %v923
    %v2508 = vpop.f32.mrb[0].mxu0
    %v2509 = vadd.f32 %v439, %v2508
    %v2510 = vpop.f32.mrb[0].mxu0
    %2511 = vmatprep.mubr.f32.mxu0 0.0
    %2512 = vmatmul.mubr.f32.gmra.mrb[0].mxu0 %v926
    %v2513 = vpop.f32.mrb[0].mxu0
    %v2514 = vadd.f32 %v439, %v2513
    %v2515 = vpop.f32.mrb[0].mxu0
    %2516 = vmatprep.mubr.f32.mxu0 0.0
    %2517 = vmatmul.mubr.f32.gmra.mrb[0].mxu0 %v929
    %v2518 = vpop.f32.mrb[0].mxu0
    %v2519 = vadd.f32 %v439, %v2518
    %v2520 = vpop.f32.mrb[0].mxu0
    %2521 = vmatprep.mubr.f32.mxu0 0.0
    %2522 = vmatmul.mubr.f32.gmra.mrb[0].mxu0 %v932
    %v2523 = vpop.f32.mrb[0].mxu0
    %v2524 = vadd.f32 %v439, %v2523
    %v2525 = vpop.f32.mrb[0].mxu0
    %2526 = vmatprep.mubr.f32.mxu0 0.0
    %2527 = vmatmul.mubr.f32.gmra.mrb[0].mxu0 %v935
    %v2528 = vpop.f32.mrb[0].mxu0
    %v2529 = vadd.f32 %v439, %v2528
    %v2530 = vpop.f32.mrb[0].mxu0
    %2531 = vmatprep.mubr.f32.mxu0 0.0
    %2532 = vmatmul.mubr.f32.gmra.mrb[0].mxu0 %v938
    %v2533 = vpop.f32.mrb[0].mxu0
    %v2534 = vadd.f32 %v439, %v2533
    %v2535 = vpop.f32.mrb[0].mxu0
    %2536 = vmatprep.mubr.f32.mxu0 0.0
    %2537 = vmatmul.mubr.f32.gmra.mrb[0].mxu0 %v941
    %v2538 = vpop.f32.mrb[0].mxu0
    %v2539 = vadd.f32 %v439, %v2538
    %v2540 = vpop.f32.mrb[0].mxu0
    %2541 = vmatprep.mubr.f32.mxu0 0.0
    %2542 = vmatmul.mubr.f32.gmra.mrb[0].mxu0 %v944
    %v2543 = vpop.f32.mrb[0].mxu0
    %v2544 = vadd.f32 %v439, %v2543
    %v2545 = vpop.f32.mrb[0].mxu0
    %2546 = vmatprep.mubr.f32.mxu0 0.0
    %2547 = vmatmul.mubr.f32.gmra.mrb[0].mxu0 %v947
    %v2548 = vpop.f32.mrb[0].mxu0
    %v2549 = vadd.f32 %v439, %v2548
    %v2550 = vpop.f32.mrb[0].mxu0
    %2551 = vmatprep.mubr.f32.mxu0 0.0
    %2552 = vmatmul.mubr.f32.gmra.mrb[0].mxu0 %v950
    %v2553 = vpop.f32.mrb[0].mxu0
    %v2554 = vadd.f32 %v439, %v2553
    %v2555 = vpop.f32.mrb[0].mxu0
    %2556 = vmatprep.mubr.f32.mxu0 0.0
    %2557 = vmatmul.mubr.f32.gmra.mrb[0].mxu0 %v953
    %v2558 = vpop.f32.mrb[0].mxu0
    %v2559 = vadd.f32 %v439, %v2558
    %v2560 = vpop.f32.mrb[0].mxu0
    %2561 = vmatprep.mubr.f32.mxu0 0.0
    %2562 = vmatmul.mubr.f32.gmra.mrb[0].mxu0 %v956
    %v2563 = vpop.f32.mrb[0].mxu0
    %v2564 = vadd.f32 %v439, %v2563
    %v2565 = vpop.f32.mrb[0].mxu0
    %2566 = vmatprep.mubr.f32.mxu0 0.0
    %2567 = vmatmul.mubr.f32.gmra.mrb[0].mxu0 %v959
    %v2568 = vpop.f32.mrb[0].mxu0
    %v2569 = vadd.f32 %v439, %v2568
    %v2570 = vpop.f32.mrb[0].mxu0
    %2571 = vmatprep.mubr.f32.mxu0 0.0
    %2572 = vmatmul.mubr.f32.gmra.mrb[0].mxu0 %v962
    %v2573 = vpop.f32.mrb[0].mxu0
    %v2574 = vadd.f32 %v439, %v2573
    %v2575 = vpop.f32.mrb[0].mxu0
    %2576 = vmatprep.mubr.f32.mxu0 0.0
    %2577 = vmatmul.mubr.f32.gmra.mrb[0].mxu0 %v965
    %v2578 = vpop.f32.mrb[0].mxu0
    %v2579 = vadd.f32 %v439, %v2578
    %v2580 = vpop.f32.mrb[0].mxu0
    %2581 = vmatprep.mubr.f32.mxu0 0.0
    %2582 = vmatmul.mubr.f32.gmra.mrb[0].mxu0 %v968
    %v2583 = vpop.f32.mrb[0].mxu0
    %v2584 = vadd.f32 %v439, %v2583
    %v2585 = vpop.f32.mrb[0].mxu0
    %2586 = vmatprep.mubr.f32.mxu0 0.0
    %2587 = vmatmul.mubr.f32.gmra.mrb[0].mxu0 %v971
    %v2588 = vpop.f32.mrb[0].mxu0
    %v2589 = vadd.f32 %v439, %v2588
    %v2590 = vpop.f32.mrb[0].mxu0
    %2591 = vmatprep.mubr.f32.mxu0 0.0
    %2592 = vmatmul.mubr.f32.gmra.mrb[0].mxu0 %v974
    %v2593 = vpop.f32.mrb[0].mxu0
    %v2594 = vadd.f32 %v439, %v2593
    %v2595 = vpop.f32.mrb[0].mxu0
    %2596 = vmatprep.mubr.f32.mxu0 0.0
    %2597 = vmatmul.mubr.f32.gmra.mrb[0].mxu0 %v977
    %v2598 = vpop.f32.mrb[0].mxu0
    %v2599 = vadd.f32 %v439, %v2598
    %v2600 = vpop.f32.mrb[0].mxu0
    %2601 = vmatprep.mubr.f32.mxu0 0.0
    %2602 = vmatmul.mubr.f32.gmra.mrb[0].mxu0 %v980
    %v2603 = vpop.f32.mrb[0].mxu0
    %v2604 = vadd.f32 %v439, %v2603
    %v2605 = vpop.f32.mrb[0].mxu0
    %2606 = vmatprep.mubr.f32.mxu0 0.0
    %2607 = vmatmul.mubr.f32.gmra.mrb[0].mxu0 %v983
    %v2608 = vpop.f32.mrb[0].mxu0
    %v2609 = vadd.f32 %v439, %v2608
    %v2610 = vpop.f32.mrb[0].mxu0
    %2611 = vmatprep.mubr.f32.mxu0 0.0
    %2612 = vmatmul.mubr.f32.gmra.mrb[0].mxu0 %v986
    %v2613 = vpop.f32.mrb[0].mxu0
    %v2614 = vadd.f32 %v439, %v2613
    %v2615 = vpop.f32.mrb[0].mxu0
    %2616 = vmatprep.mubr.f32.mxu0 0.0
    %2617 = vmatmul.mubr.f32.gmra.mrb[0].mxu0 %v989
    %v2618 = vpop.f32.mrb[0].mxu0
    %v2619 = vadd.f32 %v439, %v2618
    %v2620 = vpop.f32.mrb[0].mxu0
    %2621 = vmatprep.mubr.f32.mxu0 0.0
    %2622 = vmatmul.mubr.f32.gmra.mrb[0].mxu0 %v992
    %v2623 = vpop.f32.mrb[0].mxu0
    %v2624 = vadd.f32 %v439, %v2623
    %v2625 = vpop.f32.mrb[0].mxu0
    %2626 = vmatprep.mubr.f32.mxu0 0.0
    %2627 = vmatmul.mubr.f32.gmra.mrb[0].mxu0 %v995
    %v2628 = vpop.f32.mrb[0].mxu0
    %v2629 = vadd.f32 %v439, %v2628
    %v2630 = vpop.f32.mrb[0].mxu0
    %2631 = vmatprep.mubr.f32.mxu0 0.0
    %2632 = vmatmul.mubr.f32.gmra.mrb[0].mxu0 %v998
    %v2633 = vpop.f32.mrb[0].mxu0
    %v2634 = vadd.f32 %v439, %v2633
    %v2635 = vpop.f32.mrb[0].mxu0
    %2636 = vmatprep.mubr.f32.mxu0 0.0
    %2637 = vmatmul.mubr.f32.gmra.mrb[0].mxu0 %v1001
    %v2638 = vpop.f32.mrb[0].mxu0
    %v2639 = vadd.f32 %v439, %v2638
    %v2640 = vpop.f32.mrb[0].mxu0
    %2641 = vmatprep.mubr.f32.mxu0 0.0
    %2642 = vmatmul.mubr.f32.gmra.mrb[0].mxu0 %v1004
    %v2643 = vpop.f32.mrb[0].mxu0
    %v2644 = vadd.f32 %v439, %v2643
    %v2645 = vpop.f32.mrb[0].mxu0
    %2646 = vmatprep.mubr.f32.mxu0 0.0
    %2647 = vmatmul.mubr.f32.gmra.mrb[0].mxu0 %v1007
    %v2648 = vpop.f32.mrb[0].mxu0
    %v2649 = vadd.f32 %v439, %v2648
    %v2650 = vpop.f32.mrb[0].mxu0
    %2651 = vmatprep.mubr.f32.mxu0 0.0
    %2652 = vmatmul.mubr.f32.gmra.mrb[0].mxu0 %v1010
    %v2653 = vpop.f32.mrb[0].mxu0
    %v2654 = vadd.f32 %v439, %v2653
    %v2655 = vpop.f32.mrb[0].mxu0
    %2656 = vmatprep.mubr.f32.mxu0 0.0
    %2657 = vmatmul.mubr.f32.gmra.mrb[0].mxu0 %v1013
    %v2658 = vpop.f32.mrb[0].mxu0
    %v2659 = vadd.f32 %v439, %v2658
    %v2660 = vpop.f32.mrb[0].mxu0
    %2661 = vmatprep.mubr.f32.mxu0 0.0
    %2662 = vmatmul.mubr.f32.gmra.mrb[0].mxu0 %v1016
    %v2663 = vpop.f32.mrb[0].mxu0
    %v2664 = vadd.f32 %v439, %v2663
    %v2665 = vpop.f32.mrb[0].mxu0
    %2666 = vmatprep.mubr.f32.mxu0 0.0
    %2667 = vmatmul.mubr.f32.gmra.mrb[0].mxu0 %v1019
    %v2668 = vpop.f32.mrb[0].mxu0
    %v2669 = vadd.f32 %v439, %v2668
    %v2670 = vpop.f32.mrb[0].mxu0
    %2671 = vmatprep.mubr.f32.mxu0 0.0
    %2672 = vmatmul.mubr.f32.gmra.mrb[0].mxu0 %v1022
    %v2673 = vpop.f32.mrb[0].mxu0
    %v2674 = vadd.f32 %v439, %v2673
    %v2675 = vpop.f32.mrb[0].mxu0
    %2676 = vmatprep.mubr.f32.mxu0 0.0
    %2677 = vmatmul.mubr.f32.gmra.mrb[0].mxu0 %v1025
    %v2678 = vpop.f32.mrb[0].mxu0
    %v2679 = vadd.f32 %v439, %v2678
    %v2680 = vpop.f32.mrb[0].mxu0
    %2681 = vmatprep.mubr.f32.mxu0 0.0
    %2682 = vmatmul.mubr.f32.gmra.mrb[0].mxu0 %v1028
    %v2683 = vpop.f32.mrb[0].mxu0
    %v2684 = vadd.f32 %v439, %v2683
    %v2685 = vpop.f32.mrb[0].mxu0
    %2686 = vmatprep.mubr.f32.mxu0 0.0
    %2687 = vmatmul.mubr.f32.gmra.mrb[0].mxu0 %v1031
    %v2688 = vpop.f32.mrb[0].mxu0
    %v2689 = vadd.f32 %v439, %v2688
    %v2690 = vpop.f32.mrb[0].mxu0
    %2691 = vmatprep.mubr.f32.mxu0 0.0
    %2692 = vmatmul.mubr.f32.gmra.mrb[0].mxu0 %v1034
    %v2693 = vpop.f32.mrb[0].mxu0
    %v2694 = vadd.f32 %v439, %v2693
    %v2695 = vpop.f32.mrb[0].mxu0
    %2696 = vmatprep.mubr.f32.mxu0 0.0
    %2697 = vmatmul.mubr.f32.gmra.mrb[0].mxu0 %v1037
    %v2698 = vpop.f32.mrb[0].mxu0
    %v2699 = vadd.f32 %v439, %v2698
    %v2700 = vpop.f32.mrb[0].mxu0
    %2701 = vmatprep.mubr.f32.mxu0 0.0
    %2702 = vmatmul.mubr.f32.gmra.mrb[0].mxu0 %v1040
    %v2703 = vpop.f32.mrb[0].mxu0
    %v2704 = vadd.f32 %v439, %v2703
    %v2705 = vpop.f32.mrb[0].mxu0
    %2706 = vmatprep.mubr.f32.mxu0 0.0
    %2707 = vmatmul.mubr.f32.gmra.mrb[0].mxu0 %v1043
    %v2708 = vpop.f32.mrb[0].mxu0
    %v2709 = vadd.f32 %v439, %v2708
    %v2710 = vpop.f32.mrb[0].mxu0
    %2711 = vmatprep.mubr.f32.mxu0 0.0
    %2712 = vmatmul.mubr.f32.gmra.mrb[0].mxu0 %v1046
    %v2713 = vpop.f32.mrb[0].mxu0
    %v2714 = vadd.f32 %v439, %v2713
    %v2715 = vpop.f32.mrb[0].mxu0
    %2716 = vmatprep.mubr.f32.mxu0 0.0
    %2717 = vmatmul.mubr.f32.gmra.mrb[0].mxu0 %v1049
    %v2718 = vpop.f32.mrb[0].mxu0
    %v2719 = vadd.f32 %v439, %v2718
    %v2720 = vpop.f32.mrb[0].mxu0
    %2721 = vmatprep.mubr.f32.mxu0 0.0
    %2722 = vmatmul.mubr.f32.gmra.mrb[0].mxu0 %v1052
    %v2723 = vpop.f32.mrb[0].mxu0
    %v2724 = vadd.f32 %v439, %v2723
    %v2725 = vpop.f32.mrb[0].mxu0
    %2726 = vmatprep.mubr.f32.mxu0 0.0
    %2727 = vmatmul.mubr.f32.gmra.mrb[0].mxu0 %v1055
    %v2728 = vpop.f32.mrb[0].mxu0
    %v2729 = vadd.f32 %v439, %v2728
    %v2730 = vpop.f32.mrb[0].mxu0
    %2731 = vmatprep.mubr.f32.mxu0 0.0
    %2732 = vmatmul.mubr.f32.gmra.mrb[0].mxu0 %v1058
    %v2733 = vpop.f32.mrb[0].mxu0
    %v2734 = vadd.f32 %v439, %v2733
    %v2735 = vpop.f32.mrb[0].mxu0
    %2736 = vmatprep.mubr.f32.mxu0 0.0
    %2737 = vmatmul.mubr.f32.gmra.mrb[0].mxu0 %v1061
    %v2738 = vpop.f32.mrb[0].mxu0
    %v2739 = vadd.f32 %v439, %v2738
    %v2740 = vpop.f32.mrb[0].mxu0
    %2741 = vmatprep.mubr.f32.mxu0 0.0
    %2742 = vmatmul.mubr.f32.gmra.mrb[0].mxu0 %v1064
    %v2743 = vpop.f32.mrb[0].mxu0
    %v2744 = vadd.f32 %v439, %v2743
    %v2745 = vpop.f32.mrb[0].mxu0
    %2746 = vmatprep.mubr.f32.mxu0 0.0
    %2747 = vmatmul.mubr.f32.gmra.mrb[0].mxu0 %v1067
    %v2748 = vpop.f32.mrb[0].mxu0
    %v2749 = vadd.f32 %v439, %v2748
    %v2750 = vpop.f32.mrb[0].mxu0
    %2751 = vmatprep.mubr.f32.mxu0 0.0
    %2752 = vmatmul.mubr.f32.gmra.mrb[0].mxu0 %v1070
    %v2753 = vpop.f32.mrb[0].mxu0
    %v2754 = vadd.f32 %v439, %v2753
    %v2755 = vpop.f32.mrb[0].mxu0
    %2756 = vmatprep.mubr.f32.mxu0 0.0
    %2757 = vmatmul.mubr.f32.gmra.mrb[0].mxu0 %v1073
    %v2758 = vpop.f32.mrb[0].mxu0
    %v2759 = vadd.f32 %v439, %v2758
    %v2760 = vpop.f32.mrb[0].mxu0
    %2761 = vmatprep.mubr.f32.mxu0 0.0
    %2762 = vmatmul.mubr.f32.gmra.mrb[0].mxu0 %v1076
    %v2763 = vpop.f32.mrb[0].mxu0
    %v2764 = vadd.f32 %v439, %v2763
    %v2765 = vpop.f32.mrb[0].mxu0
    %2766 = vmatprep.mubr.f32.mxu0 0.0
    %2767 = vmatmul.mubr.f32.gmra.mrb[0].mxu0 %v1079
    %v2768 = vpop.f32.mrb[0].mxu0
    %v2769 = vadd.f32 %v439, %v2768
    %v2770 = vpop.f32.mrb[0].mxu0
    %2771 = vmatprep.mubr.f32.mxu0 0.0
    %2772 = vmatmul.mubr.f32.gmra.mrb[0].mxu0 %v1082
    %v2773 = vpop.f32.mrb[0].mxu0
    %v2774 = vadd.f32 %v439, %v2773
    %v2775 = vpop.f32.mrb[0].mxu0
    %2776 = vmatprep.mubr.f32.mxu0 0.0
    %2777 = vmatmul.mubr.f32.gmra.mrb[0].mxu0 %v1085
    %v2778 = vpop.f32.mrb[0].mxu0
    %v2779 = vadd.f32 %v439, %v2778
    %v2780 = vpop.f32.mrb[0].mxu0
    %2781 = vmatprep.mubr.f32.mxu0 0.0
    %2782 = vmatmul.mubr.f32.gmra.mrb[0].mxu0 %v1088
    %v2783 = vpop.f32.mrb[0].mxu0
    %v2784 = vadd.f32 %v439, %v2783
    %v2785 = vpop.f32.mrb[0].mxu0
    %2786 = vmatprep.mubr.f32.mxu0 0.0
    %2787 = vmatmul.mubr.f32.gmra.mrb[0].mxu0 %v1091
    %v2788 = vpop.f32.mrb[0].mxu0
    %v2789 = vadd.f32 %v439, %v2788
    %v2790 = vpop.f32.mrb[0].mxu0
    %2791 = vmatprep.mubr.f32.mxu0 0.0
    %2792 = vmatmul.mubr.f32.gmra.mrb[0].mxu0 %v1094
    %v2793 = vpop.f32.mrb[0].mxu0
    %v2794 = vadd.f32 %v439, %v2793
    %v2795 = vpop.f32.mrb[0].mxu0
    %2796 = vmatprep.mubr.f32.mxu0 0.0
    %2797 = vmatmul.mubr.f32.gmra.mrb[0].mxu0 %v1097
    %v2798 = vpop.f32.mrb[0].mxu0
    %v2799 = vadd.f32 %v439, %v2798
    %v2800 = vpop.f32.mrb[0].mxu0
    %2801 = vmatprep.mubr.f32.mxu0 0.0
    %2802 = vmatmul.mubr.f32.gmra.mrb[0].mxu0 %v1100
    %v2803 = vpop.f32.mrb[0].mxu0
    %v2804 = vadd.f32 %v439, %v2803
    %v2805 = vpop.f32.mrb[0].mxu0
    %2806 = vmatprep.mubr.f32.mxu0 0.0
    %2807 = vmatmul.mubr.f32.gmra.mrb[0].mxu0 %v1103
    %v2808 = vpop.f32.mrb[0].mxu0
    %v2809 = vadd.f32 %v439, %v2808
    %v2810 = vpop.f32.mrb[0].mxu0
    %2811 = vmatprep.mubr.f32.mxu0 0.0
    %2812 = vmatmul.mubr.f32.gmra.mrb[0].mxu0 %v1106
    %v2813 = vpop.f32.mrb[0].mxu0
    %v2814 = vadd.f32 %v439, %v2813
    %v2815 = vpop.f32.mrb[0].mxu0
    %2816 = vmatprep.mubr.f32.mxu0 0.0
    %2817 = vmatmul.mubr.f32.gmra.mrb[0].mxu0 %v1109
    %v2818 = vpop.f32.mrb[0].mxu0
    %v2819 = vadd.f32 %v439, %v2818
    %v2820 = vpop.f32.mrb[0].mxu0
    %2821 = vmatprep.mubr.f32.mxu0 0.0
    %2822 = vmatmul.mubr.f32.gmra.mrb[0].mxu0 %v1112
    %v2823 = vpop.f32.mrb[0].mxu0
    %v2824 = vadd.f32 %v439, %v2823
    %v2825 = vpop.f32.mrb[0].mxu0
    %2826 = vmatprep.mubr.f32.mxu0 0.0
    %2827 = vmatmul.mubr.f32.gmra.mrb[0].mxu0 %v1115
    %v2828 = vpop.f32.mrb[0].mxu0
    %v2829 = vadd.f32 %v439, %v2828
    %v2830 = vpop.f32.mrb[0].mxu0
    %2831 = vmatprep.mubr.f32.mxu0 0.0
    %2832 = vmatmul.mubr.f32.gmra.mrb[0].mxu0 %v1118
    %v2833 = vpop.f32.mrb[0].mxu0
    %v2834 = vadd.f32 %v439, %v2833
    %v2835 = vpop.f32.mrb[0].mxu0
    %2836 = vmatprep.mubr.f32.mxu0 0.0
    %2837 = vmatmul.mubr.f32.gmra.mrb[0].mxu0 %v1121
    %v2838 = vpop.f32.mrb[0].mxu0
    %v2839 = vadd.f32 %v439, %v2838
    %v2840 = vpop.f32.mrb[0].mxu0
    %2841 = vmatprep.mubr.f32.mxu0 0.0
    %2842 = vmatmul.mubr.f32.gmra.mrb[0].mxu0 %v1124
    %v2843 = vpop.f32.mrb[0].mxu0
    %v2844 = vadd.f32 %v439, %v2843
    %v2845 = vpop.f32.mrb[0].mxu0
    %2846 = vmatprep.mubr.f32.mxu0 0.0
    %2847 = vmatmul.mubr.f32.gmra.mrb[0].mxu0 %v1127
    %v2848 = vpop.f32.mrb[0].mxu0
    %v2849 = vadd.f32 %v439, %v2848
    %v2850 = vpop.f32.mrb[0].mxu0
    %2851 = vmatprep.mubr.f32.mxu0 0.0
    %2852 = vmatmul.mubr.f32.gmra.mrb[0].mxu0 %v1130
    %v2853 = vpop.f32.mrb[0].mxu0
    %v2854 = vadd.f32 %v439, %v2853
    %v2855 = vpop.f32.mrb[0].mxu0
    %2856 = vmatprep.mubr.f32.mxu0 0.0
    %2857 = vmatmul.mubr.f32.gmra.mrb[0].mxu0 %v1133
    %v2858 = vpop.f32.mrb[0].mxu0
    %v2859 = vadd.f32 %v439, %v2858
    %v2860 = vpop.f32.mrb[0].mxu0
    %2861 = vmatprep.mubr.f32.mxu0 0.0
    %2862 = vmatmul.mubr.f32.gmra.mrb[0].mxu0 %v1136
    %v2863 = vpop.f32.mrb[0].mxu0
    %v2864 = vadd.f32 %v439, %v2863
    %v2865 = vpop.f32.mrb[0].mxu0
    %2866 = vmatprep.mubr.f32.mxu0 0.0
    %2867 = vmatmul.mubr.f32.gmra.mrb[0].mxu0 %v1139
    %v2868 = vpop.f32.mrb[0].mxu0
    %v2869 = vadd.f32 %v439, %v2868
    %v2870 = vpop.f32.mrb[0].mxu0
    %2871 = vmatprep.mubr.f32.mxu0 0.0
    %2872 = vmatmul.mubr.f32.gmra.mrb[0].mxu0 %v1142
    %v2873 = vpop.f32.mrb[0].mxu0
    %v2874 = vadd.f32 %v439, %v2873
    %v2875 = vpop.f32.mrb[0].mxu0
    %2876 = vmatprep.mubr.f32.mxu0 0.0
    %2877 = vmatmul.mubr.f32.gmra.mrb[0].mxu0 %v1145
    %v2878 = vpop.f32.mrb[0].mxu0
    %v2879 = vadd.f32 %v439, %v2878
    %v2880 = vpop.f32.mrb[0].mxu0
    %2881 = vmatprep.mubr.f32.mxu0 0.0
    %2882 = vmatmul.mubr.f32.gmra.mrb[0].mxu0 %v1148
    %v2883 = vpop.f32.mrb[0].mxu0
    %v2884 = vadd.f32 %v439, %v2883
    %v2885 = vpop.f32.mrb[0].mxu0
    %2886 = vmatprep.mubr.f32.mxu0 0.0
    %2887 = vmatmul.mubr.f32.gmra.mrb[0].mxu0 %v1151
    %v2888 = vpop.f32.mrb[0].mxu0
    %v2889 = vadd.f32 %v439, %v2888
    %v2890 = vpop.f32.mrb[0].mxu0
    %2891 = vmatprep.mubr.f32.mxu0 0.0
    %2892 = vmatmul.mubr.f32.gmra.mrb[0].mxu0 %v1154
    %v2893 = vpop.f32.mrb[0].mxu0
    %v2894 = vadd.f32 %v439, %v2893
    %v2895 = vpop.f32.mrb[0].mxu0
    %2896 = vmatprep.mubr.f32.mxu0 0.0
    %2897 = vmatmul.mubr.f32.gmra.mrb[0].mxu0 %v1157
    %v2898 = vpop.f32.mrb[0].mxu0
    %v2899 = vadd.f32 %v439, %v2898
    %v2900 = vpop.f32.mrb[0].mxu0
    %2901 = vmatprep.mubr.f32.mxu0 0.0
    %2902 = vmatmul.mubr.f32.gmra.mrb[0].mxu0 %v1160
    %v2903 = vpop.f32.mrb[0].mxu0
    %v2904 = vadd.f32 %v439, %v2903
    %v2905 = vpop.f32.mrb[0].mxu0
    %2906 = vmatprep.mubr.f32.mxu0 0.0
    %2907 = vmatmul.mubr.f32.gmra.mrb[0].mxu0 %v1163
    %v2908 = vpop.f32.mrb[0].mxu0
    %v2909 = vadd.f32 %v439, %v2908
    %v2910 = vpop.f32.mrb[0].mxu0
    %2911 = vmatprep.mubr.f32.mxu0 0.0
    %2912 = vmatmul.mubr.f32.gmra.mrb[0].mxu0 %v1166
    %v2913 = vpop.f32.mrb[0].mxu0
    %v2914 = vadd.f32 %v439, %v2913
    %v2915 = vpop.f32.mrb[0].mxu0
    %2916 = vmatprep.mubr.f32.mxu0 0.0
    %2917 = vmatmul.mubr.f32.gmra.mrb[0].mxu0 %v1169
    %v2918 = vpop.f32.mrb[0].mxu0
    %v2919 = vadd.f32 %v439, %v2918
    %v2920 = vpop.f32.mrb[0].mxu0
    %2921 = vmatprep.mubr.f32.mxu0 0.0
    %2922 = vmatmul.mubr.f32.gmra.mrb[0].mxu0 %v1172
    %v2923 = vpop.f32.mrb[0].mxu0
    %v2924 = vadd.f32 %v439, %v2923
    %v2925 = vpop.f32.mrb[0].mxu0
    %2926 = vmatprep.mubr.f32.mxu0 0.0
    %2927 = vmatmul.mubr.f32.gmra.mrb[0].mxu0 %v1175
    %v2928 = vpop.f32.mrb[0].mxu0
    %v2929 = vadd.f32 %v439, %v2928
    %v2930 = vpop.f32.mrb[0].mxu0
    %2931 = vmatprep.mubr.f32.mxu0 0.0
    %2932 = vmatmul.mubr.f32.gmra.mrb[0].mxu0 %v1178
    %v2933 = vpop.f32.mrb[0].mxu0
    %v2934 = vadd.f32 %v439, %v2933
    %v2935 = vpop.f32.mrb[0].mxu0
    %2936 = vmatprep.mubr.f32.mxu0 0.0
    %2937 = vmatmul.mubr.f32.gmra.mrb[0].mxu0 %v1181
    %v2938 = vpop.f32.mrb[0].mxu0
    %v2939 = vadd.f32 %v439, %v2938
    %v2940 = vpop.f32.mrb[0].mxu0
    %2941 = vmatprep.mubr.f32.mxu0 0.0
    %2942 = vmatmul.mubr.f32.gmra.mrb[0].mxu0 %v1184
    %v2943 = vpop.f32.mrb[0].mxu0
    %v2944 = vadd.f32 %v439, %v2943
    %v2945 = vpop.f32.mrb[0].mxu0
    %2946 = vmatprep.mubr.f32.mxu0 0.0
    %2947 = vmatmul.mubr.f32.gmra.mrb[0].mxu0 %v1187
    %v2948 = vpop.f32.mrb[0].mxu0
    %v2949 = vadd.f32 %v439, %v2948
    %v2950 = vpop.f32.mrb[0].mxu0
    %2951 = vmatprep.mubr.f32.mxu0 0.0
    %2952 = vmatmul.mubr.f32.gmra.mrb[0].mxu0 %v1190
    %v2953 = vpop.f32.mrb[0].mxu0
    %v2954 = vadd.f32 %v439, %v2953
    %v2955 = vpop.f32.mrb[0].mxu0
    %2956 = vmatprep.mubr.f32.mxu0 0.0
    %2957 = vmatmul.mubr.f32.gmra.mrb[0].mxu0 %v1193
    %v2958 = vpop.f32.mrb[0].mxu0
    %v2959 = vadd.f32 %v439, %v2958
    %v2960 = vpop.f32.mrb[0].mxu0
    %2961 = vmatprep.mubr.f32.mxu0 0.0
    %2962 = vmatmul.mubr.f32.gmra.mrb[0].mxu0 %v1196
    %v2963 = vpop.f32.mrb[0].mxu0
    %v2964 = vadd.f32 %v439, %v2963
    %v2965 = vpop.f32.mrb[0].mxu0
    %2966 = vmatprep.mubr.f32.mxu0 0.0
    %2967 = vmatmul.mubr.f32.gmra.mrb[0].mxu0 %v1199
    %v2968 = vpop.f32.mrb[0].mxu0
    %v2969 = vadd.f32 %v439, %v2968
    %v2970 = vpop.f32.mrb[0].mxu0
    %2971 = vmatprep.mubr.f32.mxu0 0.0
    %2972 = vmatmul.mubr.f32.gmra.mrb[0].mxu0 %v1202
    %v2973 = vpop.f32.mrb[0].mxu0
    %v2974 = vadd.f32 %v439, %v2973
    %v2975 = vpop.f32.mrb[0].mxu0
    %2976 = vmatprep.mubr.f32.mxu0 0.0
    %2977 = vmatmul.mubr.f32.gmra.mrb[0].mxu0 %v1205
    %v2978 = vpop.f32.mrb[0].mxu0
    %v2979 = vadd.f32 %v439, %v2978
    %v2980 = vpop.f32.mrb[0].mxu0
    %2981 = vmatprep.mubr.f32.mxu0 0.0
    %2982 = vmatmul.mubr.f32.gmra.mrb[0].mxu0 %v1208
    %v2983 = vpop.f32.mrb[0].mxu0
    %v2984 = vadd.f32 %v439, %v2983
    %v2985 = vpop.f32.mrb[0].mxu0
    %2986 = vmatprep.mubr.f32.mxu0 0.0
    %2987 = vmatmul.mubr.f32.gmra.mrb[0].mxu0 %v1211
    %v2988 = vpop.f32.mrb[0].mxu0
    %v2989 = vadd.f32 %v439, %v2988
    %v2990 = vpop.f32.mrb[0].mxu0
    %2991 = vmatprep.mubr.f32.mxu0 0.0
    %2992 = vmatmul.mubr.f32.gmra.mrb[0].mxu0 %v1214
    %v2993 = vpop.f32.mrb[0].mxu0
    %v2994 = vadd.f32 %v439, %v2993
    %v2995 = vpop.f32.mrb[0].mxu0
    %2996 = vmatprep.mubr.f32.mxu0 0.0
    %2997 = vmatmul.mubr.f32.gmra.mrb[0].mxu0 %v1217
    %v2998 = vpop.f32.mrb[0].mxu0
    %v2999 = vadd.f32 %v439, %v2998
    %v3000 = vpop.f32.mrb[0].mxu0
    %3001 = vmatprep.mubr.f32.mxu0 0.0
    %3002 = vmatmul.mubr.f32.gmra.mrb[0].mxu0 %v1220
    %v3003 = vpop.f32.mrb[0].mxu0
    %v3004 = vadd.f32 %v439, %v3003
    %v3005 = vpop.f32.mrb[0].mxu0
    %3006 = vmatprep.mubr.f32.mxu0 0.0
    %3007 = vmatmul.mubr.f32.gmra.mrb[0].mxu0 %v1223
    %v3008 = vpop.f32.mrb[0].mxu0
    %v3009 = vadd.f32 %v439, %v3008
    %v3010 = vpop.f32.mrb[0].mxu0
    %3011 = vmatprep.mubr.f32.mxu0 0.0
    %3012 = vmatmul.mubr.f32.gmra.mrb[0].mxu0 %v1226
    %v3013 = vpop.f32.mrb[0].mxu0
    %v3014 = vadd.f32 %v439, %v3013
    %v3015 = vpop.f32.mrb[0].mxu0
    %3016 = vmatprep.mubr.f32.mxu0 0.0
    %3017 = vmatmul.mubr.f32.gmra.mrb[0].mxu0 %v1229
    %v3018 = vpop.f32.mrb[0].mxu0
    %v3019 = vadd.f32 %v439, %v3018
    %v3020 = vpop.f32.mrb[0].mxu0
    %3021 = vmatprep.mubr.f32.mxu0 0.0
    %3022 = vmatmul.mubr.f32.gmra.mrb[0].mxu0 %v1232
    %v3023 = vpop.f32.mrb[0].mxu0
    %v3024 = vadd.f32 %v439, %v3023
    %v3025 = vpop.f32.mrb[0].mxu0
    %3026 = vmatprep.mubr.f32.mxu0 0.0
    %3027 = vmatmul.mubr.f32.gmra.mrb[0].mxu0 %v1235
    %v3028 = vpop.f32.mrb[0].mxu0
    %v3029 = vadd.f32 %v439, %v3028
    %v3030 = vpop.f32.mrb[0].mxu0
    %3031 = vmatprep.mubr.f32.mxu0 0.0
    %3032 = vmatmul.mubr.f32.gmra.mrb[0].mxu0 %v1238
    %v3033 = vpop.f32.mrb[0].mxu0
    %v3034 = vadd.f32 %v439, %v3033
    %v3035 = vpop.f32.mrb[0].mxu0
    %3036 = vmatprep.mubr.f32.mxu0 0.0
    %3037 = vmatmul.mubr.f32.gmra.mrb[0].mxu0 %v1241
    %v3038 = vpop.f32.mrb[0].mxu0
    %v3039 = vadd.f32 %v439, %v3038
    %v3040 = vpop.f32.mrb[0].mxu0
    %3041 = vmatprep.mubr.f32.mxu0 0.0
    %3042 = vmatmul.mubr.f32.gmra.mrb[0].mxu0 %v1244
    %v3043 = vpop.f32.mrb[0].mxu0
    %v3044 = vadd.f32 %v439, %v3043
    %v3045 = vpop.f32.mrb[0].mxu0
    %3046 = vmatprep.mubr.f32.mxu0 0.0
    %3047 = vmatmul.mubr.f32.gmra.mrb[0].mxu0 %v1247
    %v3048 = vpop.f32.mrb[0].mxu0
    %v3049 = vadd.f32 %v439, %v3048
    %v3050 = vpop.f32.mrb[0].mxu0
    %3051 = vmatprep.mubr.f32.mxu0 0.0
    %3052 = vmatmul.mubr.f32.gmra.mrb[0].mxu0 %v1250
    %v3053 = vpop.f32.mrb[0].mxu0
    %v3054 = vadd.f32 %v439, %v3053
    %v3055 = vpop.f32.mrb[0].mxu0
    %3056 = vmatprep.mubr.f32.mxu0 0.0
    %3057 = vmatmul.mubr.f32.gmra.mrb[0].mxu0 %v1253
    %v3058 = vpop.f32.mrb[0].mxu0
    %v3059 = vadd.f32 %v439, %v3058
    %v3060 = vpop.f32.mrb[0].mxu0
    %3061 = vmatprep.mubr.f32.mxu0 0.0
    %3062 = vmatmul.mubr.f32.gmra.mrb[0].mxu0 %v1256
    %v3063 = vpop.f32.mrb[0].mxu0
    %v3064 = vadd.f32 %v439, %v3063
    %v3065 = vpop.f32.mrb[0].mxu0
    %3066 = vmatprep.mubr.f32.mxu0 0.0
    %3067 = vmatmul.mubr.f32.gmra.mrb[0].mxu0 %v1259
    %v3068 = vpop.f32.mrb[0].mxu0
    %v3069 = vadd.f32 %v439, %v3068
    %v3070 = vpop.f32.mrb[0].mxu0
    %3071 = vmatprep.mubr.f32.mxu0 0.0
    %3072 = vmatmul.mubr.f32.gmra.mrb[0].mxu0 %v1262
    %v3073 = vpop.f32.mrb[0].mxu0
    %v3074 = vadd.f32 %v439, %v3073
    %v3075 = vpop.f32.mrb[0].mxu0
    %3076 = vmatprep.mubr.f32.mxu0 0.0
    %3077 = vmatmul.mubr.f32.gmra.mrb[0].mxu0 %v1265
    %v3078 = vpop.f32.mrb[0].mxu0
    %v3079 = vadd.f32 %v439, %v3078
    %v3080 = vpop.f32.mrb[0].mxu0
    %3081 = vmatprep.mubr.f32.mxu0 0.0
    %3082 = vmatmul.mubr.f32.gmra.mrb[0].mxu0 %v1268
    %v3083 = vpop.f32.mrb[0].mxu0
    %v3084 = vadd.f32 %v439, %v3083
    %v3085 = vpop.f32.mrb[0].mxu0
    %3086 = vmatprep.mubr.f32.mxu0 0.0
    %3087 = vmatmul.mubr.f32.gmra.mrb[0].mxu0 %v1271
    %v3088 = vpop.f32.mrb[0].mxu0
    %v3089 = vadd.f32 %v439, %v3088
    %v3090 = vpop.f32.mrb[0].mxu0
    %3091 = vmatprep.mubr.f32.mxu0 0.0
    %3092 = vmatmul.mubr.f32.gmra.mrb[0].mxu0 %v1274
    %v3093 = vpop.f32.mrb[0].mxu0
    %v3094 = vadd.f32 %v439, %v3093
    %v3095 = vpop.f32.mrb[0].mxu0
    %3096 = vmatprep.mubr.f32.mxu0 0.0
    %3097 = vmatmul.mubr.f32.gmra.mrb[0].mxu0 %v1277
    %v3098 = vpop.f32.mrb[0].mxu0
    %v3099 = vadd.f32 %v439, %v3098
    %v3100 = vpop.f32.mrb[0].mxu0
    %3101 = vmatprep.mubr.f32.mxu0 0.0
    %3102 = vmatmul.mubr.f32.gmra.mrb[0].mxu0 %v1280
    %v3103 = vpop.f32.mrb[0].mxu0
    %v3104 = vadd.f32 %v439, %v3103
    %v3105 = vpop.f32.mrb[0].mxu0
    %3106 = vmatprep.mubr.f32.mxu0 0.0
    %3107 = vmatmul.mubr.f32.gmra.mrb[0].mxu0 %v1283
    %v3108 = vpop.f32.mrb[0].mxu0
    %v3109 = vadd.f32 %v439, %v3108
    %v3110 = vpop.f32.mrb[0].mxu0
    %3111 = vmatprep.mubr.f32.mxu0 0.0
    %3112 = vmatmul.mubr.f32.gmra.mrb[0].mxu0 %v1286
    %v3113 = vpop.f32.mrb[0].mxu0
    %v3114 = vadd.f32 %v439, %v3113
    %v3115 = vpop.f32.mrb[0].mxu0
    %3116 = vmatprep.mubr.f32.mxu0 0.0
    %3117 = vmatmul.mubr.f32.gmra.mrb[0].mxu0 %v1289
    %v3118 = vpop.f32.mrb[0].mxu0
    %v3119 = vadd.f32 %v439, %v3118
    %v3120 = vpop.f32.mrb[0].mxu0
    %3121 = vmatprep.mubr.f32.mxu0 0.0
    %3122 = vmatmul.mubr.f32.gmra.mrb[0].mxu0 %v1292
    %v3123 = vpop.f32.mrb[0].mxu0
    %v3124 = vadd.f32 %v439, %v3123
    %v3125 = vpop.f32.mrb[0].mxu0
    %3126 = vmatprep.mubr.f32.mxu0 0.0
    %3127 = vmatmul.mubr.f32.gmra.mrb[0].mxu0 %v1295
    %v3128 = vpop.f32.mrb[0].mxu0
    %v3129 = vadd.f32 %v439, %v3128
    %v3130 = vpop.f32.mrb[0].mxu0
    %3131 = vmatprep.mubr.f32.mxu0 0.0
    %3132 = vmatmul.mubr.f32.gmra.mrb[0].mxu0 %v1298
    %v3133 = vpop.f32.mrb[0].mxu0
    %v3134 = vadd.f32 %v439, %v3133
    %v3135 = vpop.f32.mrb[0].mxu0
    %3136 = vmatprep.mubr.f32.mxu0 0.0
    %3137 = vmatmul.mubr.f32.gmra.mrb[0].mxu0 %v1301
    %v3138 = vpop.f32.mrb[0].mxu0
    %v3139 = vadd.f32 %v439, %v3138
    %v3140 = vpop.f32.mrb[0].mxu0
    %3141 = vmatprep.mubr.f32.mxu0 0.0
    %3142 = vmatmul.mubr.f32.gmra.mrb[0].mxu0 %v1304
    %v3143 = vpop.f32.mrb[0].mxu0
    %v3144 = vadd.f32 %v439, %v3143
    %v3145 = vpop.f32.mrb[0].mxu0
    %3146 = vmatprep.mubr.f32.mxu0 0.0
    %3147 = vmatmul.mubr.f32.gmra.mrb[0].mxu0 %v1307
    %v3148 = vpop.f32.mrb[0].mxu0
    %v3149 = vadd.f32 %v439, %v3148
    %v3150 = vpop.f32.mrb[0].mxu0
    %3151 = vmatprep.mubr.f32.mxu0 0.0
    %3152 = vmatmul.mubr.f32.gmra.mrb[0].mxu0 %v1310
    %v3153 = vpop.f32.mrb[0].mxu0
    %v3154 = vadd.f32 %v439, %v3153
    %v3155 = vpop.f32.mrb[0].mxu0
    %3156 = vmatprep.mubr.f32.mxu0 0.0
    %3157 = vmatmul.mubr.f32.gmra.mrb[0].mxu0 %v1313
    %v3158 = vpop.f32.mrb[0].mxu0
    %v3159 = vadd.f32 %v439, %v3158
    %v3160 = vpop.f32.mrb[0].mxu0
    %3161 = vmatprep.mubr.f32.mxu0 0.0
    %3162 = vmatmul.mubr.f32.gmra.mrb[0].mxu0 %v1316
    %v3163 = vpop.f32.mrb[0].mxu0
    %v3164 = vadd.f32 %v439, %v3163
    %v3165 = vpop.f32.mrb[0].mxu0
    %3166 = vmatprep.mubr.f32.mxu0 0.0
    %3167 = vmatmul.mubr.f32.gmra.mrb[0].mxu0 %v1319
    %v3168 = vpop.f32.mrb[0].mxu0
    %v3169 = vadd.f32 %v439, %v3168
    %v3170 = vpop.f32.mrb[0].mxu0
    %3171 = vmatprep.mubr.f32.mxu0 0.0
    %3172 = vmatmul.mubr.f32.gmra.mrb[0].mxu0 %v1322
    %v3173 = vpop.f32.mrb[0].mxu0
    %v3174 = vadd.f32 %v439, %v3173
    %v3175 = vpop.f32.mrb[0].mxu0
    %3176 = vmatprep.mubr.f32.mxu0 0.0
    %3177 = vmatmul.mubr.f32.gmra.mrb[0].mxu0 %v1325
    %v3178 = vpop.f32.mrb[0].mxu0
    %v3179 = vadd.f32 %v439, %v3178
    %v3180 = vpop.f32.mrb[0].mxu0
    %3181 = vmatprep.mubr.f32.mxu0 0.0
    %3182 = vmatmul.mubr.f32.gmra.mrb[0].mxu0 %v1328
    %v3183 = vpop.f32.mrb[0].mxu0
    %v3184 = vadd.f32 %v439, %v3183
    %v3185 = vpop.f32.mrb[0].mxu0
    %3186 = vmatprep.mubr.f32.mxu0 0.0
    %3187 = vmatmul.mubr.f32.gmra.mrb[0].mxu0 %v1331
    %v3188 = vpop.f32.mrb[0].mxu0
    %v3189 = vadd.f32 %v439, %v3188
    %v3190 = vpop.f32.mrb[0].mxu0
    %3191 = vmatprep.mubr.f32.mxu0 0.0
    %3192 = vmatmul.mubr.f32.gmra.mrb[0].mxu0 %v1334
    %v3193 = vpop.f32.mrb[0].mxu0
    %v3194 = vadd.f32 %v439, %v3193
    %v3195 = vpop.f32.mrb[0].mxu0
    %3196 = vmatprep.mubr.f32.mxu0 0.0
    %3197 = vmatmul.mubr.f32.gmra.mrb[0].mxu0 %v1337
    %v3198 = vpop.f32.mrb[0].mxu0
    %v3199 = vadd.f32 %v439, %v3198
    %v3200 = vpop.f32.mrb[0].mxu0
    %3201 = vmatprep.mubr.f32.mxu0 0.0
    %3202 = vmatmul.mubr.f32.gmra.mrb[0].mxu0 %v1340
    %v3203 = vpop.f32.mrb[0].mxu0
    %v3204 = vadd.f32 %v439, %v3203
    %v3205 = vpop.f32.mrb[0].mxu0
    %3206 = vmatprep.mubr.f32.mxu0 0.0
    %3207 = vmatmul.mubr.f32.gmra.mrb[0].mxu0 %v1343
    %v3208 = vpop.f32.mrb[0].mxu0
    %v3209 = vadd.f32 %v439, %v3208
    %v3210 = vpop.f32.mrb[0].mxu0
    %3211 = vmatprep.mubr.f32.mxu0 0.0
    %3212 = vmatmul.mubr.f32.gmra.mrb[0].mxu0 %v1346
    %v3213 = vpop.f32.mrb[0].mxu0
    %v3214 = vadd.f32 %v439, %v3213
    %v3215 = vpop.f32.mrb[0].mxu0
    %3216 = vmatprep.mubr.f32.mxu0 0.0
    %3217 = vmatmul.mubr.f32.gmra.mrb[0].mxu0 %v1349
    %v3218 = vpop.f32.mrb[0].mxu0
    %v3219 = vadd.f32 %v439, %v3218
    %v3220 = vpop.f32.mrb[0].mxu0
    %3221 = vmatprep.mubr.f32.mxu0 0.0
    %3222 = vmatmul.mubr.f32.gmra.mrb[0].mxu0 %v1352
    %v3223 = vpop.f32.mrb[0].mxu0
    %v3224 = vadd.f32 %v439, %v3223
    %v3225 = vpop.f32.mrb[0].mxu0
    %3226 = vmatprep.mubr.f32.mxu0 0.0
    %3227 = vmatmul.mubr.f32.gmra.mrb[0].mxu0 %v1355
    %v3228 = vpop.f32.mrb[0].mxu0
    %v3229 = vadd.f32 %v439, %v3228
    %v3230 = vpop.f32.mrb[0].mxu0
    %3231 = vmatprep.mubr.f32.mxu0 0.0
    %3232 = vmatmul.mubr.f32.gmra.mrb[0].mxu0 %v1358
    %v3233 = vpop.f32.mrb[0].mxu0
    %v3234 = vadd.f32 %v439, %v3233
    %v3235 = vpop.f32.mrb[0].mxu0
    %3236 = vmatprep.mubr.f32.mxu0 0.0
    %3237 = vmatmul.mubr.f32.gmra.mrb[0].mxu0 %v1361
    %v3238 = vpop.f32.mrb[0].mxu0
    %v3239 = vadd.f32 %v439, %v3238
    %v3240 = vpop.f32.mrb[0].mxu0
    %3241 = vmatprep.mubr.f32.mxu0 0.0
    %3242 = vmatmul.mubr.f32.gmra.mrb[0].mxu0 %v1364
    %v3243 = vpop.f32.mrb[0].mxu0
    %v3244 = vadd.f32 %v439, %v3243
    %v3245 = vpop.f32.mrb[0].mxu0
    %3246 = vmatprep.mubr.f32.mxu0 0.0
    %3247 = vmatmul.mubr.f32.gmra.mrb[0].mxu0 %v1367
    %v3248 = vpop.f32.mrb[0].mxu0
    %v3249 = vadd.f32 %v439, %v3248
    %v3250 = vpop.f32.mrb[0].mxu0
    %3251 = vmatprep.mubr.f32.mxu0 0.0
    %3252 = vmatmul.mubr.f32.gmra.mrb[0].mxu0 %v1370
    %v3253 = vpop.f32.mrb[0].mxu0
    %v3254 = vadd.f32 %v439, %v3253
    %v3255 = vpop.f32.mrb[0].mxu0
    %3256 = vmatprep.mubr.f32.mxu0 0.0
    %3257 = vmatmul.mubr.f32.gmra.mrb[0].mxu0 %v1373
    %v3258 = vpop.f32.mrb[0].mxu0
    %v3259 = vadd.f32 %v439, %v3258
    %v3260 = vpop.f32.mrb[0].mxu0
    %3261 = vmatprep.mubr.f32.mxu0 0.0
    %3262 = vmatmul.mubr.f32.gmra.mrb[0].mxu0 %v1376
    %v3263 = vpop.f32.mrb[0].mxu0
    %v3264 = vadd.f32 %v439, %v3263
    %v3265 = vpop.f32.mrb[0].mxu0
    %3266 = vmatprep.mubr.f32.mxu0 0.0
    %3267 = vmatmul.mubr.f32.gmra.mrb[0].mxu0 %v1379
    %v3268 = vpop.f32.mrb[0].mxu0
    %v3269 = vadd.f32 %v439, %v3268
    %v3270 = vpop.f32.mrb[0].mxu0
    %3271 = vmatprep.mubr.f32.mxu0 0.0
    %3272 = vmatmul.mubr.f32.gmra.mrb[0].mxu0 %v1382
    %v3273 = vpop.f32.mrb[0].mxu0
    %v3274 = vadd.f32 %v439, %v3273
    %v3275 = vpop.f32.mrb[0].mxu0
    %3276 = vmatprep.mubr.f32.mxu0 0.0
    %3277 = vmatmul.mubr.f32.gmra.mrb[0].mxu0 %v1385
    %v3278 = vpop.f32.mrb[0].mxu0
    %v3279 = vadd.f32 %v439, %v3278
    %v3280 = vpop.f32.mrb[0].mxu0
    %3281 = vmatprep.mubr.f32.mxu0 0.0
    %3282 = vmatmul.mubr.f32.gmra.mrb[0].mxu0 %v1388
    %v3283 = vpop.f32.mrb[0].mxu0
    %v3284 = vadd.f32 %v439, %v3283
    %v3285 = vpop.f32.mrb[0].mxu0
    %3286 = vmatprep.mubr.f32.mxu0 0.0
    %3287 = vmatmul.mubr.f32.gmra.mrb[0].mxu0 %v1391
    %v3288 = vpop.f32.mrb[0].mxu0
    %v3289 = vadd.f32 %v439, %v3288
    %v3290 = vpop.f32.mrb[0].mxu0
    %3291 = vmatprep.mubr.f32.mxu0 0.0
    %3292 = vmatmul.mubr.f32.gmra.mrb[0].mxu0 %v1394
    %v3293 = vpop.f32.mrb[0].mxu0
    %v3294 = vadd.f32 %v439, %v3293
    %v3295 = vpop.f32.mrb[0].mxu0
    %3296 = vmatprep.mubr.f32.mxu0 0.0
    %3297 = vmatmul.mubr.f32.gmra.mrb[0].mxu0 %v1397
    %v3298 = vpop.f32.mrb[0].mxu0
    %v3299 = vadd.f32 %v439, %v3298
    %v3300 = vpop.f32.mrb[0].mxu0
    %3301 = vmatprep.mubr.f32.mxu0 0.0
    %3302 = vmatmul.mubr.f32.gmra.mrb[0].mxu0 %v1400
    %v3303 = vpop.f32.mrb[0].mxu0
    %v3304 = vadd.f32 %v439, %v3303
    %v3305 = vpop.f32.mrb[0].mxu0
    %3306 = vmatprep.mubr.f32.mxu0 0.0
    %3307 = vmatmul.mubr.f32.gmra.mrb[0].mxu0 %v1403
    %v3308 = vpop.f32.mrb[0].mxu0
    %v3309 = vadd.f32 %v439, %v3308
    %v3310 = vpop.f32.mrb[0].mxu0
    %3311 = vmatprep.mubr.f32.mxu0 0.0
    %3312 = vmatmul.mubr.f32.gmra.mrb[0].mxu0 %v1406
    %v3313 = vpop.f32.mrb[0].mxu0
    %v3314 = vadd.f32 %v439, %v3313
    %v3315 = vpop.f32.mrb[0].mxu0
    %3316 = vmatprep.mubr.f32.mxu0 0.0
    %3317 = vmatmul.mubr.f32.gmra.mrb[0].mxu0 %v1409
    %v3318 = vpop.f32.mrb[0].mxu0
    %v3319 = vadd.f32 %v439, %v3318
    %v3320 = vpop.f32.mrb[0].mxu0
    %3321 = vmatprep.mubr.f32.mxu0 0.0
    %3322 = vmatmul.mubr.f32.gmra.mrb[0].mxu0 %v1412
    %v3323 = vpop.f32.mrb[0].mxu0
    %v3324 = vadd.f32 %v439, %v3323
    %v3325 = vpop.f32.mrb[0].mxu0
    %3326 = vmatprep.mubr.f32.mxu0 0.0
    %3327 = vmatmul.mubr.f32.gmra.mrb[0].mxu0 %v1415
    %v3328 = vpop.f32.mrb[0].mxu0
    %v3329 = vadd.f32 %v439, %v3328
    %v3330 = vpop.f32.mrb[0].mxu0
    %3331 = vmatprep.mubr.f32.mxu0 0.0
    %3332 = vmatmul.mubr.f32.gmra.mrb[0].mxu0 %v1418
    %v3333 = vpop.f32.mrb[0].mxu0
    %v3334 = vadd.f32 %v439, %v3333
    %v3335 = vpop.f32.mrb[0].mxu0
    %3336 = vmatprep.mubr.f32.mxu0 0.0
    %3337 = vmatmul.mubr.f32.gmra.mrb[0].mxu0 %v1421
    %v3338 = vpop.f32.mrb[0].mxu0
    %v3339 = vadd.f32 %v439, %v3338
    %v3340 = vpop.f32.mrb[0].mxu0
    %3341 = vmatprep.mubr.f32.mxu0 0.0
    %3342 = vmatmul.mubr.f32.gmra.mrb[0].mxu0 %v1424
    %v3343 = vpop.f32.mrb[0].mxu0
    %v3344 = vadd.f32 %v439, %v3343
    %v3345 = vpop.f32.mrb[0].mxu0
    %3346 = vmatprep.mubr.f32.mxu0 0.0
    %3347 = vmatmul.mubr.f32.gmra.mrb[0].mxu0 %v1427
    %v3348 = vpop.f32.mrb[0].mxu0
    %v3349 = vadd.f32 %v439, %v3348
    %v3350 = vpop.f32.mrb[0].mxu0
    %3351 = vmatprep.mubr.f32.mxu0 0.0
    %3352 = vmatmul.mubr.f32.gmra.mrb[0].mxu0 %v1430
    %v3353 = vpop.f32.mrb[0].mxu0
    %v3354 = vadd.f32 %v439, %v3353
    %v3355 = vpop.f32.mrb[0].mxu0
    %3356 = vmatprep.mubr.f32.mxu0 0.0
    %3357 = vmatmul.mubr.f32.gmra.mrb[0].mxu0 %v1433
    %v3358 = vpop.f32.mrb[0].mxu0
    %v3359 = vadd.f32 %v439, %v3358
    %v3360 = vpop.f32.mrb[0].mxu0
    %3361 = vmatprep.mubr.f32.mxu0 0.0
    %3362 = vmatmul.mubr.f32.gmra.mrb[0].mxu0 %v1436
    %v3363 = vpop.f32.mrb[0].mxu0
    %v3364 = vadd.f32 %v439, %v3363
    %v3365 = vpop.f32.mrb[0].mxu0
    %3366 = vmatprep.mubr.f32.mxu0 0.0
    %3367 = vmatmul.mubr.f32.gmra.mrb[0].mxu0 %v1439
    %v3368 = vpop.f32.mrb[0].mxu0
    %v3369 = vadd.f32 %v439, %v3368
    %v3370 = vpop.f32.mrb[0].mxu0
    %3371 = vmatprep.mubr.f32.mxu0 0.0
    %3372 = vmatmul.mubr.f32.gmra.mrb[0].mxu0 %v1442
    %v3373 = vpop.f32.mrb[0].mxu0
    %v3374 = vadd.f32 %v439, %v3373
    %v3375 = vpop.f32.mrb[0].mxu0
    %3376 = vmatprep.mubr.f32.mxu0 0.0
    %3377 = vmatmul.mubr.f32.gmra.mrb[0].mxu0 %v1445
    %v3378 = vpop.f32.mrb[0].mxu0
    %v3379 = vadd.f32 %v439, %v3378
    %v3380 = vpop.f32.mrb[0].mxu0
    %3381 = vmatprep.mubr.f32.mxu0 0.0
    %3382 = vmatmul.mubr.f32.gmra.mrb[0].mxu0 %v1448
    %v3383 = vpop.f32.mrb[0].mxu0
    %v3384 = vadd.f32 %v439, %v3383
    %v3385 = vpop.f32.mrb[0].mxu0
    %3386 = vmatprep.mubr.f32.mxu0 0.0
    %3387 = vmatmul.mubr.f32.gmra.mrb[0].mxu0 %v1451
    %v3388 = vpop.f32.mrb[0].mxu0
    %v3389 = vadd.f32 %v439, %v3388
    %v3390 = vpop.f32.mrb[0].mxu0
    %3391 = vmatprep.mubr.f32.mxu0 0.0
    %3392 = vmatmul.mubr.f32.gmra.mrb[0].mxu0 %v1454
    %v3393 = vpop.f32.mrb[0].mxu0
    %v3394 = vadd.f32 %v439, %v3393
    %v3395 = vpop.f32.mrb[0].mxu0
    %3396 = vmatprep.mubr.f32.mxu0 0.0
    %3397 = vmatmul.mubr.f32.gmra.mrb[0].mxu0 %v1457
    %v3398 = vpop.f32.mrb[0].mxu0
    %v3399 = vadd.f32 %v439, %v3398
    %v3400 = vpop.f32.mrb[0].mxu0
    %3401 = vmatprep.mubr.f32.mxu0 0.0
    %3402 = vmatmul.mubr.f32.gmra.mrb[0].mxu0 %v1460
    %v3403 = vpop.f32.mrb[0].mxu0
    %v3404 = vadd.f32 %v439, %v3403
    %v3405 = vpop.f32.mrb[0].mxu0
    %3406 = vmatprep.mubr.f32.mxu0 0.0
    %3407 = vmatmul.mubr.f32.gmra.mrb[0].mxu0 %v1463
    %v3408 = vpop.f32.mrb[0].mxu0
    %v3409 = vadd.f32 %v439, %v3408
    %v3410 = vpop.f32.mrb[0].mxu0
    %3411 = vmatprep.mubr.f32.mxu0 0.0
    %3412 = vmatmul.mubr.f32.gmra.mrb[0].mxu0 %v1466
    %v3413 = vpop.f32.mrb[0].mxu0
    %v3414 = vadd.f32 %v439, %v3413
    %v3415 = vpop.f32.mrb[0].mxu0
    %3416 = vmatprep.mubr.f32.mxu0 0.0
    %3417 = vmatmul.mubr.f32.gmra.mrb[0].mxu0 %v1469
    %v3418 = vpop.f32.mrb[0].mxu0
    %v3419 = vadd.f32 %v439, %v3418
    %v3420 = vpop.f32.mrb[0].mxu0
    %3421 = vmatprep.mubr.f32.mxu0 0.0
    %3422 = vmatmul.mubr.f32.gmra.mrb[0].mxu0 %v1472
    %v3423 = vpop.f32.mrb[0].mxu0
    %v3424 = vadd.f32 %v439, %v3423
    %v3425 = vpop.f32.mrb[0].mxu0
    %3426 = vmatprep.mubr.f32.mxu0 0.0
    %3427 = vmatmul.mubr.f32.gmra.mrb[0].mxu0 %v1475
    %v3428 = vpop.f32.mrb[0].mxu0
    %v3429 = vadd.f32 %v439, %v3428
    %v3430 = vpop.f32.mrb[0].mxu0
    %3431 = vmatprep.mubr.f32.mxu0 0.0
    %3432 = vmatmul.mubr.f32.gmra.mrb[0].mxu0 %v1478
    %v3433 = vpop.f32.mrb[0].mxu0
    %v3434 = vadd.f32 %v439, %v3433
    %v3435 = vpop.f32.mrb[0].mxu0
    %3436 = vmatprep.mubr.f32.mxu0 0.0
    %3437 = vmatmul.mubr.f32.gmra.mrb[0].mxu0 %v1481
    %v3438 = vpop.f32.mrb[0].mxu0
    %v3439 = vadd.f32 %v439, %v3438
    %v3440 = vpop.f32.mrb[0].mxu0
    %3441 = vmatprep.mubr.f32.mxu0 0.0
    %3442 = vmatmul.mubr.f32.gmra.mrb[0].mxu0 %v1484
    %v3443 = vpop.f32.mrb[0].mxu0
    %v3444 = vadd.f32 %v439, %v3443
    %v3445 = vpop.f32.mrb[0].mxu0
    %3446 = vmatprep.mubr.f32.mxu0 0.0
    %3447 = vmatmul.mubr.f32.gmra.mrb[0].mxu0 %v1487
    %v3448 = vpop.f32.mrb[0].mxu0
    %v3449 = vadd.f32 %v439, %v3448
    %v3450 = vpop.f32.mrb[0].mxu0
    %3451 = vmatprep.mubr.f32.mxu0 0.0
    %3452 = vmatmul.mubr.f32.gmra.mrb[0].mxu0 %v1490
    %v3453 = vpop.f32.mrb[0].mxu0
    %v3454 = vadd.f32 %v439, %v3453
    %v3455 = vpop.f32.mrb[0].mxu0
    %3456 = vmatprep.mubr.f32.mxu0 0.0
    %3457 = vmatmul.mubr.f32.gmra.mrb[0].mxu0 %v1493
    %v3458 = vpop.f32.mrb[0].mxu0
    %v3459 = vadd.f32 %v439, %v3458
    %v3460 = vpop.f32.mrb[0].mxu0
    %3461 = vmatprep.mubr.f32.mxu0 0.0
    %3462 = vmatmul.mubr.f32.gmra.mrb[0].mxu0 %v1496
    %v3463 = vpop.f32.mrb[0].mxu0
    %v3464 = vadd.f32 %v439, %v3463
    %v3465 = vpop.f32.mrb[0].mxu0
    %3466 = vmatprep.mubr.f32.mxu0 0.0
    %3467 = vmatmul.mubr.f32.gmra.mrb[0].mxu0 %v1499
    %v3468 = vpop.f32.mrb[0].mxu0
    %v3469 = vadd.f32 %v439, %v3468
    %v3470 = vpop.f32.mrb[0].mxu0
    %3471 = vmatprep.mubr.f32.mxu0 0.0
    %3472 = vmatmul.mubr.f32.gmra.mrb[0].mxu0 %v1502
    %v3473 = vpop.f32.mrb[0].mxu0
    %v3474 = vadd.f32 %v439, %v3473
    %v3475 = vpop.f32.mrb[0].mxu0
    %3476 = vmatprep.mubr.f32.mxu0 0.0
    %3477 = vmatmul.mubr.f32.gmra.mrb[0].mxu0 %v1505
    %v3478 = vpop.f32.mrb[0].mxu0
    %v3479 = vadd.f32 %v439, %v3478
    %v3480 = vpop.f32.mrb[0].mxu0
    %3481 = vmatprep.mubr.f32.mxu0 0.0
    %3482 = vmatmul.mubr.f32.gmra.mrb[0].mxu0 %v1508
    %v3483 = vpop.f32.mrb[0].mxu0
    %v3484 = vadd.f32 %v439, %v3483
    %v3485 = vpop.f32.mrb[0].mxu0
    %3486 = vmatprep.mubr.f32.mxu0 0.0
    %3487 = vmatmul.mubr.f32.gmra.mrb[0].mxu0 %v1511
    %v3488 = vpop.f32.mrb[0].mxu0
    %v3489 = vadd.f32 %v439, %v3488
    %v3490 = vpop.f32.mrb[0].mxu0
    %3491 = vmatprep.mubr.f32.mxu0 0.0
    %3492 = vmatmul.mubr.f32.gmra.mrb[0].mxu0 %v1514
    %v3493 = vpop.f32.mrb[0].mxu0
    %v3494 = vadd.f32 %v439, %v3493
    %v3495 = vpop.f32.mrb[0].mxu0
    %3496 = vmatprep.mubr.f32.mxu0 0.0
    %3497 = vmatmul.mubr.f32.gmra.mrb[0].mxu0 %v1517
    %v3498 = vpop.f32.mrb[0].mxu0
    %v3499 = vadd.f32 %v439, %v3498
    %v3500 = vpop.f32.mrb[0].mxu0
    %3501 = vmatprep.mubr.f32.mxu0 0.0
    %3502 = vmatmul.mubr.f32.gmra.mrb[0].mxu0 %v1520
    %v3503 = vpop.f32.mrb[0].mxu0
    %v3504 = vadd.f32 %v439, %v3503
    %v3505 = vpop.f32.mrb[0].mxu0
    %3506 = vmatprep.mubr.f32.mxu0 0.0
    %3507 = vmatmul.mubr.f32.gmra.mrb[0].mxu0 %v1523
    %v3508 = vpop.f32.mrb[0].mxu0
    %v3509 = vadd.f32 %v439, %v3508
    %v3510 = vpop.f32.mrb[0].mxu0
    %3511 = vmatprep.mubr.f32.mxu0 0.0
    %3512 = vmatmul.mubr.f32.gmra.mrb[0].mxu0 %v1526
    %v3513 = vpop.f32.mrb[0].mxu0
    %v3514 = vadd.f32 %v439, %v3513
    %v3515 = vpop.f32.mrb[0].mxu0
    %3516 = vmatprep.mubr.f32.mxu0 0.0
    %3517 = vmatmul.mubr.f32.gmra.mrb[0].mxu0 %v1529
    %v3518 = vpop.f32.mrb[0].mxu0
    %v3519 = vadd.f32 %v439, %v3518
    %v3520 = vpop.f32.mrb[0].mxu0
    %3521 = vmatprep.mubr.f32.mxu0 0.0
    %3522 = vmatmul.mubr.f32.gmra.mrb[0].mxu0 %v1532
    %v3523 = vpop.f32.mrb[0].mxu0
    %v3524 = vadd.f32 %v439, %v3523
    %v3525 = vpop.f32.mrb[0].mxu0
    %3526 = vmatprep.mubr.f32.mxu0 0.0
    %3527 = vmatmul.mubr.f32.gmra.mrb[0].mxu0 %v1535
    %v3528 = vpop.f32.mrb[0].mxu0
    %v3529 = vadd.f32 %v439, %v3528
    %v3530 = vpop.f32.mrb[0].mxu0
    %3531 = vmatprep.mubr.f32.mxu0 0.0
    %3532 = vmatmul.mubr.f32.gmra.mrb[0].mxu0 %v1538
    %v3533 = vpop.f32.mrb[0].mxu0
    %v3534 = vadd.f32 %v439, %v3533
    %v3535 = vpop.f32.mrb[0].mxu0
    %3536 = vmatprep.mubr.f32.mxu0 0.0
    %3537 = vmatmul.mubr.f32.gmra.mrb[0].mxu0 %v1541
    %v3538 = vpop.f32.mrb[0].mxu0
    %v3539 = vadd.f32 %v439, %v3538
    %v3540 = vpop.f32.mrb[0].mxu0
    %3541 = vmatprep.mubr.f32.mxu0 0.0
    %3542 = vmatmul.mubr.f32.gmra.mrb[0].mxu0 %v1544
    %v3543 = vpop.f32.mrb[0].mxu0
    %v3544 = vadd.f32 %v439, %v3543
    %v3545 = vpop.f32.mrb[0].mxu0
    %3546 = vmatprep.mubr.f32.mxu0 0.0
    %3547 = vmatmul.mubr.f32.gmra.mrb[0].mxu0 %v1547
    %v3548 = vpop.f32.mrb[0].mxu0
    %v3549 = vadd.f32 %v439, %v3548
    %v3550 = vpop.f32.mrb[0].mxu0
    %3551 = vmatprep.mubr.f32.mxu0 0.0
    %3552 = vmatmul.mubr.f32.gmra.mrb[0].mxu0 %v1550
    %v3553 = vpop.f32.mrb[0].mxu0
    %v3554 = vadd.f32 %v439, %v3553
    %v3555 = vpop.f32.mrb[0].mxu0
    %3556 = vmatprep.mubr.f32.mxu0 0.0
    %3557 = vmatmul.mubr.f32.gmra.mrb[0].mxu0 %v1553
    %v3558 = vpop.f32.mrb[0].mxu0
    %v3559 = vadd.f32 %v439, %v3558
    %v3560 = vpop.f32.mrb[0].mxu0
    %3561 = vmatprep.mubr.f32.mxu0 0.0
    %3562 = vmatmul.mubr.f32.gmra.mrb[0].mxu0 %v1556
    %v3563 = vpop.f32.mrb[0].mxu0
    %v3564 = vadd.f32 %v439, %v3563
    %v3565 = vpop.f32.mrb[0].mxu0
    %3566 = vmatprep.mubr.f32.mxu0 0.0
    %3567 = vmatmul.mubr.f32.gmra.mrb[0].mxu0 %v1559
    %v3568 = vpop.f32.mrb[0].mxu0
    %v3569 = vadd.f32 %v439, %v3568
    %v3570 = vpop.f32.mrb[0].mxu0
    %3571 = vmatprep.mubr.f32.mxu0 0.0
    %3572 = vmatmul.mubr.f32.gmra.mrb[0].mxu0 %v1562
    %v3573 = vpop.f32.mrb[0].mxu0
    %v3574 = vadd.f32 %v439, %v3573
    %v3575 = vpop.f32.mrb[0].mxu0
    %3576 = vmatprep.mubr.f32.mxu0 0.0
    %3577 = vmatmul.mubr.f32.gmra.mrb[0].mxu0 %v1565
    %v3578 = vpop.f32.mrb[0].mxu0
    %v3579 = vadd.f32 %v439, %v3578
    %v3580 = vpop.f32.mrb[0].mxu0
    %3581 = vmatprep.mubr.f32.mxu0 0.0
    %3582 = vmatmul.mubr.f32.gmra.mrb[0].mxu0 %v1568
    %v3583 = vpop.f32.mrb[0].mxu0
    %v3584 = vadd.f32 %v439, %v3583
    %v3585 = vpop.f32.mrb[0].mxu0
    %3586 = vmatprep.mubr.f32.mxu0 0.0
    %3587 = vmatmul.mubr.f32.gmra.mrb[0].mxu0 %v1571
    %v3588 = vpop.f32.mrb[0].mxu0
    %v3589 = vadd.f32 %v439, %v3588
    %v3590 = vpop.f32.mrb[0].mxu0
    %3591 = vmatprep.mubr.f32.mxu0 0.0
    %3592 = vmatmul.mubr.f32.gmra.mrb[0].mxu0 %v1574
    %v3593 = vpop.f32.mrb[0].mxu0
    %v3594 = vadd.f32 %v439, %v3593
    %v3595 = vpop.f32.mrb[0].mxu0
    %3596 = vmatprep.mubr.f32.mxu0 0.0
    %3597 = vmatmul.mubr.f32.gmra.mrb[0].mxu0 %v1577
    %v3598 = vpop.f32.mrb[0].mxu0
    %v3599 = vadd.f32 %v439, %v3598
    %v3600 = vpop.f32.mrb[0].mxu0
    %3601 = vmatprep.mubr.f32.mxu0 0.0
    %3602 = vmatmul.mubr.f32.gmra.mrb[0].mxu0 %v1580
    %v3603 = vpop.f32.mrb[0].mxu0
    %v3604 = vadd.f32 %v439, %v3603
    %v3605 = vpop.f32.mrb[0].mxu0
    %3606 = vmatprep.mubr.f32.mxu0 0.0
    %3607 = vmatmul.mubr.f32.gmra.mrb[0].mxu0 %v1583
    %v3608 = vpop.f32.mrb[0].mxu0
    %v3609 = vadd.f32 %v439, %v3608
    %v3610 = vpop.f32.mrb[0].mxu0
    %3611 = vmatprep.mubr.f32.mxu0 0.0
    %3612 = vmatmul.mubr.f32.gmra.mrb[0].mxu0 %v1586
    %v3613 = vpop.f32.mrb[0].mxu0
    %v3614 = vadd.f32 %v439, %v3613
    %v3615 = vpop.f32.mrb[0].mxu0
    %3616 = vmatprep.mubr.f32.mxu0 0.0
    %3617 = vmatmul.mubr.f32.gmra.mrb[0].mxu0 %v1589
    %v3618 = vpop.f32.mrb[0].mxu0
    %v3619 = vadd.f32 %v439, %v3618
    %v3620 = vpop.f32.mrb[0].mxu0
    %3621 = vmatprep.mubr.f32.mxu0 0.0
    %3622 = vmatmul.mubr.f32.gmra.mrb[0].mxu0 %v1592
    %v3623 = vpop.f32.mrb[0].mxu0
    %v3624 = vadd.f32 %v439, %v3623
    %v3625 = vpop.f32.mrb[0].mxu0
    %3626 = vmatprep.mubr.f32.mxu0 0.0
    %3627 = vmatmul.mubr.f32.gmra.mrb[0].mxu0 %v1595
    %v3628 = vpop.f32.mrb[0].mxu0
    %v3629 = vadd.f32 %v439, %v3628
    %v3630 = vpop.f32.mrb[0].mxu0
    %3631 = vmatprep.mubr.f32.mxu0 0.0
    %3632 = vmatmul.mubr.f32.gmra.mrb[0].mxu0 %v1598
    %v3633 = vpop.f32.mrb[0].mxu0
    %v3634 = vadd.f32 %v439, %v3633
    %v3635 = vpop.f32.mrb[0].mxu0
    %3636 = vmatprep.mubr.f32.mxu0 0.0
    %3637 = vmatmul.mubr.f32.gmra.mrb[0].mxu0 %v1601
    %v3638 = vpop.f32.mrb[0].mxu0
    %v3639 = vadd.f32 %v439, %v3638
    %v3640 = vpop.f32.mrb[0].mxu0
    %3641 = vmatprep.mubr.f32.mxu0 0.0
    %3642 = vmatmul.mubr.f32.gmra.mrb[0].mxu0 %v1604
    %v3643 = vpop.f32.mrb[0].mxu0
    %v3644 = vadd.f32 %v439, %v3643
    %v3645 = vpop.f32.mrb[0].mxu0
    %3646 = vmatprep.mubr.f32.mxu0 0.0
    %3647 = vmatmul.mubr.f32.gmra.mrb[0].mxu0 %v1607
    %v3648 = vpop.f32.mrb[0].mxu0
    %v3649 = vadd.f32 %v439, %v3648
    %v3650 = vpop.f32.mrb[0].mxu0
    %3651 = vmatprep.mubr.f32.mxu0 0.0
    %3652 = vmatmul.mubr.f32.gmra.mrb[0].mxu0 %v1610
    %v3653 = vpop.f32.mrb[0].mxu0
    %v3654 = vadd.f32 %v439, %v3653
    %v3655 = vpop.f32.mrb[0].mxu0
    %3656 = vmatprep.mubr.f32.mxu0 0.0
    %3657 = vmatmul.mubr.f32.gmra.mrb[0].mxu0 %v1613
    %v3658 = vpop.f32.mrb[0].mxu0
    %v3659 = vadd.f32 %v439, %v3658
    %v3660 = vpop.f32.mrb[0].mxu0
    %3661 = vmatprep.mubr.f32.mxu0 0.0
    %3662 = vmatmul.mubr.f32.gmra.mrb[0].mxu0 %v1616
    %v3663 = vpop.f32.mrb[0].mxu0
    %v3664 = vadd.f32 %v439, %v3663
    %v3665 = vpop.f32.mrb[0].mxu0
    %3666 = vmatprep.mubr.f32.mxu0 0.0
    %3667 = vmatmul.mubr.f32.gmra.mrb[0].mxu0 %v1619
    %v3668 = vpop.f32.mrb[0].mxu0
    %v3669 = vadd.f32 %v439, %v3668
    %v3670 = vpop.f32.mrb[0].mxu0
    %3671 = vmatprep.mubr.f32.mxu0 0.0
    %3672 = vmatmul.mubr.f32.gmra.mrb[0].mxu0 %v1622
    %v3673 = vpop.f32.mrb[0].mxu0
    %v3674 = vadd.f32 %v439, %v3673
    %v3675 = vpop.f32.mrb[0].mxu0
    %3676 = vmatprep.mubr.f32.mxu0 0.0
    %3677 = vmatmul.mubr.f32.gmra.mrb[0].mxu0 %v1625
    %v3678 = vpop.f32.mrb[0].mxu0
    %v3679 = vadd.f32 %v439, %v3678
    %v3680 = vpop.f32.mrb[0].mxu0
    %3681 = vmatprep.mubr.f32.mxu0 0.0
    %3682 = vmatmul.mubr.f32.gmra.mrb[0].mxu0 %v1628
    %v3683 = vpop.f32.mrb[0].mxu0
    %v3684 = vadd.f32 %v439, %v3683
    %v3685 = vpop.f32.mrb[0].mxu0
    %3686 = vmatprep.mubr.f32.mxu0 0.0
    %3687 = vmatmul.mubr.f32.gmra.mrb[0].mxu0 %v1631
    %v3688 = vpop.f32.mrb[0].mxu0
    %v3689 = vadd.f32 %v439, %v3688
    %v3690 = vpop.f32.mrb[0].mxu0
    %3691 = vmatprep.mubr.f32.mxu0 0.0
    %3692 = vmatmul.mubr.f32.gmra.mrb[0].mxu0 %v1634
    %v3693 = vpop.f32.mrb[0].mxu0
    %v3694 = vadd.f32 %v439, %v3693
    %v3695 = vpop.f32.mrb[0].mxu0
    %3696 = vmatprep.mubr.f32.mxu0 0.0
    %3697 = vmatmul.mubr.f32.gmra.mrb[0].mxu0 %v1637
    %v3698 = vpop.f32.mrb[0].mxu0
    %v3699 = vadd.f32 %v439, %v3698
    %v3700 = vpop.f32.mrb[0].mxu0
    %3701 = vmatprep.mubr.f32.mxu0 0.0
    %3702 = vmatmul.mubr.f32.gmra.mrb[0].mxu0 %v1640
    %v3703 = vpop.f32.mrb[0].mxu0
    %v3704 = vadd.f32 %v439, %v3703
    %v3705 = vpop.f32.mrb[0].mxu0
    %3706 = vdwg.mxu0
    %v3707 = vmax.f32 %v1709, 0.0
    %v3708 = vmax.f32 %v1714, 0.0
    %v3709 = vmax.f32 %v1719, 0.0
    %v3710 = vmax.f32 %v1724, 0.0
    %v3711 = vmax.f32 %v1729, 0.0
    %v3712 = vmax.f32 %v1734, 0.0
    %v3713 = vmax.f32 %v1739, 0.0
    %v3714 = vmax.f32 %v1744, 0.0
    %v3715 = vmax.f32 %v1749, 0.0
    %v3716 = vmax.f32 %v1754, 0.0
    %v3717 = vmax.f32 %v1759, 0.0
    %v3718 = vmax.f32 %v1764, 0.0
    %v3719 = vmax.f32 %v1769, 0.0
    %v3720 = vmax.f32 %v1774, 0.0
    %v3721 = vmax.f32 %v1779, 0.0
    %v3722 = vmax.f32 %v1784, 0.0
    %v3723 = vmax.f32 %v1789, 0.0
    %v3724 = vmax.f32 %v1794, 0.0
    %v3725 = vmax.f32 %v1799, 0.0
    %v3726 = vmax.f32 %v1804, 0.0
    %v3727 = vmax.f32 %v1809, 0.0
    %v3728 = vmax.f32 %v1814, 0.0
    %v3729 = vmax.f32 %v1819, 0.0
    %v3730 = vmax.f32 %v1824, 0.0
    %v3731 = vmax.f32 %v1829, 0.0
    %v3732 = vmax.f32 %v1834, 0.0
    %v3733 = vmax.f32 %v1839, 0.0
    %v3734 = vmax.f32 %v1844, 0.0
    %v3735 = vmax.f32 %v1849, 0.0
    %v3736 = vmax.f32 %v1854, 0.0
    %v3737 = vmax.f32 %v1859, 0.0
    %v3738 = vmax.f32 %v1864, 0.0
    %v3739 = vmax.f32 %v1869, 0.0
    %v3740 = vmax.f32 %v1874, 0.0
    %v3741 = vmax.f32 %v1879, 0.0
    %v3742 = vmax.f32 %v1884, 0.0
    %v3743 = vmax.f32 %v1889, 0.0
    %v3744 = vmax.f32 %v1894, 0.0
    %v3745 = vmax.f32 %v1899, 0.0
    %v3746 = vmax.f32 %v1904, 0.0
    %v3747 = vmax.f32 %v1909, 0.0
    %v3748 = vmax.f32 %v1914, 0.0
    %v3749 = vmax.f32 %v1919, 0.0
    %v3750 = vmax.f32 %v1924, 0.0
    %v3751 = vmax.f32 %v1929, 0.0
    %v3752 = vmax.f32 %v1934, 0.0
    %v3753 = vmax.f32 %v1939, 0.0
    %v3754 = vmax.f32 %v1944, 0.0
    %v3755 = vmax.f32 %v1949, 0.0
    %v3756 = vmax.f32 %v1954, 0.0
    %v3757 = vmax.f32 %v1959, 0.0
    %v3758 = vmax.f32 %v1964, 0.0
    %v3759 = vmax.f32 %v1969, 0.0
    %v3760 = vmax.f32 %v1974, 0.0
    %v3761 = vmax.f32 %v1979, 0.0
    %v3762 = vmax.f32 %v1984, 0.0
    %v3763 = vmax.f32 %v1989, 0.0
    %v3764 = vmax.f32 %v1994, 0.0
    %v3765 = vmax.f32 %v1999, 0.0
    %v3766 = vmax.f32 %v2004, 0.0
    %v3767 = vmax.f32 %v2009, 0.0
    %v3768 = vmax.f32 %v2014, 0.0
    %v3769 = vmax.f32 %v2019, 0.0
    %v3770 = vmax.f32 %v2024, 0.0
    %v3771 = vmax.f32 %v2029, 0.0
    %v3772 = vmax.f32 %v2034, 0.0
    %v3773 = vmax.f32 %v2039, 0.0
    %v3774 = vmax.f32 %v2044, 0.0
    %v3775 = vmax.f32 %v2049, 0.0
    %v3776 = vmax.f32 %v2054, 0.0
    %v3777 = vmax.f32 %v2059, 0.0
    %v3778 = vmax.f32 %v2064, 0.0
    %v3779 = vmax.f32 %v2069, 0.0
    %v3780 = vmax.f32 %v2074, 0.0
    %v3781 = vmax.f32 %v2079, 0.0
    %v3782 = vmax.f32 %v2084, 0.0
    %v3783 = vmax.f32 %v2089, 0.0
    %v3784 = vmax.f32 %v2094, 0.0
    %v3785 = vmax.f32 %v2099, 0.0
    %v3786 = vmax.f32 %v2104, 0.0
    %v3787 = vmax.f32 %v2109, 0.0
    %v3788 = vmax.f32 %v2114, 0.0
    %v3789 = vmax.f32 %v2119, 0.0
    %v3790 = vmax.f32 %v2124, 0.0
    %v3791 = vmax.f32 %v2129, 0.0
    %v3792 = vmax.f32 %v2134, 0.0
    %v3793 = vmax.f32 %v2139, 0.0
    %v3794 = vmax.f32 %v2144, 0.0
    %v3795 = vmax.f32 %v2149, 0.0
    %v3796 = vmax.f32 %v2154, 0.0
    %v3797 = vmax.f32 %v2159, 0.0
    %v3798 = vmax.f32 %v2164, 0.0
    %v3799 = vmax.f32 %v2169, 0.0
    %v3800 = vmax.f32 %v2174, 0.0
    %v3801 = vmax.f32 %v2179, 0.0
    %v3802 = vmax.f32 %v2184, 0.0
    %v3803 = vmax.f32 %v2189, 0.0
    %v3804 = vmax.f32 %v2194, 0.0
    %v3805 = vmax.f32 %v2199, 0.0
    %v3806 = vmax.f32 %v2204, 0.0
    %v3807 = vmax.f32 %v2209, 0.0
    %v3808 = vmax.f32 %v2214, 0.0
    %v3809 = vmax.f32 %v2219, 0.0
    %v3810 = vmax.f32 %v2224, 0.0
    %v3811 = vmax.f32 %v2229, 0.0
    %v3812 = vmax.f32 %v2234, 0.0
    %v3813 = vmax.f32 %v2239, 0.0
    %v3814 = vmax.f32 %v2244, 0.0
    %v3815 = vmax.f32 %v2249, 0.0
    %v3816 = vmax.f32 %v2254, 0.0
    %v3817 = vmax.f32 %v2259, 0.0
    %v3818 = vmax.f32 %v2264, 0.0
    %v3819 = vmax.f32 %v2269, 0.0
    %v3820 = vmax.f32 %v2274, 0.0
    %v3821 = vmax.f32 %v2279, 0.0
    %v3822 = vmax.f32 %v2284, 0.0
    %v3823 = vmax.f32 %v2289, 0.0
    %v3824 = vmax.f32 %v2294, 0.0
    %v3825 = vmax.f32 %v2299, 0.0
    %v3826 = vmax.f32 %v2304, 0.0
    %v3827 = vmax.f32 %v2309, 0.0
    %v3828 = vmax.f32 %v2314, 0.0
    %v3829 = vmax.f32 %v2319, 0.0
    %v3830 = vmax.f32 %v2324, 0.0
    %v3831 = vmax.f32 %v2329, 0.0
    %v3832 = vmax.f32 %v2334, 0.0
    %v3833 = vmax.f32 %v2339, 0.0
    %v3834 = vmax.f32 %v2344, 0.0
    %v3835 = vmax.f32 %v2349, 0.0
    %v3836 = vmax.f32 %v2354, 0.0
    %v3837 = vmax.f32 %v2359, 0.0
    %v3838 = vmax.f32 %v2364, 0.0
    %v3839 = vmax.f32 %v2369, 0.0
    %v3840 = vmax.f32 %v2374, 0.0
    %v3841 = vmax.f32 %v2379, 0.0
    %v3842 = vmax.f32 %v2384, 0.0
    %v3843 = vmax.f32 %v2389, 0.0
    %v3844 = vmax.f32 %v2394, 0.0
    %v3845 = vmax.f32 %v2399, 0.0
    %v3846 = vmax.f32 %v2404, 0.0
    %v3847 = vmax.f32 %v2409, 0.0
    %v3848 = vmax.f32 %v2414, 0.0
    %v3849 = vmax.f32 %v2419, 0.0
    %v3850 = vmax.f32 %v2424, 0.0
    %v3851 = vmax.f32 %v2429, 0.0
    %v3852 = vmax.f32 %v2434, 0.0
    %v3853 = vmax.f32 %v2439, 0.0
    %v3854 = vmax.f32 %v2444, 0.0
    %v3855 = vmax.f32 %v2449, 0.0
    %v3856 = vmax.f32 %v2454, 0.0
    %v3857 = vmax.f32 %v2459, 0.0
    %v3858 = vmax.f32 %v2464, 0.0
    %v3859 = vmax.f32 %v2469, 0.0
    %v3860 = vmax.f32 %v2474, 0.0
    %v3861 = vmax.f32 %v2479, 0.0
    %v3862 = vmax.f32 %v2484, 0.0
    %v3863 = vmax.f32 %v2489, 0.0
    %v3864 = vmax.f32 %v2494, 0.0
    %v3865 = vmax.f32 %v2499, 0.0
    %v3866 = vmax.f32 %v2504, 0.0
    %v3867 = vmax.f32 %v2509, 0.0
    %v3868 = vmax.f32 %v2514, 0.0
    %v3869 = vmax.f32 %v2519, 0.0
    %v3870 = vmax.f32 %v2524, 0.0
    %v3871 = vmax.f32 %v2529, 0.0
    %v3872 = vmax.f32 %v2534, 0.0
    %v3873 = vmax.f32 %v2539, 0.0
    %v3874 = vmax.f32 %v2544, 0.0
    %v3875 = vmax.f32 %v2549, 0.0
    %v3876 = vmax.f32 %v2554, 0.0
    %v3877 = vmax.f32 %v2559, 0.0
    %v3878 = vmax.f32 %v2564, 0.0
    %v3879 = vmax.f32 %v2569, 0.0
    %v3880 = vmax.f32 %v2574, 0.0
    %v3881 = vmax.f32 %v2579, 0.0
    %v3882 = vmax.f32 %v2584, 0.0
    %v3883 = vmax.f32 %v2589, 0.0
    %v3884 = vmax.f32 %v2594, 0.0
    %v3885 = vmax.f32 %v2599, 0.0
    %v3886 = vmax.f32 %v2604, 0.0
    %v3887 = vmax.f32 %v2609, 0.0
    %v3888 = vmax.f32 %v2614, 0.0
    %v3889 = vmax.f32 %v2619, 0.0
    %v3890 = vmax.f32 %v2624, 0.0
    %v3891 = vmax.f32 %v2629, 0.0
    %v3892 = vmax.f32 %v2634, 0.0
    %v3893 = vmax.f32 %v2639, 0.0
    %v3894 = vmax.f32 %v2644, 0.0
    %v3895 = vmax.f32 %v2649, 0.0
    %v3896 = vmax.f32 %v2654, 0.0
    %v3897 = vmax.f32 %v2659, 0.0
    %v3898 = vmax.f32 %v2664, 0.0
    %v3899 = vmax.f32 %v2669, 0.0
    %v3900 = vmax.f32 %v2674, 0.0
    %v3901 = vmax.f32 %v2679, 0.0
    %v3902 = vmax.f32 %v2684, 0.0
    %v3903 = vmax.f32 %v2689, 0.0
    %v3904 = vmax.f32 %v2694, 0.0
    %v3905 = vmax.f32 %v2699, 0.0
    %v3906 = vmax.f32 %v2704, 0.0
    %v3907 = vmax.f32 %v2709, 0.0
    %v3908 = vmax.f32 %v2714, 0.0
    %v3909 = vmax.f32 %v2719, 0.0
    %v3910 = vmax.f32 %v2724, 0.0
    %v3911 = vmax.f32 %v2729, 0.0
    %v3912 = vmax.f32 %v2734, 0.0
    %v3913 = vmax.f32 %v2739, 0.0
    %v3914 = vmax.f32 %v2744, 0.0
    %v3915 = vmax.f32 %v2749, 0.0
    %v3916 = vmax.f32 %v2754, 0.0
    %v3917 = vmax.f32 %v2759, 0.0
    %v3918 = vmax.f32 %v2764, 0.0
    %v3919 = vmax.f32 %v2769, 0.0
    %v3920 = vmax.f32 %v2774, 0.0
    %v3921 = vmax.f32 %v2779, 0.0
    %v3922 = vmax.f32 %v2784, 0.0
    %v3923 = vmax.f32 %v2789, 0.0
    %v3924 = vmax.f32 %v2794, 0.0
    %v3925 = vmax.f32 %v2799, 0.0
    %v3926 = vmax.f32 %v2804, 0.0
    %v3927 = vmax.f32 %v2809, 0.0
    %v3928 = vmax.f32 %v2814, 0.0
    %v3929 = vmax.f32 %v2819, 0.0
    %v3930 = vmax.f32 %v2824, 0.0
    %v3931 = vmax.f32 %v2829, 0.0
    %v3932 = vmax.f32 %v2834, 0.0
    %v3933 = vmax.f32 %v2839, 0.0
    %v3934 = vmax.f32 %v2844, 0.0
    %v3935 = vmax.f32 %v2849, 0.0
    %v3936 = vmax.f32 %v2854, 0.0
    %v3937 = vmax.f32 %v2859, 0.0
    %v3938 = vmax.f32 %v2864, 0.0
    %v3939 = vmax.f32 %v2869, 0.0
    %v3940 = vmax.f32 %v2874, 0.0
    %v3941 = vmax.f32 %v2879, 0.0
    %v3942 = vmax.f32 %v2884, 0.0
    %v3943 = vmax.f32 %v2889, 0.0
    %v3944 = vmax.f32 %v2894, 0.0
    %v3945 = vmax.f32 %v2899, 0.0
    %v3946 = vmax.f32 %v2904, 0.0
    %v3947 = vmax.f32 %v2909, 0.0
    %v3948 = vmax.f32 %v2914, 0.0
    %v3949 = vmax.f32 %v2919, 0.0
    %v3950 = vmax.f32 %v2924, 0.0
    %v3951 = vmax.f32 %v2929, 0.0
    %v3952 = vmax.f32 %v2934, 0.0
    %v3953 = vmax.f32 %v2939, 0.0
    %v3954 = vmax.f32 %v2944, 0.0
    %v3955 = vmax.f32 %v2949, 0.0
    %v3956 = vmax.f32 %v2954, 0.0
    %v3957 = vmax.f32 %v2959, 0.0
    %v3958 = vmax.f32 %v2964, 0.0
    %v3959 = vmax.f32 %v2969, 0.0
    %v3960 = vmax.f32 %v2974, 0.0
    %v3961 = vmax.f32 %v2979, 0.0
    %v3962 = vmax.f32 %v2984, 0.0
    %v3963 = vmax.f32 %v2989, 0.0
    %v3964 = vmax.f32 %v2994, 0.0
    %v3965 = vmax.f32 %v2999, 0.0
    %v3966 = vmax.f32 %v3004, 0.0
    %v3967 = vmax.f32 %v3009, 0.0
    %v3968 = vmax.f32 %v3014, 0.0
    %v3969 = vmax.f32 %v3019, 0.0
    %v3970 = vmax.f32 %v3024, 0.0
    %v3971 = vmax.f32 %v3029, 0.0
    %v3972 = vmax.f32 %v3034, 0.0
    %v3973 = vmax.f32 %v3039, 0.0
    %v3974 = vmax.f32 %v3044, 0.0
    %v3975 = vmax.f32 %v3049, 0.0
    %v3976 = vmax.f32 %v3054, 0.0
    %v3977 = vmax.f32 %v3059, 0.0
    %v3978 = vmax.f32 %v3064, 0.0
    %v3979 = vmax.f32 %v3069, 0.0
    %v3980 = vmax.f32 %v3074, 0.0
    %v3981 = vmax.f32 %v3079, 0.0
    %v3982 = vmax.f32 %v3084, 0.0
    %v3983 = vmax.f32 %v3089, 0.0
    %v3984 = vmax.f32 %v3094, 0.0
    %v3985 = vmax.f32 %v3099, 0.0
    %v3986 = vmax.f32 %v3104, 0.0
    %v3987 = vmax.f32 %v3109, 0.0
    %v3988 = vmax.f32 %v3114, 0.0
    %v3989 = vmax.f32 %v3119, 0.0
    %v3990 = vmax.f32 %v3124, 0.0
    %v3991 = vmax.f32 %v3129, 0.0
    %v3992 = vmax.f32 %v3134, 0.0
    %v3993 = vmax.f32 %v3139, 0.0
    %v3994 = vmax.f32 %v3144, 0.0
    %v3995 = vmax.f32 %v3149, 0.0
    %v3996 = vmax.f32 %v3154, 0.0
    %v3997 = vmax.f32 %v3159, 0.0
    %v3998 = vmax.f32 %v3164, 0.0
    %v3999 = vmax.f32 %v3169, 0.0
    %v4000 = vmax.f32 %v3174, 0.0
    %v4001 = vmax.f32 %v3179, 0.0
    %v4002 = vmax.f32 %v3184, 0.0
    %v4003 = vmax.f32 %v3189, 0.0
    %v4004 = vmax.f32 %v3194, 0.0
    %v4005 = vmax.f32 %v3199, 0.0
    %v4006 = vmax.f32 %v3204, 0.0
    %v4007 = vmax.f32 %v3209, 0.0
    %v4008 = vmax.f32 %v3214, 0.0
    %v4009 = vmax.f32 %v3219, 0.0
    %v4010 = vmax.f32 %v3224, 0.0
    %v4011 = vmax.f32 %v3229, 0.0
    %v4012 = vmax.f32 %v3234, 0.0
    %v4013 = vmax.f32 %v3239, 0.0
    %v4014 = vmax.f32 %v3244, 0.0
    %v4015 = vmax.f32 %v3249, 0.0
    %v4016 = vmax.f32 %v3254, 0.0
    %v4017 = vmax.f32 %v3259, 0.0
    %v4018 = vmax.f32 %v3264, 0.0
    %v4019 = vmax.f32 %v3269, 0.0
    %v4020 = vmax.f32 %v3274, 0.0
    %v4021 = vmax.f32 %v3279, 0.0
    %v4022 = vmax.f32 %v3284, 0.0
    %v4023 = vmax.f32 %v3289, 0.0
    %v4024 = vmax.f32 %v3294, 0.0
    %v4025 = vmax.f32 %v3299, 0.0
    %v4026 = vmax.f32 %v3304, 0.0
    %v4027 = vmax.f32 %v3309, 0.0
    %v4028 = vmax.f32 %v3314, 0.0
    %v4029 = vmax.f32 %v3319, 0.0
    %v4030 = vmax.f32 %v3324, 0.0
    %v4031 = vmax.f32 %v3329, 0.0
    %v4032 = vmax.f32 %v3334, 0.0
    %v4033 = vmax.f32 %v3339, 0.0
    %v4034 = vmax.f32 %v3344, 0.0
    %v4035 = vmax.f32 %v3349, 0.0
    %v4036 = vmax.f32 %v3354, 0.0
    %v4037 = vmax.f32 %v3359, 0.0
    %v4038 = vmax.f32 %v3364, 0.0
    %v4039 = vmax.f32 %v3369, 0.0
    %v4040 = vmax.f32 %v3374, 0.0
    %v4041 = vmax.f32 %v3379, 0.0
    %v4042 = vmax.f32 %v3384, 0.0
    %v4043 = vmax.f32 %v3389, 0.0
    %v4044 = vmax.f32 %v3394, 0.0
    %v4045 = vmax.f32 %v3399, 0.0
    %v4046 = vmax.f32 %v3404, 0.0
    %v4047 = vmax.f32 %v3409, 0.0
    %v4048 = vmax.f32 %v3414, 0.0
    %v4049 = vmax.f32 %v3419, 0.0
    %v4050 = vmax.f32 %v3424, 0.0
    %v4051 = vmax.f32 %v3429, 0.0
    %v4052 = vmax.f32 %v3434, 0.0
    %v4053 = vmax.f32 %v3439, 0.0
    %v4054 = vmax.f32 %v3444, 0.0
    %v4055 = vmax.f32 %v3449, 0.0
    %v4056 = vmax.f32 %v3454, 0.0
    %v4057 = vmax.f32 %v3459, 0.0
    %v4058 = vmax.f32 %v3464, 0.0
    %v4059 = vmax.f32 %v3469, 0.0
    %v4060 = vmax.f32 %v3474, 0.0
    %v4061 = vmax.f32 %v3479, 0.0
    %v4062 = vmax.f32 %v3484, 0.0
    %v4063 = vmax.f32 %v3489, 0.0
    %v4064 = vmax.f32 %v3494, 0.0
    %v4065 = vmax.f32 %v3499, 0.0
    %v4066 = vmax.f32 %v3504, 0.0
    %v4067 = vmax.f32 %v3509, 0.0
    %v4068 = vmax.f32 %v3514, 0.0
    %v4069 = vmax.f32 %v3519, 0.0
    %v4070 = vmax.f32 %v3524, 0.0
    %v4071 = vmax.f32 %v3529, 0.0
    %v4072 = vmax.f32 %v3534, 0.0
    %v4073 = vmax.f32 %v3539, 0.0
    %v4074 = vmax.f32 %v3544, 0.0
    %v4075 = vmax.f32 %v3549, 0.0
    %v4076 = vmax.f32 %v3554, 0.0
    %v4077 = vmax.f32 %v3559, 0.0
    %v4078 = vmax.f32 %v3564, 0.0
    %v4079 = vmax.f32 %v3569, 0.0
    %v4080 = vmax.f32 %v3574, 0.0
    %v4081 = vmax.f32 %v3579, 0.0
    %v4082 = vmax.f32 %v3584, 0.0
    %v4083 = vmax.f32 %v3589, 0.0
    %v4084 = vmax.f32 %v3594, 0.0
    %v4085 = vmax.f32 %v3599, 0.0
    %v4086 = vmax.f32 %v3604, 0.0
    %v4087 = vmax.f32 %v3609, 0.0
    %v4088 = vmax.f32 %v3614, 0.0
    %v4089 = vmax.f32 %v3619, 0.0
    %v4090 = vmax.f32 %v3624, 0.0
    %v4091 = vmax.f32 %v3629, 0.0
    %v4092 = vmax.f32 %v3634, 0.0
    %v4093 = vmax.f32 %v3639, 0.0
    %v4094 = vmax.f32 %v3644, 0.0
    %v4095 = vmax.f32 %v3649, 0.0
    %v4096 = vmax.f32 %v3654, 0.0
    %v4097 = vmax.f32 %v3659, 0.0
    %v4098 = vmax.f32 %v3664, 0.0
    %v4099 = vmax.f32 %v3669, 0.0
    %v4100 = vmax.f32 %v3674, 0.0
    %v4101 = vmax.f32 %v3679, 0.0
    %v4102 = vmax.f32 %v3684, 0.0
    %v4103 = vmax.f32 %v3689, 0.0
    %v4104 = vmax.f32 %v3694, 0.0
    %v4105 = vmax.f32 %v3699, 0.0
    %v4106 = vmax.f32 %v3704, 0.0
    %v4107 = vld [vmem:[%s4] sm:$0xff]
    %v4108 = vld [vmem:[%s4 + $0x8] sm:$0xff]
    %v4109 = vld [vmem:[%s4 + $0x10] sm:$0xff]
    %v4110 = vld [vmem:[%s4 + $0x18] sm:$0xff]
    %v4111 = vld [vmem:[%s4 + $0x20] sm:$0xff]
    %v4112 = vld [vmem:[%s4 + $0x28] sm:$0xff]
    %v4113 = vld [vmem:[%s4 + $0x30] sm:$0xff]
    %v4114 = vld [vmem:[%s4 + $0x38] sm:$0xff]
    %s4115 = scalar_lea.vmem %s4, 64
    %v4116 = vld [vmem:[%s4115] sm:$0xff]
    %v4117 = vld [vmem:[%s4115 + $0x8] sm:$0xff]
    %v4118 = vld [vmem:[%s4115 + $0x10] sm:$0xff]
    %v4119 = vld [vmem:[%s4115 + $0x18] sm:$0xff]
    %v4120 = vld [vmem:[%s4115 + $0x20] sm:$0xff]
    %v4121 = vld [vmem:[%s4115 + $0x28] sm:$0xff]
    %v4122 = vld [vmem:[%s4115 + $0x30] sm:$0xff]
    %v4123 = vld [vmem:[%s4115 + $0x38] sm:$0xff]
    %vm4124 = vcmask 523264
    %v4126 = vsel %vm4124, %v3723, 0
    %v4129 = vsel %vm4124, %v3724, 0
    %v4132 = vsel %vm4124, %v3725, 0
    %v4135 = vsel %vm4124, %v3726, 0
    %v4138 = vsel %vm4124, %v3727, 0
    %v4141 = vsel %vm4124, %v3728, 0
    %v4144 = vsel %vm4124, %v3729, 0
    %v4147 = vsel %vm4124, %v3730, 0
    %v4150 = vsel %vm4124, %v3731, 0
    %v4153 = vsel %vm4124, %v3732, 0
    %v4156 = vsel %vm4124, %v3733, 0
    %v4159 = vsel %vm4124, %v3734, 0
    %v4162 = vsel %vm4124, %v3735, 0
    %v4165 = vsel %vm4124, %v3736, 0
    %v4168 = vsel %vm4124, %v3737, 0
    %v4171 = vsel %vm4124, %v3738, 0
    %4173 = vmatprep.subr.mxu0 0.0
    %4174 = vmatpush1.msra.mxu0 %v4116
    %4175 = vmatprep.subr.mxu0 0.0
    %4176 = vmatpush1.msra.mxu0 %v4117
    %4177 = vmatprep.subr.mxu0 0.0
    %4178 = vmatpush1.msra.mxu0 %v4118
    %4179 = vmatprep.subr.mxu0 0.0
    %4180 = vmatpush1.msra.mxu0 %v4119
    %4181 = vmatprep.subr.mxu0 0.0
    %4182 = vmatpush1.msra.mxu0 %v4120
    %4183 = vmatprep.subr.mxu0 0.0
    %4184 = vmatpush1.msra.mxu0 %v4121
    %4185 = vmatprep.subr.mxu0 0.0
    %4186 = vmatpush1.msra.mxu0 %v4122
    %4187 = vmatprep.subr.mxu0 0.0
    %4188 = vmatpush1.msra.mxu0 %v4123
    %4189 = vmatprep.subr.mxu0 0.0
    %4190 = vmatpush1.msra.mxu0 0.0
    %4191 = vmatprep.subr.mxu0 0.0
    %4192 = vmatpush1.msra.mxu0 0.0
    %4193 = vmatprep.subr.mxu0 0.0
    %4194 = vmatpush1.msra.mxu0 0.0
    %4195 = vmatprep.subr.mxu0 0.0
    %4196 = vmatpush1.msra.mxu0 0.0
    %4197 = vmatprep.subr.mxu0 0.0
    %4198 = vmatpush1.msra.mxu0 0.0
    %4199 = vmatprep.subr.mxu0 0.0
    %4200 = vmatpush1.msra.mxu0 0.0
    %4201 = vmatprep.subr.mxu0 0.0
    %4202 = vmatpush1.msra.mxu0 0.0
    %4203 = vmatprep.subr.mxu0 0.0
    %4204 = vmatpush1.msra.mxu0 0.0
    %4205 = vmatprep.subr.mxu0 0.0
    %4206 = vmatpush1.msra.mxu0 0.0
    %4207 = vmatprep.subr.mxu0 0.0
    %4208 = vmatpush1.msra.mxu0 0.0
    %4209 = vmatprep.subr.mxu0 0.0
    %4210 = vmatpush1.msra.mxu0 0.0
    %4211 = vmatprep.subr.mxu0 0.0
    %4212 = vmatpush1.msra.mxu0 0.0
    %4213 = vmatprep.subr.mxu0 0.0
    %4214 = vmatpush1.msra.mxu0 0.0
    %4215 = vmatprep.subr.mxu0 0.0
    %4216 = vmatpush1.msra.mxu0 0.0
    %4217 = vmatprep.subr.mxu0 0.0
    %4218 = vmatpush1.msra.mxu0 0.0
    %4219 = vmatprep.subr.mxu0 0.0
    %4220 = vmatpush1.msra.mxu0 0.0
    %4221 = vmatprep.subr.mxu0 0.0
    %4222 = vmatpush1.msra.mxu0 0.0
    %4223 = vmatprep.subr.mxu0 0.0
    %4224 = vmatpush1.msra.mxu0 0.0
    %4225 = vmatprep.subr.mxu0 0.0
    %4226 = vmatpush1.msra.mxu0 0.0
    %4227 = vmatprep.subr.mxu0 0.0
    %4228 = vmatpush1.msra.mxu0 0.0
    %4229 = vmatprep.subr.mxu0 0.0
    %4230 = vmatpush1.msra.mxu0 0.0
    %4231 = vmatprep.subr.mxu0 0.0
    %4232 = vmatpush1.msra.mxu0 0.0
    %4233 = vmatprep.subr.mxu0 0.0
    %4234 = vmatpush1.msra.mxu0 0.0
    %4235 = vmatprep.subr.mxu0 0.0
    %4236 = vmatpush1.msra.mxu0 0.0
    %4237 = vmatprep.mubr.f32.mxu0 0.0
    %4238 = vmatmul.mubr.f32.gmra.mrb[0].mxu0 %v4126
    %v4239 = vpop.f32.mrb[0].mxu0
    %v4240 = vadd.f32 0.0, %v4239
    %v4241 = vpop.f32.mrb[0].mxu0
    %4242 = vmatprep.mubr.f32.mxu0 0.0
    %4243 = vmatmul.mubr.f32.gmra.mrb[0].mxu0 %v4129
    %v4244 = vpop.f32.mrb[0].mxu0
    %v4245 = vadd.f32 0.0, %v4244
    %v4246 = vpop.f32.mrb[0].mxu0
    %4247 = vmatprep.mubr.f32.mxu0 0.0
    %4248 = vmatmul.mubr.f32.gmra.mrb[0].mxu0 %v4132
    %v4249 = vpop.f32.mrb[0].mxu0
    %v4250 = vadd.f32 0.0, %v4249
    %v4251 = vpop.f32.mrb[0].mxu0
    %4252 = vmatprep.mubr.f32.mxu0 0.0
    %4253 = vmatmul.mubr.f32.gmra.mrb[0].mxu0 %v4135
    %v4254 = vpop.f32.mrb[0].mxu0
    %v4255 = vadd.f32 0.0, %v4254
    %v4256 = vpop.f32.mrb[0].mxu0
    %4257 = vmatprep.mubr.f32.mxu0 0.0
    %4258 = vmatmul.mubr.f32.gmra.mrb[0].mxu0 %v4138
    %v4259 = vpop.f32.mrb[0].mxu0
    %v4260 = vadd.f32 0.0, %v4259
    %v4261 = vpop.f32.mrb[0].mxu0
    %4262 = vmatprep.mubr.f32.mxu0 0.0
    %4263 = vmatmul.mubr.f32.gmra.mrb[0].mxu0 %v4141
    %v4264 = vpop.f32.mrb[0].mxu0
    %v4265 = vadd.f32 0.0, %v4264
    %v4266 = vpop.f32.mrb[0].mxu0
    %4267 = vmatprep.mubr.f32.mxu0 0.0
    %4268 = vmatmul.mubr.f32.gmra.mrb[0].mxu0 %v4144
    %v4269 = vpop.f32.mrb[0].mxu0
    %v4270 = vadd.f32 0.0, %v4269
    %v4271 = vpop.f32.mrb[0].mxu0
    %4272 = vmatprep.mubr.f32.mxu0 0.0
    %4273 = vmatmul.mubr.f32.gmra.mrb[0].mxu0 %v4147
    %v4274 = vpop.f32.mrb[0].mxu0
    %v4275 = vadd.f32 0.0, %v4274
    %v4276 = vpop.f32.mrb[0].mxu0
    %4277 = vmatprep.mubr.f32.mxu0 0.0
    %4278 = vmatmul.mubr.f32.gmra.mrb[0].mxu0 %v4150
    %v4279 = vpop.f32.mrb[0].mxu0
    %v4280 = vadd.f32 0.0, %v4279
    %v4281 = vpop.f32.mrb[0].mxu0
    %4282 = vmatprep.mubr.f32.mxu0 0.0
    %4283 = vmatmul.mubr.f32.gmra.mrb[0].mxu0 %v4153
    %v4284 = vpop.f32.mrb[0].mxu0
    %v4285 = vadd.f32 0.0, %v4284
    %v4286 = vpop.f32.mrb[0].mxu0
    %4287 = vmatprep.mubr.f32.mxu0 0.0
    %4288 = vmatmul.mubr.f32.gmra.mrb[0].mxu0 %v4156
    %v4289 = vpop.f32.mrb[0].mxu0
    %v4290 = vadd.f32 0.0, %v4289
    %v4291 = vpop.f32.mrb[0].mxu0
    %4292 = vmatprep.mubr.f32.mxu0 0.0
    %4293 = vmatmul.mubr.f32.gmra.mrb[0].mxu0 %v4159
    %v4294 = vpop.f32.mrb[0].mxu0
    %v4295 = vadd.f32 0.0, %v4294
    %v4296 = vpop.f32.mrb[0].mxu0
    %4297 = vmatprep.mubr.f32.mxu0 0.0
    %4298 = vmatmul.mubr.f32.gmra.mrb[0].mxu0 %v4162
    %v4299 = vpop.f32.mrb[0].mxu0
    %v4300 = vadd.f32 0.0, %v4299
    %v4301 = vpop.f32.mrb[0].mxu0
    %4302 = vmatprep.mubr.f32.mxu0 0.0
    %4303 = vmatmul.mubr.f32.gmra.mrb[0].mxu0 %v4165
    %v4304 = vpop.f32.mrb[0].mxu0
    %v4305 = vadd.f32 0.0, %v4304
    %v4306 = vpop.f32.mrb[0].mxu0
    %4307 = vmatprep.mubr.f32.mxu0 0.0
    %4308 = vmatmul.mubr.f32.gmra.mrb[0].mxu0 %v4168
    %v4309 = vpop.f32.mrb[0].mxu0
    %v4310 = vadd.f32 0.0, %v4309
    %v4311 = vpop.f32.mrb[0].mxu0
    %4312 = vmatprep.mubr.f32.mxu0 0.0
    %4313 = vmatmul.mubr.f32.gmra.mrb[0].mxu0 %v4171
    %v4314 = vpop.f32.mrb[0].mxu0
    %v4315 = vadd.f32 0.0, %v4314
    %v4316 = vpop.f32.mrb[0].mxu0
    %4317 = vdwg.mxu0
    %v4319 = vsel %vm4124, %v3707, 0
    %v4322 = vsel %vm4124, %v3708, 0
    %v4325 = vsel %vm4124, %v3709, 0
    %v4328 = vsel %vm4124, %v3710, 0
    %v4331 = vsel %vm4124, %v3711, 0
    %v4334 = vsel %vm4124, %v3712, 0
    %v4337 = vsel %vm4124, %v3713, 0
    %v4340 = vsel %vm4124, %v3714, 0
    %v4343 = vsel %vm4124, %v3715, 0
    %v4346 = vsel %vm4124, %v3716, 0
    %v4349 = vsel %vm4124, %v3717, 0
    %v4352 = vsel %vm4124, %v3718, 0
    %v4355 = vsel %vm4124, %v3719, 0
    %v4358 = vsel %vm4124, %v3720, 0
    %v4361 = vsel %vm4124, %v3721, 0
    %v4364 = vsel %vm4124, %v3722, 0
    %4366 = vmatprep.subr.mxu0 0.0
    %4367 = vmatpush1.msra.mxu0 %v4107
    %4368 = vmatprep.subr.mxu0 0.0
    %4369 = vmatpush1.msra.mxu0 %v4108
    %4370 = vmatprep.subr.mxu0 0.0
    %4371 = vmatpush1.msra.mxu0 %v4109
    %4372 = vmatprep.subr.mxu0 0.0
    %4373 = vmatpush1.msra.mxu0 %v4110
    %4374 = vmatprep.subr.mxu0 0.0
    %4375 = vmatpush1.msra.mxu0 %v4111
    %4376 = vmatprep.subr.mxu0 0.0
    %4377 = vmatpush1.msra.mxu0 %v4112
    %4378 = vmatprep.subr.mxu0 0.0
    %4379 = vmatpush1.msra.mxu0 %v4113
    %4380 = vmatprep.subr.mxu0 0.0
    %4381 = vmatpush1.msra.mxu0 %v4114
    %4382 = vmatprep.subr.mxu0 0.0
    %4383 = vmatpush1.msra.mxu0 0.0
    %4384 = vmatprep.subr.mxu0 0.0
    %4385 = vmatpush1.msra.mxu0 0.0
    %4386 = vmatprep.subr.mxu0 0.0
    %4387 = vmatpush1.msra.mxu0 0.0
    %4388 = vmatprep.subr.mxu0 0.0
    %4389 = vmatpush1.msra.mxu0 0.0
    %4390 = vmatprep.subr.mxu0 0.0
    %4391 = vmatpush1.msra.mxu0 0.0
    %4392 = vmatprep.subr.mxu0 0.0
    %4393 = vmatpush1.msra.mxu0 0.0
    %4394 = vmatprep.subr.mxu0 0.0
    %4395 = vmatpush1.msra.mxu0 0.0
    %4396 = vmatprep.subr.mxu0 0.0
    %4397 = vmatpush1.msra.mxu0 0.0
    %4398 = vmatprep.subr.mxu0 0.0
    %4399 = vmatpush1.msra.mxu0 0.0
    %4400 = vmatprep.subr.mxu0 0.0
    %4401 = vmatpush1.msra.mxu0 0.0
    %4402 = vmatprep.subr.mxu0 0.0
    %4403 = vmatpush1.msra.mxu0 0.0
    %4404 = vmatprep.subr.mxu0 0.0
    %4405 = vmatpush1.msra.mxu0 0.0
    %4406 = vmatprep.subr.mxu0 0.0
    %4407 = vmatpush1.msra.mxu0 0.0
    %4408 = vmatprep.subr.mxu0 0.0
    %4409 = vmatpush1.msra.mxu0 0.0
    %4410 = vmatprep.subr.mxu0 0.0
    %4411 = vmatpush1.msra.mxu0 0.0
    %4412 = vmatprep.subr.mxu0 0.0
    %4413 = vmatpush1.msra.mxu0 0.0
    %4414 = vmatprep.subr.mxu0 0.0
    %4415 = vmatpush1.msra.mxu0 0.0
    %4416 = vmatprep.subr.mxu0 0.0
    %4417 = vmatpush1.msra.mxu0 0.0
    %4418 = vmatprep.subr.mxu0 0.0
    %4419 = vmatpush1.msra.mxu0 0.0
    %4420 = vmatprep.subr.mxu0 0.0
    %4421 = vmatpush1.msra.mxu0 0.0
    %4422 = vmatprep.subr.mxu0 0.0
    %4423 = vmatpush1.msra.mxu0 0.0
    %4424 = vmatprep.subr.mxu0 0.0
    %4425 = vmatpush1.msra.mxu0 0.0
    %4426 = vmatprep.subr.mxu0 0.0
    %4427 = vmatpush1.msra.mxu0 0.0
    %4428 = vmatprep.subr.mxu0 0.0
    %4429 = vmatpush1.msra.mxu0 0.0
    %4430 = vmatprep.mubr.f32.mxu0 0.0
    %4431 = vmatmul.mubr.f32.gmra.mrb[0].mxu0 %v4319
    %v4432 = vpop.f32.mrb[0].mxu0
    %v4433 = vadd.f32 %v4240, %v4432
    %v4434 = vpop.f32.mrb[0].mxu0
    %4435 = vmatprep.mubr.f32.mxu0 0.0
    %4436 = vmatmul.mubr.f32.gmra.mrb[0].mxu0 %v4322
    %v4437 = vpop.f32.mrb[0].mxu0
    %v4438 = vadd.f32 %v4245, %v4437
    %v4439 = vpop.f32.mrb[0].mxu0
    %4440 = vmatprep.mubr.f32.mxu0 0.0
    %4441 = vmatmul.mubr.f32.gmra.mrb[0].mxu0 %v4325
    %v4442 = vpop.f32.mrb[0].mxu0
    %v4443 = vadd.f32 %v4250, %v4442
    %v4444 = vpop.f32.mrb[0].mxu0
    %4445 = vmatprep.mubr.f32.mxu0 0.0
    %4446 = vmatmul.mubr.f32.gmra.mrb[0].mxu0 %v4328
    %v4447 = vpop.f32.mrb[0].mxu0
    %v4448 = vadd.f32 %v4255, %v4447
    %v4449 = vpop.f32.mrb[0].mxu0
    %4450 = vmatprep.mubr.f32.mxu0 0.0
    %4451 = vmatmul.mubr.f32.gmra.mrb[0].mxu0 %v4331
    %v4452 = vpop.f32.mrb[0].mxu0
    %v4453 = vadd.f32 %v4260, %v4452
    %v4454 = vpop.f32.mrb[0].mxu0
    %4455 = vmatprep.mubr.f32.mxu0 0.0
    %4456 = vmatmul.mubr.f32.gmra.mrb[0].mxu0 %v4334
    %v4457 = vpop.f32.mrb[0].mxu0
    %v4458 = vadd.f32 %v4265, %v4457
    %v4459 = vpop.f32.mrb[0].mxu0
    %4460 = vmatprep.mubr.f32.mxu0 0.0
    %4461 = vmatmul.mubr.f32.gmra.mrb[0].mxu0 %v4337
    %v4462 = vpop.f32.mrb[0].mxu0
    %v4463 = vadd.f32 %v4270, %v4462
    %v4464 = vpop.f32.mrb[0].mxu0
    %4465 = vmatprep.mubr.f32.mxu0 0.0
    %4466 = vmatmul.mubr.f32.gmra.mrb[0].mxu0 %v4340
    %v4467 = vpop.f32.mrb[0].mxu0
    %v4468 = vadd.f32 %v4275, %v4467
    %v4469 = vpop.f32.mrb[0].mxu0
    %4470 = vmatprep.mubr.f32.mxu0 0.0
    %4471 = vmatmul.mubr.f32.gmra.mrb[0].mxu0 %v4343
    %v4472 = vpop.f32.mrb[0].mxu0
    %v4473 = vadd.f32 %v4280, %v4472
    %v4474 = vpop.f32.mrb[0].mxu0
    %4475 = vmatprep.mubr.f32.mxu0 0.0
    %4476 = vmatmul.mubr.f32.gmra.mrb[0].mxu0 %v4346
    %v4477 = vpop.f32.mrb[0].mxu0
    %v4478 = vadd.f32 %v4285, %v4477
    %v4479 = vpop.f32.mrb[0].mxu0
    %4480 = vmatprep.mubr.f32.mxu0 0.0
    %4481 = vmatmul.mubr.f32.gmra.mrb[0].mxu0 %v4349
    %v4482 = vpop.f32.mrb[0].mxu0
    %v4483 = vadd.f32 %v4290, %v4482
    %v4484 = vpop.f32.mrb[0].mxu0
    %4485 = vmatprep.mubr.f32.mxu0 0.0
    %4486 = vmatmul.mubr.f32.gmra.mrb[0].mxu0 %v4352
    %v4487 = vpop.f32.mrb[0].mxu0
    %v4488 = vadd.f32 %v4295, %v4487
    %v4489 = vpop.f32.mrb[0].mxu0
    %4490 = vmatprep.mubr.f32.mxu0 0.0
    %4491 = vmatmul.mubr.f32.gmra.mrb[0].mxu0 %v4355
    %v4492 = vpop.f32.mrb[0].mxu0
    %v4493 = vadd.f32 %v4300, %v4492
    %v4494 = vpop.f32.mrb[0].mxu0
    %4495 = vmatprep.mubr.f32.mxu0 0.0
    %4496 = vmatmul.mubr.f32.gmra.mrb[0].mxu0 %v4358
    %v4497 = vpop.f32.mrb[0].mxu0
    %v4498 = vadd.f32 %v4305, %v4497
    %v4499 = vpop.f32.mrb[0].mxu0
    %4500 = vmatprep.mubr.f32.mxu0 0.0
    %4501 = vmatmul.mubr.f32.gmra.mrb[0].mxu0 %v4361
    %v4502 = vpop.f32.mrb[0].mxu0
    %v4503 = vadd.f32 %v4310, %v4502
    %v4504 = vpop.f32.mrb[0].mxu0
    %4505 = vmatprep.mubr.f32.mxu0 0.0
    %4506 = vmatmul.mubr.f32.gmra.mrb[0].mxu0 %v4364
    %v4507 = vpop.f32.mrb[0].mxu0
    %v4508 = vadd.f32 %v4315, %v4507
    %v4509 = vpop.f32.mrb[0].mxu0
    %4510 = vdwg.mxu0
    %s4511 = scalar_lea.vmem %s4, 128
    %v4512 = vld [vmem:[%s4511] sm:$0xff]
    %v4513 = vld [vmem:[%s4511 + $0x8] sm:$0xff]
    %v4514 = vld [vmem:[%s4511 + $0x10] sm:$0xff]
    %v4515 = vld [vmem:[%s4511 + $0x18] sm:$0xff]
    %v4516 = vld [vmem:[%s4511 + $0x20] sm:$0xff]
    %v4517 = vld [vmem:[%s4511 + $0x28] sm:$0xff]
    %v4518 = vld [vmem:[%s4511 + $0x30] sm:$0xff]
    %v4519 = vld [vmem:[%s4511 + $0x38] sm:$0xff]
    %v4521 = vsel %vm4124, %v3739, 0
    %v4524 = vsel %vm4124, %v3740, 0
    %v4527 = vsel %vm4124, %v3741, 0
    %v4530 = vsel %vm4124, %v3742, 0
    %v4533 = vsel %vm4124, %v3743, 0
    %v4536 = vsel %vm4124, %v3744, 0
    %v4539 = vsel %vm4124, %v3745, 0
    %v4542 = vsel %vm4124, %v3746, 0
    %v4545 = vsel %vm4124, %v3747, 0
    %v4548 = vsel %vm4124, %v3748, 0
    %v4551 = vsel %vm4124, %v3749, 0
    %v4554 = vsel %vm4124, %v3750, 0
    %v4557 = vsel %vm4124, %v3751, 0
    %v4560 = vsel %vm4124, %v3752, 0
    %v4563 = vsel %vm4124, %v3753, 0
    %v4566 = vsel %vm4124, %v3754, 0
    %4568 = vmatprep.subr.mxu0 0.0
    %4569 = vmatpush1.msra.mxu0 %v4512
    %4570 = vmatprep.subr.mxu0 0.0
    %4571 = vmatpush1.msra.mxu0 %v4513
    %4572 = vmatprep.subr.mxu0 0.0
    %4573 = vmatpush1.msra.mxu0 %v4514
    %4574 = vmatprep.subr.mxu0 0.0
    %4575 = vmatpush1.msra.mxu0 %v4515
    %4576 = vmatprep.subr.mxu0 0.0
    %4577 = vmatpush1.msra.mxu0 %v4516
    %4578 = vmatprep.subr.mxu0 0.0
    %4579 = vmatpush1.msra.mxu0 %v4517
    %4580 = vmatprep.subr.mxu0 0.0
    %4581 = vmatpush1.msra.mxu0 %v4518
    %4582 = vmatprep.subr.mxu0 0.0
    %4583 = vmatpush1.msra.mxu0 %v4519
    %4584 = vmatprep.subr.mxu0 0.0
    %4585 = vmatpush1.msra.mxu0 0.0
    %4586 = vmatprep.subr.mxu0 0.0
    %4587 = vmatpush1.msra.mxu0 0.0
    %4588 = vmatprep.subr.mxu0 0.0
    %4589 = vmatpush1.msra.mxu0 0.0
    %4590 = vmatprep.subr.mxu0 0.0
    %4591 = vmatpush1.msra.mxu0 0.0
    %4592 = vmatprep.subr.mxu0 0.0
    %4593 = vmatpush1.msra.mxu0 0.0
    %4594 = vmatprep.subr.mxu0 0.0
    %4595 = vmatpush1.msra.mxu0 0.0
    %4596 = vmatprep.subr.mxu0 0.0
    %4597 = vmatpush1.msra.mxu0 0.0
    %4598 = vmatprep.subr.mxu0 0.0
    %4599 = vmatpush1.msra.mxu0 0.0
    %4600 = vmatprep.subr.mxu0 0.0
    %4601 = vmatpush1.msra.mxu0 0.0
    %4602 = vmatprep.subr.mxu0 0.0
    %4603 = vmatpush1.msra.mxu0 0.0
    %4604 = vmatprep.subr.mxu0 0.0
    %4605 = vmatpush1.msra.mxu0 0.0
    %4606 = vmatprep.subr.mxu0 0.0
    %4607 = vmatpush1.msra.mxu0 0.0
    %4608 = vmatprep.subr.mxu0 0.0
    %4609 = vmatpush1.msra.mxu0 0.0
    %4610 = vmatprep.subr.mxu0 0.0
    %4611 = vmatpush1.msra.mxu0 0.0
    %4612 = vmatprep.subr.mxu0 0.0
    %4613 = vmatpush1.msra.mxu0 0.0
    %4614 = vmatprep.subr.mxu0 0.0
    %4615 = vmatpush1.msra.mxu0 0.0
    %4616 = vmatprep.subr.mxu0 0.0
    %4617 = vmatpush1.msra.mxu0 0.0
    %4618 = vmatprep.subr.mxu0 0.0
    %4619 = vmatpush1.msra.mxu0 0.0
    %4620 = vmatprep.subr.mxu0 0.0
    %4621 = vmatpush1.msra.mxu0 0.0
    %4622 = vmatprep.subr.mxu0 0.0
    %4623 = vmatpush1.msra.mxu0 0.0
    %4624 = vmatprep.subr.mxu0 0.0
    %4625 = vmatpush1.msra.mxu0 0.0
    %4626 = vmatprep.subr.mxu0 0.0
    %4627 = vmatpush1.msra.mxu0 0.0
    %4628 = vmatprep.subr.mxu0 0.0
    %4629 = vmatpush1.msra.mxu0 0.0
    %4630 = vmatprep.subr.mxu0 0.0
    %4631 = vmatpush1.msra.mxu0 0.0
    %4632 = vmatprep.mubr.f32.mxu0 0.0
    %4633 = vmatmul.mubr.f32.gmra.mrb[0].mxu0 %v4521
    %v4634 = vpop.f32.mrb[0].mxu0
    %v4635 = vadd.f32 0.0, %v4634
    %v4636 = vpop.f32.mrb[0].mxu0
    %4637 = vmatprep.mubr.f32.mxu0 0.0
    %4638 = vmatmul.mubr.f32.gmra.mrb[0].mxu0 %v4524
    %v4639 = vpop.f32.mrb[0].mxu0
    %v4640 = vadd.f32 0.0, %v4639
    %v4641 = vpop.f32.mrb[0].mxu0
    %4642 = vmatprep.mubr.f32.mxu0 0.0
    %4643 = vmatmul.mubr.f32.gmra.mrb[0].mxu0 %v4527
    %v4644 = vpop.f32.mrb[0].mxu0
    %v4645 = vadd.f32 0.0, %v4644
    %v4646 = vpop.f32.mrb[0].mxu0
    %4647 = vmatprep.mubr.f32.mxu0 0.0
    %4648 = vmatmul.mubr.f32.gmra.mrb[0].mxu0 %v4530
    %v4649 = vpop.f32.mrb[0].mxu0
    %v4650 = vadd.f32 0.0, %v4649
    %v4651 = vpop.f32.mrb[0].mxu0
    %4652 = vmatprep.mubr.f32.mxu0 0.0
    %4653 = vmatmul.mubr.f32.gmra.mrb[0].mxu0 %v4533
    %v4654 = vpop.f32.mrb[0].mxu0
    %v4655 = vadd.f32 0.0, %v4654
    %v4656 = vpop.f32.mrb[0].mxu0
    %4657 = vmatprep.mubr.f32.mxu0 0.0
    %4658 = vmatmul.mubr.f32.gmra.mrb[0].mxu0 %v4536
    %v4659 = vpop.f32.mrb[0].mxu0
    %v4660 = vadd.f32 0.0, %v4659
    %v4661 = vpop.f32.mrb[0].mxu0
    %4662 = vmatprep.mubr.f32.mxu0 0.0
    %4663 = vmatmul.mubr.f32.gmra.mrb[0].mxu0 %v4539
    %v4664 = vpop.f32.mrb[0].mxu0
    %v4665 = vadd.f32 0.0, %v4664
    %v4666 = vpop.f32.mrb[0].mxu0
    %4667 = vmatprep.mubr.f32.mxu0 0.0
    %4668 = vmatmul.mubr.f32.gmra.mrb[0].mxu0 %v4542
    %v4669 = vpop.f32.mrb[0].mxu0
    %v4670 = vadd.f32 0.0, %v4669
    %v4671 = vpop.f32.mrb[0].mxu0
    %4672 = vmatprep.mubr.f32.mxu0 0.0
    %4673 = vmatmul.mubr.f32.gmra.mrb[0].mxu0 %v4545
    %v4674 = vpop.f32.mrb[0].mxu0
    %v4675 = vadd.f32 0.0, %v4674
    %v4676 = vpop.f32.mrb[0].mxu0
    %4677 = vmatprep.mubr.f32.mxu0 0.0
    %4678 = vmatmul.mubr.f32.gmra.mrb[0].mxu0 %v4548
    %v4679 = vpop.f32.mrb[0].mxu0
    %v4680 = vadd.f32 0.0, %v4679
    %v4681 = vpop.f32.mrb[0].mxu0
    %4682 = vmatprep.mubr.f32.mxu0 0.0
    %4683 = vmatmul.mubr.f32.gmra.mrb[0].mxu0 %v4551
    %v4684 = vpop.f32.mrb[0].mxu0
    %v4685 = vadd.f32 0.0, %v4684
    %v4686 = vpop.f32.mrb[0].mxu0
    %4687 = vmatprep.mubr.f32.mxu0 0.0
    %4688 = vmatmul.mubr.f32.gmra.mrb[0].mxu0 %v4554
    %v4689 = vpop.f32.mrb[0].mxu0
    %v4690 = vadd.f32 0.0, %v4689
    %v4691 = vpop.f32.mrb[0].mxu0
    %4692 = vmatprep.mubr.f32.mxu0 0.0
    %4693 = vmatmul.mubr.f32.gmra.mrb[0].mxu0 %v4557
    %v4694 = vpop.f32.mrb[0].mxu0
    %v4695 = vadd.f32 0.0, %v4694
    %v4696 = vpop.f32.mrb[0].mxu0
    %4697 = vmatprep.mubr.f32.mxu0 0.0
    %4698 = vmatmul.mubr.f32.gmra.mrb[0].mxu0 %v4560
    %v4699 = vpop.f32.mrb[0].mxu0
    %v4700 = vadd.f32 0.0, %v4699
    %v4701 = vpop.f32.mrb[0].mxu0
    %4702 = vmatprep.mubr.f32.mxu0 0.0
    %4703 = vmatmul.mubr.f32.gmra.mrb[0].mxu0 %v4563
    %v4704 = vpop.f32.mrb[0].mxu0
    %v4705 = vadd.f32 0.0, %v4704
    %v4706 = vpop.f32.mrb[0].mxu0
    %4707 = vmatprep.mubr.f32.mxu0 0.0
    %4708 = vmatmul.mubr.f32.gmra.mrb[0].mxu0 %v4566
    %v4709 = vpop.f32.mrb[0].mxu0
    %v4710 = vadd.f32 0.0, %v4709
    %v4711 = vpop.f32.mrb[0].mxu0
    %4712 = vdwg.mxu0
    %v4713 = vadd.f32 %v4433, %v4635
    %v4714 = vadd.f32 %v4438, %v4640
    %v4715 = vadd.f32 %v4443, %v4645
    %v4716 = vadd.f32 %v4448, %v4650
    %v4717 = vadd.f32 %v4453, %v4655
    %v4718 = vadd.f32 %v4458, %v4660
    %v4719 = vadd.f32 %v4463, %v4665
    %v4720 = vadd.f32 %v4468, %v4670
    %v4721 = vadd.f32 %v4473, %v4675
    %v4722 = vadd.f32 %v4478, %v4680
    %v4723 = vadd.f32 %v4483, %v4685
    %v4724 = vadd.f32 %v4488, %v4690
    %v4725 = vadd.f32 %v4493, %v4695
    %v4726 = vadd.f32 %v4498, %v4700
    %v4727 = vadd.f32 %v4503, %v4705
    %v4728 = vadd.f32 %v4508, %v4710
    %s4729 = scalar_lea.vmem %s4, 192
    %v4730 = vld [vmem:[%s4729] sm:$0xff]
    %v4731 = vld [vmem:[%s4729 + $0x8] sm:$0xff]
    %v4732 = vld [vmem:[%s4729 + $0x10] sm:$0xff]
    %v4733 = vld [vmem:[%s4729 + $0x18] sm:$0xff]
    %v4734 = vld [vmem:[%s4729 + $0x20] sm:$0xff]
    %v4735 = vld [vmem:[%s4729 + $0x28] sm:$0xff]
    %v4736 = vld [vmem:[%s4729 + $0x30] sm:$0xff]
    %v4737 = vld [vmem:[%s4729 + $0x38] sm:$0xff]
    %v4739 = vsel %vm4124, %v3755, 0
    %v4742 = vsel %vm4124, %v3756, 0
    %v4745 = vsel %vm4124, %v3757, 0
    %v4748 = vsel %vm4124, %v3758, 0
    %v4751 = vsel %vm4124, %v3759, 0
    %v4754 = vsel %vm4124, %v3760, 0
    %v4757 = vsel %vm4124, %v3761, 0
    %v4760 = vsel %vm4124, %v3762, 0
    %v4763 = vsel %vm4124, %v3763, 0
    %v4766 = vsel %vm4124, %v3764, 0
    %v4769 = vsel %vm4124, %v3765, 0
    %v4772 = vsel %vm4124, %v3766, 0
    %v4775 = vsel %vm4124, %v3767, 0
    %v4778 = vsel %vm4124, %v3768, 0
    %v4781 = vsel %vm4124, %v3769, 0
    %v4784 = vsel %vm4124, %v3770, 0
    %4786 = vmatprep.subr.mxu0 0.0
    %4787 = vmatpush1.msra.mxu0 %v4730
    %4788 = vmatprep.subr.mxu0 0.0
    %4789 = vmatpush1.msra.mxu0 %v4731
    %4790 = vmatprep.subr.mxu0 0.0
    %4791 = vmatpush1.msra.mxu0 %v4732
    %4792 = vmatprep.subr.mxu0 0.0
    %4793 = vmatpush1.msra.mxu0 %v4733
    %4794 = vmatprep.subr.mxu0 0.0
    %4795 = vmatpush1.msra.mxu0 %v4734
    %4796 = vmatprep.subr.mxu0 0.0
    %4797 = vmatpush1.msra.mxu0 %v4735
    %4798 = vmatprep.subr.mxu0 0.0
    %4799 = vmatpush1.msra.mxu0 %v4736
    %4800 = vmatprep.subr.mxu0 0.0
    %4801 = vmatpush1.msra.mxu0 %v4737
    %4802 = vmatprep.subr.mxu0 0.0
    %4803 = vmatpush1.msra.mxu0 0.0
    %4804 = vmatprep.subr.mxu0 0.0
    %4805 = vmatpush1.msra.mxu0 0.0
    %4806 = vmatprep.subr.mxu0 0.0
    %4807 = vmatpush1.msra.mxu0 0.0
    %4808 = vmatprep.subr.mxu0 0.0
    %4809 = vmatpush1.msra.mxu0 0.0
    %4810 = vmatprep.subr.mxu0 0.0
    %4811 = vmatpush1.msra.mxu0 0.0
    %4812 = vmatprep.subr.mxu0 0.0
    %4813 = vmatpush1.msra.mxu0 0.0
    %4814 = vmatprep.subr.mxu0 0.0
    %4815 = vmatpush1.msra.mxu0 0.0
    %4816 = vmatprep.subr.mxu0 0.0
    %4817 = vmatpush1.msra.mxu0 0.0
    %4818 = vmatprep.subr.mxu0 0.0
    %4819 = vmatpush1.msra.mxu0 0.0
    %4820 = vmatprep.subr.mxu0 0.0
    %4821 = vmatpush1.msra.mxu0 0.0
    %4822 = vmatprep.subr.mxu0 0.0
    %4823 = vmatpush1.msra.mxu0 0.0
    %4824 = vmatprep.subr.mxu0 0.0
    %4825 = vmatpush1.msra.mxu0 0.0
    %4826 = vmatprep.subr.mxu0 0.0
    %4827 = vmatpush1.msra.mxu0 0.0
    %4828 = vmatprep.subr.mxu0 0.0
    %4829 = vmatpush1.msra.mxu0 0.0
    %4830 = vmatprep.subr.mxu0 0.0
    %4831 = vmatpush1.msra.mxu0 0.0
    %4832 = vmatprep.subr.mxu0 0.0
    %4833 = vmatpush1.msra.mxu0 0.0
    %4834 = vmatprep.subr.mxu0 0.0
    %4835 = vmatpush1.msra.mxu0 0.0
    %4836 = vmatprep.subr.mxu0 0.0
    %4837 = vmatpush1.msra.mxu0 0.0
    %4838 = vmatprep.subr.mxu0 0.0
    %4839 = vmatpush1.msra.mxu0 0.0
    %4840 = vmatprep.subr.mxu0 0.0
    %4841 = vmatpush1.msra.mxu0 0.0
    %4842 = vmatprep.subr.mxu0 0.0
    %4843 = vmatpush1.msra.mxu0 0.0
    %4844 = vmatprep.subr.mxu0 0.0
    %4845 = vmatpush1.msra.mxu0 0.0
    %4846 = vmatprep.subr.mxu0 0.0
    %4847 = vmatpush1.msra.mxu0 0.0
    %4848 = vmatprep.subr.mxu0 0.0
    %4849 = vmatpush1.msra.mxu0 0.0
    %4850 = vmatprep.mubr.f32.mxu0 0.0
    %4851 = vmatmul.mubr.f32.gmra.mrb[0].mxu0 %v4739
    %v4852 = vpop.f32.mrb[0].mxu0
    %v4853 = vadd.f32 0.0, %v4852
    %v4854 = vpop.f32.mrb[0].mxu0
    %4855 = vmatprep.mubr.f32.mxu0 0.0
    %4856 = vmatmul.mubr.f32.gmra.mrb[0].mxu0 %v4742
    %v4857 = vpop.f32.mrb[0].mxu0
    %v4858 = vadd.f32 0.0, %v4857
    %v4859 = vpop.f32.mrb[0].mxu0
    %4860 = vmatprep.mubr.f32.mxu0 0.0
    %4861 = vmatmul.mubr.f32.gmra.mrb[0].mxu0 %v4745
    %v4862 = vpop.f32.mrb[0].mxu0
    %v4863 = vadd.f32 0.0, %v4862
    %v4864 = vpop.f32.mrb[0].mxu0
    %4865 = vmatprep.mubr.f32.mxu0 0.0
    %4866 = vmatmul.mubr.f32.gmra.mrb[0].mxu0 %v4748
    %v4867 = vpop.f32.mrb[0].mxu0
    %v4868 = vadd.f32 0.0, %v4867
    %v4869 = vpop.f32.mrb[0].mxu0
    %4870 = vmatprep.mubr.f32.mxu0 0.0
    %4871 = vmatmul.mubr.f32.gmra.mrb[0].mxu0 %v4751
    %v4872 = vpop.f32.mrb[0].mxu0
    %v4873 = vadd.f32 0.0, %v4872
    %v4874 = vpop.f32.mrb[0].mxu0
    %4875 = vmatprep.mubr.f32.mxu0 0.0
    %4876 = vmatmul.mubr.f32.gmra.mrb[0].mxu0 %v4754
    %v4877 = vpop.f32.mrb[0].mxu0
    %v4878 = vadd.f32 0.0, %v4877
    %v4879 = vpop.f32.mrb[0].mxu0
    %4880 = vmatprep.mubr.f32.mxu0 0.0
    %4881 = vmatmul.mubr.f32.gmra.mrb[0].mxu0 %v4757
    %v4882 = vpop.f32.mrb[0].mxu0
    %v4883 = vadd.f32 0.0, %v4882
    %v4884 = vpop.f32.mrb[0].mxu0
    %4885 = vmatprep.mubr.f32.mxu0 0.0
    %4886 = vmatmul.mubr.f32.gmra.mrb[0].mxu0 %v4760
    %v4887 = vpop.f32.mrb[0].mxu0
    %v4888 = vadd.f32 0.0, %v4887
    %v4889 = vpop.f32.mrb[0].mxu0
    %4890 = vmatprep.mubr.f32.mxu0 0.0
    %4891 = vmatmul.mubr.f32.gmra.mrb[0].mxu0 %v4763
    %v4892 = vpop.f32.mrb[0].mxu0
    %v4893 = vadd.f32 0.0, %v4892
    %v4894 = vpop.f32.mrb[0].mxu0
    %4895 = vmatprep.mubr.f32.mxu0 0.0
    %4896 = vmatmul.mubr.f32.gmra.mrb[0].mxu0 %v4766
    %v4897 = vpop.f32.mrb[0].mxu0
    %v4898 = vadd.f32 0.0, %v4897
    %v4899 = vpop.f32.mrb[0].mxu0
    %4900 = vmatprep.mubr.f32.mxu0 0.0
    %4901 = vmatmul.mubr.f32.gmra.mrb[0].mxu0 %v4769
    %v4902 = vpop.f32.mrb[0].mxu0
    %v4903 = vadd.f32 0.0, %v4902
    %v4904 = vpop.f32.mrb[0].mxu0
    %4905 = vmatprep.mubr.f32.mxu0 0.0
    %4906 = vmatmul.mubr.f32.gmra.mrb[0].mxu0 %v4772
    %v4907 = vpop.f32.mrb[0].mxu0
    %v4908 = vadd.f32 0.0, %v4907
    %v4909 = vpop.f32.mrb[0].mxu0
    %4910 = vmatprep.mubr.f32.mxu0 0.0
    %4911 = vmatmul.mubr.f32.gmra.mrb[0].mxu0 %v4775
    %v4912 = vpop.f32.mrb[0].mxu0
    %v4913 = vadd.f32 0.0, %v4912
    %v4914 = vpop.f32.mrb[0].mxu0
    %4915 = vmatprep.mubr.f32.mxu0 0.0
    %4916 = vmatmul.mubr.f32.gmra.mrb[0].mxu0 %v4778
    %v4917 = vpop.f32.mrb[0].mxu0
    %v4918 = vadd.f32 0.0, %v4917
    %v4919 = vpop.f32.mrb[0].mxu0
    %4920 = vmatprep.mubr.f32.mxu0 0.0
    %4921 = vmatmul.mubr.f32.gmra.mrb[0].mxu0 %v4781
    %v4922 = vpop.f32.mrb[0].mxu0
    %v4923 = vadd.f32 0.0, %v4922
    %v4924 = vpop.f32.mrb[0].mxu0
    %4925 = vmatprep.mubr.f32.mxu0 0.0
    %4926 = vmatmul.mubr.f32.gmra.mrb[0].mxu0 %v4784
    %v4927 = vpop.f32.mrb[0].mxu0
    %v4928 = vadd.f32 0.0, %v4927
    %v4929 = vpop.f32.mrb[0].mxu0
    %4930 = vdwg.mxu0
    %v4931 = vadd.f32 %v4713, %v4853
    %v4932 = vadd.f32 %v4714, %v4858
    %v4933 = vadd.f32 %v4715, %v4863
    %v4934 = vadd.f32 %v4716, %v4868
    %v4935 = vadd.f32 %v4717, %v4873
    %v4936 = vadd.f32 %v4718, %v4878
    %v4937 = vadd.f32 %v4719, %v4883
    %v4938 = vadd.f32 %v4720, %v4888
    %v4939 = vadd.f32 %v4721, %v4893
    %v4940 = vadd.f32 %v4722, %v4898
    %v4941 = vadd.f32 %v4723, %v4903
    %v4942 = vadd.f32 %v4724, %v4908
    %v4943 = vadd.f32 %v4725, %v4913
    %v4944 = vadd.f32 %v4726, %v4918
    %v4945 = vadd.f32 %v4727, %v4923
    %v4946 = vadd.f32 %v4728, %v4928
    %s4947 = scalar_lea.vmem %s4, 256
    %v4948 = vld [vmem:[%s4947] sm:$0xff]
    %v4949 = vld [vmem:[%s4947 + $0x8] sm:$0xff]
    %v4950 = vld [vmem:[%s4947 + $0x10] sm:$0xff]
    %v4951 = vld [vmem:[%s4947 + $0x18] sm:$0xff]
    %v4952 = vld [vmem:[%s4947 + $0x20] sm:$0xff]
    %v4953 = vld [vmem:[%s4947 + $0x28] sm:$0xff]
    %v4954 = vld [vmem:[%s4947 + $0x30] sm:$0xff]
    %v4955 = vld [vmem:[%s4947 + $0x38] sm:$0xff]
    %v4957 = vsel %vm4124, %v3771, 0
    %v4960 = vsel %vm4124, %v3772, 0
    %v4963 = vsel %vm4124, %v3773, 0
    %v4966 = vsel %vm4124, %v3774, 0
    %v4969 = vsel %vm4124, %v3775, 0
    %v4972 = vsel %vm4124, %v3776, 0
    %v4975 = vsel %vm4124, %v3777, 0
    %v4978 = vsel %vm4124, %v3778, 0
    %v4981 = vsel %vm4124, %v3779, 0
    %v4984 = vsel %vm4124, %v3780, 0
    %v4987 = vsel %vm4124, %v3781, 0
    %v4990 = vsel %vm4124, %v3782, 0
    %v4993 = vsel %vm4124, %v3783, 0
    %v4996 = vsel %vm4124, %v3784, 0
    %v4999 = vsel %vm4124, %v3785, 0
    %v5002 = vsel %vm4124, %v3786, 0
    %5004 = vmatprep.subr.mxu0 0.0
    %5005 = vmatpush1.msra.mxu0 %v4948
    %5006 = vmatprep.subr.mxu0 0.0
    %5007 = vmatpush1.msra.mxu0 %v4949
    %5008 = vmatprep.subr.mxu0 0.0
    %5009 = vmatpush1.msra.mxu0 %v4950
    %5010 = vmatprep.subr.mxu0 0.0
    %5011 = vmatpush1.msra.mxu0 %v4951
    %5012 = vmatprep.subr.mxu0 0.0
    %5013 = vmatpush1.msra.mxu0 %v4952
    %5014 = vmatprep.subr.mxu0 0.0
    %5015 = vmatpush1.msra.mxu0 %v4953
    %5016 = vmatprep.subr.mxu0 0.0
    %5017 = vmatpush1.msra.mxu0 %v4954
    %5018 = vmatprep.subr.mxu0 0.0
    %5019 = vmatpush1.msra.mxu0 %v4955
    %5020 = vmatprep.subr.mxu0 0.0
    %5021 = vmatpush1.msra.mxu0 0.0
    %5022 = vmatprep.subr.mxu0 0.0
    %5023 = vmatpush1.msra.mxu0 0.0
    %5024 = vmatprep.subr.mxu0 0.0
    %5025 = vmatpush1.msra.mxu0 0.0
    %5026 = vmatprep.subr.mxu0 0.0
    %5027 = vmatpush1.msra.mxu0 0.0
    %5028 = vmatprep.subr.mxu0 0.0
    %5029 = vmatpush1.msra.mxu0 0.0
    %5030 = vmatprep.subr.mxu0 0.0
    %5031 = vmatpush1.msra.mxu0 0.0
    %5032 = vmatprep.subr.mxu0 0.0
    %5033 = vmatpush1.msra.mxu0 0.0
    %5034 = vmatprep.subr.mxu0 0.0
    %5035 = vmatpush1.msra.mxu0 0.0
    %5036 = vmatprep.subr.mxu0 0.0
    %5037 = vmatpush1.msra.mxu0 0.0
    %5038 = vmatprep.subr.mxu0 0.0
    %5039 = vmatpush1.msra.mxu0 0.0
    %5040 = vmatprep.subr.mxu0 0.0
    %5041 = vmatpush1.msra.mxu0 0.0
    %5042 = vmatprep.subr.mxu0 0.0
    %5043 = vmatpush1.msra.mxu0 0.0
    %5044 = vmatprep.subr.mxu0 0.0
    %5045 = vmatpush1.msra.mxu0 0.0
    %5046 = vmatprep.subr.mxu0 0.0
    %5047 = vmatpush1.msra.mxu0 0.0
    %5048 = vmatprep.subr.mxu0 0.0
    %5049 = vmatpush1.msra.mxu0 0.0
    %5050 = vmatprep.subr.mxu0 0.0
    %5051 = vmatpush1.msra.mxu0 0.0
    %5052 = vmatprep.subr.mxu0 0.0
    %5053 = vmatpush1.msra.mxu0 0.0
    %5054 = vmatprep.subr.mxu0 0.0
    %5055 = vmatpush1.msra.mxu0 0.0
    %5056 = vmatprep.subr.mxu0 0.0
    %5057 = vmatpush1.msra.mxu0 0.0
    %5058 = vmatprep.subr.mxu0 0.0
    %5059 = vmatpush1.msra.mxu0 0.0
    %5060 = vmatprep.subr.mxu0 0.0
    %5061 = vmatpush1.msra.mxu0 0.0
    %5062 = vmatprep.subr.mxu0 0.0
    %5063 = vmatpush1.msra.mxu0 0.0
    %5064 = vmatprep.subr.mxu0 0.0
    %5065 = vmatpush1.msra.mxu0 0.0
    %5066 = vmatprep.subr.mxu0 0.0
    %5067 = vmatpush1.msra.mxu0 0.0
    %5068 = vmatprep.mubr.f32.mxu0 0.0
    %5069 = vmatmul.mubr.f32.gmra.mrb[0].mxu0 %v4957
    %v5070 = vpop.f32.mrb[0].mxu0
    %v5071 = vadd.f32 0.0, %v5070
    %v5072 = vpop.f32.mrb[0].mxu0
    %5073 = vmatprep.mubr.f32.mxu0 0.0
    %5074 = vmatmul.mubr.f32.gmra.mrb[0].mxu0 %v4960
    %v5075 = vpop.f32.mrb[0].mxu0
    %v5076 = vadd.f32 0.0, %v5075
    %v5077 = vpop.f32.mrb[0].mxu0
    %5078 = vmatprep.mubr.f32.mxu0 0.0
    %5079 = vmatmul.mubr.f32.gmra.mrb[0].mxu0 %v4963
    %v5080 = vpop.f32.mrb[0].mxu0
    %v5081 = vadd.f32 0.0, %v5080
    %v5082 = vpop.f32.mrb[0].mxu0
    %5083 = vmatprep.mubr.f32.mxu0 0.0
    %5084 = vmatmul.mubr.f32.gmra.mrb[0].mxu0 %v4966
    %v5085 = vpop.f32.mrb[0].mxu0
    %v5086 = vadd.f32 0.0, %v5085
    %v5087 = vpop.f32.mrb[0].mxu0
    %5088 = vmatprep.mubr.f32.mxu0 0.0
    %5089 = vmatmul.mubr.f32.gmra.mrb[0].mxu0 %v4969
    %v5090 = vpop.f32.mrb[0].mxu0
    %v5091 = vadd.f32 0.0, %v5090
    %v5092 = vpop.f32.mrb[0].mxu0
    %5093 = vmatprep.mubr.f32.mxu0 0.0
    %5094 = vmatmul.mubr.f32.gmra.mrb[0].mxu0 %v4972
    %v5095 = vpop.f32.mrb[0].mxu0
    %v5096 = vadd.f32 0.0, %v5095
    %v5097 = vpop.f32.mrb[0].mxu0
    %5098 = vmatprep.mubr.f32.mxu0 0.0
    %5099 = vmatmul.mubr.f32.gmra.mrb[0].mxu0 %v4975
    %v5100 = vpop.f32.mrb[0].mxu0
    %v5101 = vadd.f32 0.0, %v5100
    %v5102 = vpop.f32.mrb[0].mxu0
    %5103 = vmatprep.mubr.f32.mxu0 0.0
    %5104 = vmatmul.mubr.f32.gmra.mrb[0].mxu0 %v4978
    %v5105 = vpop.f32.mrb[0].mxu0
    %v5106 = vadd.f32 0.0, %v5105
    %v5107 = vpop.f32.mrb[0].mxu0
    %5108 = vmatprep.mubr.f32.mxu0 0.0
    %5109 = vmatmul.mubr.f32.gmra.mrb[0].mxu0 %v4981
    %v5110 = vpop.f32.mrb[0].mxu0
    %v5111 = vadd.f32 0.0, %v5110
    %v5112 = vpop.f32.mrb[0].mxu0
    %5113 = vmatprep.mubr.f32.mxu0 0.0
    %5114 = vmatmul.mubr.f32.gmra.mrb[0].mxu0 %v4984
    %v5115 = vpop.f32.mrb[0].mxu0
    %v5116 = vadd.f32 0.0, %v5115
    %v5117 = vpop.f32.mrb[0].mxu0
    %5118 = vmatprep.mubr.f32.mxu0 0.0
    %5119 = vmatmul.mubr.f32.gmra.mrb[0].mxu0 %v4987
    %v5120 = vpop.f32.mrb[0].mxu0
    %v5121 = vadd.f32 0.0, %v5120
    %v5122 = vpop.f32.mrb[0].mxu0
    %5123 = vmatprep.mubr.f32.mxu0 0.0
    %5124 = vmatmul.mubr.f32.gmra.mrb[0].mxu0 %v4990
    %v5125 = vpop.f32.mrb[0].mxu0
    %v5126 = vadd.f32 0.0, %v5125
    %v5127 = vpop.f32.mrb[0].mxu0
    %5128 = vmatprep.mubr.f32.mxu0 0.0
    %5129 = vmatmul.mubr.f32.gmra.mrb[0].mxu0 %v4993
    %v5130 = vpop.f32.mrb[0].mxu0
    %v5131 = vadd.f32 0.0, %v5130
    %v5132 = vpop.f32.mrb[0].mxu0
    %5133 = vmatprep.mubr.f32.mxu0 0.0
    %5134 = vmatmul.mubr.f32.gmra.mrb[0].mxu0 %v4996
    %v5135 = vpop.f32.mrb[0].mxu0
    %v5136 = vadd.f32 0.0, %v5135
    %v5137 = vpop.f32.mrb[0].mxu0
    %5138 = vmatprep.mubr.f32.mxu0 0.0
    %5139 = vmatmul.mubr.f32.gmra.mrb[0].mxu0 %v4999
    %v5140 = vpop.f32.mrb[0].mxu0
    %v5141 = vadd.f32 0.0, %v5140
    %v5142 = vpop.f32.mrb[0].mxu0
    %5143 = vmatprep.mubr.f32.mxu0 0.0
    %5144 = vmatmul.mubr.f32.gmra.mrb[0].mxu0 %v5002
    %v5145 = vpop.f32.mrb[0].mxu0
    %v5146 = vadd.f32 0.0, %v5145
    %v5147 = vpop.f32.mrb[0].mxu0
    %5148 = vdwg.mxu0
    %v5149 = vadd.f32 %v4931, %v5071
    %v5150 = vadd.f32 %v4932, %v5076
    %v5151 = vadd.f32 %v4933, %v5081
    %v5152 = vadd.f32 %v4934, %v5086
    %v5153 = vadd.f32 %v4935, %v5091
    %v5154 = vadd.f32 %v4936, %v5096
    %v5155 = vadd.f32 %v4937, %v5101
    %v5156 = vadd.f32 %v4938, %v5106
    %v5157 = vadd.f32 %v4939, %v5111
    %v5158 = vadd.f32 %v4940, %v5116
    %v5159 = vadd.f32 %v4941, %v5121
    %v5160 = vadd.f32 %v4942, %v5126
    %v5161 = vadd.f32 %v4943, %v5131
    %v5162 = vadd.f32 %v4944, %v5136
    %v5163 = vadd.f32 %v4945, %v5141
    %v5164 = vadd.f32 %v4946, %v5146
    %s5165 = scalar_lea.vmem %s4, 320
    %v5166 = vld [vmem:[%s5165] sm:$0xff]
    %v5167 = vld [vmem:[%s5165 + $0x8] sm:$0xff]
    %v5168 = vld [vmem:[%s5165 + $0x10] sm:$0xff]
    %v5169 = vld [vmem:[%s5165 + $0x18] sm:$0xff]
    %v5170 = vld [vmem:[%s5165 + $0x20] sm:$0xff]
    %v5171 = vld [vmem:[%s5165 + $0x28] sm:$0xff]
    %v5172 = vld [vmem:[%s5165 + $0x30] sm:$0xff]
    %v5173 = vld [vmem:[%s5165 + $0x38] sm:$0xff]
    %v5175 = vsel %vm4124, %v3787, 0
    %v5178 = vsel %vm4124, %v3788, 0
    %v5181 = vsel %vm4124, %v3789, 0
    %v5184 = vsel %vm4124, %v3790, 0
    %v5187 = vsel %vm4124, %v3791, 0
    %v5190 = vsel %vm4124, %v3792, 0
    %v5193 = vsel %vm4124, %v3793, 0
    %v5196 = vsel %vm4124, %v3794, 0
    %v5199 = vsel %vm4124, %v3795, 0
    %v5202 = vsel %vm4124, %v3796, 0
    %v5205 = vsel %vm4124, %v3797, 0
    %v5208 = vsel %vm4124, %v3798, 0
    %v5211 = vsel %vm4124, %v3799, 0
    %v5214 = vsel %vm4124, %v3800, 0
    %v5217 = vsel %vm4124, %v3801, 0
    %v5220 = vsel %vm4124, %v3802, 0
    %5222 = vmatprep.subr.mxu0 0.0
    %5223 = vmatpush1.msra.mxu0 %v5166
    %5224 = vmatprep.subr.mxu0 0.0
    %5225 = vmatpush1.msra.mxu0 %v5167
    %5226 = vmatprep.subr.mxu0 0.0
    %5227 = vmatpush1.msra.mxu0 %v5168
    %5228 = vmatprep.subr.mxu0 0.0
    %5229 = vmatpush1.msra.mxu0 %v5169
    %5230 = vmatprep.subr.mxu0 0.0
    %5231 = vmatpush1.msra.mxu0 %v5170
    %5232 = vmatprep.subr.mxu0 0.0
    %5233 = vmatpush1.msra.mxu0 %v5171
    %5234 = vmatprep.subr.mxu0 0.0
    %5235 = vmatpush1.msra.mxu0 %v5172
    %5236 = vmatprep.subr.mxu0 0.0
    %5237 = vmatpush1.msra.mxu0 %v5173
    %5238 = vmatprep.subr.mxu0 0.0
    %5239 = vmatpush1.msra.mxu0 0.0
    %5240 = vmatprep.subr.mxu0 0.0
    %5241 = vmatpush1.msra.mxu0 0.0
    %5242 = vmatprep.subr.mxu0 0.0
    %5243 = vmatpush1.msra.mxu0 0.0
    %5244 = vmatprep.subr.mxu0 0.0
    %5245 = vmatpush1.msra.mxu0 0.0
    %5246 = vmatprep.subr.mxu0 0.0
    %5247 = vmatpush1.msra.mxu0 0.0
    %5248 = vmatprep.subr.mxu0 0.0
    %5249 = vmatpush1.msra.mxu0 0.0
    %5250 = vmatprep.subr.mxu0 0.0
    %5251 = vmatpush1.msra.mxu0 0.0
    %5252 = vmatprep.subr.mxu0 0.0
    %5253 = vmatpush1.msra.mxu0 0.0
    %5254 = vmatprep.subr.mxu0 0.0
    %5255 = vmatpush1.msra.mxu0 0.0
    %5256 = vmatprep.subr.mxu0 0.0
    %5257 = vmatpush1.msra.mxu0 0.0
    %5258 = vmatprep.subr.mxu0 0.0
    %5259 = vmatpush1.msra.mxu0 0.0
    %5260 = vmatprep.subr.mxu0 0.0
    %5261 = vmatpush1.msra.mxu0 0.0
    %5262 = vmatprep.subr.mxu0 0.0
    %5263 = vmatpush1.msra.mxu0 0.0
    %5264 = vmatprep.subr.mxu0 0.0
    %5265 = vmatpush1.msra.mxu0 0.0
    %5266 = vmatprep.subr.mxu0 0.0
    %5267 = vmatpush1.msra.mxu0 0.0
    %5268 = vmatprep.subr.mxu0 0.0
    %5269 = vmatpush1.msra.mxu0 0.0
    %5270 = vmatprep.subr.mxu0 0.0
    %5271 = vmatpush1.msra.mxu0 0.0
    %5272 = vmatprep.subr.mxu0 0.0
    %5273 = vmatpush1.msra.mxu0 0.0
    %5274 = vmatprep.subr.mxu0 0.0
    %5275 = vmatpush1.msra.mxu0 0.0
    %5276 = vmatprep.subr.mxu0 0.0
    %5277 = vmatpush1.msra.mxu0 0.0
    %5278 = vmatprep.subr.mxu0 0.0
    %5279 = vmatpush1.msra.mxu0 0.0
    %5280 = vmatprep.subr.mxu0 0.0
    %5281 = vmatpush1.msra.mxu0 0.0
    %5282 = vmatprep.subr.mxu0 0.0
    %5283 = vmatpush1.msra.mxu0 0.0
    %5284 = vmatprep.subr.mxu0 0.0
    %5285 = vmatpush1.msra.mxu0 0.0
    %5286 = vmatprep.mubr.f32.mxu0 0.0
    %5287 = vmatmul.mubr.f32.gmra.mrb[0].mxu0 %v5175
    %v5288 = vpop.f32.mrb[0].mxu0
    %v5289 = vadd.f32 0.0, %v5288
    %v5290 = vpop.f32.mrb[0].mxu0
    %5291 = vmatprep.mubr.f32.mxu0 0.0
    %5292 = vmatmul.mubr.f32.gmra.mrb[0].mxu0 %v5178
    %v5293 = vpop.f32.mrb[0].mxu0
    %v5294 = vadd.f32 0.0, %v5293
    %v5295 = vpop.f32.mrb[0].mxu0
    %5296 = vmatprep.mubr.f32.mxu0 0.0
    %5297 = vmatmul.mubr.f32.gmra.mrb[0].mxu0 %v5181
    %v5298 = vpop.f32.mrb[0].mxu0
    %v5299 = vadd.f32 0.0, %v5298
    %v5300 = vpop.f32.mrb[0].mxu0
    %5301 = vmatprep.mubr.f32.mxu0 0.0
    %5302 = vmatmul.mubr.f32.gmra.mrb[0].mxu0 %v5184
    %v5303 = vpop.f32.mrb[0].mxu0
    %v5304 = vadd.f32 0.0, %v5303
    %v5305 = vpop.f32.mrb[0].mxu0
    %5306 = vmatprep.mubr.f32.mxu0 0.0
    %5307 = vmatmul.mubr.f32.gmra.mrb[0].mxu0 %v5187
    %v5308 = vpop.f32.mrb[0].mxu0
    %v5309 = vadd.f32 0.0, %v5308
    %v5310 = vpop.f32.mrb[0].mxu0
    %5311 = vmatprep.mubr.f32.mxu0 0.0
    %5312 = vmatmul.mubr.f32.gmra.mrb[0].mxu0 %v5190
    %v5313 = vpop.f32.mrb[0].mxu0
    %v5314 = vadd.f32 0.0, %v5313
    %v5315 = vpop.f32.mrb[0].mxu0
    %5316 = vmatprep.mubr.f32.mxu0 0.0
    %5317 = vmatmul.mubr.f32.gmra.mrb[0].mxu0 %v5193
    %v5318 = vpop.f32.mrb[0].mxu0
    %v5319 = vadd.f32 0.0, %v5318
    %v5320 = vpop.f32.mrb[0].mxu0
    %5321 = vmatprep.mubr.f32.mxu0 0.0
    %5322 = vmatmul.mubr.f32.gmra.mrb[0].mxu0 %v5196
    %v5323 = vpop.f32.mrb[0].mxu0
    %v5324 = vadd.f32 0.0, %v5323
    %v5325 = vpop.f32.mrb[0].mxu0
    %5326 = vmatprep.mubr.f32.mxu0 0.0
    %5327 = vmatmul.mubr.f32.gmra.mrb[0].mxu0 %v5199
    %v5328 = vpop.f32.mrb[0].mxu0
    %v5329 = vadd.f32 0.0, %v5328
    %v5330 = vpop.f32.mrb[0].mxu0
    %5331 = vmatprep.mubr.f32.mxu0 0.0
    %5332 = vmatmul.mubr.f32.gmra.mrb[0].mxu0 %v5202
    %v5333 = vpop.f32.mrb[0].mxu0
    %v5334 = vadd.f32 0.0, %v5333
    %v5335 = vpop.f32.mrb[0].mxu0
    %5336 = vmatprep.mubr.f32.mxu0 0.0
    %5337 = vmatmul.mubr.f32.gmra.mrb[0].mxu0 %v5205
    %v5338 = vpop.f32.mrb[0].mxu0
    %v5339 = vadd.f32 0.0, %v5338
    %v5340 = vpop.f32.mrb[0].mxu0
    %5341 = vmatprep.mubr.f32.mxu0 0.0
    %5342 = vmatmul.mubr.f32.gmra.mrb[0].mxu0 %v5208
    %v5343 = vpop.f32.mrb[0].mxu0
    %v5344 = vadd.f32 0.0, %v5343
    %v5345 = vpop.f32.mrb[0].mxu0
    %5346 = vmatprep.mubr.f32.mxu0 0.0
    %5347 = vmatmul.mubr.f32.gmra.mrb[0].mxu0 %v5211
    %v5348 = vpop.f32.mrb[0].mxu0
    %v5349 = vadd.f32 0.0, %v5348
    %v5350 = vpop.f32.mrb[0].mxu0
    %5351 = vmatprep.mubr.f32.mxu0 0.0
    %5352 = vmatmul.mubr.f32.gmra.mrb[0].mxu0 %v5214
    %v5353 = vpop.f32.mrb[0].mxu0
    %v5354 = vadd.f32 0.0, %v5353
    %v5355 = vpop.f32.mrb[0].mxu0
    %5356 = vmatprep.mubr.f32.mxu0 0.0
    %5357 = vmatmul.mubr.f32.gmra.mrb[0].mxu0 %v5217
    %v5358 = vpop.f32.mrb[0].mxu0
    %v5359 = vadd.f32 0.0, %v5358
    %v5360 = vpop.f32.mrb[0].mxu0
    %5361 = vmatprep.mubr.f32.mxu0 0.0
    %5362 = vmatmul.mubr.f32.gmra.mrb[0].mxu0 %v5220
    %v5363 = vpop.f32.mrb[0].mxu0
    %v5364 = vadd.f32 0.0, %v5363
    %v5365 = vpop.f32.mrb[0].mxu0
    %5366 = vdwg.mxu0
    %v5367 = vadd.f32 %v5149, %v5289
    %v5368 = vadd.f32 %v5150, %v5294
    %v5369 = vadd.f32 %v5151, %v5299
    %v5370 = vadd.f32 %v5152, %v5304
    %v5371 = vadd.f32 %v5153, %v5309
    %v5372 = vadd.f32 %v5154, %v5314
    %v5373 = vadd.f32 %v5155, %v5319
    %v5374 = vadd.f32 %v5156, %v5324
    %v5375 = vadd.f32 %v5157, %v5329
    %v5376 = vadd.f32 %v5158, %v5334
    %v5377 = vadd.f32 %v5159, %v5339
    %v5378 = vadd.f32 %v5160, %v5344
    %v5379 = vadd.f32 %v5161, %v5349
    %v5380 = vadd.f32 %v5162, %v5354
    %v5381 = vadd.f32 %v5163, %v5359
    %v5382 = vadd.f32 %v5164, %v5364
    %s5383 = scalar_lea.vmem %s4, 384
    %v5384 = vld [vmem:[%s5383] sm:$0xff]
    %v5385 = vld [vmem:[%s5383 + $0x8] sm:$0xff]
    %v5386 = vld [vmem:[%s5383 + $0x10] sm:$0xff]
    %v5387 = vld [vmem:[%s5383 + $0x18] sm:$0xff]
    %v5388 = vld [vmem:[%s5383 + $0x20] sm:$0xff]
    %v5389 = vld [vmem:[%s5383 + $0x28] sm:$0xff]
    %v5390 = vld [vmem:[%s5383 + $0x30] sm:$0xff]
    %v5391 = vld [vmem:[%s5383 + $0x38] sm:$0xff]
    %v5393 = vsel %vm4124, %v3803, 0
    %v5396 = vsel %vm4124, %v3804, 0
    %v5399 = vsel %vm4124, %v3805, 0
    %v5402 = vsel %vm4124, %v3806, 0
    %v5405 = vsel %vm4124, %v3807, 0
    %v5408 = vsel %vm4124, %v3808, 0
    %v5411 = vsel %vm4124, %v3809, 0
    %v5414 = vsel %vm4124, %v3810, 0
    %v5417 = vsel %vm4124, %v3811, 0
    %v5420 = vsel %vm4124, %v3812, 0
    %v5423 = vsel %vm4124, %v3813, 0
    %v5426 = vsel %vm4124, %v3814, 0
    %v5429 = vsel %vm4124, %v3815, 0
    %v5432 = vsel %vm4124, %v3816, 0
    %v5435 = vsel %vm4124, %v3817, 0
    %v5438 = vsel %vm4124, %v3818, 0
    %5440 = vmatprep.subr.mxu0 0.0
    %5441 = vmatpush1.msra.mxu0 %v5384
    %5442 = vmatprep.subr.mxu0 0.0
    %5443 = vmatpush1.msra.mxu0 %v5385
    %5444 = vmatprep.subr.mxu0 0.0
    %5445 = vmatpush1.msra.mxu0 %v5386
    %5446 = vmatprep.subr.mxu0 0.0
    %5447 = vmatpush1.msra.mxu0 %v5387
    %5448 = vmatprep.subr.mxu0 0.0
    %5449 = vmatpush1.msra.mxu0 %v5388
    %5450 = vmatprep.subr.mxu0 0.0
    %5451 = vmatpush1.msra.mxu0 %v5389
    %5452 = vmatprep.subr.mxu0 0.0
    %5453 = vmatpush1.msra.mxu0 %v5390
    %5454 = vmatprep.subr.mxu0 0.0
    %5455 = vmatpush1.msra.mxu0 %v5391
    %5456 = vmatprep.subr.mxu0 0.0
    %5457 = vmatpush1.msra.mxu0 0.0
    %5458 = vmatprep.subr.mxu0 0.0
    %5459 = vmatpush1.msra.mxu0 0.0
    %5460 = vmatprep.subr.mxu0 0.0
    %5461 = vmatpush1.msra.mxu0 0.0
    %5462 = vmatprep.subr.mxu0 0.0
    %5463 = vmatpush1.msra.mxu0 0.0
    %5464 = vmatprep.subr.mxu0 0.0
    %5465 = vmatpush1.msra.mxu0 0.0
    %5466 = vmatprep.subr.mxu0 0.0
    %5467 = vmatpush1.msra.mxu0 0.0
    %5468 = vmatprep.subr.mxu0 0.0
    %5469 = vmatpush1.msra.mxu0 0.0
    %5470 = vmatprep.subr.mxu0 0.0
    %5471 = vmatpush1.msra.mxu0 0.0
    %5472 = vmatprep.subr.mxu0 0.0
    %5473 = vmatpush1.msra.mxu0 0.0
    %5474 = vmatprep.subr.mxu0 0.0
    %5475 = vmatpush1.msra.mxu0 0.0
    %5476 = vmatprep.subr.mxu0 0.0
    %5477 = vmatpush1.msra.mxu0 0.0
    %5478 = vmatprep.subr.mxu0 0.0
    %5479 = vmatpush1.msra.mxu0 0.0
    %5480 = vmatprep.subr.mxu0 0.0
    %5481 = vmatpush1.msra.mxu0 0.0
    %5482 = vmatprep.subr.mxu0 0.0
    %5483 = vmatpush1.msra.mxu0 0.0
    %5484 = vmatprep.subr.mxu0 0.0
    %5485 = vmatpush1.msra.mxu0 0.0
    %5486 = vmatprep.subr.mxu0 0.0
    %5487 = vmatpush1.msra.mxu0 0.0
    %5488 = vmatprep.subr.mxu0 0.0
    %5489 = vmatpush1.msra.mxu0 0.0
    %5490 = vmatprep.subr.mxu0 0.0
    %5491 = vmatpush1.msra.mxu0 0.0
    %5492 = vmatprep.subr.mxu0 0.0
    %5493 = vmatpush1.msra.mxu0 0.0
    %5494 = vmatprep.subr.mxu0 0.0
    %5495 = vmatpush1.msra.mxu0 0.0
    %5496 = vmatprep.subr.mxu0 0.0
    %5497 = vmatpush1.msra.mxu0 0.0
    %5498 = vmatprep.subr.mxu0 0.0
    %5499 = vmatpush1.msra.mxu0 0.0
    %5500 = vmatprep.subr.mxu0 0.0
    %5501 = vmatpush1.msra.mxu0 0.0
    %5502 = vmatprep.subr.mxu0 0.0
    %5503 = vmatpush1.msra.mxu0 0.0
    %5504 = vmatprep.mubr.f32.mxu0 0.0
    %5505 = vmatmul.mubr.f32.gmra.mrb[0].mxu0 %v5393
    %v5506 = vpop.f32.mrb[0].mxu0
    %v5507 = vadd.f32 0.0, %v5506
    %v5508 = vpop.f32.mrb[0].mxu0
    %5509 = vmatprep.mubr.f32.mxu0 0.0
    %5510 = vmatmul.mubr.f32.gmra.mrb[0].mxu0 %v5396
    %v5511 = vpop.f32.mrb[0].mxu0
    %v5512 = vadd.f32 0.0, %v5511
    %v5513 = vpop.f32.mrb[0].mxu0
    %5514 = vmatprep.mubr.f32.mxu0 0.0
    %5515 = vmatmul.mubr.f32.gmra.mrb[0].mxu0 %v5399
    %v5516 = vpop.f32.mrb[0].mxu0
    %v5517 = vadd.f32 0.0, %v5516
    %v5518 = vpop.f32.mrb[0].mxu0
    %5519 = vmatprep.mubr.f32.mxu0 0.0
    %5520 = vmatmul.mubr.f32.gmra.mrb[0].mxu0 %v5402
    %v5521 = vpop.f32.mrb[0].mxu0
    %v5522 = vadd.f32 0.0, %v5521
    %v5523 = vpop.f32.mrb[0].mxu0
    %5524 = vmatprep.mubr.f32.mxu0 0.0
    %5525 = vmatmul.mubr.f32.gmra.mrb[0].mxu0 %v5405
    %v5526 = vpop.f32.mrb[0].mxu0
    %v5527 = vadd.f32 0.0, %v5526
    %v5528 = vpop.f32.mrb[0].mxu0
    %5529 = vmatprep.mubr.f32.mxu0 0.0
    %5530 = vmatmul.mubr.f32.gmra.mrb[0].mxu0 %v5408
    %v5531 = vpop.f32.mrb[0].mxu0
    %v5532 = vadd.f32 0.0, %v5531
    %v5533 = vpop.f32.mrb[0].mxu0
    %5534 = vmatprep.mubr.f32.mxu0 0.0
    %5535 = vmatmul.mubr.f32.gmra.mrb[0].mxu0 %v5411
    %v5536 = vpop.f32.mrb[0].mxu0
    %v5537 = vadd.f32 0.0, %v5536
    %v5538 = vpop.f32.mrb[0].mxu0
    %5539 = vmatprep.mubr.f32.mxu0 0.0
    %5540 = vmatmul.mubr.f32.gmra.mrb[0].mxu0 %v5414
    %v5541 = vpop.f32.mrb[0].mxu0
    %v5542 = vadd.f32 0.0, %v5541
    %v5543 = vpop.f32.mrb[0].mxu0
    %5544 = vmatprep.mubr.f32.mxu0 0.0
    %5545 = vmatmul.mubr.f32.gmra.mrb[0].mxu0 %v5417
    %v5546 = vpop.f32.mrb[0].mxu0
    %v5547 = vadd.f32 0.0, %v5546
    %v5548 = vpop.f32.mrb[0].mxu0
    %5549 = vmatprep.mubr.f32.mxu0 0.0
    %5550 = vmatmul.mubr.f32.gmra.mrb[0].mxu0 %v5420
    %v5551 = vpop.f32.mrb[0].mxu0
    %v5552 = vadd.f32 0.0, %v5551
    %v5553 = vpop.f32.mrb[0].mxu0
    %5554 = vmatprep.mubr.f32.mxu0 0.0
    %5555 = vmatmul.mubr.f32.gmra.mrb[0].mxu0 %v5423
    %v5556 = vpop.f32.mrb[0].mxu0
    %v5557 = vadd.f32 0.0, %v5556
    %v5558 = vpop.f32.mrb[0].mxu0
    %5559 = vmatprep.mubr.f32.mxu0 0.0
    %5560 = vmatmul.mubr.f32.gmra.mrb[0].mxu0 %v5426
    %v5561 = vpop.f32.mrb[0].mxu0
    %v5562 = vadd.f32 0.0, %v5561
    %v5563 = vpop.f32.mrb[0].mxu0
    %5564 = vmatprep.mubr.f32.mxu0 0.0
    %5565 = vmatmul.mubr.f32.gmra.mrb[0].mxu0 %v5429
    %v5566 = vpop.f32.mrb[0].mxu0
    %v5567 = vadd.f32 0.0, %v5566
    %v5568 = vpop.f32.mrb[0].mxu0
    %5569 = vmatprep.mubr.f32.mxu0 0.0
    %5570 = vmatmul.mubr.f32.gmra.mrb[0].mxu0 %v5432
    %v5571 = vpop.f32.mrb[0].mxu0
    %v5572 = vadd.f32 0.0, %v5571
    %v5573 = vpop.f32.mrb[0].mxu0
    %5574 = vmatprep.mubr.f32.mxu0 0.0
    %5575 = vmatmul.mubr.f32.gmra.mrb[0].mxu0 %v5435
    %v5576 = vpop.f32.mrb[0].mxu0
    %v5577 = vadd.f32 0.0, %v5576
    %v5578 = vpop.f32.mrb[0].mxu0
    %5579 = vmatprep.mubr.f32.mxu0 0.0
    %5580 = vmatmul.mubr.f32.gmra.mrb[0].mxu0 %v5438
    %v5581 = vpop.f32.mrb[0].mxu0
    %v5582 = vadd.f32 0.0, %v5581
    %v5583 = vpop.f32.mrb[0].mxu0
    %5584 = vdwg.mxu0
    %v5585 = vadd.f32 %v5367, %v5507
    %v5586 = vadd.f32 %v5368, %v5512
    %v5587 = vadd.f32 %v5369, %v5517
    %v5588 = vadd.f32 %v5370, %v5522
    %v5589 = vadd.f32 %v5371, %v5527
    %v5590 = vadd.f32 %v5372, %v5532
    %v5591 = vadd.f32 %v5373, %v5537
    %v5592 = vadd.f32 %v5374, %v5542
    %v5593 = vadd.f32 %v5375, %v5547
    %v5594 = vadd.f32 %v5376, %v5552
    %v5595 = vadd.f32 %v5377, %v5557
    %v5596 = vadd.f32 %v5378, %v5562
    %v5597 = vadd.f32 %v5379, %v5567
    %v5598 = vadd.f32 %v5380, %v5572
    %v5599 = vadd.f32 %v5381, %v5577
    %v5600 = vadd.f32 %v5382, %v5582
    %s5601 = scalar_lea.vmem %s4, 448
    %v5602 = vld [vmem:[%s5601] sm:$0xff]
    %v5603 = vld [vmem:[%s5601 + $0x8] sm:$0xff]
    %v5604 = vld [vmem:[%s5601 + $0x10] sm:$0xff]
    %v5605 = vld [vmem:[%s5601 + $0x18] sm:$0xff]
    %v5606 = vld [vmem:[%s5601 + $0x20] sm:$0xff]
    %v5607 = vld [vmem:[%s5601 + $0x28] sm:$0xff]
    %v5608 = vld [vmem:[%s5601 + $0x30] sm:$0xff]
    %v5609 = vld [vmem:[%s5601 + $0x38] sm:$0xff]
    %v5611 = vsel %vm4124, %v3819, 0
    %v5614 = vsel %vm4124, %v3820, 0
    %v5617 = vsel %vm4124, %v3821, 0
    %v5620 = vsel %vm4124, %v3822, 0
    %v5623 = vsel %vm4124, %v3823, 0
    %v5626 = vsel %vm4124, %v3824, 0
    %v5629 = vsel %vm4124, %v3825, 0
    %v5632 = vsel %vm4124, %v3826, 0
    %v5635 = vsel %vm4124, %v3827, 0
    %v5638 = vsel %vm4124, %v3828, 0
    %v5641 = vsel %vm4124, %v3829, 0
    %v5644 = vsel %vm4124, %v3830, 0
    %v5647 = vsel %vm4124, %v3831, 0
    %v5650 = vsel %vm4124, %v3832, 0
    %v5653 = vsel %vm4124, %v3833, 0
    %v5656 = vsel %vm4124, %v3834, 0
    %5658 = vmatprep.subr.mxu0 0.0
    %5659 = vmatpush1.msra.mxu0 %v5602
    %5660 = vmatprep.subr.mxu0 0.0
    %5661 = vmatpush1.msra.mxu0 %v5603
    %5662 = vmatprep.subr.mxu0 0.0
    %5663 = vmatpush1.msra.mxu0 %v5604
    %5664 = vmatprep.subr.mxu0 0.0
    %5665 = vmatpush1.msra.mxu0 %v5605
    %5666 = vmatprep.subr.mxu0 0.0
    %5667 = vmatpush1.msra.mxu0 %v5606
    %5668 = vmatprep.subr.mxu0 0.0
    %5669 = vmatpush1.msra.mxu0 %v5607
    %5670 = vmatprep.subr.mxu0 0.0
    %5671 = vmatpush1.msra.mxu0 %v5608
    %5672 = vmatprep.subr.mxu0 0.0
    %5673 = vmatpush1.msra.mxu0 %v5609
    %5674 = vmatprep.subr.mxu0 0.0
    %5675 = vmatpush1.msra.mxu0 0.0
    %5676 = vmatprep.subr.mxu0 0.0
    %5677 = vmatpush1.msra.mxu0 0.0
    %5678 = vmatprep.subr.mxu0 0.0
    %5679 = vmatpush1.msra.mxu0 0.0
    %5680 = vmatprep.subr.mxu0 0.0
    %5681 = vmatpush1.msra.mxu0 0.0
    %5682 = vmatprep.subr.mxu0 0.0
    %5683 = vmatpush1.msra.mxu0 0.0
    %5684 = vmatprep.subr.mxu0 0.0
    %5685 = vmatpush1.msra.mxu0 0.0
    %5686 = vmatprep.subr.mxu0 0.0
    %5687 = vmatpush1.msra.mxu0 0.0
    %5688 = vmatprep.subr.mxu0 0.0
    %5689 = vmatpush1.msra.mxu0 0.0
    %5690 = vmatprep.subr.mxu0 0.0
    %5691 = vmatpush1.msra.mxu0 0.0
    %5692 = vmatprep.subr.mxu0 0.0
    %5693 = vmatpush1.msra.mxu0 0.0
    %5694 = vmatprep.subr.mxu0 0.0
    %5695 = vmatpush1.msra.mxu0 0.0
    %5696 = vmatprep.subr.mxu0 0.0
    %5697 = vmatpush1.msra.mxu0 0.0
    %5698 = vmatprep.subr.mxu0 0.0
    %5699 = vmatpush1.msra.mxu0 0.0
    %5700 = vmatprep.subr.mxu0 0.0
    %5701 = vmatpush1.msra.mxu0 0.0
    %5702 = vmatprep.subr.mxu0 0.0
    %5703 = vmatpush1.msra.mxu0 0.0
    %5704 = vmatprep.subr.mxu0 0.0
    %5705 = vmatpush1.msra.mxu0 0.0
    %5706 = vmatprep.subr.mxu0 0.0
    %5707 = vmatpush1.msra.mxu0 0.0
    %5708 = vmatprep.subr.mxu0 0.0
    %5709 = vmatpush1.msra.mxu0 0.0
    %5710 = vmatprep.subr.mxu0 0.0
    %5711 = vmatpush1.msra.mxu0 0.0
    %5712 = vmatprep.subr.mxu0 0.0
    %5713 = vmatpush1.msra.mxu0 0.0
    %5714 = vmatprep.subr.mxu0 0.0
    %5715 = vmatpush1.msra.mxu0 0.0
    %5716 = vmatprep.subr.mxu0 0.0
    %5717 = vmatpush1.msra.mxu0 0.0
    %5718 = vmatprep.subr.mxu0 0.0
    %5719 = vmatpush1.msra.mxu0 0.0
    %5720 = vmatprep.subr.mxu0 0.0
    %5721 = vmatpush1.msra.mxu0 0.0
    %5722 = vmatprep.mubr.f32.mxu0 0.0
    %5723 = vmatmul.mubr.f32.gmra.mrb[0].mxu0 %v5611
    %v5724 = vpop.f32.mrb[0].mxu0
    %v5725 = vadd.f32 0.0, %v5724
    %v5726 = vpop.f32.mrb[0].mxu0
    %5727 = vmatprep.mubr.f32.mxu0 0.0
    %5728 = vmatmul.mubr.f32.gmra.mrb[0].mxu0 %v5614
    %v5729 = vpop.f32.mrb[0].mxu0
    %v5730 = vadd.f32 0.0, %v5729
    %v5731 = vpop.f32.mrb[0].mxu0
    %5732 = vmatprep.mubr.f32.mxu0 0.0
    %5733 = vmatmul.mubr.f32.gmra.mrb[0].mxu0 %v5617
    %v5734 = vpop.f32.mrb[0].mxu0
    %v5735 = vadd.f32 0.0, %v5734
    %v5736 = vpop.f32.mrb[0].mxu0
    %5737 = vmatprep.mubr.f32.mxu0 0.0
    %5738 = vmatmul.mubr.f32.gmra.mrb[0].mxu0 %v5620
    %v5739 = vpop.f32.mrb[0].mxu0
    %v5740 = vadd.f32 0.0, %v5739
    %v5741 = vpop.f32.mrb[0].mxu0
    %5742 = vmatprep.mubr.f32.mxu0 0.0
    %5743 = vmatmul.mubr.f32.gmra.mrb[0].mxu0 %v5623
    %v5744 = vpop.f32.mrb[0].mxu0
    %v5745 = vadd.f32 0.0, %v5744
    %v5746 = vpop.f32.mrb[0].mxu0
    %5747 = vmatprep.mubr.f32.mxu0 0.0
    %5748 = vmatmul.mubr.f32.gmra.mrb[0].mxu0 %v5626
    %v5749 = vpop.f32.mrb[0].mxu0
    %v5750 = vadd.f32 0.0, %v5749
    %v5751 = vpop.f32.mrb[0].mxu0
    %5752 = vmatprep.mubr.f32.mxu0 0.0
    %5753 = vmatmul.mubr.f32.gmra.mrb[0].mxu0 %v5629
    %v5754 = vpop.f32.mrb[0].mxu0
    %v5755 = vadd.f32 0.0, %v5754
    %v5756 = vpop.f32.mrb[0].mxu0
    %5757 = vmatprep.mubr.f32.mxu0 0.0
    %5758 = vmatmul.mubr.f32.gmra.mrb[0].mxu0 %v5632
    %v5759 = vpop.f32.mrb[0].mxu0
    %v5760 = vadd.f32 0.0, %v5759
    %v5761 = vpop.f32.mrb[0].mxu0
    %5762 = vmatprep.mubr.f32.mxu0 0.0
    %5763 = vmatmul.mubr.f32.gmra.mrb[0].mxu0 %v5635
    %v5764 = vpop.f32.mrb[0].mxu0
    %v5765 = vadd.f32 0.0, %v5764
    %v5766 = vpop.f32.mrb[0].mxu0
    %5767 = vmatprep.mubr.f32.mxu0 0.0
    %5768 = vmatmul.mubr.f32.gmra.mrb[0].mxu0 %v5638
    %v5769 = vpop.f32.mrb[0].mxu0
    %v5770 = vadd.f32 0.0, %v5769
    %v5771 = vpop.f32.mrb[0].mxu0
    %5772 = vmatprep.mubr.f32.mxu0 0.0
    %5773 = vmatmul.mubr.f32.gmra.mrb[0].mxu0 %v5641
    %v5774 = vpop.f32.mrb[0].mxu0
    %v5775 = vadd.f32 0.0, %v5774
    %v5776 = vpop.f32.mrb[0].mxu0
    %5777 = vmatprep.mubr.f32.mxu0 0.0
    %5778 = vmatmul.mubr.f32.gmra.mrb[0].mxu0 %v5644
    %v5779 = vpop.f32.mrb[0].mxu0
    %v5780 = vadd.f32 0.0, %v5779
    %v5781 = vpop.f32.mrb[0].mxu0
    %5782 = vmatprep.mubr.f32.mxu0 0.0
    %5783 = vmatmul.mubr.f32.gmra.mrb[0].mxu0 %v5647
    %v5784 = vpop.f32.mrb[0].mxu0
    %v5785 = vadd.f32 0.0, %v5784
    %v5786 = vpop.f32.mrb[0].mxu0
    %5787 = vmatprep.mubr.f32.mxu0 0.0
    %5788 = vmatmul.mubr.f32.gmra.mrb[0].mxu0 %v5650
    %v5789 = vpop.f32.mrb[0].mxu0
    %v5790 = vadd.f32 0.0, %v5789
    %v5791 = vpop.f32.mrb[0].mxu0
    %5792 = vmatprep.mubr.f32.mxu0 0.0
    %5793 = vmatmul.mubr.f32.gmra.mrb[0].mxu0 %v5653
    %v5794 = vpop.f32.mrb[0].mxu0
    %v5795 = vadd.f32 0.0, %v5794
    %v5796 = vpop.f32.mrb[0].mxu0
    %5797 = vmatprep.mubr.f32.mxu0 0.0
    %5798 = vmatmul.mubr.f32.gmra.mrb[0].mxu0 %v5656
    %v5799 = vpop.f32.mrb[0].mxu0
    %v5800 = vadd.f32 0.0, %v5799
    %v5801 = vpop.f32.mrb[0].mxu0
    %5802 = vdwg.mxu0
    %v5803 = vadd.f32 %v5585, %v5725
    %v5804 = vadd.f32 %v5586, %v5730
    %v5805 = vadd.f32 %v5587, %v5735
    %v5806 = vadd.f32 %v5588, %v5740
    %v5807 = vadd.f32 %v5589, %v5745
    %v5808 = vadd.f32 %v5590, %v5750
    %v5809 = vadd.f32 %v5591, %v5755
    %v5810 = vadd.f32 %v5592, %v5760
    %v5811 = vadd.f32 %v5593, %v5765
    %v5812 = vadd.f32 %v5594, %v5770
    %v5813 = vadd.f32 %v5595, %v5775
    %v5814 = vadd.f32 %v5596, %v5780
    %v5815 = vadd.f32 %v5597, %v5785
    %v5816 = vadd.f32 %v5598, %v5790
    %v5817 = vadd.f32 %v5599, %v5795
    %v5818 = vadd.f32 %v5600, %v5800
    %s5819 = scalar_lea.vmem %s4, 512
    %v5820 = vld [vmem:[%s5819] sm:$0xff]
    %v5821 = vld [vmem:[%s5819 + $0x8] sm:$0xff]
    %v5822 = vld [vmem:[%s5819 + $0x10] sm:$0xff]
    %v5823 = vld [vmem:[%s5819 + $0x18] sm:$0xff]
    %v5824 = vld [vmem:[%s5819 + $0x20] sm:$0xff]
    %v5825 = vld [vmem:[%s5819 + $0x28] sm:$0xff]
    %v5826 = vld [vmem:[%s5819 + $0x30] sm:$0xff]
    %v5827 = vld [vmem:[%s5819 + $0x38] sm:$0xff]
    %v5829 = vsel %vm4124, %v3835, 0
    %v5832 = vsel %vm4124, %v3836, 0
    %v5835 = vsel %vm4124, %v3837, 0
    %v5838 = vsel %vm4124, %v3838, 0
    %v5841 = vsel %vm4124, %v3839, 0
    %v5844 = vsel %vm4124, %v3840, 0
    %v5847 = vsel %vm4124, %v3841, 0
    %v5850 = vsel %vm4124, %v3842, 0
    %v5853 = vsel %vm4124, %v3843, 0
    %v5856 = vsel %vm4124, %v3844, 0
    %v5859 = vsel %vm4124, %v3845, 0
    %v5862 = vsel %vm4124, %v3846, 0
    %v5865 = vsel %vm4124, %v3847, 0
    %v5868 = vsel %vm4124, %v3848, 0
    %v5871 = vsel %vm4124, %v3849, 0
    %v5874 = vsel %vm4124, %v3850, 0
    %5876 = vmatprep.subr.mxu0 0.0
    %5877 = vmatpush1.msra.mxu0 %v5820
    %5878 = vmatprep.subr.mxu0 0.0
    %5879 = vmatpush1.msra.mxu0 %v5821
    %5880 = vmatprep.subr.mxu0 0.0
    %5881 = vmatpush1.msra.mxu0 %v5822
    %5882 = vmatprep.subr.mxu0 0.0
    %5883 = vmatpush1.msra.mxu0 %v5823
    %5884 = vmatprep.subr.mxu0 0.0
    %5885 = vmatpush1.msra.mxu0 %v5824
    %5886 = vmatprep.subr.mxu0 0.0
    %5887 = vmatpush1.msra.mxu0 %v5825
    %5888 = vmatprep.subr.mxu0 0.0
    %5889 = vmatpush1.msra.mxu0 %v5826
    %5890 = vmatprep.subr.mxu0 0.0
    %5891 = vmatpush1.msra.mxu0 %v5827
    %5892 = vmatprep.subr.mxu0 0.0
    %5893 = vmatpush1.msra.mxu0 0.0
    %5894 = vmatprep.subr.mxu0 0.0
    %5895 = vmatpush1.msra.mxu0 0.0
    %5896 = vmatprep.subr.mxu0 0.0
    %5897 = vmatpush1.msra.mxu0 0.0
    %5898 = vmatprep.subr.mxu0 0.0
    %5899 = vmatpush1.msra.mxu0 0.0
    %5900 = vmatprep.subr.mxu0 0.0
    %5901 = vmatpush1.msra.mxu0 0.0
    %5902 = vmatprep.subr.mxu0 0.0
    %5903 = vmatpush1.msra.mxu0 0.0
    %5904 = vmatprep.subr.mxu0 0.0
    %5905 = vmatpush1.msra.mxu0 0.0
    %5906 = vmatprep.subr.mxu0 0.0
    %5907 = vmatpush1.msra.mxu0 0.0
    %5908 = vmatprep.subr.mxu0 0.0
    %5909 = vmatpush1.msra.mxu0 0.0
    %5910 = vmatprep.subr.mxu0 0.0
    %5911 = vmatpush1.msra.mxu0 0.0
    %5912 = vmatprep.subr.mxu0 0.0
    %5913 = vmatpush1.msra.mxu0 0.0
    %5914 = vmatprep.subr.mxu0 0.0
    %5915 = vmatpush1.msra.mxu0 0.0
    %5916 = vmatprep.subr.mxu0 0.0
    %5917 = vmatpush1.msra.mxu0 0.0
    %5918 = vmatprep.subr.mxu0 0.0
    %5919 = vmatpush1.msra.mxu0 0.0
    %5920 = vmatprep.subr.mxu0 0.0
    %5921 = vmatpush1.msra.mxu0 0.0
    %5922 = vmatprep.subr.mxu0 0.0
    %5923 = vmatpush1.msra.mxu0 0.0
    %5924 = vmatprep.subr.mxu0 0.0
    %5925 = vmatpush1.msra.mxu0 0.0
    %5926 = vmatprep.subr.mxu0 0.0
    %5927 = vmatpush1.msra.mxu0 0.0
    %5928 = vmatprep.subr.mxu0 0.0
    %5929 = vmatpush1.msra.mxu0 0.0
    %5930 = vmatprep.subr.mxu0 0.0
    %5931 = vmatpush1.msra.mxu0 0.0
    %5932 = vmatprep.subr.mxu0 0.0
    %5933 = vmatpush1.msra.mxu0 0.0
    %5934 = vmatprep.subr.mxu0 0.0
    %5935 = vmatpush1.msra.mxu0 0.0
    %5936 = vmatprep.subr.mxu0 0.0
    %5937 = vmatpush1.msra.mxu0 0.0
    %5938 = vmatprep.subr.mxu0 0.0
    %5939 = vmatpush1.msra.mxu0 0.0
    %5940 = vmatprep.mubr.f32.mxu0 0.0
    %5941 = vmatmul.mubr.f32.gmra.mrb[0].mxu0 %v5829
    %v5942 = vpop.f32.mrb[0].mxu0
    %v5943 = vadd.f32 0.0, %v5942
    %v5944 = vpop.f32.mrb[0].mxu0
    %5945 = vmatprep.mubr.f32.mxu0 0.0
    %5946 = vmatmul.mubr.f32.gmra.mrb[0].mxu0 %v5832
    %v5947 = vpop.f32.mrb[0].mxu0
    %v5948 = vadd.f32 0.0, %v5947
    %v5949 = vpop.f32.mrb[0].mxu0
    %5950 = vmatprep.mubr.f32.mxu0 0.0
    %5951 = vmatmul.mubr.f32.gmra.mrb[0].mxu0 %v5835
    %v5952 = vpop.f32.mrb[0].mxu0
    %v5953 = vadd.f32 0.0, %v5952
    %v5954 = vpop.f32.mrb[0].mxu0
    %5955 = vmatprep.mubr.f32.mxu0 0.0
    %5956 = vmatmul.mubr.f32.gmra.mrb[0].mxu0 %v5838
    %v5957 = vpop.f32.mrb[0].mxu0
    %v5958 = vadd.f32 0.0, %v5957
    %v5959 = vpop.f32.mrb[0].mxu0
    %5960 = vmatprep.mubr.f32.mxu0 0.0
    %5961 = vmatmul.mubr.f32.gmra.mrb[0].mxu0 %v5841
    %v5962 = vpop.f32.mrb[0].mxu0
    %v5963 = vadd.f32 0.0, %v5962
    %v5964 = vpop.f32.mrb[0].mxu0
    %5965 = vmatprep.mubr.f32.mxu0 0.0
    %5966 = vmatmul.mubr.f32.gmra.mrb[0].mxu0 %v5844
    %v5967 = vpop.f32.mrb[0].mxu0
    %v5968 = vadd.f32 0.0, %v5967
    %v5969 = vpop.f32.mrb[0].mxu0
    %5970 = vmatprep.mubr.f32.mxu0 0.0
    %5971 = vmatmul.mubr.f32.gmra.mrb[0].mxu0 %v5847
    %v5972 = vpop.f32.mrb[0].mxu0
    %v5973 = vadd.f32 0.0, %v5972
    %v5974 = vpop.f32.mrb[0].mxu0
    %5975 = vmatprep.mubr.f32.mxu0 0.0
    %5976 = vmatmul.mubr.f32.gmra.mrb[0].mxu0 %v5850
    %v5977 = vpop.f32.mrb[0].mxu0
    %v5978 = vadd.f32 0.0, %v5977
    %v5979 = vpop.f32.mrb[0].mxu0
    %5980 = vmatprep.mubr.f32.mxu0 0.0
    %5981 = vmatmul.mubr.f32.gmra.mrb[0].mxu0 %v5853
    %v5982 = vpop.f32.mrb[0].mxu0
    %v5983 = vadd.f32 0.0, %v5982
    %v5984 = vpop.f32.mrb[0].mxu0
    %5985 = vmatprep.mubr.f32.mxu0 0.0
    %5986 = vmatmul.mubr.f32.gmra.mrb[0].mxu0 %v5856
    %v5987 = vpop.f32.mrb[0].mxu0
    %v5988 = vadd.f32 0.0, %v5987
    %v5989 = vpop.f32.mrb[0].mxu0
    %5990 = vmatprep.mubr.f32.mxu0 0.0
    %5991 = vmatmul.mubr.f32.gmra.mrb[0].mxu0 %v5859
    %v5992 = vpop.f32.mrb[0].mxu0
    %v5993 = vadd.f32 0.0, %v5992
    %v5994 = vpop.f32.mrb[0].mxu0
    %5995 = vmatprep.mubr.f32.mxu0 0.0
    %5996 = vmatmul.mubr.f32.gmra.mrb[0].mxu0 %v5862
    %v5997 = vpop.f32.mrb[0].mxu0
    %v5998 = vadd.f32 0.0, %v5997
    %v5999 = vpop.f32.mrb[0].mxu0
    %6000 = vmatprep.mubr.f32.mxu0 0.0
    %6001 = vmatmul.mubr.f32.gmra.mrb[0].mxu0 %v5865
    %v6002 = vpop.f32.mrb[0].mxu0
    %v6003 = vadd.f32 0.0, %v6002
    %v6004 = vpop.f32.mrb[0].mxu0
    %6005 = vmatprep.mubr.f32.mxu0 0.0
    %6006 = vmatmul.mubr.f32.gmra.mrb[0].mxu0 %v5868
    %v6007 = vpop.f32.mrb[0].mxu0
    %v6008 = vadd.f32 0.0, %v6007
    %v6009 = vpop.f32.mrb[0].mxu0
    %6010 = vmatprep.mubr.f32.mxu0 0.0
    %6011 = vmatmul.mubr.f32.gmra.mrb[0].mxu0 %v5871
    %v6012 = vpop.f32.mrb[0].mxu0
    %v6013 = vadd.f32 0.0, %v6012
    %v6014 = vpop.f32.mrb[0].mxu0
    %6015 = vmatprep.mubr.f32.mxu0 0.0
    %6016 = vmatmul.mubr.f32.gmra.mrb[0].mxu0 %v5874
    %v6017 = vpop.f32.mrb[0].mxu0
    %v6018 = vadd.f32 0.0, %v6017
    %v6019 = vpop.f32.mrb[0].mxu0
    %6020 = vdwg.mxu0
    %v6021 = vadd.f32 %v5803, %v5943
    %v6022 = vadd.f32 %v5804, %v5948
    %v6023 = vadd.f32 %v5805, %v5953
    %v6024 = vadd.f32 %v5806, %v5958
    %v6025 = vadd.f32 %v5807, %v5963
    %v6026 = vadd.f32 %v5808, %v5968
    %v6027 = vadd.f32 %v5809, %v5973
    %v6028 = vadd.f32 %v5810, %v5978
    %v6029 = vadd.f32 %v5811, %v5983
    %v6030 = vadd.f32 %v5812, %v5988
    %v6031 = vadd.f32 %v5813, %v5993
    %v6032 = vadd.f32 %v5814, %v5998
    %v6033 = vadd.f32 %v5815, %v6003
    %v6034 = vadd.f32 %v5816, %v6008
    %v6035 = vadd.f32 %v5817, %v6013
    %v6036 = vadd.f32 %v5818, %v6018
    %s6037 = scalar_lea.vmem %s4, 576
    %v6038 = vld [vmem:[%s6037] sm:$0xff]
    %v6039 = vld [vmem:[%s6037 + $0x8] sm:$0xff]
    %v6040 = vld [vmem:[%s6037 + $0x10] sm:$0xff]
    %v6041 = vld [vmem:[%s6037 + $0x18] sm:$0xff]
    %v6042 = vld [vmem:[%s6037 + $0x20] sm:$0xff]
    %v6043 = vld [vmem:[%s6037 + $0x28] sm:$0xff]
    %v6044 = vld [vmem:[%s6037 + $0x30] sm:$0xff]
    %v6045 = vld [vmem:[%s6037 + $0x38] sm:$0xff]
    %v6047 = vsel %vm4124, %v3851, 0
    %v6050 = vsel %vm4124, %v3852, 0
    %v6053 = vsel %vm4124, %v3853, 0
    %v6056 = vsel %vm4124, %v3854, 0
    %v6059 = vsel %vm4124, %v3855, 0
    %v6062 = vsel %vm4124, %v3856, 0
    %v6065 = vsel %vm4124, %v3857, 0
    %v6068 = vsel %vm4124, %v3858, 0
    %v6071 = vsel %vm4124, %v3859, 0
    %v6074 = vsel %vm4124, %v3860, 0
    %v6077 = vsel %vm4124, %v3861, 0
    %v6080 = vsel %vm4124, %v3862, 0
    %v6083 = vsel %vm4124, %v3863, 0
    %v6086 = vsel %vm4124, %v3864, 0
    %v6089 = vsel %vm4124, %v3865, 0
    %v6092 = vsel %vm4124, %v3866, 0
    %6094 = vmatprep.subr.mxu0 0.0
    %6095 = vmatpush1.msra.mxu0 %v6038
    %6096 = vmatprep.subr.mxu0 0.0
    %6097 = vmatpush1.msra.mxu0 %v6039
    %6098 = vmatprep.subr.mxu0 0.0
    %6099 = vmatpush1.msra.mxu0 %v6040
    %6100 = vmatprep.subr.mxu0 0.0
    %6101 = vmatpush1.msra.mxu0 %v6041
    %6102 = vmatprep.subr.mxu0 0.0
    %6103 = vmatpush1.msra.mxu0 %v6042
    %6104 = vmatprep.subr.mxu0 0.0
    %6105 = vmatpush1.msra.mxu0 %v6043
    %6106 = vmatprep.subr.mxu0 0.0
    %6107 = vmatpush1.msra.mxu0 %v6044
    %6108 = vmatprep.subr.mxu0 0.0
    %6109 = vmatpush1.msra.mxu0 %v6045
    %6110 = vmatprep.subr.mxu0 0.0
    %6111 = vmatpush1.msra.mxu0 0.0
    %6112 = vmatprep.subr.mxu0 0.0
    %6113 = vmatpush1.msra.mxu0 0.0
    %6114 = vmatprep.subr.mxu0 0.0
    %6115 = vmatpush1.msra.mxu0 0.0
    %6116 = vmatprep.subr.mxu0 0.0
    %6117 = vmatpush1.msra.mxu0 0.0
    %6118 = vmatprep.subr.mxu0 0.0
    %6119 = vmatpush1.msra.mxu0 0.0
    %6120 = vmatprep.subr.mxu0 0.0
    %6121 = vmatpush1.msra.mxu0 0.0
    %6122 = vmatprep.subr.mxu0 0.0
    %6123 = vmatpush1.msra.mxu0 0.0
    %6124 = vmatprep.subr.mxu0 0.0
    %6125 = vmatpush1.msra.mxu0 0.0
    %6126 = vmatprep.subr.mxu0 0.0
    %6127 = vmatpush1.msra.mxu0 0.0
    %6128 = vmatprep.subr.mxu0 0.0
    %6129 = vmatpush1.msra.mxu0 0.0
    %6130 = vmatprep.subr.mxu0 0.0
    %6131 = vmatpush1.msra.mxu0 0.0
    %6132 = vmatprep.subr.mxu0 0.0
    %6133 = vmatpush1.msra.mxu0 0.0
    %6134 = vmatprep.subr.mxu0 0.0
    %6135 = vmatpush1.msra.mxu0 0.0
    %6136 = vmatprep.subr.mxu0 0.0
    %6137 = vmatpush1.msra.mxu0 0.0
    %6138 = vmatprep.subr.mxu0 0.0
    %6139 = vmatpush1.msra.mxu0 0.0
    %6140 = vmatprep.subr.mxu0 0.0
    %6141 = vmatpush1.msra.mxu0 0.0
    %6142 = vmatprep.subr.mxu0 0.0
    %6143 = vmatpush1.msra.mxu0 0.0
    %6144 = vmatprep.subr.mxu0 0.0
    %6145 = vmatpush1.msra.mxu0 0.0
    %6146 = vmatprep.subr.mxu0 0.0
    %6147 = vmatpush1.msra.mxu0 0.0
    %6148 = vmatprep.subr.mxu0 0.0
    %6149 = vmatpush1.msra.mxu0 0.0
    %6150 = vmatprep.subr.mxu0 0.0
    %6151 = vmatpush1.msra.mxu0 0.0
    %6152 = vmatprep.subr.mxu0 0.0
    %6153 = vmatpush1.msra.mxu0 0.0
    %6154 = vmatprep.subr.mxu0 0.0
    %6155 = vmatpush1.msra.mxu0 0.0
    %6156 = vmatprep.subr.mxu0 0.0
    %6157 = vmatpush1.msra.mxu0 0.0
    %6158 = vmatprep.mubr.f32.mxu0 0.0
    %6159 = vmatmul.mubr.f32.gmra.mrb[0].mxu0 %v6047
    %v6160 = vpop.f32.mrb[0].mxu0
    %v6161 = vadd.f32 0.0, %v6160
    %v6162 = vpop.f32.mrb[0].mxu0
    %6163 = vmatprep.mubr.f32.mxu0 0.0
    %6164 = vmatmul.mubr.f32.gmra.mrb[0].mxu0 %v6050
    %v6165 = vpop.f32.mrb[0].mxu0
    %v6166 = vadd.f32 0.0, %v6165
    %v6167 = vpop.f32.mrb[0].mxu0
    %6168 = vmatprep.mubr.f32.mxu0 0.0
    %6169 = vmatmul.mubr.f32.gmra.mrb[0].mxu0 %v6053
    %v6170 = vpop.f32.mrb[0].mxu0
    %v6171 = vadd.f32 0.0, %v6170
    %v6172 = vpop.f32.mrb[0].mxu0
    %6173 = vmatprep.mubr.f32.mxu0 0.0
    %6174 = vmatmul.mubr.f32.gmra.mrb[0].mxu0 %v6056
    %v6175 = vpop.f32.mrb[0].mxu0
    %v6176 = vadd.f32 0.0, %v6175
    %v6177 = vpop.f32.mrb[0].mxu0
    %6178 = vmatprep.mubr.f32.mxu0 0.0
    %6179 = vmatmul.mubr.f32.gmra.mrb[0].mxu0 %v6059
    %v6180 = vpop.f32.mrb[0].mxu0
    %v6181 = vadd.f32 0.0, %v6180
    %v6182 = vpop.f32.mrb[0].mxu0
    %6183 = vmatprep.mubr.f32.mxu0 0.0
    %6184 = vmatmul.mubr.f32.gmra.mrb[0].mxu0 %v6062
    %v6185 = vpop.f32.mrb[0].mxu0
    %v6186 = vadd.f32 0.0, %v6185
    %v6187 = vpop.f32.mrb[0].mxu0
    %6188 = vmatprep.mubr.f32.mxu0 0.0
    %6189 = vmatmul.mubr.f32.gmra.mrb[0].mxu0 %v6065
    %v6190 = vpop.f32.mrb[0].mxu0
    %v6191 = vadd.f32 0.0, %v6190
    %v6192 = vpop.f32.mrb[0].mxu0
    %6193 = vmatprep.mubr.f32.mxu0 0.0
    %6194 = vmatmul.mubr.f32.gmra.mrb[0].mxu0 %v6068
    %v6195 = vpop.f32.mrb[0].mxu0
    %v6196 = vadd.f32 0.0, %v6195
    %v6197 = vpop.f32.mrb[0].mxu0
    %6198 = vmatprep.mubr.f32.mxu0 0.0
    %6199 = vmatmul.mubr.f32.gmra.mrb[0].mxu0 %v6071
    %v6200 = vpop.f32.mrb[0].mxu0
    %v6201 = vadd.f32 0.0, %v6200
    %v6202 = vpop.f32.mrb[0].mxu0
    %6203 = vmatprep.mubr.f32.mxu0 0.0
    %6204 = vmatmul.mubr.f32.gmra.mrb[0].mxu0 %v6074
    %v6205 = vpop.f32.mrb[0].mxu0
    %v6206 = vadd.f32 0.0, %v6205
    %v6207 = vpop.f32.mrb[0].mxu0
    %6208 = vmatprep.mubr.f32.mxu0 0.0
    %6209 = vmatmul.mubr.f32.gmra.mrb[0].mxu0 %v6077
    %v6210 = vpop.f32.mrb[0].mxu0
    %v6211 = vadd.f32 0.0, %v6210
    %v6212 = vpop.f32.mrb[0].mxu0
    %6213 = vmatprep.mubr.f32.mxu0 0.0
    %6214 = vmatmul.mubr.f32.gmra.mrb[0].mxu0 %v6080
    %v6215 = vpop.f32.mrb[0].mxu0
    %v6216 = vadd.f32 0.0, %v6215
    %v6217 = vpop.f32.mrb[0].mxu0
    %6218 = vmatprep.mubr.f32.mxu0 0.0
    %6219 = vmatmul.mubr.f32.gmra.mrb[0].mxu0 %v6083
    %v6220 = vpop.f32.mrb[0].mxu0
    %v6221 = vadd.f32 0.0, %v6220
    %v6222 = vpop.f32.mrb[0].mxu0
    %6223 = vmatprep.mubr.f32.mxu0 0.0
    %6224 = vmatmul.mubr.f32.gmra.mrb[0].mxu0 %v6086
    %v6225 = vpop.f32.mrb[0].mxu0
    %v6226 = vadd.f32 0.0, %v6225
    %v6227 = vpop.f32.mrb[0].mxu0
    %6228 = vmatprep.mubr.f32.mxu0 0.0
    %6229 = vmatmul.mubr.f32.gmra.mrb[0].mxu0 %v6089
    %v6230 = vpop.f32.mrb[0].mxu0
    %v6231 = vadd.f32 0.0, %v6230
    %v6232 = vpop.f32.mrb[0].mxu0
    %6233 = vmatprep.mubr.f32.mxu0 0.0
    %6234 = vmatmul.mubr.f32.gmra.mrb[0].mxu0 %v6092
    %v6235 = vpop.f32.mrb[0].mxu0
    %v6236 = vadd.f32 0.0, %v6235
    %v6237 = vpop.f32.mrb[0].mxu0
    %6238 = vdwg.mxu0
    %v6239 = vadd.f32 %v6021, %v6161
    %v6240 = vadd.f32 %v6022, %v6166
    %v6241 = vadd.f32 %v6023, %v6171
    %v6242 = vadd.f32 %v6024, %v6176
    %v6243 = vadd.f32 %v6025, %v6181
    %v6244 = vadd.f32 %v6026, %v6186
    %v6245 = vadd.f32 %v6027, %v6191
    %v6246 = vadd.f32 %v6028, %v6196
    %v6247 = vadd.f32 %v6029, %v6201
    %v6248 = vadd.f32 %v6030, %v6206
    %v6249 = vadd.f32 %v6031, %v6211
    %v6250 = vadd.f32 %v6032, %v6216
    %v6251 = vadd.f32 %v6033, %v6221
    %v6252 = vadd.f32 %v6034, %v6226
    %v6253 = vadd.f32 %v6035, %v6231
    %v6254 = vadd.f32 %v6036, %v6236
    %s6255 = scalar_lea.vmem %s4, 640
    %v6256 = vld [vmem:[%s6255] sm:$0xff]
    %v6257 = vld [vmem:[%s6255 + $0x8] sm:$0xff]
    %v6258 = vld [vmem:[%s6255 + $0x10] sm:$0xff]
    %v6259 = vld [vmem:[%s6255 + $0x18] sm:$0xff]
    %v6260 = vld [vmem:[%s6255 + $0x20] sm:$0xff]
    %v6261 = vld [vmem:[%s6255 + $0x28] sm:$0xff]
    %v6262 = vld [vmem:[%s6255 + $0x30] sm:$0xff]
    %v6263 = vld [vmem:[%s6255 + $0x38] sm:$0xff]
    %v6265 = vsel %vm4124, %v3867, 0
    %v6268 = vsel %vm4124, %v3868, 0
    %v6271 = vsel %vm4124, %v3869, 0
    %v6274 = vsel %vm4124, %v3870, 0
    %v6277 = vsel %vm4124, %v3871, 0
    %v6280 = vsel %vm4124, %v3872, 0
    %v6283 = vsel %vm4124, %v3873, 0
    %v6286 = vsel %vm4124, %v3874, 0
    %v6289 = vsel %vm4124, %v3875, 0
    %v6292 = vsel %vm4124, %v3876, 0
    %v6295 = vsel %vm4124, %v3877, 0
    %v6298 = vsel %vm4124, %v3878, 0
    %v6301 = vsel %vm4124, %v3879, 0
    %v6304 = vsel %vm4124, %v3880, 0
    %v6307 = vsel %vm4124, %v3881, 0
    %v6310 = vsel %vm4124, %v3882, 0
    %6312 = vmatprep.subr.mxu0 0.0
    %6313 = vmatpush1.msra.mxu0 %v6256
    %6314 = vmatprep.subr.mxu0 0.0
    %6315 = vmatpush1.msra.mxu0 %v6257
    %6316 = vmatprep.subr.mxu0 0.0
    %6317 = vmatpush1.msra.mxu0 %v6258
    %6318 = vmatprep.subr.mxu0 0.0
    %6319 = vmatpush1.msra.mxu0 %v6259
    %6320 = vmatprep.subr.mxu0 0.0
    %6321 = vmatpush1.msra.mxu0 %v6260
    %6322 = vmatprep.subr.mxu0 0.0
    %6323 = vmatpush1.msra.mxu0 %v6261
    %6324 = vmatprep.subr.mxu0 0.0
    %6325 = vmatpush1.msra.mxu0 %v6262
    %6326 = vmatprep.subr.mxu0 0.0
    %6327 = vmatpush1.msra.mxu0 %v6263
    %6328 = vmatprep.subr.mxu0 0.0
    %6329 = vmatpush1.msra.mxu0 0.0
    %6330 = vmatprep.subr.mxu0 0.0
    %6331 = vmatpush1.msra.mxu0 0.0
    %6332 = vmatprep.subr.mxu0 0.0
    %6333 = vmatpush1.msra.mxu0 0.0
    %6334 = vmatprep.subr.mxu0 0.0
    %6335 = vmatpush1.msra.mxu0 0.0
    %6336 = vmatprep.subr.mxu0 0.0
    %6337 = vmatpush1.msra.mxu0 0.0
    %6338 = vmatprep.subr.mxu0 0.0
    %6339 = vmatpush1.msra.mxu0 0.0
    %6340 = vmatprep.subr.mxu0 0.0
    %6341 = vmatpush1.msra.mxu0 0.0
    %6342 = vmatprep.subr.mxu0 0.0
    %6343 = vmatpush1.msra.mxu0 0.0
    %6344 = vmatprep.subr.mxu0 0.0
    %6345 = vmatpush1.msra.mxu0 0.0
    %6346 = vmatprep.subr.mxu0 0.0
    %6347 = vmatpush1.msra.mxu0 0.0
    %6348 = vmatprep.subr.mxu0 0.0
    %6349 = vmatpush1.msra.mxu0 0.0
    %6350 = vmatprep.subr.mxu0 0.0
    %6351 = vmatpush1.msra.mxu0 0.0
    %6352 = vmatprep.subr.mxu0 0.0
    %6353 = vmatpush1.msra.mxu0 0.0
    %6354 = vmatprep.subr.mxu0 0.0
    %6355 = vmatpush1.msra.mxu0 0.0
    %6356 = vmatprep.subr.mxu0 0.0
    %6357 = vmatpush1.msra.mxu0 0.0
    %6358 = vmatprep.subr.mxu0 0.0
    %6359 = vmatpush1.msra.mxu0 0.0
    %6360 = vmatprep.subr.mxu0 0.0
    %6361 = vmatpush1.msra.mxu0 0.0
    %6362 = vmatprep.subr.mxu0 0.0
    %6363 = vmatpush1.msra.mxu0 0.0
    %6364 = vmatprep.subr.mxu0 0.0
    %6365 = vmatpush1.msra.mxu0 0.0
    %6366 = vmatprep.subr.mxu0 0.0
    %6367 = vmatpush1.msra.mxu0 0.0
    %6368 = vmatprep.subr.mxu0 0.0
    %6369 = vmatpush1.msra.mxu0 0.0
    %6370 = vmatprep.subr.mxu0 0.0
    %6371 = vmatpush1.msra.mxu0 0.0
    %6372 = vmatprep.subr.mxu0 0.0
    %6373 = vmatpush1.msra.mxu0 0.0
    %6374 = vmatprep.subr.mxu0 0.0
    %6375 = vmatpush1.msra.mxu0 0.0
    %6376 = vmatprep.mubr.f32.mxu0 0.0
    %6377 = vmatmul.mubr.f32.gmra.mrb[0].mxu0 %v6265
    %v6378 = vpop.f32.mrb[0].mxu0
    %v6379 = vadd.f32 0.0, %v6378
    %v6380 = vpop.f32.mrb[0].mxu0
    %6381 = vmatprep.mubr.f32.mxu0 0.0
    %6382 = vmatmul.mubr.f32.gmra.mrb[0].mxu0 %v6268
    %v6383 = vpop.f32.mrb[0].mxu0
    %v6384 = vadd.f32 0.0, %v6383
    %v6385 = vpop.f32.mrb[0].mxu0
    %6386 = vmatprep.mubr.f32.mxu0 0.0
    %6387 = vmatmul.mubr.f32.gmra.mrb[0].mxu0 %v6271
    %v6388 = vpop.f32.mrb[0].mxu0
    %v6389 = vadd.f32 0.0, %v6388
    %v6390 = vpop.f32.mrb[0].mxu0
    %6391 = vmatprep.mubr.f32.mxu0 0.0
    %6392 = vmatmul.mubr.f32.gmra.mrb[0].mxu0 %v6274
    %v6393 = vpop.f32.mrb[0].mxu0
    %v6394 = vadd.f32 0.0, %v6393
    %v6395 = vpop.f32.mrb[0].mxu0
    %6396 = vmatprep.mubr.f32.mxu0 0.0
    %6397 = vmatmul.mubr.f32.gmra.mrb[0].mxu0 %v6277
    %v6398 = vpop.f32.mrb[0].mxu0
    %v6399 = vadd.f32 0.0, %v6398
    %v6400 = vpop.f32.mrb[0].mxu0
    %6401 = vmatprep.mubr.f32.mxu0 0.0
    %6402 = vmatmul.mubr.f32.gmra.mrb[0].mxu0 %v6280
    %v6403 = vpop.f32.mrb[0].mxu0
    %v6404 = vadd.f32 0.0, %v6403
    %v6405 = vpop.f32.mrb[0].mxu0
    %6406 = vmatprep.mubr.f32.mxu0 0.0
    %6407 = vmatmul.mubr.f32.gmra.mrb[0].mxu0 %v6283
    %v6408 = vpop.f32.mrb[0].mxu0
    %v6409 = vadd.f32 0.0, %v6408
    %v6410 = vpop.f32.mrb[0].mxu0
    %6411 = vmatprep.mubr.f32.mxu0 0.0
    %6412 = vmatmul.mubr.f32.gmra.mrb[0].mxu0 %v6286
    %v6413 = vpop.f32.mrb[0].mxu0
    %v6414 = vadd.f32 0.0, %v6413
    %v6415 = vpop.f32.mrb[0].mxu0
    %6416 = vmatprep.mubr.f32.mxu0 0.0
    %6417 = vmatmul.mubr.f32.gmra.mrb[0].mxu0 %v6289
    %v6418 = vpop.f32.mrb[0].mxu0
    %v6419 = vadd.f32 0.0, %v6418
    %v6420 = vpop.f32.mrb[0].mxu0
    %6421 = vmatprep.mubr.f32.mxu0 0.0
    %6422 = vmatmul.mubr.f32.gmra.mrb[0].mxu0 %v6292
    %v6423 = vpop.f32.mrb[0].mxu0
    %v6424 = vadd.f32 0.0, %v6423
    %v6425 = vpop.f32.mrb[0].mxu0
    %6426 = vmatprep.mubr.f32.mxu0 0.0
    %6427 = vmatmul.mubr.f32.gmra.mrb[0].mxu0 %v6295
    %v6428 = vpop.f32.mrb[0].mxu0
    %v6429 = vadd.f32 0.0, %v6428
    %v6430 = vpop.f32.mrb[0].mxu0
    %6431 = vmatprep.mubr.f32.mxu0 0.0
    %6432 = vmatmul.mubr.f32.gmra.mrb[0].mxu0 %v6298
    %v6433 = vpop.f32.mrb[0].mxu0
    %v6434 = vadd.f32 0.0, %v6433
    %v6435 = vpop.f32.mrb[0].mxu0
    %6436 = vmatprep.mubr.f32.mxu0 0.0
    %6437 = vmatmul.mubr.f32.gmra.mrb[0].mxu0 %v6301
    %v6438 = vpop.f32.mrb[0].mxu0
    %v6439 = vadd.f32 0.0, %v6438
    %v6440 = vpop.f32.mrb[0].mxu0
    %6441 = vmatprep.mubr.f32.mxu0 0.0
    %6442 = vmatmul.mubr.f32.gmra.mrb[0].mxu0 %v6304
    %v6443 = vpop.f32.mrb[0].mxu0
    %v6444 = vadd.f32 0.0, %v6443
    %v6445 = vpop.f32.mrb[0].mxu0
    %6446 = vmatprep.mubr.f32.mxu0 0.0
    %6447 = vmatmul.mubr.f32.gmra.mrb[0].mxu0 %v6307
    %v6448 = vpop.f32.mrb[0].mxu0
    %v6449 = vadd.f32 0.0, %v6448
    %v6450 = vpop.f32.mrb[0].mxu0
    %6451 = vmatprep.mubr.f32.mxu0 0.0
    %6452 = vmatmul.mubr.f32.gmra.mrb[0].mxu0 %v6310
    %v6453 = vpop.f32.mrb[0].mxu0
    %v6454 = vadd.f32 0.0, %v6453
    %v6455 = vpop.f32.mrb[0].mxu0
    %6456 = vdwg.mxu0
    %v6457 = vadd.f32 %v6239, %v6379
    %v6458 = vadd.f32 %v6240, %v6384
    %v6459 = vadd.f32 %v6241, %v6389
    %v6460 = vadd.f32 %v6242, %v6394
    %v6461 = vadd.f32 %v6243, %v6399
    %v6462 = vadd.f32 %v6244, %v6404
    %v6463 = vadd.f32 %v6245, %v6409
    %v6464 = vadd.f32 %v6246, %v6414
    %v6465 = vadd.f32 %v6247, %v6419
    %v6466 = vadd.f32 %v6248, %v6424
    %v6467 = vadd.f32 %v6249, %v6429
    %v6468 = vadd.f32 %v6250, %v6434
    %v6469 = vadd.f32 %v6251, %v6439
    %v6470 = vadd.f32 %v6252, %v6444
    %v6471 = vadd.f32 %v6253, %v6449
    %v6472 = vadd.f32 %v6254, %v6454
    %s6473 = scalar_lea.vmem %s4, 704
    %v6474 = vld [vmem:[%s6473] sm:$0xff]
    %v6475 = vld [vmem:[%s6473 + $0x8] sm:$0xff]
    %v6476 = vld [vmem:[%s6473 + $0x10] sm:$0xff]
    %v6477 = vld [vmem:[%s6473 + $0x18] sm:$0xff]
    %v6478 = vld [vmem:[%s6473 + $0x20] sm:$0xff]
    %v6479 = vld [vmem:[%s6473 + $0x28] sm:$0xff]
    %v6480 = vld [vmem:[%s6473 + $0x30] sm:$0xff]
    %v6481 = vld [vmem:[%s6473 + $0x38] sm:$0xff]
    %v6483 = vsel %vm4124, %v3883, 0
    %v6486 = vsel %vm4124, %v3884, 0
    %v6489 = vsel %vm4124, %v3885, 0
    %v6492 = vsel %vm4124, %v3886, 0
    %v6495 = vsel %vm4124, %v3887, 0
    %v6498 = vsel %vm4124, %v3888, 0
    %v6501 = vsel %vm4124, %v3889, 0
    %v6504 = vsel %vm4124, %v3890, 0
    %v6507 = vsel %vm4124, %v3891, 0
    %v6510 = vsel %vm4124, %v3892, 0
    %v6513 = vsel %vm4124, %v3893, 0
    %v6516 = vsel %vm4124, %v3894, 0
    %v6519 = vsel %vm4124, %v3895, 0
    %v6522 = vsel %vm4124, %v3896, 0
    %v6525 = vsel %vm4124, %v3897, 0
    %v6528 = vsel %vm4124, %v3898, 0
    %6530 = vmatprep.subr.mxu0 0.0
    %6531 = vmatpush1.msra.mxu0 %v6474
    %6532 = vmatprep.subr.mxu0 0.0
    %6533 = vmatpush1.msra.mxu0 %v6475
    %6534 = vmatprep.subr.mxu0 0.0
    %6535 = vmatpush1.msra.mxu0 %v6476
    %6536 = vmatprep.subr.mxu0 0.0
    %6537 = vmatpush1.msra.mxu0 %v6477
    %6538 = vmatprep.subr.mxu0 0.0
    %6539 = vmatpush1.msra.mxu0 %v6478
    %6540 = vmatprep.subr.mxu0 0.0
    %6541 = vmatpush1.msra.mxu0 %v6479
    %6542 = vmatprep.subr.mxu0 0.0
    %6543 = vmatpush1.msra.mxu0 %v6480
    %6544 = vmatprep.subr.mxu0 0.0
    %6545 = vmatpush1.msra.mxu0 %v6481
    %6546 = vmatprep.subr.mxu0 0.0
    %6547 = vmatpush1.msra.mxu0 0.0
    %6548 = vmatprep.subr.mxu0 0.0
    %6549 = vmatpush1.msra.mxu0 0.0
    %6550 = vmatprep.subr.mxu0 0.0
    %6551 = vmatpush1.msra.mxu0 0.0
    %6552 = vmatprep.subr.mxu0 0.0
    %6553 = vmatpush1.msra.mxu0 0.0
    %6554 = vmatprep.subr.mxu0 0.0
    %6555 = vmatpush1.msra.mxu0 0.0
    %6556 = vmatprep.subr.mxu0 0.0
    %6557 = vmatpush1.msra.mxu0 0.0
    %6558 = vmatprep.subr.mxu0 0.0
    %6559 = vmatpush1.msra.mxu0 0.0
    %6560 = vmatprep.subr.mxu0 0.0
    %6561 = vmatpush1.msra.mxu0 0.0
    %6562 = vmatprep.subr.mxu0 0.0
    %6563 = vmatpush1.msra.mxu0 0.0
    %6564 = vmatprep.subr.mxu0 0.0
    %6565 = vmatpush1.msra.mxu0 0.0
    %6566 = vmatprep.subr.mxu0 0.0
    %6567 = vmatpush1.msra.mxu0 0.0
    %6568 = vmatprep.subr.mxu0 0.0
    %6569 = vmatpush1.msra.mxu0 0.0
    %6570 = vmatprep.subr.mxu0 0.0
    %6571 = vmatpush1.msra.mxu0 0.0
    %6572 = vmatprep.subr.mxu0 0.0
    %6573 = vmatpush1.msra.mxu0 0.0
    %6574 = vmatprep.subr.mxu0 0.0
    %6575 = vmatpush1.msra.mxu0 0.0
    %6576 = vmatprep.subr.mxu0 0.0
    %6577 = vmatpush1.msra.mxu0 0.0
    %6578 = vmatprep.subr.mxu0 0.0
    %6579 = vmatpush1.msra.mxu0 0.0
    %6580 = vmatprep.subr.mxu0 0.0
    %6581 = vmatpush1.msra.mxu0 0.0
    %6582 = vmatprep.subr.mxu0 0.0
    %6583 = vmatpush1.msra.mxu0 0.0
    %6584 = vmatprep.subr.mxu0 0.0
    %6585 = vmatpush1.msra.mxu0 0.0
    %6586 = vmatprep.subr.mxu0 0.0
    %6587 = vmatpush1.msra.mxu0 0.0
    %6588 = vmatprep.subr.mxu0 0.0
    %6589 = vmatpush1.msra.mxu0 0.0
    %6590 = vmatprep.subr.mxu0 0.0
    %6591 = vmatpush1.msra.mxu0 0.0
    %6592 = vmatprep.subr.mxu0 0.0
    %6593 = vmatpush1.msra.mxu0 0.0
    %6594 = vmatprep.mubr.f32.mxu0 0.0
    %6595 = vmatmul.mubr.f32.gmra.mrb[0].mxu0 %v6483
    %v6596 = vpop.f32.mrb[0].mxu0
    %v6597 = vadd.f32 0.0, %v6596
    %v6598 = vpop.f32.mrb[0].mxu0
    %6599 = vmatprep.mubr.f32.mxu0 0.0
    %6600 = vmatmul.mubr.f32.gmra.mrb[0].mxu0 %v6486
    %v6601 = vpop.f32.mrb[0].mxu0
    %v6602 = vadd.f32 0.0, %v6601
    %v6603 = vpop.f32.mrb[0].mxu0
    %6604 = vmatprep.mubr.f32.mxu0 0.0
    %6605 = vmatmul.mubr.f32.gmra.mrb[0].mxu0 %v6489
    %v6606 = vpop.f32.mrb[0].mxu0
    %v6607 = vadd.f32 0.0, %v6606
    %v6608 = vpop.f32.mrb[0].mxu0
    %6609 = vmatprep.mubr.f32.mxu0 0.0
    %6610 = vmatmul.mubr.f32.gmra.mrb[0].mxu0 %v6492
    %v6611 = vpop.f32.mrb[0].mxu0
    %v6612 = vadd.f32 0.0, %v6611
    %v6613 = vpop.f32.mrb[0].mxu0
    %6614 = vmatprep.mubr.f32.mxu0 0.0
    %6615 = vmatmul.mubr.f32.gmra.mrb[0].mxu0 %v6495
    %v6616 = vpop.f32.mrb[0].mxu0
    %v6617 = vadd.f32 0.0, %v6616
    %v6618 = vpop.f32.mrb[0].mxu0
    %6619 = vmatprep.mubr.f32.mxu0 0.0
    %6620 = vmatmul.mubr.f32.gmra.mrb[0].mxu0 %v6498
    %v6621 = vpop.f32.mrb[0].mxu0
    %v6622 = vadd.f32 0.0, %v6621
    %v6623 = vpop.f32.mrb[0].mxu0
    %6624 = vmatprep.mubr.f32.mxu0 0.0
    %6625 = vmatmul.mubr.f32.gmra.mrb[0].mxu0 %v6501
    %v6626 = vpop.f32.mrb[0].mxu0
    %v6627 = vadd.f32 0.0, %v6626
    %v6628 = vpop.f32.mrb[0].mxu0
    %6629 = vmatprep.mubr.f32.mxu0 0.0
    %6630 = vmatmul.mubr.f32.gmra.mrb[0].mxu0 %v6504
    %v6631 = vpop.f32.mrb[0].mxu0
    %v6632 = vadd.f32 0.0, %v6631
    %v6633 = vpop.f32.mrb[0].mxu0
    %6634 = vmatprep.mubr.f32.mxu0 0.0
    %6635 = vmatmul.mubr.f32.gmra.mrb[0].mxu0 %v6507
    %v6636 = vpop.f32.mrb[0].mxu0
    %v6637 = vadd.f32 0.0, %v6636
    %v6638 = vpop.f32.mrb[0].mxu0
    %6639 = vmatprep.mubr.f32.mxu0 0.0
    %6640 = vmatmul.mubr.f32.gmra.mrb[0].mxu0 %v6510
    %v6641 = vpop.f32.mrb[0].mxu0
    %v6642 = vadd.f32 0.0, %v6641
    %v6643 = vpop.f32.mrb[0].mxu0
    %6644 = vmatprep.mubr.f32.mxu0 0.0
    %6645 = vmatmul.mubr.f32.gmra.mrb[0].mxu0 %v6513
    %v6646 = vpop.f32.mrb[0].mxu0
    %v6647 = vadd.f32 0.0, %v6646
    %v6648 = vpop.f32.mrb[0].mxu0
    %6649 = vmatprep.mubr.f32.mxu0 0.0
    %6650 = vmatmul.mubr.f32.gmra.mrb[0].mxu0 %v6516
    %v6651 = vpop.f32.mrb[0].mxu0
    %v6652 = vadd.f32 0.0, %v6651
    %v6653 = vpop.f32.mrb[0].mxu0
    %6654 = vmatprep.mubr.f32.mxu0 0.0
    %6655 = vmatmul.mubr.f32.gmra.mrb[0].mxu0 %v6519
    %v6656 = vpop.f32.mrb[0].mxu0
    %v6657 = vadd.f32 0.0, %v6656
    %v6658 = vpop.f32.mrb[0].mxu0
    %6659 = vmatprep.mubr.f32.mxu0 0.0
    %6660 = vmatmul.mubr.f32.gmra.mrb[0].mxu0 %v6522
    %v6661 = vpop.f32.mrb[0].mxu0
    %v6662 = vadd.f32 0.0, %v6661
    %v6663 = vpop.f32.mrb[0].mxu0
    %6664 = vmatprep.mubr.f32.mxu0 0.0
    %6665 = vmatmul.mubr.f32.gmra.mrb[0].mxu0 %v6525
    %v6666 = vpop.f32.mrb[0].mxu0
    %v6667 = vadd.f32 0.0, %v6666
    %v6668 = vpop.f32.mrb[0].mxu0
    %6669 = vmatprep.mubr.f32.mxu0 0.0
    %6670 = vmatmul.mubr.f32.gmra.mrb[0].mxu0 %v6528
    %v6671 = vpop.f32.mrb[0].mxu0
    %v6672 = vadd.f32 0.0, %v6671
    %v6673 = vpop.f32.mrb[0].mxu0
    %6674 = vdwg.mxu0
    %v6675 = vadd.f32 %v6457, %v6597
    %v6676 = vadd.f32 %v6458, %v6602
    %v6677 = vadd.f32 %v6459, %v6607
    %v6678 = vadd.f32 %v6460, %v6612
    %v6679 = vadd.f32 %v6461, %v6617
    %v6680 = vadd.f32 %v6462, %v6622
    %v6681 = vadd.f32 %v6463, %v6627
    %v6682 = vadd.f32 %v6464, %v6632
    %v6683 = vadd.f32 %v6465, %v6637
    %v6684 = vadd.f32 %v6466, %v6642
    %v6685 = vadd.f32 %v6467, %v6647
    %v6686 = vadd.f32 %v6468, %v6652
    %v6687 = vadd.f32 %v6469, %v6657
    %v6688 = vadd.f32 %v6470, %v6662
    %v6689 = vadd.f32 %v6471, %v6667
    %v6690 = vadd.f32 %v6472, %v6672
    %s6691 = scalar_lea.vmem %s4, 768
    %v6692 = vld [vmem:[%s6691] sm:$0xff]
    %v6693 = vld [vmem:[%s6691 + $0x8] sm:$0xff]
    %v6694 = vld [vmem:[%s6691 + $0x10] sm:$0xff]
    %v6695 = vld [vmem:[%s6691 + $0x18] sm:$0xff]
    %v6696 = vld [vmem:[%s6691 + $0x20] sm:$0xff]
    %v6697 = vld [vmem:[%s6691 + $0x28] sm:$0xff]
    %v6698 = vld [vmem:[%s6691 + $0x30] sm:$0xff]
    %v6699 = vld [vmem:[%s6691 + $0x38] sm:$0xff]
    %v6701 = vsel %vm4124, %v3899, 0
    %v6704 = vsel %vm4124, %v3900, 0
    %v6707 = vsel %vm4124, %v3901, 0
    %v6710 = vsel %vm4124, %v3902, 0
    %v6713 = vsel %vm4124, %v3903, 0
    %v6716 = vsel %vm4124, %v3904, 0
    %v6719 = vsel %vm4124, %v3905, 0
    %v6722 = vsel %vm4124, %v3906, 0
    %v6725 = vsel %vm4124, %v3907, 0
    %v6728 = vsel %vm4124, %v3908, 0
    %v6731 = vsel %vm4124, %v3909, 0
    %v6734 = vsel %vm4124, %v3910, 0
    %v6737 = vsel %vm4124, %v3911, 0
    %v6740 = vsel %vm4124, %v3912, 0
    %v6743 = vsel %vm4124, %v3913, 0
    %v6746 = vsel %vm4124, %v3914, 0
    %6748 = vmatprep.subr.mxu0 0.0
    %6749 = vmatpush1.msra.mxu0 %v6692
    %6750 = vmatprep.subr.mxu0 0.0
    %6751 = vmatpush1.msra.mxu0 %v6693
    %6752 = vmatprep.subr.mxu0 0.0
    %6753 = vmatpush1.msra.mxu0 %v6694
    %6754 = vmatprep.subr.mxu0 0.0
    %6755 = vmatpush1.msra.mxu0 %v6695
    %6756 = vmatprep.subr.mxu0 0.0
    %6757 = vmatpush1.msra.mxu0 %v6696
    %6758 = vmatprep.subr.mxu0 0.0
    %6759 = vmatpush1.msra.mxu0 %v6697
    %6760 = vmatprep.subr.mxu0 0.0
    %6761 = vmatpush1.msra.mxu0 %v6698
    %6762 = vmatprep.subr.mxu0 0.0
    %6763 = vmatpush1.msra.mxu0 %v6699
    %6764 = vmatprep.subr.mxu0 0.0
    %6765 = vmatpush1.msra.mxu0 0.0
    %6766 = vmatprep.subr.mxu0 0.0
    %6767 = vmatpush1.msra.mxu0 0.0
    %6768 = vmatprep.subr.mxu0 0.0
    %6769 = vmatpush1.msra.mxu0 0.0
    %6770 = vmatprep.subr.mxu0 0.0
    %6771 = vmatpush1.msra.mxu0 0.0
    %6772 = vmatprep.subr.mxu0 0.0
    %6773 = vmatpush1.msra.mxu0 0.0
    %6774 = vmatprep.subr.mxu0 0.0
    %6775 = vmatpush1.msra.mxu0 0.0
    %6776 = vmatprep.subr.mxu0 0.0
    %6777 = vmatpush1.msra.mxu0 0.0
    %6778 = vmatprep.subr.mxu0 0.0
    %6779 = vmatpush1.msra.mxu0 0.0
    %6780 = vmatprep.subr.mxu0 0.0
    %6781 = vmatpush1.msra.mxu0 0.0
    %6782 = vmatprep.subr.mxu0 0.0
    %6783 = vmatpush1.msra.mxu0 0.0
    %6784 = vmatprep.subr.mxu0 0.0
    %6785 = vmatpush1.msra.mxu0 0.0
    %6786 = vmatprep.subr.mxu0 0.0
    %6787 = vmatpush1.msra.mxu0 0.0
    %6788 = vmatprep.subr.mxu0 0.0
    %6789 = vmatpush1.msra.mxu0 0.0
    %6790 = vmatprep.subr.mxu0 0.0
    %6791 = vmatpush1.msra.mxu0 0.0
    %6792 = vmatprep.subr.mxu0 0.0
    %6793 = vmatpush1.msra.mxu0 0.0
    %6794 = vmatprep.subr.mxu0 0.0
    %6795 = vmatpush1.msra.mxu0 0.0
    %6796 = vmatprep.subr.mxu0 0.0
    %6797 = vmatpush1.msra.mxu0 0.0
    %6798 = vmatprep.subr.mxu0 0.0
    %6799 = vmatpush1.msra.mxu0 0.0
    %6800 = vmatprep.subr.mxu0 0.0
    %6801 = vmatpush1.msra.mxu0 0.0
    %6802 = vmatprep.subr.mxu0 0.0
    %6803 = vmatpush1.msra.mxu0 0.0
    %6804 = vmatprep.subr.mxu0 0.0
    %6805 = vmatpush1.msra.mxu0 0.0
    %6806 = vmatprep.subr.mxu0 0.0
    %6807 = vmatpush1.msra.mxu0 0.0
    %6808 = vmatprep.subr.mxu0 0.0
    %6809 = vmatpush1.msra.mxu0 0.0
    %6810 = vmatprep.subr.mxu0 0.0
    %6811 = vmatpush1.msra.mxu0 0.0
    %6812 = vmatprep.mubr.f32.mxu0 0.0
    %6813 = vmatmul.mubr.f32.gmra.mrb[0].mxu0 %v6701
    %v6814 = vpop.f32.mrb[0].mxu0
    %v6815 = vadd.f32 0.0, %v6814
    %v6816 = vpop.f32.mrb[0].mxu0
    %6817 = vmatprep.mubr.f32.mxu0 0.0
    %6818 = vmatmul.mubr.f32.gmra.mrb[0].mxu0 %v6704
    %v6819 = vpop.f32.mrb[0].mxu0
    %v6820 = vadd.f32 0.0, %v6819
    %v6821 = vpop.f32.mrb[0].mxu0
    %6822 = vmatprep.mubr.f32.mxu0 0.0
    %6823 = vmatmul.mubr.f32.gmra.mrb[0].mxu0 %v6707
    %v6824 = vpop.f32.mrb[0].mxu0
    %v6825 = vadd.f32 0.0, %v6824
    %v6826 = vpop.f32.mrb[0].mxu0
    %6827 = vmatprep.mubr.f32.mxu0 0.0
    %6828 = vmatmul.mubr.f32.gmra.mrb[0].mxu0 %v6710
    %v6829 = vpop.f32.mrb[0].mxu0
    %v6830 = vadd.f32 0.0, %v6829
    %v6831 = vpop.f32.mrb[0].mxu0
    %6832 = vmatprep.mubr.f32.mxu0 0.0
    %6833 = vmatmul.mubr.f32.gmra.mrb[0].mxu0 %v6713
    %v6834 = vpop.f32.mrb[0].mxu0
    %v6835 = vadd.f32 0.0, %v6834
    %v6836 = vpop.f32.mrb[0].mxu0
    %6837 = vmatprep.mubr.f32.mxu0 0.0
    %6838 = vmatmul.mubr.f32.gmra.mrb[0].mxu0 %v6716
    %v6839 = vpop.f32.mrb[0].mxu0
    %v6840 = vadd.f32 0.0, %v6839
    %v6841 = vpop.f32.mrb[0].mxu0
    %6842 = vmatprep.mubr.f32.mxu0 0.0
    %6843 = vmatmul.mubr.f32.gmra.mrb[0].mxu0 %v6719
    %v6844 = vpop.f32.mrb[0].mxu0
    %v6845 = vadd.f32 0.0, %v6844
    %v6846 = vpop.f32.mrb[0].mxu0
    %6847 = vmatprep.mubr.f32.mxu0 0.0
    %6848 = vmatmul.mubr.f32.gmra.mrb[0].mxu0 %v6722
    %v6849 = vpop.f32.mrb[0].mxu0
    %v6850 = vadd.f32 0.0, %v6849
    %v6851 = vpop.f32.mrb[0].mxu0
    %6852 = vmatprep.mubr.f32.mxu0 0.0
    %6853 = vmatmul.mubr.f32.gmra.mrb[0].mxu0 %v6725
    %v6854 = vpop.f32.mrb[0].mxu0
    %v6855 = vadd.f32 0.0, %v6854
    %v6856 = vpop.f32.mrb[0].mxu0
    %6857 = vmatprep.mubr.f32.mxu0 0.0
    %6858 = vmatmul.mubr.f32.gmra.mrb[0].mxu0 %v6728
    %v6859 = vpop.f32.mrb[0].mxu0
    %v6860 = vadd.f32 0.0, %v6859
    %v6861 = vpop.f32.mrb[0].mxu0
    %6862 = vmatprep.mubr.f32.mxu0 0.0
    %6863 = vmatmul.mubr.f32.gmra.mrb[0].mxu0 %v6731
    %v6864 = vpop.f32.mrb[0].mxu0
    %v6865 = vadd.f32 0.0, %v6864
    %v6866 = vpop.f32.mrb[0].mxu0
    %6867 = vmatprep.mubr.f32.mxu0 0.0
    %6868 = vmatmul.mubr.f32.gmra.mrb[0].mxu0 %v6734
    %v6869 = vpop.f32.mrb[0].mxu0
    %v6870 = vadd.f32 0.0, %v6869
    %v6871 = vpop.f32.mrb[0].mxu0
    %6872 = vmatprep.mubr.f32.mxu0 0.0
    %6873 = vmatmul.mubr.f32.gmra.mrb[0].mxu0 %v6737
    %v6874 = vpop.f32.mrb[0].mxu0
    %v6875 = vadd.f32 0.0, %v6874
    %v6876 = vpop.f32.mrb[0].mxu0
    %6877 = vmatprep.mubr.f32.mxu0 0.0
    %6878 = vmatmul.mubr.f32.gmra.mrb[0].mxu0 %v6740
    %v6879 = vpop.f32.mrb[0].mxu0
    %v6880 = vadd.f32 0.0, %v6879
    %v6881 = vpop.f32.mrb[0].mxu0
    %6882 = vmatprep.mubr.f32.mxu0 0.0
    %6883 = vmatmul.mubr.f32.gmra.mrb[0].mxu0 %v6743
    %v6884 = vpop.f32.mrb[0].mxu0
    %v6885 = vadd.f32 0.0, %v6884
    %v6886 = vpop.f32.mrb[0].mxu0
    %6887 = vmatprep.mubr.f32.mxu0 0.0
    %6888 = vmatmul.mubr.f32.gmra.mrb[0].mxu0 %v6746
    %v6889 = vpop.f32.mrb[0].mxu0
    %v6890 = vadd.f32 0.0, %v6889
    %v6891 = vpop.f32.mrb[0].mxu0
    %6892 = vdwg.mxu0
    %v6893 = vadd.f32 %v6675, %v6815
    %v6894 = vadd.f32 %v6676, %v6820
    %v6895 = vadd.f32 %v6677, %v6825
    %v6896 = vadd.f32 %v6678, %v6830
    %v6897 = vadd.f32 %v6679, %v6835
    %v6898 = vadd.f32 %v6680, %v6840
    %v6899 = vadd.f32 %v6681, %v6845
    %v6900 = vadd.f32 %v6682, %v6850
    %v6901 = vadd.f32 %v6683, %v6855
    %v6902 = vadd.f32 %v6684, %v6860
    %v6903 = vadd.f32 %v6685, %v6865
    %v6904 = vadd.f32 %v6686, %v6870
    %v6905 = vadd.f32 %v6687, %v6875
    %v6906 = vadd.f32 %v6688, %v6880
    %v6907 = vadd.f32 %v6689, %v6885
    %v6908 = vadd.f32 %v6690, %v6890
    %s6909 = scalar_lea.vmem %s4, 832
    %v6910 = vld [vmem:[%s6909] sm:$0xff]
    %v6911 = vld [vmem:[%s6909 + $0x8] sm:$0xff]
    %v6912 = vld [vmem:[%s6909 + $0x10] sm:$0xff]
    %v6913 = vld [vmem:[%s6909 + $0x18] sm:$0xff]
    %v6914 = vld [vmem:[%s6909 + $0x20] sm:$0xff]
    %v6915 = vld [vmem:[%s6909 + $0x28] sm:$0xff]
    %v6916 = vld [vmem:[%s6909 + $0x30] sm:$0xff]
    %v6917 = vld [vmem:[%s6909 + $0x38] sm:$0xff]
    %v6919 = vsel %vm4124, %v3915, 0
    %v6922 = vsel %vm4124, %v3916, 0
    %v6925 = vsel %vm4124, %v3917, 0
    %v6928 = vsel %vm4124, %v3918, 0
    %v6931 = vsel %vm4124, %v3919, 0
    %v6934 = vsel %vm4124, %v3920, 0
    %v6937 = vsel %vm4124, %v3921, 0
    %v6940 = vsel %vm4124, %v3922, 0
    %v6943 = vsel %vm4124, %v3923, 0
    %v6946 = vsel %vm4124, %v3924, 0
    %v6949 = vsel %vm4124, %v3925, 0
    %v6952 = vsel %vm4124, %v3926, 0
    %v6955 = vsel %vm4124, %v3927, 0
    %v6958 = vsel %vm4124, %v3928, 0
    %v6961 = vsel %vm4124, %v3929, 0
    %v6964 = vsel %vm4124, %v3930, 0
    %6966 = vmatprep.subr.mxu0 0.0
    %6967 = vmatpush1.msra.mxu0 %v6910
    %6968 = vmatprep.subr.mxu0 0.0
    %6969 = vmatpush1.msra.mxu0 %v6911
    %6970 = vmatprep.subr.mxu0 0.0
    %6971 = vmatpush1.msra.mxu0 %v6912
    %6972 = vmatprep.subr.mxu0 0.0
    %6973 = vmatpush1.msra.mxu0 %v6913
    %6974 = vmatprep.subr.mxu0 0.0
    %6975 = vmatpush1.msra.mxu0 %v6914
    %6976 = vmatprep.subr.mxu0 0.0
    %6977 = vmatpush1.msra.mxu0 %v6915
    %6978 = vmatprep.subr.mxu0 0.0
    %6979 = vmatpush1.msra.mxu0 %v6916
    %6980 = vmatprep.subr.mxu0 0.0
    %6981 = vmatpush1.msra.mxu0 %v6917
    %6982 = vmatprep.subr.mxu0 0.0
    %6983 = vmatpush1.msra.mxu0 0.0
    %6984 = vmatprep.subr.mxu0 0.0
    %6985 = vmatpush1.msra.mxu0 0.0
    %6986 = vmatprep.subr.mxu0 0.0
    %6987 = vmatpush1.msra.mxu0 0.0
    %6988 = vmatprep.subr.mxu0 0.0
    %6989 = vmatpush1.msra.mxu0 0.0
    %6990 = vmatprep.subr.mxu0 0.0
    %6991 = vmatpush1.msra.mxu0 0.0
    %6992 = vmatprep.subr.mxu0 0.0
    %6993 = vmatpush1.msra.mxu0 0.0
    %6994 = vmatprep.subr.mxu0 0.0
    %6995 = vmatpush1.msra.mxu0 0.0
    %6996 = vmatprep.subr.mxu0 0.0
    %6997 = vmatpush1.msra.mxu0 0.0
    %6998 = vmatprep.subr.mxu0 0.0
    %6999 = vmatpush1.msra.mxu0 0.0
    %7000 = vmatprep.subr.mxu0 0.0
    %7001 = vmatpush1.msra.mxu0 0.0
    %7002 = vmatprep.subr.mxu0 0.0
    %7003 = vmatpush1.msra.mxu0 0.0
    %7004 = vmatprep.subr.mxu0 0.0
    %7005 = vmatpush1.msra.mxu0 0.0
    %7006 = vmatprep.subr.mxu0 0.0
    %7007 = vmatpush1.msra.mxu0 0.0
    %7008 = vmatprep.subr.mxu0 0.0
    %7009 = vmatpush1.msra.mxu0 0.0
    %7010 = vmatprep.subr.mxu0 0.0
    %7011 = vmatpush1.msra.mxu0 0.0
    %7012 = vmatprep.subr.mxu0 0.0
    %7013 = vmatpush1.msra.mxu0 0.0
    %7014 = vmatprep.subr.mxu0 0.0
    %7015 = vmatpush1.msra.mxu0 0.0
    %7016 = vmatprep.subr.mxu0 0.0
    %7017 = vmatpush1.msra.mxu0 0.0
    %7018 = vmatprep.subr.mxu0 0.0
    %7019 = vmatpush1.msra.mxu0 0.0
    %7020 = vmatprep.subr.mxu0 0.0
    %7021 = vmatpush1.msra.mxu0 0.0
    %7022 = vmatprep.subr.mxu0 0.0
    %7023 = vmatpush1.msra.mxu0 0.0
    %7024 = vmatprep.subr.mxu0 0.0
    %7025 = vmatpush1.msra.mxu0 0.0
    %7026 = vmatprep.subr.mxu0 0.0
    %7027 = vmatpush1.msra.mxu0 0.0
    %7028 = vmatprep.subr.mxu0 0.0
    %7029 = vmatpush1.msra.mxu0 0.0
    %7030 = vmatprep.mubr.f32.mxu0 0.0
    %7031 = vmatmul.mubr.f32.gmra.mrb[0].mxu0 %v6919
    %v7032 = vpop.f32.mrb[0].mxu0
    %v7033 = vadd.f32 0.0, %v7032
    %v7034 = vpop.f32.mrb[0].mxu0
    %7035 = vmatprep.mubr.f32.mxu0 0.0
    %7036 = vmatmul.mubr.f32.gmra.mrb[0].mxu0 %v6922
    %v7037 = vpop.f32.mrb[0].mxu0
    %v7038 = vadd.f32 0.0, %v7037
    %v7039 = vpop.f32.mrb[0].mxu0
    %7040 = vmatprep.mubr.f32.mxu0 0.0
    %7041 = vmatmul.mubr.f32.gmra.mrb[0].mxu0 %v6925
    %v7042 = vpop.f32.mrb[0].mxu0
    %v7043 = vadd.f32 0.0, %v7042
    %v7044 = vpop.f32.mrb[0].mxu0
    %7045 = vmatprep.mubr.f32.mxu0 0.0
    %7046 = vmatmul.mubr.f32.gmra.mrb[0].mxu0 %v6928
    %v7047 = vpop.f32.mrb[0].mxu0
    %v7048 = vadd.f32 0.0, %v7047
    %v7049 = vpop.f32.mrb[0].mxu0
    %7050 = vmatprep.mubr.f32.mxu0 0.0
    %7051 = vmatmul.mubr.f32.gmra.mrb[0].mxu0 %v6931
    %v7052 = vpop.f32.mrb[0].mxu0
    %v7053 = vadd.f32 0.0, %v7052
    %v7054 = vpop.f32.mrb[0].mxu0
    %7055 = vmatprep.mubr.f32.mxu0 0.0
    %7056 = vmatmul.mubr.f32.gmra.mrb[0].mxu0 %v6934
    %v7057 = vpop.f32.mrb[0].mxu0
    %v7058 = vadd.f32 0.0, %v7057
    %v7059 = vpop.f32.mrb[0].mxu0
    %7060 = vmatprep.mubr.f32.mxu0 0.0
    %7061 = vmatmul.mubr.f32.gmra.mrb[0].mxu0 %v6937
    %v7062 = vpop.f32.mrb[0].mxu0
    %v7063 = vadd.f32 0.0, %v7062
    %v7064 = vpop.f32.mrb[0].mxu0
    %7065 = vmatprep.mubr.f32.mxu0 0.0
    %7066 = vmatmul.mubr.f32.gmra.mrb[0].mxu0 %v6940
    %v7067 = vpop.f32.mrb[0].mxu0
    %v7068 = vadd.f32 0.0, %v7067
    %v7069 = vpop.f32.mrb[0].mxu0
    %7070 = vmatprep.mubr.f32.mxu0 0.0
    %7071 = vmatmul.mubr.f32.gmra.mrb[0].mxu0 %v6943
    %v7072 = vpop.f32.mrb[0].mxu0
    %v7073 = vadd.f32 0.0, %v7072
    %v7074 = vpop.f32.mrb[0].mxu0
    %7075 = vmatprep.mubr.f32.mxu0 0.0
    %7076 = vmatmul.mubr.f32.gmra.mrb[0].mxu0 %v6946
    %v7077 = vpop.f32.mrb[0].mxu0
    %v7078 = vadd.f32 0.0, %v7077
    %v7079 = vpop.f32.mrb[0].mxu0
    %7080 = vmatprep.mubr.f32.mxu0 0.0
    %7081 = vmatmul.mubr.f32.gmra.mrb[0].mxu0 %v6949
    %v7082 = vpop.f32.mrb[0].mxu0
    %v7083 = vadd.f32 0.0, %v7082
    %v7084 = vpop.f32.mrb[0].mxu0
    %7085 = vmatprep.mubr.f32.mxu0 0.0
    %7086 = vmatmul.mubr.f32.gmra.mrb[0].mxu0 %v6952
    %v7087 = vpop.f32.mrb[0].mxu0
    %v7088 = vadd.f32 0.0, %v7087
    %v7089 = vpop.f32.mrb[0].mxu0
    %7090 = vmatprep.mubr.f32.mxu0 0.0
    %7091 = vmatmul.mubr.f32.gmra.mrb[0].mxu0 %v6955
    %v7092 = vpop.f32.mrb[0].mxu0
    %v7093 = vadd.f32 0.0, %v7092
    %v7094 = vpop.f32.mrb[0].mxu0
    %7095 = vmatprep.mubr.f32.mxu0 0.0
    %7096 = vmatmul.mubr.f32.gmra.mrb[0].mxu0 %v6958
    %v7097 = vpop.f32.mrb[0].mxu0
    %v7098 = vadd.f32 0.0, %v7097
    %v7099 = vpop.f32.mrb[0].mxu0
    %7100 = vmatprep.mubr.f32.mxu0 0.0
    %7101 = vmatmul.mubr.f32.gmra.mrb[0].mxu0 %v6961
    %v7102 = vpop.f32.mrb[0].mxu0
    %v7103 = vadd.f32 0.0, %v7102
    %v7104 = vpop.f32.mrb[0].mxu0
    %7105 = vmatprep.mubr.f32.mxu0 0.0
    %7106 = vmatmul.mubr.f32.gmra.mrb[0].mxu0 %v6964
    %v7107 = vpop.f32.mrb[0].mxu0
    %v7108 = vadd.f32 0.0, %v7107
    %v7109 = vpop.f32.mrb[0].mxu0
    %7110 = vdwg.mxu0
    %v7111 = vadd.f32 %v6893, %v7033
    %v7112 = vadd.f32 %v6894, %v7038
    %v7113 = vadd.f32 %v6895, %v7043
    %v7114 = vadd.f32 %v6896, %v7048
    %v7115 = vadd.f32 %v6897, %v7053
    %v7116 = vadd.f32 %v6898, %v7058
    %v7117 = vadd.f32 %v6899, %v7063
    %v7118 = vadd.f32 %v6900, %v7068
    %v7119 = vadd.f32 %v6901, %v7073
    %v7120 = vadd.f32 %v6902, %v7078
    %v7121 = vadd.f32 %v6903, %v7083
    %v7122 = vadd.f32 %v6904, %v7088
    %v7123 = vadd.f32 %v6905, %v7093
    %v7124 = vadd.f32 %v6906, %v7098
    %v7125 = vadd.f32 %v6907, %v7103
    %v7126 = vadd.f32 %v6908, %v7108
    %s7127 = scalar_lea.vmem %s4, 896
    %v7128 = vld [vmem:[%s7127] sm:$0xff]
    %v7129 = vld [vmem:[%s7127 + $0x8] sm:$0xff]
    %v7130 = vld [vmem:[%s7127 + $0x10] sm:$0xff]
    %v7131 = vld [vmem:[%s7127 + $0x18] sm:$0xff]
    %v7132 = vld [vmem:[%s7127 + $0x20] sm:$0xff]
    %v7133 = vld [vmem:[%s7127 + $0x28] sm:$0xff]
    %v7134 = vld [vmem:[%s7127 + $0x30] sm:$0xff]
    %v7135 = vld [vmem:[%s7127 + $0x38] sm:$0xff]
    %v7137 = vsel %vm4124, %v3931, 0
    %v7140 = vsel %vm4124, %v3932, 0
    %v7143 = vsel %vm4124, %v3933, 0
    %v7146 = vsel %vm4124, %v3934, 0
    %v7149 = vsel %vm4124, %v3935, 0
    %v7152 = vsel %vm4124, %v3936, 0
    %v7155 = vsel %vm4124, %v3937, 0
    %v7158 = vsel %vm4124, %v3938, 0
    %v7161 = vsel %vm4124, %v3939, 0
    %v7164 = vsel %vm4124, %v3940, 0
    %v7167 = vsel %vm4124, %v3941, 0
    %v7170 = vsel %vm4124, %v3942, 0
    %v7173 = vsel %vm4124, %v3943, 0
    %v7176 = vsel %vm4124, %v3944, 0
    %v7179 = vsel %vm4124, %v3945, 0
    %v7182 = vsel %vm4124, %v3946, 0
    %7184 = vmatprep.subr.mxu0 0.0
    %7185 = vmatpush1.msra.mxu0 %v7128
    %7186 = vmatprep.subr.mxu0 0.0
    %7187 = vmatpush1.msra.mxu0 %v7129
    %7188 = vmatprep.subr.mxu0 0.0
    %7189 = vmatpush1.msra.mxu0 %v7130
    %7190 = vmatprep.subr.mxu0 0.0
    %7191 = vmatpush1.msra.mxu0 %v7131
    %7192 = vmatprep.subr.mxu0 0.0
    %7193 = vmatpush1.msra.mxu0 %v7132
    %7194 = vmatprep.subr.mxu0 0.0
    %7195 = vmatpush1.msra.mxu0 %v7133
    %7196 = vmatprep.subr.mxu0 0.0
    %7197 = vmatpush1.msra.mxu0 %v7134
    %7198 = vmatprep.subr.mxu0 0.0
    %7199 = vmatpush1.msra.mxu0 %v7135
    %7200 = vmatprep.subr.mxu0 0.0
    %7201 = vmatpush1.msra.mxu0 0.0
    %7202 = vmatprep.subr.mxu0 0.0
    %7203 = vmatpush1.msra.mxu0 0.0
    %7204 = vmatprep.subr.mxu0 0.0
    %7205 = vmatpush1.msra.mxu0 0.0
    %7206 = vmatprep.subr.mxu0 0.0
    %7207 = vmatpush1.msra.mxu0 0.0
    %7208 = vmatprep.subr.mxu0 0.0
    %7209 = vmatpush1.msra.mxu0 0.0
    %7210 = vmatprep.subr.mxu0 0.0
    %7211 = vmatpush1.msra.mxu0 0.0
    %7212 = vmatprep.subr.mxu0 0.0
    %7213 = vmatpush1.msra.mxu0 0.0
    %7214 = vmatprep.subr.mxu0 0.0
    %7215 = vmatpush1.msra.mxu0 0.0
    %7216 = vmatprep.subr.mxu0 0.0
    %7217 = vmatpush1.msra.mxu0 0.0
    %7218 = vmatprep.subr.mxu0 0.0
    %7219 = vmatpush1.msra.mxu0 0.0
    %7220 = vmatprep.subr.mxu0 0.0
    %7221 = vmatpush1.msra.mxu0 0.0
    %7222 = vmatprep.subr.mxu0 0.0
    %7223 = vmatpush1.msra.mxu0 0.0
    %7224 = vmatprep.subr.mxu0 0.0
    %7225 = vmatpush1.msra.mxu0 0.0
    %7226 = vmatprep.subr.mxu0 0.0
    %7227 = vmatpush1.msra.mxu0 0.0
    %7228 = vmatprep.subr.mxu0 0.0
    %7229 = vmatpush1.msra.mxu0 0.0
    %7230 = vmatprep.subr.mxu0 0.0
    %7231 = vmatpush1.msra.mxu0 0.0
    %7232 = vmatprep.subr.mxu0 0.0
    %7233 = vmatpush1.msra.mxu0 0.0
    %7234 = vmatprep.subr.mxu0 0.0
    %7235 = vmatpush1.msra.mxu0 0.0
    %7236 = vmatprep.subr.mxu0 0.0
    %7237 = vmatpush1.msra.mxu0 0.0
    %7238 = vmatprep.subr.mxu0 0.0
    %7239 = vmatpush1.msra.mxu0 0.0
    %7240 = vmatprep.subr.mxu0 0.0
    %7241 = vmatpush1.msra.mxu0 0.0
    %7242 = vmatprep.subr.mxu0 0.0
    %7243 = vmatpush1.msra.mxu0 0.0
    %7244 = vmatprep.subr.mxu0 0.0
    %7245 = vmatpush1.msra.mxu0 0.0
    %7246 = vmatprep.subr.mxu0 0.0
    %7247 = vmatpush1.msra.mxu0 0.0
    %7248 = vmatprep.mubr.f32.mxu0 0.0
    %7249 = vmatmul.mubr.f32.gmra.mrb[0].mxu0 %v7137
    %v7250 = vpop.f32.mrb[0].mxu0
    %v7251 = vadd.f32 0.0, %v7250
    %v7252 = vpop.f32.mrb[0].mxu0
    %7253 = vmatprep.mubr.f32.mxu0 0.0
    %7254 = vmatmul.mubr.f32.gmra.mrb[0].mxu0 %v7140
    %v7255 = vpop.f32.mrb[0].mxu0
    %v7256 = vadd.f32 0.0, %v7255
    %v7257 = vpop.f32.mrb[0].mxu0
    %7258 = vmatprep.mubr.f32.mxu0 0.0
    %7259 = vmatmul.mubr.f32.gmra.mrb[0].mxu0 %v7143
    %v7260 = vpop.f32.mrb[0].mxu0
    %v7261 = vadd.f32 0.0, %v7260
    %v7262 = vpop.f32.mrb[0].mxu0
    %7263 = vmatprep.mubr.f32.mxu0 0.0
    %7264 = vmatmul.mubr.f32.gmra.mrb[0].mxu0 %v7146
    %v7265 = vpop.f32.mrb[0].mxu0
    %v7266 = vadd.f32 0.0, %v7265
    %v7267 = vpop.f32.mrb[0].mxu0
    %7268 = vmatprep.mubr.f32.mxu0 0.0
    %7269 = vmatmul.mubr.f32.gmra.mrb[0].mxu0 %v7149
    %v7270 = vpop.f32.mrb[0].mxu0
    %v7271 = vadd.f32 0.0, %v7270
    %v7272 = vpop.f32.mrb[0].mxu0
    %7273 = vmatprep.mubr.f32.mxu0 0.0
    %7274 = vmatmul.mubr.f32.gmra.mrb[0].mxu0 %v7152
    %v7275 = vpop.f32.mrb[0].mxu0
    %v7276 = vadd.f32 0.0, %v7275
    %v7277 = vpop.f32.mrb[0].mxu0
    %7278 = vmatprep.mubr.f32.mxu0 0.0
    %7279 = vmatmul.mubr.f32.gmra.mrb[0].mxu0 %v7155
    %v7280 = vpop.f32.mrb[0].mxu0
    %v7281 = vadd.f32 0.0, %v7280
    %v7282 = vpop.f32.mrb[0].mxu0
    %7283 = vmatprep.mubr.f32.mxu0 0.0
    %7284 = vmatmul.mubr.f32.gmra.mrb[0].mxu0 %v7158
    %v7285 = vpop.f32.mrb[0].mxu0
    %v7286 = vadd.f32 0.0, %v7285
    %v7287 = vpop.f32.mrb[0].mxu0
    %7288 = vmatprep.mubr.f32.mxu0 0.0
    %7289 = vmatmul.mubr.f32.gmra.mrb[0].mxu0 %v7161
    %v7290 = vpop.f32.mrb[0].mxu0
    %v7291 = vadd.f32 0.0, %v7290
    %v7292 = vpop.f32.mrb[0].mxu0
    %7293 = vmatprep.mubr.f32.mxu0 0.0
    %7294 = vmatmul.mubr.f32.gmra.mrb[0].mxu0 %v7164
    %v7295 = vpop.f32.mrb[0].mxu0
    %v7296 = vadd.f32 0.0, %v7295
    %v7297 = vpop.f32.mrb[0].mxu0
    %7298 = vmatprep.mubr.f32.mxu0 0.0
    %7299 = vmatmul.mubr.f32.gmra.mrb[0].mxu0 %v7167
    %v7300 = vpop.f32.mrb[0].mxu0
    %v7301 = vadd.f32 0.0, %v7300
    %v7302 = vpop.f32.mrb[0].mxu0
    %7303 = vmatprep.mubr.f32.mxu0 0.0
    %7304 = vmatmul.mubr.f32.gmra.mrb[0].mxu0 %v7170
    %v7305 = vpop.f32.mrb[0].mxu0
    %v7306 = vadd.f32 0.0, %v7305
    %v7307 = vpop.f32.mrb[0].mxu0
    %7308 = vmatprep.mubr.f32.mxu0 0.0
    %7309 = vmatmul.mubr.f32.gmra.mrb[0].mxu0 %v7173
    %v7310 = vpop.f32.mrb[0].mxu0
    %v7311 = vadd.f32 0.0, %v7310
    %v7312 = vpop.f32.mrb[0].mxu0
    %7313 = vmatprep.mubr.f32.mxu0 0.0
    %7314 = vmatmul.mubr.f32.gmra.mrb[0].mxu0 %v7176
    %v7315 = vpop.f32.mrb[0].mxu0
    %v7316 = vadd.f32 0.0, %v7315
    %v7317 = vpop.f32.mrb[0].mxu0
    %7318 = vmatprep.mubr.f32.mxu0 0.0
    %7319 = vmatmul.mubr.f32.gmra.mrb[0].mxu0 %v7179
    %v7320 = vpop.f32.mrb[0].mxu0
    %v7321 = vadd.f32 0.0, %v7320
    %v7322 = vpop.f32.mrb[0].mxu0
    %7323 = vmatprep.mubr.f32.mxu0 0.0
    %7324 = vmatmul.mubr.f32.gmra.mrb[0].mxu0 %v7182
    %v7325 = vpop.f32.mrb[0].mxu0
    %v7326 = vadd.f32 0.0, %v7325
    %v7327 = vpop.f32.mrb[0].mxu0
    %7328 = vdwg.mxu0
    %v7329 = vadd.f32 %v7111, %v7251
    %v7330 = vadd.f32 %v7112, %v7256
    %v7331 = vadd.f32 %v7113, %v7261
    %v7332 = vadd.f32 %v7114, %v7266
    %v7333 = vadd.f32 %v7115, %v7271
    %v7334 = vadd.f32 %v7116, %v7276
    %v7335 = vadd.f32 %v7117, %v7281
    %v7336 = vadd.f32 %v7118, %v7286
    %v7337 = vadd.f32 %v7119, %v7291
    %v7338 = vadd.f32 %v7120, %v7296
    %v7339 = vadd.f32 %v7121, %v7301
    %v7340 = vadd.f32 %v7122, %v7306
    %v7341 = vadd.f32 %v7123, %v7311
    %v7342 = vadd.f32 %v7124, %v7316
    %v7343 = vadd.f32 %v7125, %v7321
    %v7344 = vadd.f32 %v7126, %v7326
    %s7345 = scalar_lea.vmem %s4, 960
    %v7346 = vld [vmem:[%s7345] sm:$0xff]
    %v7347 = vld [vmem:[%s7345 + $0x8] sm:$0xff]
    %v7348 = vld [vmem:[%s7345 + $0x10] sm:$0xff]
    %v7349 = vld [vmem:[%s7345 + $0x18] sm:$0xff]
    %v7350 = vld [vmem:[%s7345 + $0x20] sm:$0xff]
    %v7351 = vld [vmem:[%s7345 + $0x28] sm:$0xff]
    %v7352 = vld [vmem:[%s7345 + $0x30] sm:$0xff]
    %v7353 = vld [vmem:[%s7345 + $0x38] sm:$0xff]
    %v7355 = vsel %vm4124, %v3947, 0
    %v7358 = vsel %vm4124, %v3948, 0
    %v7361 = vsel %vm4124, %v3949, 0
    %v7364 = vsel %vm4124, %v3950, 0
    %v7367 = vsel %vm4124, %v3951, 0
    %v7370 = vsel %vm4124, %v3952, 0
    %v7373 = vsel %vm4124, %v3953, 0
    %v7376 = vsel %vm4124, %v3954, 0
    %v7379 = vsel %vm4124, %v3955, 0
    %v7382 = vsel %vm4124, %v3956, 0
    %v7385 = vsel %vm4124, %v3957, 0
    %v7388 = vsel %vm4124, %v3958, 0
    %v7391 = vsel %vm4124, %v3959, 0
    %v7394 = vsel %vm4124, %v3960, 0
    %v7397 = vsel %vm4124, %v3961, 0
    %v7400 = vsel %vm4124, %v3962, 0
    %7402 = vmatprep.subr.mxu0 0.0
    %7403 = vmatpush1.msra.mxu0 %v7346
    %7404 = vmatprep.subr.mxu0 0.0
    %7405 = vmatpush1.msra.mxu0 %v7347
    %7406 = vmatprep.subr.mxu0 0.0
    %7407 = vmatpush1.msra.mxu0 %v7348
    %7408 = vmatprep.subr.mxu0 0.0
    %7409 = vmatpush1.msra.mxu0 %v7349
    %7410 = vmatprep.subr.mxu0 0.0
    %7411 = vmatpush1.msra.mxu0 %v7350
    %7412 = vmatprep.subr.mxu0 0.0
    %7413 = vmatpush1.msra.mxu0 %v7351
    %7414 = vmatprep.subr.mxu0 0.0
    %7415 = vmatpush1.msra.mxu0 %v7352
    %7416 = vmatprep.subr.mxu0 0.0
    %7417 = vmatpush1.msra.mxu0 %v7353
    %7418 = vmatprep.subr.mxu0 0.0
    %7419 = vmatpush1.msra.mxu0 0.0
    %7420 = vmatprep.subr.mxu0 0.0
    %7421 = vmatpush1.msra.mxu0 0.0
    %7422 = vmatprep.subr.mxu0 0.0
    %7423 = vmatpush1.msra.mxu0 0.0
    %7424 = vmatprep.subr.mxu0 0.0
    %7425 = vmatpush1.msra.mxu0 0.0
    %7426 = vmatprep.subr.mxu0 0.0
    %7427 = vmatpush1.msra.mxu0 0.0
    %7428 = vmatprep.subr.mxu0 0.0
    %7429 = vmatpush1.msra.mxu0 0.0
    %7430 = vmatprep.subr.mxu0 0.0
    %7431 = vmatpush1.msra.mxu0 0.0
    %7432 = vmatprep.subr.mxu0 0.0
    %7433 = vmatpush1.msra.mxu0 0.0
    %7434 = vmatprep.subr.mxu0 0.0
    %7435 = vmatpush1.msra.mxu0 0.0
    %7436 = vmatprep.subr.mxu0 0.0
    %7437 = vmatpush1.msra.mxu0 0.0
    %7438 = vmatprep.subr.mxu0 0.0
    %7439 = vmatpush1.msra.mxu0 0.0
    %7440 = vmatprep.subr.mxu0 0.0
    %7441 = vmatpush1.msra.mxu0 0.0
    %7442 = vmatprep.subr.mxu0 0.0
    %7443 = vmatpush1.msra.mxu0 0.0
    %7444 = vmatprep.subr.mxu0 0.0
    %7445 = vmatpush1.msra.mxu0 0.0
    %7446 = vmatprep.subr.mxu0 0.0
    %7447 = vmatpush1.msra.mxu0 0.0
    %7448 = vmatprep.subr.mxu0 0.0
    %7449 = vmatpush1.msra.mxu0 0.0
    %7450 = vmatprep.subr.mxu0 0.0
    %7451 = vmatpush1.msra.mxu0 0.0
    %7452 = vmatprep.subr.mxu0 0.0
    %7453 = vmatpush1.msra.mxu0 0.0
    %7454 = vmatprep.subr.mxu0 0.0
    %7455 = vmatpush1.msra.mxu0 0.0
    %7456 = vmatprep.subr.mxu0 0.0
    %7457 = vmatpush1.msra.mxu0 0.0
    %7458 = vmatprep.subr.mxu0 0.0
    %7459 = vmatpush1.msra.mxu0 0.0
    %7460 = vmatprep.subr.mxu0 0.0
    %7461 = vmatpush1.msra.mxu0 0.0
    %7462 = vmatprep.subr.mxu0 0.0
    %7463 = vmatpush1.msra.mxu0 0.0
    %7464 = vmatprep.subr.mxu0 0.0
    %7465 = vmatpush1.msra.mxu0 0.0
    %7466 = vmatprep.mubr.f32.mxu0 0.0
    %7467 = vmatmul.mubr.f32.gmra.mrb[0].mxu0 %v7355
    %v7468 = vpop.f32.mrb[0].mxu0
    %v7469 = vadd.f32 0.0, %v7468
    %v7470 = vpop.f32.mrb[0].mxu0
    %7471 = vmatprep.mubr.f32.mxu0 0.0
    %7472 = vmatmul.mubr.f32.gmra.mrb[0].mxu0 %v7358
    %v7473 = vpop.f32.mrb[0].mxu0
    %v7474 = vadd.f32 0.0, %v7473
    %v7475 = vpop.f32.mrb[0].mxu0
    %7476 = vmatprep.mubr.f32.mxu0 0.0
    %7477 = vmatmul.mubr.f32.gmra.mrb[0].mxu0 %v7361
    %v7478 = vpop.f32.mrb[0].mxu0
    %v7479 = vadd.f32 0.0, %v7478
    %v7480 = vpop.f32.mrb[0].mxu0
    %7481 = vmatprep.mubr.f32.mxu0 0.0
    %7482 = vmatmul.mubr.f32.gmra.mrb[0].mxu0 %v7364
    %v7483 = vpop.f32.mrb[0].mxu0
    %v7484 = vadd.f32 0.0, %v7483
    %v7485 = vpop.f32.mrb[0].mxu0
    %7486 = vmatprep.mubr.f32.mxu0 0.0
    %7487 = vmatmul.mubr.f32.gmra.mrb[0].mxu0 %v7367
    %v7488 = vpop.f32.mrb[0].mxu0
    %v7489 = vadd.f32 0.0, %v7488
    %v7490 = vpop.f32.mrb[0].mxu0
    %7491 = vmatprep.mubr.f32.mxu0 0.0
    %7492 = vmatmul.mubr.f32.gmra.mrb[0].mxu0 %v7370
    %v7493 = vpop.f32.mrb[0].mxu0
    %v7494 = vadd.f32 0.0, %v7493
    %v7495 = vpop.f32.mrb[0].mxu0
    %7496 = vmatprep.mubr.f32.mxu0 0.0
    %7497 = vmatmul.mubr.f32.gmra.mrb[0].mxu0 %v7373
    %v7498 = vpop.f32.mrb[0].mxu0
    %v7499 = vadd.f32 0.0, %v7498
    %v7500 = vpop.f32.mrb[0].mxu0
    %7501 = vmatprep.mubr.f32.mxu0 0.0
    %7502 = vmatmul.mubr.f32.gmra.mrb[0].mxu0 %v7376
    %v7503 = vpop.f32.mrb[0].mxu0
    %v7504 = vadd.f32 0.0, %v7503
    %v7505 = vpop.f32.mrb[0].mxu0
    %7506 = vmatprep.mubr.f32.mxu0 0.0
    %7507 = vmatmul.mubr.f32.gmra.mrb[0].mxu0 %v7379
    %v7508 = vpop.f32.mrb[0].mxu0
    %v7509 = vadd.f32 0.0, %v7508
    %v7510 = vpop.f32.mrb[0].mxu0
    %7511 = vmatprep.mubr.f32.mxu0 0.0
    %7512 = vmatmul.mubr.f32.gmra.mrb[0].mxu0 %v7382
    %v7513 = vpop.f32.mrb[0].mxu0
    %v7514 = vadd.f32 0.0, %v7513
    %v7515 = vpop.f32.mrb[0].mxu0
    %7516 = vmatprep.mubr.f32.mxu0 0.0
    %7517 = vmatmul.mubr.f32.gmra.mrb[0].mxu0 %v7385
    %v7518 = vpop.f32.mrb[0].mxu0
    %v7519 = vadd.f32 0.0, %v7518
    %v7520 = vpop.f32.mrb[0].mxu0
    %7521 = vmatprep.mubr.f32.mxu0 0.0
    %7522 = vmatmul.mubr.f32.gmra.mrb[0].mxu0 %v7388
    %v7523 = vpop.f32.mrb[0].mxu0
    %v7524 = vadd.f32 0.0, %v7523
    %v7525 = vpop.f32.mrb[0].mxu0
    %7526 = vmatprep.mubr.f32.mxu0 0.0
    %7527 = vmatmul.mubr.f32.gmra.mrb[0].mxu0 %v7391
    %v7528 = vpop.f32.mrb[0].mxu0
    %v7529 = vadd.f32 0.0, %v7528
    %v7530 = vpop.f32.mrb[0].mxu0
    %7531 = vmatprep.mubr.f32.mxu0 0.0
    %7532 = vmatmul.mubr.f32.gmra.mrb[0].mxu0 %v7394
    %v7533 = vpop.f32.mrb[0].mxu0
    %v7534 = vadd.f32 0.0, %v7533
    %v7535 = vpop.f32.mrb[0].mxu0
    %7536 = vmatprep.mubr.f32.mxu0 0.0
    %7537 = vmatmul.mubr.f32.gmra.mrb[0].mxu0 %v7397
    %v7538 = vpop.f32.mrb[0].mxu0
    %v7539 = vadd.f32 0.0, %v7538
    %v7540 = vpop.f32.mrb[0].mxu0
    %7541 = vmatprep.mubr.f32.mxu0 0.0
    %7542 = vmatmul.mubr.f32.gmra.mrb[0].mxu0 %v7400
    %v7543 = vpop.f32.mrb[0].mxu0
    %v7544 = vadd.f32 0.0, %v7543
    %v7545 = vpop.f32.mrb[0].mxu0
    %7546 = vdwg.mxu0
    %v7547 = vadd.f32 %v7329, %v7469
    %v7548 = vadd.f32 %v7330, %v7474
    %v7549 = vadd.f32 %v7331, %v7479
    %v7550 = vadd.f32 %v7332, %v7484
    %v7551 = vadd.f32 %v7333, %v7489
    %v7552 = vadd.f32 %v7334, %v7494
    %v7553 = vadd.f32 %v7335, %v7499
    %v7554 = vadd.f32 %v7336, %v7504
    %v7555 = vadd.f32 %v7337, %v7509
    %v7556 = vadd.f32 %v7338, %v7514
    %v7557 = vadd.f32 %v7339, %v7519
    %v7558 = vadd.f32 %v7340, %v7524
    %v7559 = vadd.f32 %v7341, %v7529
    %v7560 = vadd.f32 %v7342, %v7534
    %v7561 = vadd.f32 %v7343, %v7539
    %v7562 = vadd.f32 %v7344, %v7544
    %s7563 = scalar_lea.vmem %s4, 1024
    %v7564 = vld [vmem:[%s7563] sm:$0xff]
    %v7565 = vld [vmem:[%s7563 + $0x8] sm:$0xff]
    %v7566 = vld [vmem:[%s7563 + $0x10] sm:$0xff]
    %v7567 = vld [vmem:[%s7563 + $0x18] sm:$0xff]
    %v7568 = vld [vmem:[%s7563 + $0x20] sm:$0xff]
    %v7569 = vld [vmem:[%s7563 + $0x28] sm:$0xff]
    %v7570 = vld [vmem:[%s7563 + $0x30] sm:$0xff]
    %v7571 = vld [vmem:[%s7563 + $0x38] sm:$0xff]
    %v7573 = vsel %vm4124, %v3963, 0
    %v7576 = vsel %vm4124, %v3964, 0
    %v7579 = vsel %vm4124, %v3965, 0
    %v7582 = vsel %vm4124, %v3966, 0
    %v7585 = vsel %vm4124, %v3967, 0
    %v7588 = vsel %vm4124, %v3968, 0
    %v7591 = vsel %vm4124, %v3969, 0
    %v7594 = vsel %vm4124, %v3970, 0
    %v7597 = vsel %vm4124, %v3971, 0
    %v7600 = vsel %vm4124, %v3972, 0
    %v7603 = vsel %vm4124, %v3973, 0
    %v7606 = vsel %vm4124, %v3974, 0
    %v7609 = vsel %vm4124, %v3975, 0
    %v7612 = vsel %vm4124, %v3976, 0
    %v7615 = vsel %vm4124, %v3977, 0
    %v7618 = vsel %vm4124, %v3978, 0
    %7620 = vmatprep.subr.mxu0 0.0
    %7621 = vmatpush1.msra.mxu0 %v7564
    %7622 = vmatprep.subr.mxu0 0.0
    %7623 = vmatpush1.msra.mxu0 %v7565
    %7624 = vmatprep.subr.mxu0 0.0
    %7625 = vmatpush1.msra.mxu0 %v7566
    %7626 = vmatprep.subr.mxu0 0.0
    %7627 = vmatpush1.msra.mxu0 %v7567
    %7628 = vmatprep.subr.mxu0 0.0
    %7629 = vmatpush1.msra.mxu0 %v7568
    %7630 = vmatprep.subr.mxu0 0.0
    %7631 = vmatpush1.msra.mxu0 %v7569
    %7632 = vmatprep.subr.mxu0 0.0
    %7633 = vmatpush1.msra.mxu0 %v7570
    %7634 = vmatprep.subr.mxu0 0.0
    %7635 = vmatpush1.msra.mxu0 %v7571
    %7636 = vmatprep.subr.mxu0 0.0
    %7637 = vmatpush1.msra.mxu0 0.0
    %7638 = vmatprep.subr.mxu0 0.0
    %7639 = vmatpush1.msra.mxu0 0.0
    %7640 = vmatprep.subr.mxu0 0.0
    %7641 = vmatpush1.msra.mxu0 0.0
    %7642 = vmatprep.subr.mxu0 0.0
    %7643 = vmatpush1.msra.mxu0 0.0
    %7644 = vmatprep.subr.mxu0 0.0
    %7645 = vmatpush1.msra.mxu0 0.0
    %7646 = vmatprep.subr.mxu0 0.0
    %7647 = vmatpush1.msra.mxu0 0.0
    %7648 = vmatprep.subr.mxu0 0.0
    %7649 = vmatpush1.msra.mxu0 0.0
    %7650 = vmatprep.subr.mxu0 0.0
    %7651 = vmatpush1.msra.mxu0 0.0
    %7652 = vmatprep.subr.mxu0 0.0
    %7653 = vmatpush1.msra.mxu0 0.0
    %7654 = vmatprep.subr.mxu0 0.0
    %7655 = vmatpush1.msra.mxu0 0.0
    %7656 = vmatprep.subr.mxu0 0.0
    %7657 = vmatpush1.msra.mxu0 0.0
    %7658 = vmatprep.subr.mxu0 0.0
    %7659 = vmatpush1.msra.mxu0 0.0
    %7660 = vmatprep.subr.mxu0 0.0
    %7661 = vmatpush1.msra.mxu0 0.0
    %7662 = vmatprep.subr.mxu0 0.0
    %7663 = vmatpush1.msra.mxu0 0.0
    %7664 = vmatprep.subr.mxu0 0.0
    %7665 = vmatpush1.msra.mxu0 0.0
    %7666 = vmatprep.subr.mxu0 0.0
    %7667 = vmatpush1.msra.mxu0 0.0
    %7668 = vmatprep.subr.mxu0 0.0
    %7669 = vmatpush1.msra.mxu0 0.0
    %7670 = vmatprep.subr.mxu0 0.0
    %7671 = vmatpush1.msra.mxu0 0.0
    %7672 = vmatprep.subr.mxu0 0.0
    %7673 = vmatpush1.msra.mxu0 0.0
    %7674 = vmatprep.subr.mxu0 0.0
    %7675 = vmatpush1.msra.mxu0 0.0
    %7676 = vmatprep.subr.mxu0 0.0
    %7677 = vmatpush1.msra.mxu0 0.0
    %7678 = vmatprep.subr.mxu0 0.0
    %7679 = vmatpush1.msra.mxu0 0.0
    %7680 = vmatprep.subr.mxu0 0.0
    %7681 = vmatpush1.msra.mxu0 0.0
    %7682 = vmatprep.subr.mxu0 0.0
    %7683 = vmatpush1.msra.mxu0 0.0
    %7684 = vmatprep.mubr.f32.mxu0 0.0
    %7685 = vmatmul.mubr.f32.gmra.mrb[0].mxu0 %v7573
    %v7686 = vpop.f32.mrb[0].mxu0
    %v7687 = vadd.f32 0.0, %v7686
    %v7688 = vpop.f32.mrb[0].mxu0
    %7689 = vmatprep.mubr.f32.mxu0 0.0
    %7690 = vmatmul.mubr.f32.gmra.mrb[0].mxu0 %v7576
    %v7691 = vpop.f32.mrb[0].mxu0
    %v7692 = vadd.f32 0.0, %v7691
    %v7693 = vpop.f32.mrb[0].mxu0
    %7694 = vmatprep.mubr.f32.mxu0 0.0
    %7695 = vmatmul.mubr.f32.gmra.mrb[0].mxu0 %v7579
    %v7696 = vpop.f32.mrb[0].mxu0
    %v7697 = vadd.f32 0.0, %v7696
    %v7698 = vpop.f32.mrb[0].mxu0
    %7699 = vmatprep.mubr.f32.mxu0 0.0
    %7700 = vmatmul.mubr.f32.gmra.mrb[0].mxu0 %v7582
    %v7701 = vpop.f32.mrb[0].mxu0
    %v7702 = vadd.f32 0.0, %v7701
    %v7703 = vpop.f32.mrb[0].mxu0
    %7704 = vmatprep.mubr.f32.mxu0 0.0
    %7705 = vmatmul.mubr.f32.gmra.mrb[0].mxu0 %v7585
    %v7706 = vpop.f32.mrb[0].mxu0
    %v7707 = vadd.f32 0.0, %v7706
    %v7708 = vpop.f32.mrb[0].mxu0
    %7709 = vmatprep.mubr.f32.mxu0 0.0
    %7710 = vmatmul.mubr.f32.gmra.mrb[0].mxu0 %v7588
    %v7711 = vpop.f32.mrb[0].mxu0
    %v7712 = vadd.f32 0.0, %v7711
    %v7713 = vpop.f32.mrb[0].mxu0
    %7714 = vmatprep.mubr.f32.mxu0 0.0
    %7715 = vmatmul.mubr.f32.gmra.mrb[0].mxu0 %v7591
    %v7716 = vpop.f32.mrb[0].mxu0
    %v7717 = vadd.f32 0.0, %v7716
    %v7718 = vpop.f32.mrb[0].mxu0
    %7719 = vmatprep.mubr.f32.mxu0 0.0
    %7720 = vmatmul.mubr.f32.gmra.mrb[0].mxu0 %v7594
    %v7721 = vpop.f32.mrb[0].mxu0
    %v7722 = vadd.f32 0.0, %v7721
    %v7723 = vpop.f32.mrb[0].mxu0
    %7724 = vmatprep.mubr.f32.mxu0 0.0
    %7725 = vmatmul.mubr.f32.gmra.mrb[0].mxu0 %v7597
    %v7726 = vpop.f32.mrb[0].mxu0
    %v7727 = vadd.f32 0.0, %v7726
    %v7728 = vpop.f32.mrb[0].mxu0
    %7729 = vmatprep.mubr.f32.mxu0 0.0
    %7730 = vmatmul.mubr.f32.gmra.mrb[0].mxu0 %v7600
    %v7731 = vpop.f32.mrb[0].mxu0
    %v7732 = vadd.f32 0.0, %v7731
    %v7733 = vpop.f32.mrb[0].mxu0
    %7734 = vmatprep.mubr.f32.mxu0 0.0
    %7735 = vmatmul.mubr.f32.gmra.mrb[0].mxu0 %v7603
    %v7736 = vpop.f32.mrb[0].mxu0
    %v7737 = vadd.f32 0.0, %v7736
    %v7738 = vpop.f32.mrb[0].mxu0
    %7739 = vmatprep.mubr.f32.mxu0 0.0
    %7740 = vmatmul.mubr.f32.gmra.mrb[0].mxu0 %v7606
    %v7741 = vpop.f32.mrb[0].mxu0
    %v7742 = vadd.f32 0.0, %v7741
    %v7743 = vpop.f32.mrb[0].mxu0
    %7744 = vmatprep.mubr.f32.mxu0 0.0
    %7745 = vmatmul.mubr.f32.gmra.mrb[0].mxu0 %v7609
    %v7746 = vpop.f32.mrb[0].mxu0
    %v7747 = vadd.f32 0.0, %v7746
    %v7748 = vpop.f32.mrb[0].mxu0
    %7749 = vmatprep.mubr.f32.mxu0 0.0
    %7750 = vmatmul.mubr.f32.gmra.mrb[0].mxu0 %v7612
    %v7751 = vpop.f32.mrb[0].mxu0
    %v7752 = vadd.f32 0.0, %v7751
    %v7753 = vpop.f32.mrb[0].mxu0
    %7754 = vmatprep.mubr.f32.mxu0 0.0
    %7755 = vmatmul.mubr.f32.gmra.mrb[0].mxu0 %v7615
    %v7756 = vpop.f32.mrb[0].mxu0
    %v7757 = vadd.f32 0.0, %v7756
    %v7758 = vpop.f32.mrb[0].mxu0
    %7759 = vmatprep.mubr.f32.mxu0 0.0
    %7760 = vmatmul.mubr.f32.gmra.mrb[0].mxu0 %v7618
    %v7761 = vpop.f32.mrb[0].mxu0
    %v7762 = vadd.f32 0.0, %v7761
    %v7763 = vpop.f32.mrb[0].mxu0
    %7764 = vdwg.mxu0
    %v7765 = vadd.f32 %v7547, %v7687
    %v7766 = vadd.f32 %v7548, %v7692
    %v7767 = vadd.f32 %v7549, %v7697
    %v7768 = vadd.f32 %v7550, %v7702
    %v7769 = vadd.f32 %v7551, %v7707
    %v7770 = vadd.f32 %v7552, %v7712
    %v7771 = vadd.f32 %v7553, %v7717
    %v7772 = vadd.f32 %v7554, %v7722
    %v7773 = vadd.f32 %v7555, %v7727
    %v7774 = vadd.f32 %v7556, %v7732
    %v7775 = vadd.f32 %v7557, %v7737
    %v7776 = vadd.f32 %v7558, %v7742
    %v7777 = vadd.f32 %v7559, %v7747
    %v7778 = vadd.f32 %v7560, %v7752
    %v7779 = vadd.f32 %v7561, %v7757
    %v7780 = vadd.f32 %v7562, %v7762
    %s7781 = scalar_lea.vmem %s4, 1088
    %v7782 = vld [vmem:[%s7781] sm:$0xff]
    %v7783 = vld [vmem:[%s7781 + $0x8] sm:$0xff]
    %v7784 = vld [vmem:[%s7781 + $0x10] sm:$0xff]
    %v7785 = vld [vmem:[%s7781 + $0x18] sm:$0xff]
    %v7786 = vld [vmem:[%s7781 + $0x20] sm:$0xff]
    %v7787 = vld [vmem:[%s7781 + $0x28] sm:$0xff]
    %v7788 = vld [vmem:[%s7781 + $0x30] sm:$0xff]
    %v7789 = vld [vmem:[%s7781 + $0x38] sm:$0xff]
    %v7791 = vsel %vm4124, %v3979, 0
    %v7794 = vsel %vm4124, %v3980, 0
    %v7797 = vsel %vm4124, %v3981, 0
    %v7800 = vsel %vm4124, %v3982, 0
    %v7803 = vsel %vm4124, %v3983, 0
    %v7806 = vsel %vm4124, %v3984, 0
    %v7809 = vsel %vm4124, %v3985, 0
    %v7812 = vsel %vm4124, %v3986, 0
    %v7815 = vsel %vm4124, %v3987, 0
    %v7818 = vsel %vm4124, %v3988, 0
    %v7821 = vsel %vm4124, %v3989, 0
    %v7824 = vsel %vm4124, %v3990, 0
    %v7827 = vsel %vm4124, %v3991, 0
    %v7830 = vsel %vm4124, %v3992, 0
    %v7833 = vsel %vm4124, %v3993, 0
    %v7836 = vsel %vm4124, %v3994, 0
    %7838 = vmatprep.subr.mxu0 0.0
    %7839 = vmatpush1.msra.mxu0 %v7782
    %7840 = vmatprep.subr.mxu0 0.0
    %7841 = vmatpush1.msra.mxu0 %v7783
    %7842 = vmatprep.subr.mxu0 0.0
    %7843 = vmatpush1.msra.mxu0 %v7784
    %7844 = vmatprep.subr.mxu0 0.0
    %7845 = vmatpush1.msra.mxu0 %v7785
    %7846 = vmatprep.subr.mxu0 0.0
    %7847 = vmatpush1.msra.mxu0 %v7786
    %7848 = vmatprep.subr.mxu0 0.0
    %7849 = vmatpush1.msra.mxu0 %v7787
    %7850 = vmatprep.subr.mxu0 0.0
    %7851 = vmatpush1.msra.mxu0 %v7788
    %7852 = vmatprep.subr.mxu0 0.0
    %7853 = vmatpush1.msra.mxu0 %v7789
    %7854 = vmatprep.subr.mxu0 0.0
    %7855 = vmatpush1.msra.mxu0 0.0
    %7856 = vmatprep.subr.mxu0 0.0
    %7857 = vmatpush1.msra.mxu0 0.0
    %7858 = vmatprep.subr.mxu0 0.0
    %7859 = vmatpush1.msra.mxu0 0.0
    %7860 = vmatprep.subr.mxu0 0.0
    %7861 = vmatpush1.msra.mxu0 0.0
    %7862 = vmatprep.subr.mxu0 0.0
    %7863 = vmatpush1.msra.mxu0 0.0
    %7864 = vmatprep.subr.mxu0 0.0
    %7865 = vmatpush1.msra.mxu0 0.0
    %7866 = vmatprep.subr.mxu0 0.0
    %7867 = vmatpush1.msra.mxu0 0.0
    %7868 = vmatprep.subr.mxu0 0.0
    %7869 = vmatpush1.msra.mxu0 0.0
    %7870 = vmatprep.subr.mxu0 0.0
    %7871 = vmatpush1.msra.mxu0 0.0
    %7872 = vmatprep.subr.mxu0 0.0
    %7873 = vmatpush1.msra.mxu0 0.0
    %7874 = vmatprep.subr.mxu0 0.0
    %7875 = vmatpush1.msra.mxu0 0.0
    %7876 = vmatprep.subr.mxu0 0.0
    %7877 = vmatpush1.msra.mxu0 0.0
    %7878 = vmatprep.subr.mxu0 0.0
    %7879 = vmatpush1.msra.mxu0 0.0
    %7880 = vmatprep.subr.mxu0 0.0
    %7881 = vmatpush1.msra.mxu0 0.0
    %7882 = vmatprep.subr.mxu0 0.0
    %7883 = vmatpush1.msra.mxu0 0.0
    %7884 = vmatprep.subr.mxu0 0.0
    %7885 = vmatpush1.msra.mxu0 0.0
    %7886 = vmatprep.subr.mxu0 0.0
    %7887 = vmatpush1.msra.mxu0 0.0
    %7888 = vmatprep.subr.mxu0 0.0
    %7889 = vmatpush1.msra.mxu0 0.0
    %7890 = vmatprep.subr.mxu0 0.0
    %7891 = vmatpush1.msra.mxu0 0.0
    %7892 = vmatprep.subr.mxu0 0.0
    %7893 = vmatpush1.msra.mxu0 0.0
    %7894 = vmatprep.subr.mxu0 0.0
    %7895 = vmatpush1.msra.mxu0 0.0
    %7896 = vmatprep.subr.mxu0 0.0
    %7897 = vmatpush1.msra.mxu0 0.0
    %7898 = vmatprep.subr.mxu0 0.0
    %7899 = vmatpush1.msra.mxu0 0.0
    %7900 = vmatprep.subr.mxu0 0.0
    %7901 = vmatpush1.msra.mxu0 0.0
    %7902 = vmatprep.mubr.f32.mxu0 0.0
    %7903 = vmatmul.mubr.f32.gmra.mrb[0].mxu0 %v7791
    %v7904 = vpop.f32.mrb[0].mxu0
    %v7905 = vadd.f32 0.0, %v7904
    %v7906 = vpop.f32.mrb[0].mxu0
    %7907 = vmatprep.mubr.f32.mxu0 0.0
    %7908 = vmatmul.mubr.f32.gmra.mrb[0].mxu0 %v7794
    %v7909 = vpop.f32.mrb[0].mxu0
    %v7910 = vadd.f32 0.0, %v7909
    %v7911 = vpop.f32.mrb[0].mxu0
    %7912 = vmatprep.mubr.f32.mxu0 0.0
    %7913 = vmatmul.mubr.f32.gmra.mrb[0].mxu0 %v7797
    %v7914 = vpop.f32.mrb[0].mxu0
    %v7915 = vadd.f32 0.0, %v7914
    %v7916 = vpop.f32.mrb[0].mxu0
    %7917 = vmatprep.mubr.f32.mxu0 0.0
    %7918 = vmatmul.mubr.f32.gmra.mrb[0].mxu0 %v7800
    %v7919 = vpop.f32.mrb[0].mxu0
    %v7920 = vadd.f32 0.0, %v7919
    %v7921 = vpop.f32.mrb[0].mxu0
    %7922 = vmatprep.mubr.f32.mxu0 0.0
    %7923 = vmatmul.mubr.f32.gmra.mrb[0].mxu0 %v7803
    %v7924 = vpop.f32.mrb[0].mxu0
    %v7925 = vadd.f32 0.0, %v7924
    %v7926 = vpop.f32.mrb[0].mxu0
    %7927 = vmatprep.mubr.f32.mxu0 0.0
    %7928 = vmatmul.mubr.f32.gmra.mrb[0].mxu0 %v7806
    %v7929 = vpop.f32.mrb[0].mxu0
    %v7930 = vadd.f32 0.0, %v7929
    %v7931 = vpop.f32.mrb[0].mxu0
    %7932 = vmatprep.mubr.f32.mxu0 0.0
    %7933 = vmatmul.mubr.f32.gmra.mrb[0].mxu0 %v7809
    %v7934 = vpop.f32.mrb[0].mxu0
    %v7935 = vadd.f32 0.0, %v7934
    %v7936 = vpop.f32.mrb[0].mxu0
    %7937 = vmatprep.mubr.f32.mxu0 0.0
    %7938 = vmatmul.mubr.f32.gmra.mrb[0].mxu0 %v7812
    %v7939 = vpop.f32.mrb[0].mxu0
    %v7940 = vadd.f32 0.0, %v7939
    %v7941 = vpop.f32.mrb[0].mxu0
    %7942 = vmatprep.mubr.f32.mxu0 0.0
    %7943 = vmatmul.mubr.f32.gmra.mrb[0].mxu0 %v7815
    %v7944 = vpop.f32.mrb[0].mxu0
    %v7945 = vadd.f32 0.0, %v7944
    %v7946 = vpop.f32.mrb[0].mxu0
    %7947 = vmatprep.mubr.f32.mxu0 0.0
    %7948 = vmatmul.mubr.f32.gmra.mrb[0].mxu0 %v7818
    %v7949 = vpop.f32.mrb[0].mxu0
    %v7950 = vadd.f32 0.0, %v7949
    %v7951 = vpop.f32.mrb[0].mxu0
    %7952 = vmatprep.mubr.f32.mxu0 0.0
    %7953 = vmatmul.mubr.f32.gmra.mrb[0].mxu0 %v7821
    %v7954 = vpop.f32.mrb[0].mxu0
    %v7955 = vadd.f32 0.0, %v7954
    %v7956 = vpop.f32.mrb[0].mxu0
    %7957 = vmatprep.mubr.f32.mxu0 0.0
    %7958 = vmatmul.mubr.f32.gmra.mrb[0].mxu0 %v7824
    %v7959 = vpop.f32.mrb[0].mxu0
    %v7960 = vadd.f32 0.0, %v7959
    %v7961 = vpop.f32.mrb[0].mxu0
    %7962 = vmatprep.mubr.f32.mxu0 0.0
    %7963 = vmatmul.mubr.f32.gmra.mrb[0].mxu0 %v7827
    %v7964 = vpop.f32.mrb[0].mxu0
    %v7965 = vadd.f32 0.0, %v7964
    %v7966 = vpop.f32.mrb[0].mxu0
    %7967 = vmatprep.mubr.f32.mxu0 0.0
    %7968 = vmatmul.mubr.f32.gmra.mrb[0].mxu0 %v7830
    %v7969 = vpop.f32.mrb[0].mxu0
    %v7970 = vadd.f32 0.0, %v7969
    %v7971 = vpop.f32.mrb[0].mxu0
    %7972 = vmatprep.mubr.f32.mxu0 0.0
    %7973 = vmatmul.mubr.f32.gmra.mrb[0].mxu0 %v7833
    %v7974 = vpop.f32.mrb[0].mxu0
    %v7975 = vadd.f32 0.0, %v7974
    %v7976 = vpop.f32.mrb[0].mxu0
    %7977 = vmatprep.mubr.f32.mxu0 0.0
    %7978 = vmatmul.mubr.f32.gmra.mrb[0].mxu0 %v7836
    %v7979 = vpop.f32.mrb[0].mxu0
    %v7980 = vadd.f32 0.0, %v7979
    %v7981 = vpop.f32.mrb[0].mxu0
    %7982 = vdwg.mxu0
    %v7983 = vadd.f32 %v7765, %v7905
    %v7984 = vadd.f32 %v7766, %v7910
    %v7985 = vadd.f32 %v7767, %v7915
    %v7986 = vadd.f32 %v7768, %v7920
    %v7987 = vadd.f32 %v7769, %v7925
    %v7988 = vadd.f32 %v7770, %v7930
    %v7989 = vadd.f32 %v7771, %v7935
    %v7990 = vadd.f32 %v7772, %v7940
    %v7991 = vadd.f32 %v7773, %v7945
    %v7992 = vadd.f32 %v7774, %v7950
    %v7993 = vadd.f32 %v7775, %v7955
    %v7994 = vadd.f32 %v7776, %v7960
    %v7995 = vadd.f32 %v7777, %v7965
    %v7996 = vadd.f32 %v7778, %v7970
    %v7997 = vadd.f32 %v7779, %v7975
    %v7998 = vadd.f32 %v7780, %v7980
    %s7999 = scalar_lea.vmem %s4, 1152
    %v8000 = vld [vmem:[%s7999] sm:$0xff]
    %v8001 = vld [vmem:[%s7999 + $0x8] sm:$0xff]
    %v8002 = vld [vmem:[%s7999 + $0x10] sm:$0xff]
    %v8003 = vld [vmem:[%s7999 + $0x18] sm:$0xff]
    %v8004 = vld [vmem:[%s7999 + $0x20] sm:$0xff]
    %v8005 = vld [vmem:[%s7999 + $0x28] sm:$0xff]
    %v8006 = vld [vmem:[%s7999 + $0x30] sm:$0xff]
    %v8007 = vld [vmem:[%s7999 + $0x38] sm:$0xff]
    %v8009 = vsel %vm4124, %v3995, 0
    %v8012 = vsel %vm4124, %v3996, 0
    %v8015 = vsel %vm4124, %v3997, 0
    %v8018 = vsel %vm4124, %v3998, 0
    %v8021 = vsel %vm4124, %v3999, 0
    %v8024 = vsel %vm4124, %v4000, 0
    %v8027 = vsel %vm4124, %v4001, 0
    %v8030 = vsel %vm4124, %v4002, 0
    %v8033 = vsel %vm4124, %v4003, 0
    %v8036 = vsel %vm4124, %v4004, 0
    %v8039 = vsel %vm4124, %v4005, 0
    %v8042 = vsel %vm4124, %v4006, 0
    %v8045 = vsel %vm4124, %v4007, 0
    %v8048 = vsel %vm4124, %v4008, 0
    %v8051 = vsel %vm4124, %v4009, 0
    %v8054 = vsel %vm4124, %v4010, 0
    %8056 = vmatprep.subr.mxu0 0.0
    %8057 = vmatpush1.msra.mxu0 %v8000
    %8058 = vmatprep.subr.mxu0 0.0
    %8059 = vmatpush1.msra.mxu0 %v8001
    %8060 = vmatprep.subr.mxu0 0.0
    %8061 = vmatpush1.msra.mxu0 %v8002
    %8062 = vmatprep.subr.mxu0 0.0
    %8063 = vmatpush1.msra.mxu0 %v8003
    %8064 = vmatprep.subr.mxu0 0.0
    %8065 = vmatpush1.msra.mxu0 %v8004
    %8066 = vmatprep.subr.mxu0 0.0
    %8067 = vmatpush1.msra.mxu0 %v8005
    %8068 = vmatprep.subr.mxu0 0.0
    %8069 = vmatpush1.msra.mxu0 %v8006
    %8070 = vmatprep.subr.mxu0 0.0
    %8071 = vmatpush1.msra.mxu0 %v8007
    %8072 = vmatprep.subr.mxu0 0.0
    %8073 = vmatpush1.msra.mxu0 0.0
    %8074 = vmatprep.subr.mxu0 0.0
    %8075 = vmatpush1.msra.mxu0 0.0
    %8076 = vmatprep.subr.mxu0 0.0
    %8077 = vmatpush1.msra.mxu0 0.0
    %8078 = vmatprep.subr.mxu0 0.0
    %8079 = vmatpush1.msra.mxu0 0.0
    %8080 = vmatprep.subr.mxu0 0.0
    %8081 = vmatpush1.msra.mxu0 0.0
    %8082 = vmatprep.subr.mxu0 0.0
    %8083 = vmatpush1.msra.mxu0 0.0
    %8084 = vmatprep.subr.mxu0 0.0
    %8085 = vmatpush1.msra.mxu0 0.0
    %8086 = vmatprep.subr.mxu0 0.0
    %8087 = vmatpush1.msra.mxu0 0.0
    %8088 = vmatprep.subr.mxu0 0.0
    %8089 = vmatpush1.msra.mxu0 0.0
    %8090 = vmatprep.subr.mxu0 0.0
    %8091 = vmatpush1.msra.mxu0 0.0
    %8092 = vmatprep.subr.mxu0 0.0
    %8093 = vmatpush1.msra.mxu0 0.0
    %8094 = vmatprep.subr.mxu0 0.0
    %8095 = vmatpush1.msra.mxu0 0.0
    %8096 = vmatprep.subr.mxu0 0.0
    %8097 = vmatpush1.msra.mxu0 0.0
    %8098 = vmatprep.subr.mxu0 0.0
    %8099 = vmatpush1.msra.mxu0 0.0
    %8100 = vmatprep.subr.mxu0 0.0
    %8101 = vmatpush1.msra.mxu0 0.0
    %8102 = vmatprep.subr.mxu0 0.0
    %8103 = vmatpush1.msra.mxu0 0.0
    %8104 = vmatprep.subr.mxu0 0.0
    %8105 = vmatpush1.msra.mxu0 0.0
    %8106 = vmatprep.subr.mxu0 0.0
    %8107 = vmatpush1.msra.mxu0 0.0
    %8108 = vmatprep.subr.mxu0 0.0
    %8109 = vmatpush1.msra.mxu0 0.0
    %8110 = vmatprep.subr.mxu0 0.0
    %8111 = vmatpush1.msra.mxu0 0.0
    %8112 = vmatprep.subr.mxu0 0.0
    %8113 = vmatpush1.msra.mxu0 0.0
    %8114 = vmatprep.subr.mxu0 0.0
    %8115 = vmatpush1.msra.mxu0 0.0
    %8116 = vmatprep.subr.mxu0 0.0
    %8117 = vmatpush1.msra.mxu0 0.0
    %8118 = vmatprep.subr.mxu0 0.0
    %8119 = vmatpush1.msra.mxu0 0.0
    %8120 = vmatprep.mubr.f32.mxu0 0.0
    %8121 = vmatmul.mubr.f32.gmra.mrb[0].mxu0 %v8009
    %v8122 = vpop.f32.mrb[0].mxu0
    %v8123 = vadd.f32 0.0, %v8122
    %v8124 = vpop.f32.mrb[0].mxu0
    %8125 = vmatprep.mubr.f32.mxu0 0.0
    %8126 = vmatmul.mubr.f32.gmra.mrb[0].mxu0 %v8012
    %v8127 = vpop.f32.mrb[0].mxu0
    %v8128 = vadd.f32 0.0, %v8127
    %v8129 = vpop.f32.mrb[0].mxu0
    %8130 = vmatprep.mubr.f32.mxu0 0.0
    %8131 = vmatmul.mubr.f32.gmra.mrb[0].mxu0 %v8015
    %v8132 = vpop.f32.mrb[0].mxu0
    %v8133 = vadd.f32 0.0, %v8132
    %v8134 = vpop.f32.mrb[0].mxu0
    %8135 = vmatprep.mubr.f32.mxu0 0.0
    %8136 = vmatmul.mubr.f32.gmra.mrb[0].mxu0 %v8018
    %v8137 = vpop.f32.mrb[0].mxu0
    %v8138 = vadd.f32 0.0, %v8137
    %v8139 = vpop.f32.mrb[0].mxu0
    %8140 = vmatprep.mubr.f32.mxu0 0.0
    %8141 = vmatmul.mubr.f32.gmra.mrb[0].mxu0 %v8021
    %v8142 = vpop.f32.mrb[0].mxu0
    %v8143 = vadd.f32 0.0, %v8142
    %v8144 = vpop.f32.mrb[0].mxu0
    %8145 = vmatprep.mubr.f32.mxu0 0.0
    %8146 = vmatmul.mubr.f32.gmra.mrb[0].mxu0 %v8024
    %v8147 = vpop.f32.mrb[0].mxu0
    %v8148 = vadd.f32 0.0, %v8147
    %v8149 = vpop.f32.mrb[0].mxu0
    %8150 = vmatprep.mubr.f32.mxu0 0.0
    %8151 = vmatmul.mubr.f32.gmra.mrb[0].mxu0 %v8027
    %v8152 = vpop.f32.mrb[0].mxu0
    %v8153 = vadd.f32 0.0, %v8152
    %v8154 = vpop.f32.mrb[0].mxu0
    %8155 = vmatprep.mubr.f32.mxu0 0.0
    %8156 = vmatmul.mubr.f32.gmra.mrb[0].mxu0 %v8030
    %v8157 = vpop.f32.mrb[0].mxu0
    %v8158 = vadd.f32 0.0, %v8157
    %v8159 = vpop.f32.mrb[0].mxu0
    %8160 = vmatprep.mubr.f32.mxu0 0.0
    %8161 = vmatmul.mubr.f32.gmra.mrb[0].mxu0 %v8033
    %v8162 = vpop.f32.mrb[0].mxu0
    %v8163 = vadd.f32 0.0, %v8162
    %v8164 = vpop.f32.mrb[0].mxu0
    %8165 = vmatprep.mubr.f32.mxu0 0.0
    %8166 = vmatmul.mubr.f32.gmra.mrb[0].mxu0 %v8036
    %v8167 = vpop.f32.mrb[0].mxu0
    %v8168 = vadd.f32 0.0, %v8167
    %v8169 = vpop.f32.mrb[0].mxu0
    %8170 = vmatprep.mubr.f32.mxu0 0.0
    %8171 = vmatmul.mubr.f32.gmra.mrb[0].mxu0 %v8039
    %v8172 = vpop.f32.mrb[0].mxu0
    %v8173 = vadd.f32 0.0, %v8172
    %v8174 = vpop.f32.mrb[0].mxu0
    %8175 = vmatprep.mubr.f32.mxu0 0.0
    %8176 = vmatmul.mubr.f32.gmra.mrb[0].mxu0 %v8042
    %v8177 = vpop.f32.mrb[0].mxu0
    %v8178 = vadd.f32 0.0, %v8177
    %v8179 = vpop.f32.mrb[0].mxu0
    %8180 = vmatprep.mubr.f32.mxu0 0.0
    %8181 = vmatmul.mubr.f32.gmra.mrb[0].mxu0 %v8045
    %v8182 = vpop.f32.mrb[0].mxu0
    %v8183 = vadd.f32 0.0, %v8182
    %v8184 = vpop.f32.mrb[0].mxu0
    %8185 = vmatprep.mubr.f32.mxu0 0.0
    %8186 = vmatmul.mubr.f32.gmra.mrb[0].mxu0 %v8048
    %v8187 = vpop.f32.mrb[0].mxu0
    %v8188 = vadd.f32 0.0, %v8187
    %v8189 = vpop.f32.mrb[0].mxu0
    %8190 = vmatprep.mubr.f32.mxu0 0.0
    %8191 = vmatmul.mubr.f32.gmra.mrb[0].mxu0 %v8051
    %v8192 = vpop.f32.mrb[0].mxu0
    %v8193 = vadd.f32 0.0, %v8192
    %v8194 = vpop.f32.mrb[0].mxu0
    %8195 = vmatprep.mubr.f32.mxu0 0.0
    %8196 = vmatmul.mubr.f32.gmra.mrb[0].mxu0 %v8054
    %v8197 = vpop.f32.mrb[0].mxu0
    %v8198 = vadd.f32 0.0, %v8197
    %v8199 = vpop.f32.mrb[0].mxu0
    %8200 = vdwg.mxu0
    %v8201 = vadd.f32 %v7983, %v8123
    %v8202 = vadd.f32 %v7984, %v8128
    %v8203 = vadd.f32 %v7985, %v8133
    %v8204 = vadd.f32 %v7986, %v8138
    %v8205 = vadd.f32 %v7987, %v8143
    %v8206 = vadd.f32 %v7988, %v8148
    %v8207 = vadd.f32 %v7989, %v8153
    %v8208 = vadd.f32 %v7990, %v8158
    %v8209 = vadd.f32 %v7991, %v8163
    %v8210 = vadd.f32 %v7992, %v8168
    %v8211 = vadd.f32 %v7993, %v8173
    %v8212 = vadd.f32 %v7994, %v8178
    %v8213 = vadd.f32 %v7995, %v8183
    %v8214 = vadd.f32 %v7996, %v8188
    %v8215 = vadd.f32 %v7997, %v8193
    %v8216 = vadd.f32 %v7998, %v8198
    %s8217 = scalar_lea.vmem %s4, 1216
    %v8218 = vld [vmem:[%s8217] sm:$0xff]
    %v8219 = vld [vmem:[%s8217 + $0x8] sm:$0xff]
    %v8220 = vld [vmem:[%s8217 + $0x10] sm:$0xff]
    %v8221 = vld [vmem:[%s8217 + $0x18] sm:$0xff]
    %v8222 = vld [vmem:[%s8217 + $0x20] sm:$0xff]
    %v8223 = vld [vmem:[%s8217 + $0x28] sm:$0xff]
    %v8224 = vld [vmem:[%s8217 + $0x30] sm:$0xff]
    %v8225 = vld [vmem:[%s8217 + $0x38] sm:$0xff]
    %v8227 = vsel %vm4124, %v4011, 0
    %v8230 = vsel %vm4124, %v4012, 0
    %v8233 = vsel %vm4124, %v4013, 0
    %v8236 = vsel %vm4124, %v4014, 0
    %v8239 = vsel %vm4124, %v4015, 0
    %v8242 = vsel %vm4124, %v4016, 0
    %v8245 = vsel %vm4124, %v4017, 0
    %v8248 = vsel %vm4124, %v4018, 0
    %v8251 = vsel %vm4124, %v4019, 0
    %v8254 = vsel %vm4124, %v4020, 0
    %v8257 = vsel %vm4124, %v4021, 0
    %v8260 = vsel %vm4124, %v4022, 0
    %v8263 = vsel %vm4124, %v4023, 0
    %v8266 = vsel %vm4124, %v4024, 0
    %v8269 = vsel %vm4124, %v4025, 0
    %v8272 = vsel %vm4124, %v4026, 0
    %8274 = vmatprep.subr.mxu0 0.0
    %8275 = vmatpush1.msra.mxu0 %v8218
    %8276 = vmatprep.subr.mxu0 0.0
    %8277 = vmatpush1.msra.mxu0 %v8219
    %8278 = vmatprep.subr.mxu0 0.0
    %8279 = vmatpush1.msra.mxu0 %v8220
    %8280 = vmatprep.subr.mxu0 0.0
    %8281 = vmatpush1.msra.mxu0 %v8221
    %8282 = vmatprep.subr.mxu0 0.0
    %8283 = vmatpush1.msra.mxu0 %v8222
    %8284 = vmatprep.subr.mxu0 0.0
    %8285 = vmatpush1.msra.mxu0 %v8223
    %8286 = vmatprep.subr.mxu0 0.0
    %8287 = vmatpush1.msra.mxu0 %v8224
    %8288 = vmatprep.subr.mxu0 0.0
    %8289 = vmatpush1.msra.mxu0 %v8225
    %8290 = vmatprep.subr.mxu0 0.0
    %8291 = vmatpush1.msra.mxu0 0.0
    %8292 = vmatprep.subr.mxu0 0.0
    %8293 = vmatpush1.msra.mxu0 0.0
    %8294 = vmatprep.subr.mxu0 0.0
    %8295 = vmatpush1.msra.mxu0 0.0
    %8296 = vmatprep.subr.mxu0 0.0
    %8297 = vmatpush1.msra.mxu0 0.0
    %8298 = vmatprep.subr.mxu0 0.0
    %8299 = vmatpush1.msra.mxu0 0.0
    %8300 = vmatprep.subr.mxu0 0.0
    %8301 = vmatpush1.msra.mxu0 0.0
    %8302 = vmatprep.subr.mxu0 0.0
    %8303 = vmatpush1.msra.mxu0 0.0
    %8304 = vmatprep.subr.mxu0 0.0
    %8305 = vmatpush1.msra.mxu0 0.0
    %8306 = vmatprep.subr.mxu0 0.0
    %8307 = vmatpush1.msra.mxu0 0.0
    %8308 = vmatprep.subr.mxu0 0.0
    %8309 = vmatpush1.msra.mxu0 0.0
    %8310 = vmatprep.subr.mxu0 0.0
    %8311 = vmatpush1.msra.mxu0 0.0
    %8312 = vmatprep.subr.mxu0 0.0
    %8313 = vmatpush1.msra.mxu0 0.0
    %8314 = vmatprep.subr.mxu0 0.0
    %8315 = vmatpush1.msra.mxu0 0.0
    %8316 = vmatprep.subr.mxu0 0.0
    %8317 = vmatpush1.msra.mxu0 0.0
    %8318 = vmatprep.subr.mxu0 0.0
    %8319 = vmatpush1.msra.mxu0 0.0
    %8320 = vmatprep.subr.mxu0 0.0
    %8321 = vmatpush1.msra.mxu0 0.0
    %8322 = vmatprep.subr.mxu0 0.0
    %8323 = vmatpush1.msra.mxu0 0.0
    %8324 = vmatprep.subr.mxu0 0.0
    %8325 = vmatpush1.msra.mxu0 0.0
    %8326 = vmatprep.subr.mxu0 0.0
    %8327 = vmatpush1.msra.mxu0 0.0
    %8328 = vmatprep.subr.mxu0 0.0
    %8329 = vmatpush1.msra.mxu0 0.0
    %8330 = vmatprep.subr.mxu0 0.0
    %8331 = vmatpush1.msra.mxu0 0.0
    %8332 = vmatprep.subr.mxu0 0.0
    %8333 = vmatpush1.msra.mxu0 0.0
    %8334 = vmatprep.subr.mxu0 0.0
    %8335 = vmatpush1.msra.mxu0 0.0
    %8336 = vmatprep.subr.mxu0 0.0
    %8337 = vmatpush1.msra.mxu0 0.0
    %8338 = vmatprep.mubr.f32.mxu0 0.0
    %8339 = vmatmul.mubr.f32.gmra.mrb[0].mxu0 %v8227
    %v8340 = vpop.f32.mrb[0].mxu0
    %v8341 = vadd.f32 0.0, %v8340
    %v8342 = vpop.f32.mrb[0].mxu0
    %8343 = vmatprep.mubr.f32.mxu0 0.0
    %8344 = vmatmul.mubr.f32.gmra.mrb[0].mxu0 %v8230
    %v8345 = vpop.f32.mrb[0].mxu0
    %v8346 = vadd.f32 0.0, %v8345
    %v8347 = vpop.f32.mrb[0].mxu0
    %8348 = vmatprep.mubr.f32.mxu0 0.0
    %8349 = vmatmul.mubr.f32.gmra.mrb[0].mxu0 %v8233
    %v8350 = vpop.f32.mrb[0].mxu0
    %v8351 = vadd.f32 0.0, %v8350
    %v8352 = vpop.f32.mrb[0].mxu0
    %8353 = vmatprep.mubr.f32.mxu0 0.0
    %8354 = vmatmul.mubr.f32.gmra.mrb[0].mxu0 %v8236
    %v8355 = vpop.f32.mrb[0].mxu0
    %v8356 = vadd.f32 0.0, %v8355
    %v8357 = vpop.f32.mrb[0].mxu0
    %8358 = vmatprep.mubr.f32.mxu0 0.0
    %8359 = vmatmul.mubr.f32.gmra.mrb[0].mxu0 %v8239
    %v8360 = vpop.f32.mrb[0].mxu0
    %v8361 = vadd.f32 0.0, %v8360
    %v8362 = vpop.f32.mrb[0].mxu0
    %8363 = vmatprep.mubr.f32.mxu0 0.0
    %8364 = vmatmul.mubr.f32.gmra.mrb[0].mxu0 %v8242
    %v8365 = vpop.f32.mrb[0].mxu0
    %v8366 = vadd.f32 0.0, %v8365
    %v8367 = vpop.f32.mrb[0].mxu0
    %8368 = vmatprep.mubr.f32.mxu0 0.0
    %8369 = vmatmul.mubr.f32.gmra.mrb[0].mxu0 %v8245
    %v8370 = vpop.f32.mrb[0].mxu0
    %v8371 = vadd.f32 0.0, %v8370
    %v8372 = vpop.f32.mrb[0].mxu0
    %8373 = vmatprep.mubr.f32.mxu0 0.0
    %8374 = vmatmul.mubr.f32.gmra.mrb[0].mxu0 %v8248
    %v8375 = vpop.f32.mrb[0].mxu0
    %v8376 = vadd.f32 0.0, %v8375
    %v8377 = vpop.f32.mrb[0].mxu0
    %8378 = vmatprep.mubr.f32.mxu0 0.0
    %8379 = vmatmul.mubr.f32.gmra.mrb[0].mxu0 %v8251
    %v8380 = vpop.f32.mrb[0].mxu0
    %v8381 = vadd.f32 0.0, %v8380
    %v8382 = vpop.f32.mrb[0].mxu0
    %8383 = vmatprep.mubr.f32.mxu0 0.0
    %8384 = vmatmul.mubr.f32.gmra.mrb[0].mxu0 %v8254
    %v8385 = vpop.f32.mrb[0].mxu0
    %v8386 = vadd.f32 0.0, %v8385
    %v8387 = vpop.f32.mrb[0].mxu0
    %8388 = vmatprep.mubr.f32.mxu0 0.0
    %8389 = vmatmul.mubr.f32.gmra.mrb[0].mxu0 %v8257
    %v8390 = vpop.f32.mrb[0].mxu0
    %v8391 = vadd.f32 0.0, %v8390
    %v8392 = vpop.f32.mrb[0].mxu0
    %8393 = vmatprep.mubr.f32.mxu0 0.0
    %8394 = vmatmul.mubr.f32.gmra.mrb[0].mxu0 %v8260
    %v8395 = vpop.f32.mrb[0].mxu0
    %v8396 = vadd.f32 0.0, %v8395
    %v8397 = vpop.f32.mrb[0].mxu0
    %8398 = vmatprep.mubr.f32.mxu0 0.0
    %8399 = vmatmul.mubr.f32.gmra.mrb[0].mxu0 %v8263
    %v8400 = vpop.f32.mrb[0].mxu0
    %v8401 = vadd.f32 0.0, %v8400
    %v8402 = vpop.f32.mrb[0].mxu0
    %8403 = vmatprep.mubr.f32.mxu0 0.0
    %8404 = vmatmul.mubr.f32.gmra.mrb[0].mxu0 %v8266
    %v8405 = vpop.f32.mrb[0].mxu0
    %v8406 = vadd.f32 0.0, %v8405
    %v8407 = vpop.f32.mrb[0].mxu0
    %8408 = vmatprep.mubr.f32.mxu0 0.0
    %8409 = vmatmul.mubr.f32.gmra.mrb[0].mxu0 %v8269
    %v8410 = vpop.f32.mrb[0].mxu0
    %v8411 = vadd.f32 0.0, %v8410
    %v8412 = vpop.f32.mrb[0].mxu0
    %8413 = vmatprep.mubr.f32.mxu0 0.0
    %8414 = vmatmul.mubr.f32.gmra.mrb[0].mxu0 %v8272
    %v8415 = vpop.f32.mrb[0].mxu0
    %v8416 = vadd.f32 0.0, %v8415
    %v8417 = vpop.f32.mrb[0].mxu0
    %8418 = vdwg.mxu0
    %v8419 = vadd.f32 %v8201, %v8341
    %v8420 = vadd.f32 %v8202, %v8346
    %v8421 = vadd.f32 %v8203, %v8351
    %v8422 = vadd.f32 %v8204, %v8356
    %v8423 = vadd.f32 %v8205, %v8361
    %v8424 = vadd.f32 %v8206, %v8366
    %v8425 = vadd.f32 %v8207, %v8371
    %v8426 = vadd.f32 %v8208, %v8376
    %v8427 = vadd.f32 %v8209, %v8381
    %v8428 = vadd.f32 %v8210, %v8386
    %v8429 = vadd.f32 %v8211, %v8391
    %v8430 = vadd.f32 %v8212, %v8396
    %v8431 = vadd.f32 %v8213, %v8401
    %v8432 = vadd.f32 %v8214, %v8406
    %v8433 = vadd.f32 %v8215, %v8411
    %v8434 = vadd.f32 %v8216, %v8416
    %s8435 = scalar_lea.vmem %s4, 1280
    %v8436 = vld [vmem:[%s8435] sm:$0xff]
    %v8437 = vld [vmem:[%s8435 + $0x8] sm:$0xff]
    %v8438 = vld [vmem:[%s8435 + $0x10] sm:$0xff]
    %v8439 = vld [vmem:[%s8435 + $0x18] sm:$0xff]
    %v8440 = vld [vmem:[%s8435 + $0x20] sm:$0xff]
    %v8441 = vld [vmem:[%s8435 + $0x28] sm:$0xff]
    %v8442 = vld [vmem:[%s8435 + $0x30] sm:$0xff]
    %v8443 = vld [vmem:[%s8435 + $0x38] sm:$0xff]
    %v8445 = vsel %vm4124, %v4027, 0
    %v8448 = vsel %vm4124, %v4028, 0
    %v8451 = vsel %vm4124, %v4029, 0
    %v8454 = vsel %vm4124, %v4030, 0
    %v8457 = vsel %vm4124, %v4031, 0
    %v8460 = vsel %vm4124, %v4032, 0
    %v8463 = vsel %vm4124, %v4033, 0
    %v8466 = vsel %vm4124, %v4034, 0
    %v8469 = vsel %vm4124, %v4035, 0
    %v8472 = vsel %vm4124, %v4036, 0
    %v8475 = vsel %vm4124, %v4037, 0
    %v8478 = vsel %vm4124, %v4038, 0
    %v8481 = vsel %vm4124, %v4039, 0
    %v8484 = vsel %vm4124, %v4040, 0
    %v8487 = vsel %vm4124, %v4041, 0
    %v8490 = vsel %vm4124, %v4042, 0
    %8492 = vmatprep.subr.mxu0 0.0
    %8493 = vmatpush1.msra.mxu0 %v8436
    %8494 = vmatprep.subr.mxu0 0.0
    %8495 = vmatpush1.msra.mxu0 %v8437
    %8496 = vmatprep.subr.mxu0 0.0
    %8497 = vmatpush1.msra.mxu0 %v8438
    %8498 = vmatprep.subr.mxu0 0.0
    %8499 = vmatpush1.msra.mxu0 %v8439
    %8500 = vmatprep.subr.mxu0 0.0
    %8501 = vmatpush1.msra.mxu0 %v8440
    %8502 = vmatprep.subr.mxu0 0.0
    %8503 = vmatpush1.msra.mxu0 %v8441
    %8504 = vmatprep.subr.mxu0 0.0
    %8505 = vmatpush1.msra.mxu0 %v8442
    %8506 = vmatprep.subr.mxu0 0.0
    %8507 = vmatpush1.msra.mxu0 %v8443
    %8508 = vmatprep.subr.mxu0 0.0
    %8509 = vmatpush1.msra.mxu0 0.0
    %8510 = vmatprep.subr.mxu0 0.0
    %8511 = vmatpush1.msra.mxu0 0.0
    %8512 = vmatprep.subr.mxu0 0.0
    %8513 = vmatpush1.msra.mxu0 0.0
    %8514 = vmatprep.subr.mxu0 0.0
    %8515 = vmatpush1.msra.mxu0 0.0
    %8516 = vmatprep.subr.mxu0 0.0
    %8517 = vmatpush1.msra.mxu0 0.0
    %8518 = vmatprep.subr.mxu0 0.0
    %8519 = vmatpush1.msra.mxu0 0.0
    %8520 = vmatprep.subr.mxu0 0.0
    %8521 = vmatpush1.msra.mxu0 0.0
    %8522 = vmatprep.subr.mxu0 0.0
    %8523 = vmatpush1.msra.mxu0 0.0
    %8524 = vmatprep.subr.mxu0 0.0
    %8525 = vmatpush1.msra.mxu0 0.0
    %8526 = vmatprep.subr.mxu0 0.0
    %8527 = vmatpush1.msra.mxu0 0.0
    %8528 = vmatprep.subr.mxu0 0.0
    %8529 = vmatpush1.msra.mxu0 0.0
    %8530 = vmatprep.subr.mxu0 0.0
    %8531 = vmatpush1.msra.mxu0 0.0
    %8532 = vmatprep.subr.mxu0 0.0
    %8533 = vmatpush1.msra.mxu0 0.0
    %8534 = vmatprep.subr.mxu0 0.0
    %8535 = vmatpush1.msra.mxu0 0.0
    %8536 = vmatprep.subr.mxu0 0.0
    %8537 = vmatpush1.msra.mxu0 0.0
    %8538 = vmatprep.subr.mxu0 0.0
    %8539 = vmatpush1.msra.mxu0 0.0
    %8540 = vmatprep.subr.mxu0 0.0
    %8541 = vmatpush1.msra.mxu0 0.0
    %8542 = vmatprep.subr.mxu0 0.0
    %8543 = vmatpush1.msra.mxu0 0.0
    %8544 = vmatprep.subr.mxu0 0.0
    %8545 = vmatpush1.msra.mxu0 0.0
    %8546 = vmatprep.subr.mxu0 0.0
    %8547 = vmatpush1.msra.mxu0 0.0
    %8548 = vmatprep.subr.mxu0 0.0
    %8549 = vmatpush1.msra.mxu0 0.0
    %8550 = vmatprep.subr.mxu0 0.0
    %8551 = vmatpush1.msra.mxu0 0.0
    %8552 = vmatprep.subr.mxu0 0.0
    %8553 = vmatpush1.msra.mxu0 0.0
    %8554 = vmatprep.subr.mxu0 0.0
    %8555 = vmatpush1.msra.mxu0 0.0
    %8556 = vmatprep.mubr.f32.mxu0 0.0
    %8557 = vmatmul.mubr.f32.gmra.mrb[0].mxu0 %v8445
    %v8558 = vpop.f32.mrb[0].mxu0
    %v8559 = vadd.f32 0.0, %v8558
    %v8560 = vpop.f32.mrb[0].mxu0
    %8561 = vmatprep.mubr.f32.mxu0 0.0
    %8562 = vmatmul.mubr.f32.gmra.mrb[0].mxu0 %v8448
    %v8563 = vpop.f32.mrb[0].mxu0
    %v8564 = vadd.f32 0.0, %v8563
    %v8565 = vpop.f32.mrb[0].mxu0
    %8566 = vmatprep.mubr.f32.mxu0 0.0
    %8567 = vmatmul.mubr.f32.gmra.mrb[0].mxu0 %v8451
    %v8568 = vpop.f32.mrb[0].mxu0
    %v8569 = vadd.f32 0.0, %v8568
    %v8570 = vpop.f32.mrb[0].mxu0
    %8571 = vmatprep.mubr.f32.mxu0 0.0
    %8572 = vmatmul.mubr.f32.gmra.mrb[0].mxu0 %v8454
    %v8573 = vpop.f32.mrb[0].mxu0
    %v8574 = vadd.f32 0.0, %v8573
    %v8575 = vpop.f32.mrb[0].mxu0
    %8576 = vmatprep.mubr.f32.mxu0 0.0
    %8577 = vmatmul.mubr.f32.gmra.mrb[0].mxu0 %v8457
    %v8578 = vpop.f32.mrb[0].mxu0
    %v8579 = vadd.f32 0.0, %v8578
    %v8580 = vpop.f32.mrb[0].mxu0
    %8581 = vmatprep.mubr.f32.mxu0 0.0
    %8582 = vmatmul.mubr.f32.gmra.mrb[0].mxu0 %v8460
    %v8583 = vpop.f32.mrb[0].mxu0
    %v8584 = vadd.f32 0.0, %v8583
    %v8585 = vpop.f32.mrb[0].mxu0
    %8586 = vmatprep.mubr.f32.mxu0 0.0
    %8587 = vmatmul.mubr.f32.gmra.mrb[0].mxu0 %v8463
    %v8588 = vpop.f32.mrb[0].mxu0
    %v8589 = vadd.f32 0.0, %v8588
    %v8590 = vpop.f32.mrb[0].mxu0
    %8591 = vmatprep.mubr.f32.mxu0 0.0
    %8592 = vmatmul.mubr.f32.gmra.mrb[0].mxu0 %v8466
    %v8593 = vpop.f32.mrb[0].mxu0
    %v8594 = vadd.f32 0.0, %v8593
    %v8595 = vpop.f32.mrb[0].mxu0
    %8596 = vmatprep.mubr.f32.mxu0 0.0
    %8597 = vmatmul.mubr.f32.gmra.mrb[0].mxu0 %v8469
    %v8598 = vpop.f32.mrb[0].mxu0
    %v8599 = vadd.f32 0.0, %v8598
    %v8600 = vpop.f32.mrb[0].mxu0
    %8601 = vmatprep.mubr.f32.mxu0 0.0
    %8602 = vmatmul.mubr.f32.gmra.mrb[0].mxu0 %v8472
    %v8603 = vpop.f32.mrb[0].mxu0
    %v8604 = vadd.f32 0.0, %v8603
    %v8605 = vpop.f32.mrb[0].mxu0
    %8606 = vmatprep.mubr.f32.mxu0 0.0
    %8607 = vmatmul.mubr.f32.gmra.mrb[0].mxu0 %v8475
    %v8608 = vpop.f32.mrb[0].mxu0
    %v8609 = vadd.f32 0.0, %v8608
    %v8610 = vpop.f32.mrb[0].mxu0
    %8611 = vmatprep.mubr.f32.mxu0 0.0
    %8612 = vmatmul.mubr.f32.gmra.mrb[0].mxu0 %v8478
    %v8613 = vpop.f32.mrb[0].mxu0
    %v8614 = vadd.f32 0.0, %v8613
    %v8615 = vpop.f32.mrb[0].mxu0
    %8616 = vmatprep.mubr.f32.mxu0 0.0
    %8617 = vmatmul.mubr.f32.gmra.mrb[0].mxu0 %v8481
    %v8618 = vpop.f32.mrb[0].mxu0
    %v8619 = vadd.f32 0.0, %v8618
    %v8620 = vpop.f32.mrb[0].mxu0
    %8621 = vmatprep.mubr.f32.mxu0 0.0
    %8622 = vmatmul.mubr.f32.gmra.mrb[0].mxu0 %v8484
    %v8623 = vpop.f32.mrb[0].mxu0
    %v8624 = vadd.f32 0.0, %v8623
    %v8625 = vpop.f32.mrb[0].mxu0
    %8626 = vmatprep.mubr.f32.mxu0 0.0
    %8627 = vmatmul.mubr.f32.gmra.mrb[0].mxu0 %v8487
    %v8628 = vpop.f32.mrb[0].mxu0
    %v8629 = vadd.f32 0.0, %v8628
    %v8630 = vpop.f32.mrb[0].mxu0
    %8631 = vmatprep.mubr.f32.mxu0 0.0
    %8632 = vmatmul.mubr.f32.gmra.mrb[0].mxu0 %v8490
    %v8633 = vpop.f32.mrb[0].mxu0
    %v8634 = vadd.f32 0.0, %v8633
    %v8635 = vpop.f32.mrb[0].mxu0
    %8636 = vdwg.mxu0
    %v8637 = vadd.f32 %v8419, %v8559
    %v8638 = vadd.f32 %v8420, %v8564
    %v8639 = vadd.f32 %v8421, %v8569
    %v8640 = vadd.f32 %v8422, %v8574
    %v8641 = vadd.f32 %v8423, %v8579
    %v8642 = vadd.f32 %v8424, %v8584
    %v8643 = vadd.f32 %v8425, %v8589
    %v8644 = vadd.f32 %v8426, %v8594
    %v8645 = vadd.f32 %v8427, %v8599
    %v8646 = vadd.f32 %v8428, %v8604
    %v8647 = vadd.f32 %v8429, %v8609
    %v8648 = vadd.f32 %v8430, %v8614
    %v8649 = vadd.f32 %v8431, %v8619
    %v8650 = vadd.f32 %v8432, %v8624
    %v8651 = vadd.f32 %v8433, %v8629
    %v8652 = vadd.f32 %v8434, %v8634
    %s8653 = scalar_lea.vmem %s4, 1344
    %v8654 = vld [vmem:[%s8653] sm:$0xff]
    %v8655 = vld [vmem:[%s8653 + $0x8] sm:$0xff]
    %v8656 = vld [vmem:[%s8653 + $0x10] sm:$0xff]
    %v8657 = vld [vmem:[%s8653 + $0x18] sm:$0xff]
    %v8658 = vld [vmem:[%s8653 + $0x20] sm:$0xff]
    %v8659 = vld [vmem:[%s8653 + $0x28] sm:$0xff]
    %v8660 = vld [vmem:[%s8653 + $0x30] sm:$0xff]
    %v8661 = vld [vmem:[%s8653 + $0x38] sm:$0xff]
    %v8663 = vsel %vm4124, %v4043, 0
    %v8666 = vsel %vm4124, %v4044, 0
    %v8669 = vsel %vm4124, %v4045, 0
    %v8672 = vsel %vm4124, %v4046, 0
    %v8675 = vsel %vm4124, %v4047, 0
    %v8678 = vsel %vm4124, %v4048, 0
    %v8681 = vsel %vm4124, %v4049, 0
    %v8684 = vsel %vm4124, %v4050, 0
    %v8687 = vsel %vm4124, %v4051, 0
    %v8690 = vsel %vm4124, %v4052, 0
    %v8693 = vsel %vm4124, %v4053, 0
    %v8696 = vsel %vm4124, %v4054, 0
    %v8699 = vsel %vm4124, %v4055, 0
    %v8702 = vsel %vm4124, %v4056, 0
    %v8705 = vsel %vm4124, %v4057, 0
    %v8708 = vsel %vm4124, %v4058, 0
    %8710 = vmatprep.subr.mxu0 0.0
    %8711 = vmatpush1.msra.mxu0 %v8654
    %8712 = vmatprep.subr.mxu0 0.0
    %8713 = vmatpush1.msra.mxu0 %v8655
    %8714 = vmatprep.subr.mxu0 0.0
    %8715 = vmatpush1.msra.mxu0 %v8656
    %8716 = vmatprep.subr.mxu0 0.0
    %8717 = vmatpush1.msra.mxu0 %v8657
    %8718 = vmatprep.subr.mxu0 0.0
    %8719 = vmatpush1.msra.mxu0 %v8658
    %8720 = vmatprep.subr.mxu0 0.0
    %8721 = vmatpush1.msra.mxu0 %v8659
    %8722 = vmatprep.subr.mxu0 0.0
    %8723 = vmatpush1.msra.mxu0 %v8660
    %8724 = vmatprep.subr.mxu0 0.0
    %8725 = vmatpush1.msra.mxu0 %v8661
    %8726 = vmatprep.subr.mxu0 0.0
    %8727 = vmatpush1.msra.mxu0 0.0
    %8728 = vmatprep.subr.mxu0 0.0
    %8729 = vmatpush1.msra.mxu0 0.0
    %8730 = vmatprep.subr.mxu0 0.0
    %8731 = vmatpush1.msra.mxu0 0.0
    %8732 = vmatprep.subr.mxu0 0.0
    %8733 = vmatpush1.msra.mxu0 0.0
    %8734 = vmatprep.subr.mxu0 0.0
    %8735 = vmatpush1.msra.mxu0 0.0
    %8736 = vmatprep.subr.mxu0 0.0
    %8737 = vmatpush1.msra.mxu0 0.0
    %8738 = vmatprep.subr.mxu0 0.0
    %8739 = vmatpush1.msra.mxu0 0.0
    %8740 = vmatprep.subr.mxu0 0.0
    %8741 = vmatpush1.msra.mxu0 0.0
    %8742 = vmatprep.subr.mxu0 0.0
    %8743 = vmatpush1.msra.mxu0 0.0
    %8744 = vmatprep.subr.mxu0 0.0
    %8745 = vmatpush1.msra.mxu0 0.0
    %8746 = vmatprep.subr.mxu0 0.0
    %8747 = vmatpush1.msra.mxu0 0.0
    %8748 = vmatprep.subr.mxu0 0.0
    %8749 = vmatpush1.msra.mxu0 0.0
    %8750 = vmatprep.subr.mxu0 0.0
    %8751 = vmatpush1.msra.mxu0 0.0
    %8752 = vmatprep.subr.mxu0 0.0
    %8753 = vmatpush1.msra.mxu0 0.0
    %8754 = vmatprep.subr.mxu0 0.0
    %8755 = vmatpush1.msra.mxu0 0.0
    %8756 = vmatprep.subr.mxu0 0.0
    %8757 = vmatpush1.msra.mxu0 0.0
    %8758 = vmatprep.subr.mxu0 0.0
    %8759 = vmatpush1.msra.mxu0 0.0
    %8760 = vmatprep.subr.mxu0 0.0
    %8761 = vmatpush1.msra.mxu0 0.0
    %8762 = vmatprep.subr.mxu0 0.0
    %8763 = vmatpush1.msra.mxu0 0.0
    %8764 = vmatprep.subr.mxu0 0.0
    %8765 = vmatpush1.msra.mxu0 0.0
    %8766 = vmatprep.subr.mxu0 0.0
    %8767 = vmatpush1.msra.mxu0 0.0
    %8768 = vmatprep.subr.mxu0 0.0
    %8769 = vmatpush1.msra.mxu0 0.0
    %8770 = vmatprep.subr.mxu0 0.0
    %8771 = vmatpush1.msra.mxu0 0.0
    %8772 = vmatprep.subr.mxu0 0.0
    %8773 = vmatpush1.msra.mxu0 0.0
    %8774 = vmatprep.mubr.f32.mxu0 0.0
    %8775 = vmatmul.mubr.f32.gmra.mrb[0].mxu0 %v8663
    %v8776 = vpop.f32.mrb[0].mxu0
    %v8777 = vadd.f32 0.0, %v8776
    %v8778 = vpop.f32.mrb[0].mxu0
    %8779 = vmatprep.mubr.f32.mxu0 0.0
    %8780 = vmatmul.mubr.f32.gmra.mrb[0].mxu0 %v8666
    %v8781 = vpop.f32.mrb[0].mxu0
    %v8782 = vadd.f32 0.0, %v8781
    %v8783 = vpop.f32.mrb[0].mxu0
    %8784 = vmatprep.mubr.f32.mxu0 0.0
    %8785 = vmatmul.mubr.f32.gmra.mrb[0].mxu0 %v8669
    %v8786 = vpop.f32.mrb[0].mxu0
    %v8787 = vadd.f32 0.0, %v8786
    %v8788 = vpop.f32.mrb[0].mxu0
    %8789 = vmatprep.mubr.f32.mxu0 0.0
    %8790 = vmatmul.mubr.f32.gmra.mrb[0].mxu0 %v8672
    %v8791 = vpop.f32.mrb[0].mxu0
    %v8792 = vadd.f32 0.0, %v8791
    %v8793 = vpop.f32.mrb[0].mxu0
    %8794 = vmatprep.mubr.f32.mxu0 0.0
    %8795 = vmatmul.mubr.f32.gmra.mrb[0].mxu0 %v8675
    %v8796 = vpop.f32.mrb[0].mxu0
    %v8797 = vadd.f32 0.0, %v8796
    %v8798 = vpop.f32.mrb[0].mxu0
    %8799 = vmatprep.mubr.f32.mxu0 0.0
    %8800 = vmatmul.mubr.f32.gmra.mrb[0].mxu0 %v8678
    %v8801 = vpop.f32.mrb[0].mxu0
    %v8802 = vadd.f32 0.0, %v8801
    %v8803 = vpop.f32.mrb[0].mxu0
    %8804 = vmatprep.mubr.f32.mxu0 0.0
    %8805 = vmatmul.mubr.f32.gmra.mrb[0].mxu0 %v8681
    %v8806 = vpop.f32.mrb[0].mxu0
    %v8807 = vadd.f32 0.0, %v8806
    %v8808 = vpop.f32.mrb[0].mxu0
    %8809 = vmatprep.mubr.f32.mxu0 0.0
    %8810 = vmatmul.mubr.f32.gmra.mrb[0].mxu0 %v8684
    %v8811 = vpop.f32.mrb[0].mxu0
    %v8812 = vadd.f32 0.0, %v8811
    %v8813 = vpop.f32.mrb[0].mxu0
    %8814 = vmatprep.mubr.f32.mxu0 0.0
    %8815 = vmatmul.mubr.f32.gmra.mrb[0].mxu0 %v8687
    %v8816 = vpop.f32.mrb[0].mxu0
    %v8817 = vadd.f32 0.0, %v8816
    %v8818 = vpop.f32.mrb[0].mxu0
    %8819 = vmatprep.mubr.f32.mxu0 0.0
    %8820 = vmatmul.mubr.f32.gmra.mrb[0].mxu0 %v8690
    %v8821 = vpop.f32.mrb[0].mxu0
    %v8822 = vadd.f32 0.0, %v8821
    %v8823 = vpop.f32.mrb[0].mxu0
    %8824 = vmatprep.mubr.f32.mxu0 0.0
    %8825 = vmatmul.mubr.f32.gmra.mrb[0].mxu0 %v8693
    %v8826 = vpop.f32.mrb[0].mxu0
    %v8827 = vadd.f32 0.0, %v8826
    %v8828 = vpop.f32.mrb[0].mxu0
    %8829 = vmatprep.mubr.f32.mxu0 0.0
    %8830 = vmatmul.mubr.f32.gmra.mrb[0].mxu0 %v8696
    %v8831 = vpop.f32.mrb[0].mxu0
    %v8832 = vadd.f32 0.0, %v8831
    %v8833 = vpop.f32.mrb[0].mxu0
    %8834 = vmatprep.mubr.f32.mxu0 0.0
    %8835 = vmatmul.mubr.f32.gmra.mrb[0].mxu0 %v8699
    %v8836 = vpop.f32.mrb[0].mxu0
    %v8837 = vadd.f32 0.0, %v8836
    %v8838 = vpop.f32.mrb[0].mxu0
    %8839 = vmatprep.mubr.f32.mxu0 0.0
    %8840 = vmatmul.mubr.f32.gmra.mrb[0].mxu0 %v8702
    %v8841 = vpop.f32.mrb[0].mxu0
    %v8842 = vadd.f32 0.0, %v8841
    %v8843 = vpop.f32.mrb[0].mxu0
    %8844 = vmatprep.mubr.f32.mxu0 0.0
    %8845 = vmatmul.mubr.f32.gmra.mrb[0].mxu0 %v8705
    %v8846 = vpop.f32.mrb[0].mxu0
    %v8847 = vadd.f32 0.0, %v8846
    %v8848 = vpop.f32.mrb[0].mxu0
    %8849 = vmatprep.mubr.f32.mxu0 0.0
    %8850 = vmatmul.mubr.f32.gmra.mrb[0].mxu0 %v8708
    %v8851 = vpop.f32.mrb[0].mxu0
    %v8852 = vadd.f32 0.0, %v8851
    %v8853 = vpop.f32.mrb[0].mxu0
    %8854 = vdwg.mxu0
    %v8855 = vadd.f32 %v8637, %v8777
    %v8856 = vadd.f32 %v8638, %v8782
    %v8857 = vadd.f32 %v8639, %v8787
    %v8858 = vadd.f32 %v8640, %v8792
    %v8859 = vadd.f32 %v8641, %v8797
    %v8860 = vadd.f32 %v8642, %v8802
    %v8861 = vadd.f32 %v8643, %v8807
    %v8862 = vadd.f32 %v8644, %v8812
    %v8863 = vadd.f32 %v8645, %v8817
    %v8864 = vadd.f32 %v8646, %v8822
    %v8865 = vadd.f32 %v8647, %v8827
    %v8866 = vadd.f32 %v8648, %v8832
    %v8867 = vadd.f32 %v8649, %v8837
    %v8868 = vadd.f32 %v8650, %v8842
    %v8869 = vadd.f32 %v8651, %v8847
    %v8870 = vadd.f32 %v8652, %v8852
    %s8871 = scalar_lea.vmem %s4, 1408
    %v8872 = vld [vmem:[%s8871] sm:$0xff]
    %v8873 = vld [vmem:[%s8871 + $0x8] sm:$0xff]
    %v8874 = vld [vmem:[%s8871 + $0x10] sm:$0xff]
    %v8875 = vld [vmem:[%s8871 + $0x18] sm:$0xff]
    %v8876 = vld [vmem:[%s8871 + $0x20] sm:$0xff]
    %v8877 = vld [vmem:[%s8871 + $0x28] sm:$0xff]
    %v8878 = vld [vmem:[%s8871 + $0x30] sm:$0xff]
    %v8879 = vld [vmem:[%s8871 + $0x38] sm:$0xff]
    %v8881 = vsel %vm4124, %v4059, 0
    %v8884 = vsel %vm4124, %v4060, 0
    %v8887 = vsel %vm4124, %v4061, 0
    %v8890 = vsel %vm4124, %v4062, 0
    %v8893 = vsel %vm4124, %v4063, 0
    %v8896 = vsel %vm4124, %v4064, 0
    %v8899 = vsel %vm4124, %v4065, 0
    %v8902 = vsel %vm4124, %v4066, 0
    %v8905 = vsel %vm4124, %v4067, 0
    %v8908 = vsel %vm4124, %v4068, 0
    %v8911 = vsel %vm4124, %v4069, 0
    %v8914 = vsel %vm4124, %v4070, 0
    %v8917 = vsel %vm4124, %v4071, 0
    %v8920 = vsel %vm4124, %v4072, 0
    %v8923 = vsel %vm4124, %v4073, 0
    %v8926 = vsel %vm4124, %v4074, 0
    %8928 = vmatprep.subr.mxu0 0.0
    %8929 = vmatpush1.msra.mxu0 %v8872
    %8930 = vmatprep.subr.mxu0 0.0
    %8931 = vmatpush1.msra.mxu0 %v8873
    %8932 = vmatprep.subr.mxu0 0.0
    %8933 = vmatpush1.msra.mxu0 %v8874
    %8934 = vmatprep.subr.mxu0 0.0
    %8935 = vmatpush1.msra.mxu0 %v8875
    %8936 = vmatprep.subr.mxu0 0.0
    %8937 = vmatpush1.msra.mxu0 %v8876
    %8938 = vmatprep.subr.mxu0 0.0
    %8939 = vmatpush1.msra.mxu0 %v8877
    %8940 = vmatprep.subr.mxu0 0.0
    %8941 = vmatpush1.msra.mxu0 %v8878
    %8942 = vmatprep.subr.mxu0 0.0
    %8943 = vmatpush1.msra.mxu0 %v8879
    %8944 = vmatprep.subr.mxu0 0.0
    %8945 = vmatpush1.msra.mxu0 0.0
    %8946 = vmatprep.subr.mxu0 0.0
    %8947 = vmatpush1.msra.mxu0 0.0
    %8948 = vmatprep.subr.mxu0 0.0
    %8949 = vmatpush1.msra.mxu0 0.0
    %8950 = vmatprep.subr.mxu0 0.0
    %8951 = vmatpush1.msra.mxu0 0.0
    %8952 = vmatprep.subr.mxu0 0.0
    %8953 = vmatpush1.msra.mxu0 0.0
    %8954 = vmatprep.subr.mxu0 0.0
    %8955 = vmatpush1.msra.mxu0 0.0
    %8956 = vmatprep.subr.mxu0 0.0
    %8957 = vmatpush1.msra.mxu0 0.0
    %8958 = vmatprep.subr.mxu0 0.0
    %8959 = vmatpush1.msra.mxu0 0.0
    %8960 = vmatprep.subr.mxu0 0.0
    %8961 = vmatpush1.msra.mxu0 0.0
    %8962 = vmatprep.subr.mxu0 0.0
    %8963 = vmatpush1.msra.mxu0 0.0
    %8964 = vmatprep.subr.mxu0 0.0
    %8965 = vmatpush1.msra.mxu0 0.0
    %8966 = vmatprep.subr.mxu0 0.0
    %8967 = vmatpush1.msra.mxu0 0.0
    %8968 = vmatprep.subr.mxu0 0.0
    %8969 = vmatpush1.msra.mxu0 0.0
    %8970 = vmatprep.subr.mxu0 0.0
    %8971 = vmatpush1.msra.mxu0 0.0
    %8972 = vmatprep.subr.mxu0 0.0
    %8973 = vmatpush1.msra.mxu0 0.0
    %8974 = vmatprep.subr.mxu0 0.0
    %8975 = vmatpush1.msra.mxu0 0.0
    %8976 = vmatprep.subr.mxu0 0.0
    %8977 = vmatpush1.msra.mxu0 0.0
    %8978 = vmatprep.subr.mxu0 0.0
    %8979 = vmatpush1.msra.mxu0 0.0
    %8980 = vmatprep.subr.mxu0 0.0
    %8981 = vmatpush1.msra.mxu0 0.0
    %8982 = vmatprep.subr.mxu0 0.0
    %8983 = vmatpush1.msra.mxu0 0.0
    %8984 = vmatprep.subr.mxu0 0.0
    %8985 = vmatpush1.msra.mxu0 0.0
    %8986 = vmatprep.subr.mxu0 0.0
    %8987 = vmatpush1.msra.mxu0 0.0
    %8988 = vmatprep.subr.mxu0 0.0
    %8989 = vmatpush1.msra.mxu0 0.0
    %8990 = vmatprep.subr.mxu0 0.0
    %8991 = vmatpush1.msra.mxu0 0.0
    %8992 = vmatprep.mubr.f32.mxu0 0.0
    %8993 = vmatmul.mubr.f32.gmra.mrb[0].mxu0 %v8881
    %v8994 = vpop.f32.mrb[0].mxu0
    %v8995 = vadd.f32 0.0, %v8994
    %v8996 = vpop.f32.mrb[0].mxu0
    %8997 = vmatprep.mubr.f32.mxu0 0.0
    %8998 = vmatmul.mubr.f32.gmra.mrb[0].mxu0 %v8884
    %v8999 = vpop.f32.mrb[0].mxu0
    %v9000 = vadd.f32 0.0, %v8999
    %v9001 = vpop.f32.mrb[0].mxu0
    %9002 = vmatprep.mubr.f32.mxu0 0.0
    %9003 = vmatmul.mubr.f32.gmra.mrb[0].mxu0 %v8887
    %v9004 = vpop.f32.mrb[0].mxu0
    %v9005 = vadd.f32 0.0, %v9004
    %v9006 = vpop.f32.mrb[0].mxu0
    %9007 = vmatprep.mubr.f32.mxu0 0.0
    %9008 = vmatmul.mubr.f32.gmra.mrb[0].mxu0 %v8890
    %v9009 = vpop.f32.mrb[0].mxu0
    %v9010 = vadd.f32 0.0, %v9009
    %v9011 = vpop.f32.mrb[0].mxu0
    %9012 = vmatprep.mubr.f32.mxu0 0.0
    %9013 = vmatmul.mubr.f32.gmra.mrb[0].mxu0 %v8893
    %v9014 = vpop.f32.mrb[0].mxu0
    %v9015 = vadd.f32 0.0, %v9014
    %v9016 = vpop.f32.mrb[0].mxu0
    %9017 = vmatprep.mubr.f32.mxu0 0.0
    %9018 = vmatmul.mubr.f32.gmra.mrb[0].mxu0 %v8896
    %v9019 = vpop.f32.mrb[0].mxu0
    %v9020 = vadd.f32 0.0, %v9019
    %v9021 = vpop.f32.mrb[0].mxu0
    %9022 = vmatprep.mubr.f32.mxu0 0.0
    %9023 = vmatmul.mubr.f32.gmra.mrb[0].mxu0 %v8899
    %v9024 = vpop.f32.mrb[0].mxu0
    %v9025 = vadd.f32 0.0, %v9024
    %v9026 = vpop.f32.mrb[0].mxu0
    %9027 = vmatprep.mubr.f32.mxu0 0.0
    %9028 = vmatmul.mubr.f32.gmra.mrb[0].mxu0 %v8902
    %v9029 = vpop.f32.mrb[0].mxu0
    %v9030 = vadd.f32 0.0, %v9029
    %v9031 = vpop.f32.mrb[0].mxu0
    %9032 = vmatprep.mubr.f32.mxu0 0.0
    %9033 = vmatmul.mubr.f32.gmra.mrb[0].mxu0 %v8905
    %v9034 = vpop.f32.mrb[0].mxu0
    %v9035 = vadd.f32 0.0, %v9034
    %v9036 = vpop.f32.mrb[0].mxu0
    %9037 = vmatprep.mubr.f32.mxu0 0.0
    %9038 = vmatmul.mubr.f32.gmra.mrb[0].mxu0 %v8908
    %v9039 = vpop.f32.mrb[0].mxu0
    %v9040 = vadd.f32 0.0, %v9039
    %v9041 = vpop.f32.mrb[0].mxu0
    %9042 = vmatprep.mubr.f32.mxu0 0.0
    %9043 = vmatmul.mubr.f32.gmra.mrb[0].mxu0 %v8911
    %v9044 = vpop.f32.mrb[0].mxu0
    %v9045 = vadd.f32 0.0, %v9044
    %v9046 = vpop.f32.mrb[0].mxu0
    %9047 = vmatprep.mubr.f32.mxu0 0.0
    %9048 = vmatmul.mubr.f32.gmra.mrb[0].mxu0 %v8914
    %v9049 = vpop.f32.mrb[0].mxu0
    %v9050 = vadd.f32 0.0, %v9049
    %v9051 = vpop.f32.mrb[0].mxu0
    %9052 = vmatprep.mubr.f32.mxu0 0.0
    %9053 = vmatmul.mubr.f32.gmra.mrb[0].mxu0 %v8917
    %v9054 = vpop.f32.mrb[0].mxu0
    %v9055 = vadd.f32 0.0, %v9054
    %v9056 = vpop.f32.mrb[0].mxu0
    %9057 = vmatprep.mubr.f32.mxu0 0.0
    %9058 = vmatmul.mubr.f32.gmra.mrb[0].mxu0 %v8920
    %v9059 = vpop.f32.mrb[0].mxu0
    %v9060 = vadd.f32 0.0, %v9059
    %v9061 = vpop.f32.mrb[0].mxu0
    %9062 = vmatprep.mubr.f32.mxu0 0.0
    %9063 = vmatmul.mubr.f32.gmra.mrb[0].mxu0 %v8923
    %v9064 = vpop.f32.mrb[0].mxu0
    %v9065 = vadd.f32 0.0, %v9064
    %v9066 = vpop.f32.mrb[0].mxu0
    %9067 = vmatprep.mubr.f32.mxu0 0.0
    %9068 = vmatmul.mubr.f32.gmra.mrb[0].mxu0 %v8926
    %v9069 = vpop.f32.mrb[0].mxu0
    %v9070 = vadd.f32 0.0, %v9069
    %v9071 = vpop.f32.mrb[0].mxu0
    %9072 = vdwg.mxu0
    %v9073 = vadd.f32 %v8855, %v8995
    %v9074 = vadd.f32 %v8856, %v9000
    %v9075 = vadd.f32 %v8857, %v9005
    %v9076 = vadd.f32 %v8858, %v9010
    %v9077 = vadd.f32 %v8859, %v9015
    %v9078 = vadd.f32 %v8860, %v9020
    %v9079 = vadd.f32 %v8861, %v9025
    %v9080 = vadd.f32 %v8862, %v9030
    %v9081 = vadd.f32 %v8863, %v9035
    %v9082 = vadd.f32 %v8864, %v9040
    %v9083 = vadd.f32 %v8865, %v9045
    %v9084 = vadd.f32 %v8866, %v9050
    %v9085 = vadd.f32 %v8867, %v9055
    %v9086 = vadd.f32 %v8868, %v9060
    %v9087 = vadd.f32 %v8869, %v9065
    %v9088 = vadd.f32 %v8870, %v9070
    %s9089 = scalar_lea.vmem %s4, 1472
    %v9090 = vld [vmem:[%s9089] sm:$0xff]
    %v9091 = vld [vmem:[%s9089 + $0x8] sm:$0xff]
    %v9092 = vld [vmem:[%s9089 + $0x10] sm:$0xff]
    %v9093 = vld [vmem:[%s9089 + $0x18] sm:$0xff]
    %v9094 = vld [vmem:[%s9089 + $0x20] sm:$0xff]
    %v9095 = vld [vmem:[%s9089 + $0x28] sm:$0xff]
    %v9096 = vld [vmem:[%s9089 + $0x30] sm:$0xff]
    %v9097 = vld [vmem:[%s9089 + $0x38] sm:$0xff]
    %v9099 = vsel %vm4124, %v4075, 0
    %v9102 = vsel %vm4124, %v4076, 0
    %v9105 = vsel %vm4124, %v4077, 0
    %v9108 = vsel %vm4124, %v4078, 0
    %v9111 = vsel %vm4124, %v4079, 0
    %v9114 = vsel %vm4124, %v4080, 0
    %v9117 = vsel %vm4124, %v4081, 0
    %v9120 = vsel %vm4124, %v4082, 0
    %v9123 = vsel %vm4124, %v4083, 0
    %v9126 = vsel %vm4124, %v4084, 0
    %v9129 = vsel %vm4124, %v4085, 0
    %v9132 = vsel %vm4124, %v4086, 0
    %v9135 = vsel %vm4124, %v4087, 0
    %v9138 = vsel %vm4124, %v4088, 0
    %v9141 = vsel %vm4124, %v4089, 0
    %v9144 = vsel %vm4124, %v4090, 0
    %9146 = vmatprep.subr.mxu0 0.0
    %9147 = vmatpush1.msra.mxu0 %v9090
    %9148 = vmatprep.subr.mxu0 0.0
    %9149 = vmatpush1.msra.mxu0 %v9091
    %9150 = vmatprep.subr.mxu0 0.0
    %9151 = vmatpush1.msra.mxu0 %v9092
    %9152 = vmatprep.subr.mxu0 0.0
    %9153 = vmatpush1.msra.mxu0 %v9093
    %9154 = vmatprep.subr.mxu0 0.0
    %9155 = vmatpush1.msra.mxu0 %v9094
    %9156 = vmatprep.subr.mxu0 0.0
    %9157 = vmatpush1.msra.mxu0 %v9095
    %9158 = vmatprep.subr.mxu0 0.0
    %9159 = vmatpush1.msra.mxu0 %v9096
    %9160 = vmatprep.subr.mxu0 0.0
    %9161 = vmatpush1.msra.mxu0 %v9097
    %9162 = vmatprep.subr.mxu0 0.0
    %9163 = vmatpush1.msra.mxu0 0.0
    %9164 = vmatprep.subr.mxu0 0.0
    %9165 = vmatpush1.msra.mxu0 0.0
    %9166 = vmatprep.subr.mxu0 0.0
    %9167 = vmatpush1.msra.mxu0 0.0
    %9168 = vmatprep.subr.mxu0 0.0
    %9169 = vmatpush1.msra.mxu0 0.0
    %9170 = vmatprep.subr.mxu0 0.0
    %9171 = vmatpush1.msra.mxu0 0.0
    %9172 = vmatprep.subr.mxu0 0.0
    %9173 = vmatpush1.msra.mxu0 0.0
    %9174 = vmatprep.subr.mxu0 0.0
    %9175 = vmatpush1.msra.mxu0 0.0
    %9176 = vmatprep.subr.mxu0 0.0
    %9177 = vmatpush1.msra.mxu0 0.0
    %9178 = vmatprep.subr.mxu0 0.0
    %9179 = vmatpush1.msra.mxu0 0.0
    %9180 = vmatprep.subr.mxu0 0.0
    %9181 = vmatpush1.msra.mxu0 0.0
    %9182 = vmatprep.subr.mxu0 0.0
    %9183 = vmatpush1.msra.mxu0 0.0
    %9184 = vmatprep.subr.mxu0 0.0
    %9185 = vmatpush1.msra.mxu0 0.0
    %9186 = vmatprep.subr.mxu0 0.0
    %9187 = vmatpush1.msra.mxu0 0.0
    %9188 = vmatprep.subr.mxu0 0.0
    %9189 = vmatpush1.msra.mxu0 0.0
    %9190 = vmatprep.subr.mxu0 0.0
    %9191 = vmatpush1.msra.mxu0 0.0
    %9192 = vmatprep.subr.mxu0 0.0
    %9193 = vmatpush1.msra.mxu0 0.0
    %9194 = vmatprep.subr.mxu0 0.0
    %9195 = vmatpush1.msra.mxu0 0.0
    %9196 = vmatprep.subr.mxu0 0.0
    %9197 = vmatpush1.msra.mxu0 0.0
    %9198 = vmatprep.subr.mxu0 0.0
    %9199 = vmatpush1.msra.mxu0 0.0
    %9200 = vmatprep.subr.mxu0 0.0
    %9201 = vmatpush1.msra.mxu0 0.0
    %9202 = vmatprep.subr.mxu0 0.0
    %9203 = vmatpush1.msra.mxu0 0.0
    %9204 = vmatprep.subr.mxu0 0.0
    %9205 = vmatpush1.msra.mxu0 0.0
    %9206 = vmatprep.subr.mxu0 0.0
    %9207 = vmatpush1.msra.mxu0 0.0
    %9208 = vmatprep.subr.mxu0 0.0
    %9209 = vmatpush1.msra.mxu0 0.0
    %9210 = vmatprep.mubr.f32.mxu0 0.0
    %9211 = vmatmul.mubr.f32.gmra.mrb[0].mxu0 %v9099
    %v9212 = vpop.f32.mrb[0].mxu0
    %v9213 = vadd.f32 0.0, %v9212
    %v9214 = vpop.f32.mrb[0].mxu0
    %9215 = vmatprep.mubr.f32.mxu0 0.0
    %9216 = vmatmul.mubr.f32.gmra.mrb[0].mxu0 %v9102
    %v9217 = vpop.f32.mrb[0].mxu0
    %v9218 = vadd.f32 0.0, %v9217
    %v9219 = vpop.f32.mrb[0].mxu0
    %9220 = vmatprep.mubr.f32.mxu0 0.0
    %9221 = vmatmul.mubr.f32.gmra.mrb[0].mxu0 %v9105
    %v9222 = vpop.f32.mrb[0].mxu0
    %v9223 = vadd.f32 0.0, %v9222
    %v9224 = vpop.f32.mrb[0].mxu0
    %9225 = vmatprep.mubr.f32.mxu0 0.0
    %9226 = vmatmul.mubr.f32.gmra.mrb[0].mxu0 %v9108
    %v9227 = vpop.f32.mrb[0].mxu0
    %v9228 = vadd.f32 0.0, %v9227
    %v9229 = vpop.f32.mrb[0].mxu0
    %9230 = vmatprep.mubr.f32.mxu0 0.0
    %9231 = vmatmul.mubr.f32.gmra.mrb[0].mxu0 %v9111
    %v9232 = vpop.f32.mrb[0].mxu0
    %v9233 = vadd.f32 0.0, %v9232
    %v9234 = vpop.f32.mrb[0].mxu0
    %9235 = vmatprep.mubr.f32.mxu0 0.0
    %9236 = vmatmul.mubr.f32.gmra.mrb[0].mxu0 %v9114
    %v9237 = vpop.f32.mrb[0].mxu0
    %v9238 = vadd.f32 0.0, %v9237
    %v9239 = vpop.f32.mrb[0].mxu0
    %9240 = vmatprep.mubr.f32.mxu0 0.0
    %9241 = vmatmul.mubr.f32.gmra.mrb[0].mxu0 %v9117
    %v9242 = vpop.f32.mrb[0].mxu0
    %v9243 = vadd.f32 0.0, %v9242
    %v9244 = vpop.f32.mrb[0].mxu0
    %9245 = vmatprep.mubr.f32.mxu0 0.0
    %9246 = vmatmul.mubr.f32.gmra.mrb[0].mxu0 %v9120
    %v9247 = vpop.f32.mrb[0].mxu0
    %v9248 = vadd.f32 0.0, %v9247
    %v9249 = vpop.f32.mrb[0].mxu0
    %9250 = vmatprep.mubr.f32.mxu0 0.0
    %9251 = vmatmul.mubr.f32.gmra.mrb[0].mxu0 %v9123
    %v9252 = vpop.f32.mrb[0].mxu0
    %v9253 = vadd.f32 0.0, %v9252
    %v9254 = vpop.f32.mrb[0].mxu0
    %9255 = vmatprep.mubr.f32.mxu0 0.0
    %9256 = vmatmul.mubr.f32.gmra.mrb[0].mxu0 %v9126
    %v9257 = vpop.f32.mrb[0].mxu0
    %v9258 = vadd.f32 0.0, %v9257
    %v9259 = vpop.f32.mrb[0].mxu0
    %9260 = vmatprep.mubr.f32.mxu0 0.0
    %9261 = vmatmul.mubr.f32.gmra.mrb[0].mxu0 %v9129
    %v9262 = vpop.f32.mrb[0].mxu0
    %v9263 = vadd.f32 0.0, %v9262
    %v9264 = vpop.f32.mrb[0].mxu0
    %9265 = vmatprep.mubr.f32.mxu0 0.0
    %9266 = vmatmul.mubr.f32.gmra.mrb[0].mxu0 %v9132
    %v9267 = vpop.f32.mrb[0].mxu0
    %v9268 = vadd.f32 0.0, %v9267
    %v9269 = vpop.f32.mrb[0].mxu0
    %9270 = vmatprep.mubr.f32.mxu0 0.0
    %9271 = vmatmul.mubr.f32.gmra.mrb[0].mxu0 %v9135
    %v9272 = vpop.f32.mrb[0].mxu0
    %v9273 = vadd.f32 0.0, %v9272
    %v9274 = vpop.f32.mrb[0].mxu0
    %9275 = vmatprep.mubr.f32.mxu0 0.0
    %9276 = vmatmul.mubr.f32.gmra.mrb[0].mxu0 %v9138
    %v9277 = vpop.f32.mrb[0].mxu0
    %v9278 = vadd.f32 0.0, %v9277
    %v9279 = vpop.f32.mrb[0].mxu0
    %9280 = vmatprep.mubr.f32.mxu0 0.0
    %9281 = vmatmul.mubr.f32.gmra.mrb[0].mxu0 %v9141
    %v9282 = vpop.f32.mrb[0].mxu0
    %v9283 = vadd.f32 0.0, %v9282
    %v9284 = vpop.f32.mrb[0].mxu0
    %9285 = vmatprep.mubr.f32.mxu0 0.0
    %9286 = vmatmul.mubr.f32.gmra.mrb[0].mxu0 %v9144
    %v9287 = vpop.f32.mrb[0].mxu0
    %v9288 = vadd.f32 0.0, %v9287
    %v9289 = vpop.f32.mrb[0].mxu0
    %9290 = vdwg.mxu0
    %v9291 = vadd.f32 %v9073, %v9213
    %v9292 = vadd.f32 %v9074, %v9218
    %v9293 = vadd.f32 %v9075, %v9223
    %v9294 = vadd.f32 %v9076, %v9228
    %v9295 = vadd.f32 %v9077, %v9233
    %v9296 = vadd.f32 %v9078, %v9238
    %v9297 = vadd.f32 %v9079, %v9243
    %v9298 = vadd.f32 %v9080, %v9248
    %v9299 = vadd.f32 %v9081, %v9253
    %v9300 = vadd.f32 %v9082, %v9258
    %v9301 = vadd.f32 %v9083, %v9263
    %v9302 = vadd.f32 %v9084, %v9268
    %v9303 = vadd.f32 %v9085, %v9273
    %v9304 = vadd.f32 %v9086, %v9278
    %v9305 = vadd.f32 %v9087, %v9283
    %v9306 = vadd.f32 %v9088, %v9288
    %s9307 = scalar_lea.vmem %s4, 1536
    %v9308 = vld [vmem:[%s9307] sm:$0xff]
    %v9309 = vld [vmem:[%s9307 + $0x8] sm:$0xff]
    %v9310 = vld [vmem:[%s9307 + $0x10] sm:$0xff]
    %v9311 = vld [vmem:[%s9307 + $0x18] sm:$0xff]
    %v9312 = vld [vmem:[%s9307 + $0x20] sm:$0xff]
    %v9313 = vld [vmem:[%s9307 + $0x28] sm:$0xff]
    %v9314 = vld [vmem:[%s9307 + $0x30] sm:$0xff]
    %v9315 = vld [vmem:[%s9307 + $0x38] sm:$0xff]
    %v9317 = vsel %vm4124, %v4091, 0
    %v9320 = vsel %vm4124, %v4092, 0
    %v9323 = vsel %vm4124, %v4093, 0
    %v9326 = vsel %vm4124, %v4094, 0
    %v9329 = vsel %vm4124, %v4095, 0
    %v9332 = vsel %vm4124, %v4096, 0
    %v9335 = vsel %vm4124, %v4097, 0
    %v9338 = vsel %vm4124, %v4098, 0
    %v9341 = vsel %vm4124, %v4099, 0
    %v9344 = vsel %vm4124, %v4100, 0
    %v9347 = vsel %vm4124, %v4101, 0
    %v9350 = vsel %vm4124, %v4102, 0
    %v9353 = vsel %vm4124, %v4103, 0
    %v9356 = vsel %vm4124, %v4104, 0
    %v9359 = vsel %vm4124, %v4105, 0
    %v9362 = vsel %vm4124, %v4106, 0
    %9364 = vmatprep.subr.mxu0 0.0
    %9365 = vmatpush1.msra.mxu0 %v9308
    %9366 = vmatprep.subr.mxu0 0.0
    %9367 = vmatpush1.msra.mxu0 %v9309
    %9368 = vmatprep.subr.mxu0 0.0
    %9369 = vmatpush1.msra.mxu0 %v9310
    %9370 = vmatprep.subr.mxu0 0.0
    %9371 = vmatpush1.msra.mxu0 %v9311
    %9372 = vmatprep.subr.mxu0 0.0
    %9373 = vmatpush1.msra.mxu0 %v9312
    %9374 = vmatprep.subr.mxu0 0.0
    %9375 = vmatpush1.msra.mxu0 %v9313
    %9376 = vmatprep.subr.mxu0 0.0
    %9377 = vmatpush1.msra.mxu0 %v9314
    %9378 = vmatprep.subr.mxu0 0.0
    %9379 = vmatpush1.msra.mxu0 %v9315
    %9380 = vmatprep.subr.mxu0 0.0
    %9381 = vmatpush1.msra.mxu0 0.0
    %9382 = vmatprep.subr.mxu0 0.0
    %9383 = vmatpush1.msra.mxu0 0.0
    %9384 = vmatprep.subr.mxu0 0.0
    %9385 = vmatpush1.msra.mxu0 0.0
    %9386 = vmatprep.subr.mxu0 0.0
    %9387 = vmatpush1.msra.mxu0 0.0
    %9388 = vmatprep.subr.mxu0 0.0
    %9389 = vmatpush1.msra.mxu0 0.0
    %9390 = vmatprep.subr.mxu0 0.0
    %9391 = vmatpush1.msra.mxu0 0.0
    %9392 = vmatprep.subr.mxu0 0.0
    %9393 = vmatpush1.msra.mxu0 0.0
    %9394 = vmatprep.subr.mxu0 0.0
    %9395 = vmatpush1.msra.mxu0 0.0
    %9396 = vmatprep.subr.mxu0 0.0
    %9397 = vmatpush1.msra.mxu0 0.0
    %9398 = vmatprep.subr.mxu0 0.0
    %9399 = vmatpush1.msra.mxu0 0.0
    %9400 = vmatprep.subr.mxu0 0.0
    %9401 = vmatpush1.msra.mxu0 0.0
    %9402 = vmatprep.subr.mxu0 0.0
    %9403 = vmatpush1.msra.mxu0 0.0
    %9404 = vmatprep.subr.mxu0 0.0
    %9405 = vmatpush1.msra.mxu0 0.0
    %9406 = vmatprep.subr.mxu0 0.0
    %9407 = vmatpush1.msra.mxu0 0.0
    %9408 = vmatprep.subr.mxu0 0.0
    %9409 = vmatpush1.msra.mxu0 0.0
    %9410 = vmatprep.subr.mxu0 0.0
    %9411 = vmatpush1.msra.mxu0 0.0
    %9412 = vmatprep.subr.mxu0 0.0
    %9413 = vmatpush1.msra.mxu0 0.0
    %9414 = vmatprep.subr.mxu0 0.0
    %9415 = vmatpush1.msra.mxu0 0.0
    %9416 = vmatprep.subr.mxu0 0.0
    %9417 = vmatpush1.msra.mxu0 0.0
    %9418 = vmatprep.subr.mxu0 0.0
    %9419 = vmatpush1.msra.mxu0 0.0
    %9420 = vmatprep.subr.mxu0 0.0
    %9421 = vmatpush1.msra.mxu0 0.0
    %9422 = vmatprep.subr.mxu0 0.0
    %9423 = vmatpush1.msra.mxu0 0.0
    %9424 = vmatprep.subr.mxu0 0.0
    %9425 = vmatpush1.msra.mxu0 0.0
    %9426 = vmatprep.subr.mxu0 0.0
    %9427 = vmatpush1.msra.mxu0 0.0
    %9428 = vmatprep.mubr.f32.mxu0 0.0
    %9429 = vmatmul.mubr.f32.gmra.mrb[0].mxu0 %v9317
    %v9430 = vpop.f32.mrb[0].mxu0
    %v9431 = vadd.f32 0.0, %v9430
    %v9432 = vpop.f32.mrb[0].mxu0
    %9433 = vmatprep.mubr.f32.mxu0 0.0
    %9434 = vmatmul.mubr.f32.gmra.mrb[0].mxu0 %v9320
    %v9435 = vpop.f32.mrb[0].mxu0
    %v9436 = vadd.f32 0.0, %v9435
    %v9437 = vpop.f32.mrb[0].mxu0
    %9438 = vmatprep.mubr.f32.mxu0 0.0
    %9439 = vmatmul.mubr.f32.gmra.mrb[0].mxu0 %v9323
    %v9440 = vpop.f32.mrb[0].mxu0
    %v9441 = vadd.f32 0.0, %v9440
    %v9442 = vpop.f32.mrb[0].mxu0
    %9443 = vmatprep.mubr.f32.mxu0 0.0
    %9444 = vmatmul.mubr.f32.gmra.mrb[0].mxu0 %v9326
    %v9445 = vpop.f32.mrb[0].mxu0
    %v9446 = vadd.f32 0.0, %v9445
    %v9447 = vpop.f32.mrb[0].mxu0
    %9448 = vmatprep.mubr.f32.mxu0 0.0
    %9449 = vmatmul.mubr.f32.gmra.mrb[0].mxu0 %v9329
    %v9450 = vpop.f32.mrb[0].mxu0
    %v9451 = vadd.f32 0.0, %v9450
    %v9452 = vpop.f32.mrb[0].mxu0
    %9453 = vmatprep.mubr.f32.mxu0 0.0
    %9454 = vmatmul.mubr.f32.gmra.mrb[0].mxu0 %v9332
    %v9455 = vpop.f32.mrb[0].mxu0
    %v9456 = vadd.f32 0.0, %v9455
    %v9457 = vpop.f32.mrb[0].mxu0
    %9458 = vmatprep.mubr.f32.mxu0 0.0
    %9459 = vmatmul.mubr.f32.gmra.mrb[0].mxu0 %v9335
    %v9460 = vpop.f32.mrb[0].mxu0
    %v9461 = vadd.f32 0.0, %v9460
    %v9462 = vpop.f32.mrb[0].mxu0
    %9463 = vmatprep.mubr.f32.mxu0 0.0
    %9464 = vmatmul.mubr.f32.gmra.mrb[0].mxu0 %v9338
    %v9465 = vpop.f32.mrb[0].mxu0
    %v9466 = vadd.f32 0.0, %v9465
    %v9467 = vpop.f32.mrb[0].mxu0
    %9468 = vmatprep.mubr.f32.mxu0 0.0
    %9469 = vmatmul.mubr.f32.gmra.mrb[0].mxu0 %v9341
    %v9470 = vpop.f32.mrb[0].mxu0
    %v9471 = vadd.f32 0.0, %v9470
    %v9472 = vpop.f32.mrb[0].mxu0
    %9473 = vmatprep.mubr.f32.mxu0 0.0
    %9474 = vmatmul.mubr.f32.gmra.mrb[0].mxu0 %v9344
    %v9475 = vpop.f32.mrb[0].mxu0
    %v9476 = vadd.f32 0.0, %v9475
    %v9477 = vpop.f32.mrb[0].mxu0
    %9478 = vmatprep.mubr.f32.mxu0 0.0
    %9479 = vmatmul.mubr.f32.gmra.mrb[0].mxu0 %v9347
    %v9480 = vpop.f32.mrb[0].mxu0
    %v9481 = vadd.f32 0.0, %v9480
    %v9482 = vpop.f32.mrb[0].mxu0
    %9483 = vmatprep.mubr.f32.mxu0 0.0
    %9484 = vmatmul.mubr.f32.gmra.mrb[0].mxu0 %v9350
    %v9485 = vpop.f32.mrb[0].mxu0
    %v9486 = vadd.f32 0.0, %v9485
    %v9487 = vpop.f32.mrb[0].mxu0
    %9488 = vmatprep.mubr.f32.mxu0 0.0
    %9489 = vmatmul.mubr.f32.gmra.mrb[0].mxu0 %v9353
    %v9490 = vpop.f32.mrb[0].mxu0
    %v9491 = vadd.f32 0.0, %v9490
    %v9492 = vpop.f32.mrb[0].mxu0
    %9493 = vmatprep.mubr.f32.mxu0 0.0
    %9494 = vmatmul.mubr.f32.gmra.mrb[0].mxu0 %v9356
    %v9495 = vpop.f32.mrb[0].mxu0
    %v9496 = vadd.f32 0.0, %v9495
    %v9497 = vpop.f32.mrb[0].mxu0
    %9498 = vmatprep.mubr.f32.mxu0 0.0
    %9499 = vmatmul.mubr.f32.gmra.mrb[0].mxu0 %v9359
    %v9500 = vpop.f32.mrb[0].mxu0
    %v9501 = vadd.f32 0.0, %v9500
    %v9502 = vpop.f32.mrb[0].mxu0
    %9503 = vmatprep.mubr.f32.mxu0 0.0
    %9504 = vmatmul.mubr.f32.gmra.mrb[0].mxu0 %v9362
    %v9505 = vpop.f32.mrb[0].mxu0
    %v9506 = vadd.f32 0.0, %v9505
    %v9507 = vpop.f32.mrb[0].mxu0
    %9508 = vdwg.mxu0
    %v9509 = vadd.f32 %v9291, %v9431
    %v9510 = vadd.f32 %v9292, %v9436
    %v9511 = vadd.f32 %v9293, %v9441
    %v9512 = vadd.f32 %v9294, %v9446
    %v9513 = vadd.f32 %v9295, %v9451
    %v9514 = vadd.f32 %v9296, %v9456
    %v9515 = vadd.f32 %v9297, %v9461
    %v9516 = vadd.f32 %v9298, %v9466
    %v9517 = vadd.f32 %v9299, %v9471
    %v9518 = vadd.f32 %v9300, %v9476
    %v9519 = vadd.f32 %v9301, %v9481
    %v9520 = vadd.f32 %v9302, %v9486
    %v9521 = vadd.f32 %v9303, %v9491
    %v9522 = vadd.f32 %v9304, %v9496
    %v9523 = vadd.f32 %v9305, %v9501
    %v9524 = vadd.f32 %v9306, %v9506
    %v9525 = vld [vmem:[%s5] sm:$0x1]
    %v9527 = vlaneseq
    %v9528 = vshrl.u32 %v9527, 7
    %v9529 = vsub.s32 0, %v9528
    %v9530 = vrot.slane %v9525, %v9529
    %v9532 = vadd.f32 %v9509, %v9530
    %v9533 = vadd.f32 %v9510, %v9530
    %v9534 = vadd.f32 %v9511, %v9530
    %v9535 = vadd.f32 %v9512, %v9530
    %v9536 = vadd.f32 %v9513, %v9530
    %v9537 = vadd.f32 %v9514, %v9530
    %v9538 = vadd.f32 %v9515, %v9530
    %v9539 = vadd.f32 %v9516, %v9530
    %v9540 = vadd.f32 %v9517, %v9530
    %v9541 = vadd.f32 %v9518, %v9530
    %v9542 = vadd.f32 %v9519, %v9530
    %v9543 = vadd.f32 %v9520, %v9530
    %v9544 = vadd.f32 %v9521, %v9530
    %v9545 = vadd.f32 %v9522, %v9530
    %v9546 = vadd.f32 %v9523, %v9530
    %v9547 = vadd.f32 %v9524, %v9530
    %v9548 = vmax.f32 %v9532, 0.0
    %v9549 = vmax.f32 %v9533, 0.0
    %v9550 = vmax.f32 %v9534, 0.0
    %v9551 = vmax.f32 %v9535, 0.0
    %v9552 = vmax.f32 %v9536, 0.0
    %v9553 = vmax.f32 %v9537, 0.0
    %v9554 = vmax.f32 %v9538, 0.0
    %v9555 = vmax.f32 %v9539, 0.0
    %v9556 = vmax.f32 %v9540, 0.0
    %v9557 = vmax.f32 %v9541, 0.0
    %v9558 = vmax.f32 %v9542, 0.0
    %v9559 = vmax.f32 %v9543, 0.0
    %v9560 = vmax.f32 %v9544, 0.0
    %v9561 = vmax.f32 %v9545, 0.0
    %v9562 = vmax.f32 %v9546, 0.0
    %v9563 = vmax.f32 %v9547, 0.0
    %v9564 = vld [vmem:[%s6] sm:$0xff]
    %v9565 = vld [vmem:[%s6 + $0x8] sm:$0xff]
    %v9566 = vld [vmem:[%s6 + $0x10] sm:$0xff]
    %v9567 = vld [vmem:[%s6 + $0x18] sm:$0xff]
    %v9568 = vld [vmem:[%s6 + $0x20] sm:$0xff]
    %v9569 = vld [vmem:[%s6 + $0x28] sm:$0xff]
    %v9570 = vld [vmem:[%s6 + $0x30] sm:$0xff]
    %v9571 = vld [vmem:[%s6 + $0x38] sm:$0xff]
    %v9572 = vld [vmem:[%s7] sm:$0x1]
    %v9574 = vlaneseq
    %v9575 = vshrl.u32 %v9574, 7
    %v9576 = vsub.s32 0, %v9575
    %v9577 = vrot.slane %v9572, %v9576
    %v9580 = vsel %vm4124, %v9548, 0
    %v9583 = vsel %vm4124, %v9549, 0
    %v9586 = vsel %vm4124, %v9550, 0
    %v9589 = vsel %vm4124, %v9551, 0
    %v9592 = vsel %vm4124, %v9552, 0
    %v9595 = vsel %vm4124, %v9553, 0
    %v9598 = vsel %vm4124, %v9554, 0
    %v9601 = vsel %vm4124, %v9555, 0
    %v9604 = vsel %vm4124, %v9556, 0
    %v9607 = vsel %vm4124, %v9557, 0
    %v9610 = vsel %vm4124, %v9558, 0
    %v9613 = vsel %vm4124, %v9559, 0
    %v9616 = vsel %vm4124, %v9560, 0
    %v9619 = vsel %vm4124, %v9561, 0
    %v9622 = vsel %vm4124, %v9562, 0
    %v9625 = vsel %vm4124, %v9563, 0
    %9627 = vmatprep.subr.mxu0 0.0
    %9628 = vmatpush1.msra.mxu0 %v9564
    %9629 = vmatprep.subr.mxu0 0.0
    %9630 = vmatpush1.msra.mxu0 %v9565
    %9631 = vmatprep.subr.mxu0 0.0
    %9632 = vmatpush1.msra.mxu0 %v9566
    %9633 = vmatprep.subr.mxu0 0.0
    %9634 = vmatpush1.msra.mxu0 %v9567
    %9635 = vmatprep.subr.mxu0 0.0
    %9636 = vmatpush1.msra.mxu0 %v9568
    %9637 = vmatprep.subr.mxu0 0.0
    %9638 = vmatpush1.msra.mxu0 %v9569
    %9639 = vmatprep.subr.mxu0 0.0
    %9640 = vmatpush1.msra.mxu0 %v9570
    %9641 = vmatprep.subr.mxu0 0.0
    %9642 = vmatpush1.msra.mxu0 %v9571
    %9643 = vmatprep.subr.mxu0 0.0
    %9644 = vmatpush1.msra.mxu0 0.0
    %9645 = vmatprep.subr.mxu0 0.0
    %9646 = vmatpush1.msra.mxu0 0.0
    %9647 = vmatprep.subr.mxu0 0.0
    %9648 = vmatpush1.msra.mxu0 0.0
    %9649 = vmatprep.subr.mxu0 0.0
    %9650 = vmatpush1.msra.mxu0 0.0
    %9651 = vmatprep.subr.mxu0 0.0
    %9652 = vmatpush1.msra.mxu0 0.0
    %9653 = vmatprep.subr.mxu0 0.0
    %9654 = vmatpush1.msra.mxu0 0.0
    %9655 = vmatprep.subr.mxu0 0.0
    %9656 = vmatpush1.msra.mxu0 0.0
    %9657 = vmatprep.subr.mxu0 0.0
    %9658 = vmatpush1.msra.mxu0 0.0
    %9659 = vmatprep.subr.mxu0 0.0
    %9660 = vmatpush1.msra.mxu0 0.0
    %9661 = vmatprep.subr.mxu0 0.0
    %9662 = vmatpush1.msra.mxu0 0.0
    %9663 = vmatprep.subr.mxu0 0.0
    %9664 = vmatpush1.msra.mxu0 0.0
    %9665 = vmatprep.subr.mxu0 0.0
    %9666 = vmatpush1.msra.mxu0 0.0
    %9667 = vmatprep.subr.mxu0 0.0
    %9668 = vmatpush1.msra.mxu0 0.0
    %9669 = vmatprep.subr.mxu0 0.0
    %9670 = vmatpush1.msra.mxu0 0.0
    %9671 = vmatprep.subr.mxu0 0.0
    %9672 = vmatpush1.msra.mxu0 0.0
    %9673 = vmatprep.subr.mxu0 0.0
    %9674 = vmatpush1.msra.mxu0 0.0
    %9675 = vmatprep.subr.mxu0 0.0
    %9676 = vmatpush1.msra.mxu0 0.0
    %9677 = vmatprep.subr.mxu0 0.0
    %9678 = vmatpush1.msra.mxu0 0.0
    %9679 = vmatprep.subr.mxu0 0.0
    %9680 = vmatpush1.msra.mxu0 0.0
    %9681 = vmatprep.subr.mxu0 0.0
    %9682 = vmatpush1.msra.mxu0 0.0
    %9683 = vmatprep.subr.mxu0 0.0
    %9684 = vmatpush1.msra.mxu0 0.0
    %9685 = vmatprep.subr.mxu0 0.0
    %9686 = vmatpush1.msra.mxu0 0.0
    %9687 = vmatprep.subr.mxu0 0.0
    %9688 = vmatpush1.msra.mxu0 0.0
    %9689 = vmatprep.subr.mxu0 0.0
    %9690 = vmatpush1.msra.mxu0 0.0
    %9691 = vmatprep.mubr.f32.mxu0 0.0
    %9692 = vmatmul.mubr.f32.gmra.mrb[0].mxu0 %v9580
    %v9693 = vpop.f32.mrb[0].mxu0
    %v9694 = vadd.f32 %v9577, %v9693
    %v9695 = vpop.f32.mrb[0].mxu0
    %9696 = vmatprep.mubr.f32.mxu0 0.0
    %9697 = vmatmul.mubr.f32.gmra.mrb[0].mxu0 %v9583
    %v9698 = vpop.f32.mrb[0].mxu0
    %v9699 = vadd.f32 %v9577, %v9698
    %v9700 = vpop.f32.mrb[0].mxu0
    %9701 = vmatprep.mubr.f32.mxu0 0.0
    %9702 = vmatmul.mubr.f32.gmra.mrb[0].mxu0 %v9586
    %v9703 = vpop.f32.mrb[0].mxu0
    %v9704 = vadd.f32 %v9577, %v9703
    %v9705 = vpop.f32.mrb[0].mxu0
    %9706 = vmatprep.mubr.f32.mxu0 0.0
    %9707 = vmatmul.mubr.f32.gmra.mrb[0].mxu0 %v9589
    %v9708 = vpop.f32.mrb[0].mxu0
    %v9709 = vadd.f32 %v9577, %v9708
    %v9710 = vpop.f32.mrb[0].mxu0
    %9711 = vmatprep.mubr.f32.mxu0 0.0
    %9712 = vmatmul.mubr.f32.gmra.mrb[0].mxu0 %v9592
    %v9713 = vpop.f32.mrb[0].mxu0
    %v9714 = vadd.f32 %v9577, %v9713
    %v9715 = vpop.f32.mrb[0].mxu0
    %9716 = vmatprep.mubr.f32.mxu0 0.0
    %9717 = vmatmul.mubr.f32.gmra.mrb[0].mxu0 %v9595
    %v9718 = vpop.f32.mrb[0].mxu0
    %v9719 = vadd.f32 %v9577, %v9718
    %v9720 = vpop.f32.mrb[0].mxu0
    %9721 = vmatprep.mubr.f32.mxu0 0.0
    %9722 = vmatmul.mubr.f32.gmra.mrb[0].mxu0 %v9598
    %v9723 = vpop.f32.mrb[0].mxu0
    %v9724 = vadd.f32 %v9577, %v9723
    %v9725 = vpop.f32.mrb[0].mxu0
    %9726 = vmatprep.mubr.f32.mxu0 0.0
    %9727 = vmatmul.mubr.f32.gmra.mrb[0].mxu0 %v9601
    %v9728 = vpop.f32.mrb[0].mxu0
    %v9729 = vadd.f32 %v9577, %v9728
    %v9730 = vpop.f32.mrb[0].mxu0
    %9731 = vmatprep.mubr.f32.mxu0 0.0
    %9732 = vmatmul.mubr.f32.gmra.mrb[0].mxu0 %v9604
    %v9733 = vpop.f32.mrb[0].mxu0
    %v9734 = vadd.f32 %v9577, %v9733
    %v9735 = vpop.f32.mrb[0].mxu0
    %9736 = vmatprep.mubr.f32.mxu0 0.0
    %9737 = vmatmul.mubr.f32.gmra.mrb[0].mxu0 %v9607
    %v9738 = vpop.f32.mrb[0].mxu0
    %v9739 = vadd.f32 %v9577, %v9738
    %v9740 = vpop.f32.mrb[0].mxu0
    %9741 = vmatprep.mubr.f32.mxu0 0.0
    %9742 = vmatmul.mubr.f32.gmra.mrb[0].mxu0 %v9610
    %v9743 = vpop.f32.mrb[0].mxu0
    %v9744 = vadd.f32 %v9577, %v9743
    %v9745 = vpop.f32.mrb[0].mxu0
    %9746 = vmatprep.mubr.f32.mxu0 0.0
    %9747 = vmatmul.mubr.f32.gmra.mrb[0].mxu0 %v9613
    %v9748 = vpop.f32.mrb[0].mxu0
    %v9749 = vadd.f32 %v9577, %v9748
    %v9750 = vpop.f32.mrb[0].mxu0
    %9751 = vmatprep.mubr.f32.mxu0 0.0
    %9752 = vmatmul.mubr.f32.gmra.mrb[0].mxu0 %v9616
    %v9753 = vpop.f32.mrb[0].mxu0
    %v9754 = vadd.f32 %v9577, %v9753
    %v9755 = vpop.f32.mrb[0].mxu0
    %9756 = vmatprep.mubr.f32.mxu0 0.0
    %9757 = vmatmul.mubr.f32.gmra.mrb[0].mxu0 %v9619
    %v9758 = vpop.f32.mrb[0].mxu0
    %v9759 = vadd.f32 %v9577, %v9758
    %v9760 = vpop.f32.mrb[0].mxu0
    %9761 = vmatprep.mubr.f32.mxu0 0.0
    %9762 = vmatmul.mubr.f32.gmra.mrb[0].mxu0 %v9622
    %v9763 = vpop.f32.mrb[0].mxu0
    %v9764 = vadd.f32 %v9577, %v9763
    %v9765 = vpop.f32.mrb[0].mxu0
    %9766 = vmatprep.mubr.f32.mxu0 0.0
    %9767 = vmatmul.mubr.f32.gmra.mrb[0].mxu0 %v9625
    %v9768 = vpop.f32.mrb[0].mxu0
    %v9769 = vadd.f32 %v9577, %v9768
    %v9770 = vpop.f32.mrb[0].mxu0
    %9771 = vdwg.mxu0
    %v9772 = vld [vmem:[%s1] sm:$0xff]
    %v9773 = vld [vmem:[%s1 + $0x8] sm:$0xff]
    %v9774 = vld [vmem:[%s1 + $0x10] sm:$0xff]
    %v9775 = vld [vmem:[%s1 + $0x18] sm:$0xff]
    %v9776 = vld [vmem:[%s1 + $0x20] sm:$0xff]
    %v9777 = vld [vmem:[%s1 + $0x28] sm:$0xff]
    %v9778 = vld [vmem:[%s1 + $0x30] sm:$0xff]
    %v9779 = vld [vmem:[%s1 + $0x38] sm:$0xff]
    %v9780 = vld [vmem:[%s1 + $0x40] sm:$0xff]
    %v9781 = vld [vmem:[%s1 + $0x48] sm:$0xff]
    %v9782 = vld [vmem:[%s1 + $0x50] sm:$0xff]
    %v9783 = vld [vmem:[%s1 + $0x58] sm:$0xff]
    %v9784 = vld [vmem:[%s1 + $0x60] sm:$0xff]
    %v9785 = vld [vmem:[%s1 + $0x68] sm:$0xff]
    %v9786 = vld [vmem:[%s1 + $0x70] sm:$0xff]
    %v9787 = vld [vmem:[%s1 + $0x78] sm:$0xff]
    %v9788 = vadd.f32 %v9694, %v9772
    %v9789 = vadd.f32 %v9699, %v9773
    %v9790 = vadd.f32 %v9704, %v9774
    %v9791 = vadd.f32 %v9709, %v9775
    %v9792 = vadd.f32 %v9714, %v9776
    %v9793 = vadd.f32 %v9719, %v9777
    %v9794 = vadd.f32 %v9724, %v9778
    %v9795 = vadd.f32 %v9729, %v9779
    %v9796 = vadd.f32 %v9734, %v9780
    %v9797 = vadd.f32 %v9739, %v9781
    %v9798 = vadd.f32 %v9744, %v9782
    %v9799 = vadd.f32 %v9749, %v9783
    %v9800 = vadd.f32 %v9754, %v9784
    %v9801 = vadd.f32 %v9759, %v9785
    %v9802 = vadd.f32 %v9764, %v9786
    %v9803 = vadd.f32 %v9769, %v9787
    %v9804 = vmax.f32 %v9788, 0.0
    %v9805 = vmax.f32 %v9789, 0.0
    %v9806 = vmax.f32 %v9790, 0.0
    %v9807 = vmax.f32 %v9791, 0.0
    %v9808 = vmax.f32 %v9792, 0.0
    %v9809 = vmax.f32 %v9793, 0.0
    %v9810 = vmax.f32 %v9794, 0.0
    %v9811 = vmax.f32 %v9795, 0.0
    %v9812 = vmax.f32 %v9796, 0.0
    %v9813 = vmax.f32 %v9797, 0.0
    %v9814 = vmax.f32 %v9798, 0.0
    %v9815 = vmax.f32 %v9799, 0.0
    %v9816 = vmax.f32 %v9800, 0.0
    %v9817 = vmax.f32 %v9801, 0.0
    %v9818 = vmax.f32 %v9802, 0.0
    %v9819 = vmax.f32 %v9803, 0.0
    %9820 = vst.msk [vmem:[#allocation2] sm:$0xff] %vm441, %v9804
    %9821 = vst.msk [vmem:[#allocation2 + $0x8] sm:$0xff] %vm441, %v9805
    %9822 = vst.msk [vmem:[#allocation2 + $0x10] sm:$0xff] %vm441, %v9806
    %9823 = vst.msk [vmem:[#allocation2 + $0x18] sm:$0xff] %vm441, %v9807
    %9824 = vst.msk [vmem:[#allocation2 + $0x20] sm:$0xff] %vm441, %v9808
    %9825 = vst.msk [vmem:[#allocation2 + $0x28] sm:$0xff] %vm441, %v9809
    %9826 = vst.msk [vmem:[#allocation2 + $0x30] sm:$0xff] %vm441, %v9810
    %9827 = vst.msk [vmem:[#allocation2 + $0x38] sm:$0xff] %vm441, %v9811
    %9828 = vst.msk [vmem:[#allocation2 + $0x40] sm:$0xff] %vm441, %v9812
    %9829 = vst.msk [vmem:[#allocation2 + $0x48] sm:$0xff] %vm441, %v9813
    %9830 = vst.msk [vmem:[#allocation2 + $0x50] sm:$0xff] %vm441, %v9814
    %9831 = vst.msk [vmem:[#allocation2 + $0x58] sm:$0xff] %vm441, %v9815
    %9832 = vst.msk [vmem:[#allocation2 + $0x60] sm:$0xff] %vm441, %v9816
    %9833 = vst.msk [vmem:[#allocation2 + $0x68] sm:$0xff] %vm441, %v9817
    %9834 = vst.msk [vmem:[#allocation2 + $0x70] sm:$0xff] %vm441, %v9818
    %9835 = vst.msk [vmem:[#allocation2 + $0x78] sm:$0xff] %vm441, %v9819
    // Predicated region
    $region34: #{renet_pallas.1} parent=1 // pred_check
      _
    $region35: #{renet_pallas.1} parent=1 // pred_check_branch
      %9837 = sbr.rel (0) target = $region37
    $region36: #{renet_pallas.1} parent=1 // pred_region
      %s9839 = ssub.s32 2048, 2048
      %9840 = vsyncadd [#allocation3], %s9839
      %s9841 = sshll.u32 [#allocation2], 4
      %s9842 = int_to_ptr.vmem [resolvable:$true] %s9841
      %9847 = dma.vmem_to_hbm [thread:$0]  %s9842, 2048, %s8, [#allocation3], 128, 128, 8
    $region37: #{renet_pallas.1} parent=1 // pred_fallthru
      _
    // Predicated region
    $region38: #{renet_pallas.1} parent=1 // pred_check
      _
    $region39: #{renet_pallas.1} parent=1 // pred_check_branch
      %9849 = sbr.rel (0) target = $region41
    $region40: #{renet_pallas.1} parent=1 // pred_region
      %9850 = dma.done [#allocation3], 2048
    $region41: #{renet_pallas.1} parent=1 // pred_fallthru
      _
    %9851 = vsyncpa [#allocation3], 1

</llo_original>
